<compile_context>
chip_gen: v7x
topology: tpu7x:2x2x1
jax: 0.10.0
libtpu: 0.0.40
codegen_flags: <defaults>
</compile_context>

<pallas_src>
import math

import numpy as np
import jax
import jax.numpy as jnp
from jax import lax
from jax.experimental import pallas as pl
from jax.experimental.pallas import tpu as pltpu

# ---------------- dictionary / token conventions (fairseq Dictionary) --------
BOS, PAD, EOS, UNK = 0, 1, 2, 3
VOCAB = 4 + 100          # <s>,<pad>,</s>,<unk> + 100 dummy symbols
VOCAB_PAD = 128          # padded to lane width for the output projection

# ---------------- model dims -------------------------------------------------
D_MODEL = 128
N_HEADS = 4
HEAD_DIM = D_MODEL // N_HEADS
FFN_DIM = 256
ENC_LAYERS = 2
DEC_LAYERS = 1
MAX_LEN_B = 10           # SequenceGenerator(max_len_b=10)
MAX_NEW = MAX_LEN_B      # number of decode steps
MAX_T = 16               # padded decoder position budget / KV-cache length
MAX_POS = 64             # positional-embedding table length
NEG_INF = -1e9
ATTN_SCALE = HEAD_DIM ** -0.5


# ============================ in-kernel helpers ==============================

def _head_masks():
    """Per-head (1, D) lane masks used to pack all heads into one matmul."""
    lane = lax.broadcasted_iota(jnp.int32, (1, D_MODEL), 1)
    return [jnp.where((lane >= h * HEAD_DIM) & (lane < (h + 1) * HEAD_DIM), 1.0, 0.0)
            for h in range(N_HEADS)]


def _layer_norm(y, g, b):
    mu = jnp.mean(y, axis=-1, keepdims=True)
    var = jnp.mean((y - mu) ** 2, axis=-1, keepdims=True)
    return (y - mu) * lax.rsqrt(var + 1e-5) * g + b


def _packed_mha(q, k, v, bias, hmasks):
    """All heads in ONE score matmul + ONE PV matmul.
    q: (T, D) f32; k, v: (Tk, D) f32; bias additive, broadcastable to (H*T, Tk).
    Rows h*T+i of the packed Q hold q[i] with only head-h lanes nonzero, so the
    full-D contraction computes exactly the per-head scores; the PV result is
    re-assembled into the concatenated-head context with the same lane masks."""
    T = q.shape[0]
    qm = jnp.concatenate([q * hmasks[h] for h in range(N_HEADS)], axis=0)      # (H*T, D)
    s = lax.dot_general(qm.astype(jnp.bfloat16), k.astype(jnp.bfloat16),
                        (((1,), (1,)), ((), ())),
                        preferred_element_type=jnp.float32) * ATTN_SCALE + bias
    s = s - jnp.max(s, axis=-1, keepdims=True)
    p = jnp.exp(s)
    p = p * pl.reciprocal(jnp.sum(p, axis=-1, keepdims=True), approx=True)
    o = jnp.dot(p.astype(jnp.bfloat16), v.astype(jnp.bfloat16),
                preferred_element_type=jnp.float32)                            # (H*T, D)
    ctx = o[0:T, :] * hmasks[0]
    for h in range(1, N_HEADS):
        ctx = ctx + o[h * T:(h + 1) * T, :] * hmasks[h]
    return ctx                                                                  # (T, D)


# ============================ encoder kernel =================================

def _encoder_kernel(x_ref, kbias_ref, wqkv_ref, bqkv_ref, wo_ref, bo_ref,
                    w1_ref, b1_ref, w2_ref, b2_ref, ln_ref, o_ref):
    """One grid step = one batch row; the full 2-layer encoder is fused."""
    hmasks = _head_masks()
    x = x_ref[0]                       # (S, D) f32
    kb = kbias_ref[0]                  # (1, S) additive key-pad bias
    for li in range(ENC_LAYERS):
        ln = ln_ref[li]                # (4, D)
        qkv = jnp.dot(x.astype(jnp.bfloat16), wqkv_ref[li],
                      preferred_element_type=jnp.float32) + bqkv_ref[li]        # (S, 3D)
        q = qkv[:, :D_MODEL]
        k = qkv[:, D_MODEL:2 * D_MODEL]
        v = qkv[:, 2 * D_MODEL:]
        ctx = _packed_mha(q, k, v, kb, hmasks)                                  # (S, D)
        proj = jnp.dot(ctx.astype(jnp.bfloat16), wo_ref[li],
                       preferred_element_type=jnp.float32) + bo_ref[li]
        x = _layer_norm(x + proj, ln[0:1, :], ln[1:2, :])
        h = jnp.maximum(jnp.dot(x.astype(jnp.bfloat16), w1_ref[li],
                                preferred_element_type=jnp.float32) + b1_ref[li], 0.0)
        y = x + jnp.dot(h.astype(jnp.bfloat16), w2_ref[li],
                        preferred_element_type=jnp.float32) + b2_ref[li]
        x = _layer_norm(y, ln[2:3, :], ln[3:4, :])
    o_ref[0] = x


def pallas_encoder(x, key_bias, ew):
    B, S, D = x.shape

    def csp(a):  # whole-array spec, constant index map -> DMA'd once
        nd = a.ndim
        return pl.BlockSpec(a.shape, lambda b, _n=nd: (0,) * _n)

    return pl.pallas_call(
        _encoder_kernel,
        out_shape=jax.ShapeDtypeStruct((B, S, D), jnp.float32),
        grid=(B,),
        in_specs=[pl.BlockSpec((1, S, D), lambda b: (b, 0, 0)),
                  pl.BlockSpec((1, 1, S), lambda b: (b, 0, 0)),
                  csp(ew['wqkv']), csp(ew['bqkv']), csp(ew['wo']), csp(ew['bo']),
                  csp(ew['w1']), csp(ew['b1']), csp(ew['w2']), csp(ew['b2']),
                  csp(ew['ln'])],
        out_specs=pl.BlockSpec((1, S, D), lambda b: (b, 0, 0)),
        compiler_params=pltpu.CompilerParams(dimension_semantics=("parallel",)),
    )(x, key_bias, ew['wqkv'], ew['bqkv'], ew['wo'], ew['bo'],
      ew['w1'], ew['b1'], ew['w2'], ew['b2'], ew['ln'])


# ============================ fused decode-loop kernel =======================
# TODO(synk): fairseq SequenceGenerator uses beam_size=2; greedy (beam-1) decoding
# is used here.  no_repeat_ngram_size=2 and max_len_b=10 (forced EOS) are kept.

def _decode_kernel(pos_ref, dec_emb_ref, enc_ref, cbias_ref,
                   self_wqkv_ref, self_bqkv_ref, self_wo_ref, self_bo_ref,
                   cross_wq_ref, cross_bq_ref, cross_wkv_ref, cross_bkv_ref,
                   cross_wo_ref, cross_bo_ref,
                   w1_ref, b1_ref, w2_ref, b2_ref, ln_ref,
                   out_w_ref, out_b_ref,
                   tok_ref,
                   kc_ref, vc_ref, ek_ref, ev_ref):
    t = pl.program_id(0)
    B, S, _ = enc_ref.shape
    hmasks = _head_masks()

    @pl.when(t == 0)
    def _init():
        # tokens primed with EOS at position 0, PAD elsewhere; KV caches zeroed;
        # cross-attention K/V projected once from the encoder output.
        pos0 = lax.broadcasted_iota(jnp.int32, (B, MAX_T), 1)
        tok_ref[...] = jnp.where(pos0 == 0, jnp.full_like(pos0, EOS),
                                 jnp.full_like(pos0, PAD))
        kc_ref[...] = jnp.zeros_like(kc_ref)
        vc_ref[...] = jnp.zeros_like(vc_ref)
        enc2 = enc_ref[...].reshape(B * S, D_MODEL)
        ekv = jnp.dot(enc2.astype(jnp.bfloat16), cross_wkv_ref[...],
                      preferred_element_type=jnp.float32) + cross_bkv_ref[...]
        ek_ref[...] = ekv[:, :D_MODEL].reshape(B, S, D_MODEL)
        ev_ref[...] = ekv[:, D_MODEL:].reshape(B, S, D_MODEL)

    tokens = tok_ref[...]                                          # (B, MAX_T) int32
    tok_f = tokens.astype(jnp.float32)
    pos_row = lax.broadcasted_iota(jnp.int32, (B, MAX_T), 1)
    cur_f = jnp.sum(jnp.where(pos_row == t, tok_f, 0.0),
                    axis=-1, keepdims=True)                        # (B, 1) current token

    # ---- token embedding (one-hot matmul; sqrt(D) scale fused into the table) ----
    voc_i = lax.broadcasted_iota(jnp.int32, (B, VOCAB_PAD), 1)
    voc_f = voc_i.astype(jnp.float32)
    onehot = jnp.where(voc_f == cur_f, 1.0, 0.0)                   # (B, V)
    x = jnp.dot(onehot, dec_emb_ref[...], preferred_element_type=jnp.float32)
    x = x + pos_ref[pl.ds(t, 1), :]                                # (B, D)

    ln = ln_ref[...]
    cb = cbias_ref[...]                                            # (B, S) cross key bias

    # ---- self-attention with VMEM-resident KV cache ----
    qkv = jnp.dot(x.astype(jnp.bfloat16), self_wqkv_ref[...],
                  preferred_element_type=jnp.float32) + self_bqkv_ref[...]
    q = qkv[:, :D_MODEL]
    k_new = qkv[:, D_MODEL:2 * D_MODEL]
    v_new = qkv[:, 2 * D_MODEL:]
    tsel = lax.broadcasted_iota(jnp.int32, (B, MAX_T, D_MODEL), 1) == t
    kc = jnp.where(tsel, k_new[:, None, :], kc_ref[...])
    vc = jnp.where(tsel, v_new[:, None, :], vc_ref[...])
    kc_ref[...] = kc
    vc_ref[...] = vc

    pos_k = lax.broadcasted_iota(jnp.int32, (1, MAX_T), 1)
    self_bias = jnp.where(pos_k <= t, 0.0, NEG_INF)                # (1, MAX_T)

    ctx_rows = [_packed_mha(q[b:b + 1, :], kc[b], vc[b], self_bias, hmasks)
                for b in range(B)]
    ctx = jnp.concatenate(ctx_rows, axis=0)                        # (B, D)
    proj = jnp.dot(ctx.astype(jnp.bfloat16), self_wo_ref[...],
                   preferred_element_type=jnp.float32) + self_bo_ref[...]
    y1 = _layer_norm(x + proj, ln[0:1, :], ln[1:2, :])

    # ---- cross-attention over the pre-projected encoder K/V ----
    qc = jnp.dot(y1.astype(jnp.bfloat16), cross_wq_ref[...],
                 preferred_element_type=jnp.float32) + cross_bq_ref[...]
    ctx_rows = [_packed_mha(qc[b:b + 1, :], ek_ref[b], ev_ref[b],
                            cb[b:b + 1, :], hmasks) for b in range(B)]
    ctx2 = jnp.concatenate(ctx_rows, axis=0)
    proj2 = jnp.dot(ctx2.astype(jnp.bfloat16), cross_wo_ref[...],
                    preferred_element_type=jnp.float32) + cross_bo_ref[...]
    y2 = _layer_norm(y1 + proj2, ln[2:3, :], ln[3:4, :])

    # ---- FFN ----
    hdn = jnp.maximum(jnp.dot(y2.astype(jnp.bfloat16), w1_ref[...],
                              preferred_element_type=jnp.float32) + b1_ref[...], 0.0)
    y3 = y2 + jnp.dot(hdn.astype(jnp.bfloat16), w2_ref[...],
                      preferred_element_type=jnp.float32) + b2_ref[...]
    y3 = _layer_norm(y3, ln[4:5, :], ln[5:6, :])

    # ---- output projection + vocab masking + 2-gram ban + greedy argmax ----
    logits = jnp.dot(y3.astype(jnp.bfloat16), out_w_ref[...],
                     preferred_element_type=jnp.float32) + out_b_ref[...]   # (B, V)
    lp = jnp.where((voc_i == PAD) | (voc_i >= VOCAB), NEG_INF, logits)

    # no_repeat_ngram_size = 2: ban any token completing an already-seen bigram.
    ii = lax.broadcasted_iota(jnp.int32, (MAX_T, MAX_T), 0)
    jj = lax.broadcasted_iota(jnp.int32, (MAX_T, MAX_T), 1)
    shift = jnp.where(jj == ii + 1, 1.0, 0.0)                      # position-shift matrix
    prev_f = jnp.dot(tok_f.astype(jnp.bfloat16), shift.astype(jnp.bfloat16),
                     preferred_element_type=jnp.float32)           # prev_f[b,j] = tok[b,j-1]
    cond_f = ((prev_f == cur_f) & (pos_row >= 1) & (pos_row <= t)).astype(jnp.float32)
    eq3 = tokens[:, :, None] == lax.broadcasted_iota(
        jnp.int32, (B, MAX_T, VOCAB_PAD), 2)
    cnt = jnp.sum(jnp.where(eq3, cond_f[:, :, None], 0.0), axis=1)  # (B, V)
    lp = jnp.where(cnt > 0.0, NEG_INF, lp)

    mx = jnp.max(lp, axis=-1, keepdims=True)
    nxt_f = jnp.min(jnp.where(lp >= mx, voc_f, jnp.float32(VOCAB_PAD)),
                    axis=-1, keepdims=True)                         # lowest argmax index
    fin = jnp.sum(jnp.where((tokens == EOS) & (pos_row >= 1) & (pos_row <= t), 1.0, 0.0),
                  axis=-1, keepdims=True) > 0.0                     # (B, 1) finished?
    nxt_f = jnp.where(t == MAX_NEW - 1, jnp.float32(EOS), nxt_f)    # force EOS at the cap
    nxt_f = jnp.where(fin, jnp.float32(PAD), nxt_f)
    tok_ref[...] = jnp.where(pos_row == t + 1, nxt_f.astype(jnp.int32), tokens)


def pallas_generate(pos_emb, dec_embed, enc_out, cross_bias, dw, out_w, out_b):
    B, S, D = enc_out.shape

    def csp(a):  # whole-array spec, constant index map -> DMA'd once, VMEM-resident
        nd = a.ndim
        return pl.BlockSpec(a.shape, lambda t, _n=nd: (0,) * _n)

    args = (pos_emb, dec_embed, enc_out, cross_bias,
            dw['self_wqkv'], dw['self_bqkv'], dw['self_wo'], dw['self_bo'],
            dw['cross_wq'], dw['cross_bq'], dw['cross_wkv'], dw['cross_bkv'],
            dw['cross_wo'], dw['cross_bo'],
            dw['w1'], dw['b1'], dw['w2'], dw['b2'], dw['ln'],
            out_w, out_b)
    return pl.pallas_call(
        _decode_kernel,
        out_shape=jax.ShapeDtypeStruct((B, MAX_T), jnp.int32),
        grid=(MAX_NEW,),
        in_specs=[csp(a) for a in args],
        out_specs=pl.BlockSpec((B, MAX_T), lambda t: (0, 0)),
        scratch_shapes=[pltpu.VMEM((B, MAX_T, D), jnp.float32),   # self-attn K cache
                        pltpu.VMEM((B, MAX_T, D), jnp.float32),   # self-attn V cache
                        pltpu.VMEM((B, S, D), jnp.float32),       # cross K
                        pltpu.VMEM((B, S, D), jnp.float32)],      # cross V
        compiler_params=pltpu.CompilerParams(dimension_semantics=("arbitrary",)),
    )(*args)


# ============================ transformer glue ===============================

def sinusoidal_pos_emb(T, D):
    # TODO(synk): fairseq offsets positions by padding_idx+1 and interleaves sin/cos;
    # a standard sinusoid table is used here.
    half = D // 2
    emb = math.log(10000.0) / (half - 1)
    freqs = jnp.exp(jnp.arange(half, dtype=jnp.float32) * -emb)
    pos = jnp.arange(T, dtype=jnp.float32)[:, None] * freqs[None, :]
    return jnp.concatenate([jnp.sin(pos), jnp.cos(pos)], axis=-1)  # (T, D)


def _generate_impl(params, src_tokens):
    B, S = src_tokens.shape
    pad = (src_tokens == PAD)
    x = jnp.take(params['enc_embed'], src_tokens, axis=0)          # scale fused at init
    x = x + params['pos_emb'][:S][None]
    x = jnp.where(pad[..., None], 0.0, x)
    key_bias = jnp.where(pad, NEG_INF, 0.0).astype(jnp.float32)
    enc_out = pallas_encoder(x, key_bias[:, None, :], params['enc'])
    tokens = pallas_generate(params['pos_emb'], params['dec_embed'], enc_out,
                             key_bias, params['dec'], params['out_w'], params['out_b'])
    return tokens


_generate_jit = jax.jit(_generate_impl)


def generate(params, src_tokens, src_lengths):
    del src_lengths  # padding mask is derived from PAD tokens
    tokens = np.asarray(_generate_jit(params, src_tokens))         # single host sync
    results = []
    for b in range(tokens.shape[0]):
        toks = [int(v) for v in tokens[b, 1:1 + MAX_NEW]]
        if EOS in toks:
            toks = toks[:toks.index(EOS) + 1]
        results.append(jnp.asarray(toks, dtype=jnp.int32))
    return results[0], results[1]


# ============================ parameter init =================================

def _wf(key, shape, scale=0.02):
    return scale * jax.random.normal(key, shape, jnp.float32)


def _wb(key, shape, scale=0.02):
    # matmul weights stored in bf16 (f32 accumulation inside the kernels)
    return _wf(key, shape, scale).astype(jnp.bfloat16)


def init_params(key):
    ks = jax.random.split(key, 16)
    D, F, L = D_MODEL, FFN_DIM, ENC_LAYERS
    # sqrt(D) embedding scale fused into the tables; PAD row zeroed.
    enc_embed = (_wf(ks[0], (VOCAB_PAD, D)) * math.sqrt(D)).at[PAD].set(0.0)
    dec_embed = (_wf(ks[1], (VOCAB_PAD, D)) * math.sqrt(D)).at[PAD].set(0.0)
    enc = {
        'wqkv': _wb(ks[2], (L, D, 3 * D)), 'bqkv': jnp.zeros((L, 1, 3 * D), jnp.float32),
        'wo': _wb(ks[3], (L, D, D)), 'bo': jnp.zeros((L, 1, D), jnp.float32),
        'w1': _wb(ks[4], (L, D, F)), 'b1': jnp.zeros((L, 1, F), jnp.float32),
        'w2': _wb(ks[5], (L, F, D)), 'b2': jnp.zeros((L, 1, D), jnp.float32),
        'ln': jnp.tile(jnp.stack([jnp.ones((D,), jnp.float32), jnp.zeros((D,), jnp.float32),
                                  jnp.ones((D,), jnp.float32), jnp.zeros((D,), jnp.float32)]
                                 )[None], (L, 1, 1)),
    }
    dec = {
        'self_wqkv': _wb(ks[6], (D, 3 * D)), 'self_bqkv': jnp.zeros((1, 3 * D), jnp.float32),
        'self_wo': _wb(ks[7], (D, D)), 'self_bo': jnp.zeros((1, D), jnp.float32),
        'cross_wq': _wb(ks[8], (D, D)), 'cross_bq': jnp.zeros((1, D), jnp.float32),
        'cross_wkv': _wb(ks[9], (D, 2 * D)), 'cross_bkv': jnp.zeros((1, 2 * D), jnp.float32),
        'cross_wo': _wb(ks[10], (D, D)), 'cross_bo': jnp.zeros((1, D), jnp.float32),
        'w1': _wb(ks[11], (D, F)), 'b1': jnp.zeros((1, F), jnp.float32),
        'w2': _wb(ks[12], (F, D)), 'b2': jnp.zeros((1, D), jnp.float32),
        'ln': jnp.concatenate([jnp.ones((1, D), jnp.float32),
                               jnp.zeros((1, D), jnp.float32)] * 3, axis=0),
    }
    return {
        'enc_embed': enc_embed,
        'dec_embed': dec_embed,
        'pos_emb': sinusoidal_pos_emb(MAX_POS, D),
        'out_w': _wb(ks[13], (D, VOCAB_PAD)),
        'out_b': jnp.zeros((1, VOCAB_PAD), jnp.float32),
        'enc': enc,
        'dec': dec,
    }


# ============================ main ===========================================

if __name__ == "__main__":
    key = jax.random.PRNGKey(0)
    pkey, dkey = jax.random.split(key)
    params = init_params(pkey)

    # src_tokens: (2, 8) long, ids in the dummy-symbol range, EOS-terminated,
    # second sentence right-padded per src_lengths.
    B, S = 2, 8
    src_lengths = jnp.asarray([8, 5], dtype=jnp.int32)
    body = jax.random.randint(dkey, (B, S), 4, VOCAB, dtype=jnp.int32)
    src = np.asarray(body).copy()
    for b in range(B):
        L = int(src_lengths[b])
        src[b, L - 1] = EOS
        src[b, L:] = PAD
    src_tokens = jnp.asarray(src, dtype=jnp.int32)

    tokens0, tokens1 = generate(params, src_tokens, src_lengths)
    jax.block_until_ready((tokens0, tokens1))
    print("KERNEL_OK")
</pallas_src>

<mosaic_0001>
module attributes {stable_mosaic.version = 11 : i64} {
  func.func @_encoder_kernel(%arg0: i32, %arg1: memref<1x8x128xf32, #tpu.memory_space<vmem>>, %arg2: memref<1x1x8xf32, #tpu.memory_space<vmem>>, %arg3: memref<2x128x384xbf16, #tpu.memory_space<vmem>>, %arg4: memref<2x1x384xf32, #tpu.memory_space<vmem>>, %arg5: memref<2x128x128xbf16, #tpu.memory_space<vmem>>, %arg6: memref<2x1x128xf32, #tpu.memory_space<vmem>>, %arg7: memref<2x128x256xbf16, #tpu.memory_space<vmem>>, %arg8: memref<2x1x256xf32, #tpu.memory_space<vmem>>, %arg9: memref<2x256x128xbf16, #tpu.memory_space<vmem>>, %arg10: memref<2x1x128xf32, #tpu.memory_space<vmem>>, %arg11: memref<2x4x128xf32, #tpu.memory_space<vmem>>, %arg12: memref<1x8x128xf32, #tpu.memory_space<vmem>>) attributes {dimension_semantics = [#tpu.dimension_semantics<parallel>], iteration_bounds = array<i64: 2>, scalar_prefetch = 0 : i64, scratch_operands = 0 : i64, tpu.core_type = #tpu.core_type<tc>, window_params = [{transform_indices = @transform_0, window_bounds = array<i64: 1, 8, 128>}, {transform_indices = @transform_1, window_bounds = array<i64: 1, 1, 8>}, {pipeline_mode = #tpu.pipeline_mode<synchronous>, transform_indices = @transform_2, window_bounds = array<i64: 2, 128, 384>}, {pipeline_mode = #tpu.pipeline_mode<synchronous>, transform_indices = @transform_3, window_bounds = array<i64: 2, 1, 384>}, {pipeline_mode = #tpu.pipeline_mode<synchronous>, transform_indices = @transform_4, window_bounds = array<i64: 2, 128, 128>}, {pipeline_mode = #tpu.pipeline_mode<synchronous>, transform_indices = @transform_5, window_bounds = array<i64: 2, 1, 128>}, {pipeline_mode = #tpu.pipeline_mode<synchronous>, transform_indices = @transform_6, window_bounds = array<i64: 2, 128, 256>}, {pipeline_mode = #tpu.pipeline_mode<synchronous>, transform_indices = @transform_7, window_bounds = array<i64: 2, 1, 256>}, {pipeline_mode = #tpu.pipeline_mode<synchronous>, transform_indices = @transform_8, window_bounds = array<i64: 2, 256, 128>}, {pipeline_mode = #tpu.pipeline_mode<synchronous>, transform_indices = @transform_9, window_bounds = array<i64: 2, 1, 128>}, {pipeline_mode = #tpu.pipeline_mode<synchronous>, transform_indices = @transform_10, window_bounds = array<i64: 2, 4, 128>}, {transform_indices = @transform_11, window_bounds = array<i64: 1, 8, 128>}]} {
    %0 = tpu.iota {dimensions = array<i32: 1>} : vector<1x128xi32>
    %c0_i32 = arith.constant 0 : i32
    %1 = vector.broadcast %c0_i32 : i32 to vector<1x128xi32>
    %2 = arith.cmpi sge, %0, %1 : vector<1x128xi32>
    %c32_i32 = arith.constant 32 : i32
    %3 = vector.broadcast %c32_i32 : i32 to vector<1x128xi32>
    %4 = arith.cmpi slt, %0, %3 : vector<1x128xi32>
    %5 = arith.andi %2, %4 : vector<1x128xi1>
    %cst = arith.constant 1.000000e+00 : f32
    %cst_0 = arith.constant 0.000000e+00 : f32
    %6 = vector.broadcast %cst : f32 to vector<1x128xf32>
    %7 = vector.broadcast %cst_0 : f32 to vector<1x128xf32>
    %8 = arith.select %5, %6, %7 : vector<1x128xi1>, vector<1x128xf32>
    %c32_i32_1 = arith.constant 32 : i32
    %9 = vector.broadcast %c32_i32_1 : i32 to vector<1x128xi32>
    %10 = arith.cmpi sge, %0, %9 : vector<1x128xi32>
    %c64_i32 = arith.constant 64 : i32
    %11 = vector.broadcast %c64_i32 : i32 to vector<1x128xi32>
    %12 = arith.cmpi slt, %0, %11 : vector<1x128xi32>
    %13 = arith.andi %10, %12 : vector<1x128xi1>
    %cst_2 = arith.constant 1.000000e+00 : f32
    %cst_3 = arith.constant 0.000000e+00 : f32
    %14 = vector.broadcast %cst_2 : f32 to vector<1x128xf32>
    %15 = vector.broadcast %cst_3 : f32 to vector<1x128xf32>
    %16 = arith.select %13, %14, %15 : vector<1x128xi1>, vector<1x128xf32>
    %c64_i32_4 = arith.constant 64 : i32
    %17 = vector.broadcast %c64_i32_4 : i32 to vector<1x128xi32>
    %18 = arith.cmpi sge, %0, %17 : vector<1x128xi32>
    %c96_i32 = arith.constant 96 : i32
    %19 = vector.broadcast %c96_i32 : i32 to vector<1x128xi32>
    %20 = arith.cmpi slt, %0, %19 : vector<1x128xi32>
    %21 = arith.andi %18, %20 : vector<1x128xi1>
    %cst_5 = arith.constant 1.000000e+00 : f32
    %cst_6 = arith.constant 0.000000e+00 : f32
    %22 = vector.broadcast %cst_5 : f32 to vector<1x128xf32>
    %23 = vector.broadcast %cst_6 : f32 to vector<1x128xf32>
    %24 = arith.select %21, %22, %23 : vector<1x128xi1>, vector<1x128xf32>
    %c96_i32_7 = arith.constant 96 : i32
    %25 = vector.broadcast %c96_i32_7 : i32 to vector<1x128xi32>
    %26 = arith.cmpi sge, %0, %25 : vector<1x128xi32>
    %c128_i32 = arith.constant 128 : i32
    %27 = vector.broadcast %c128_i32 : i32 to vector<1x128xi32>
    %28 = arith.cmpi slt, %0, %27 : vector<1x128xi32>
    %29 = arith.andi %26, %28 : vector<1x128xi1>
    %cst_8 = arith.constant 1.000000e+00 : f32
    %cst_9 = arith.constant 0.000000e+00 : f32
    %30 = vector.broadcast %cst_8 : f32 to vector<1x128xf32>
    %31 = vector.broadcast %cst_9 : f32 to vector<1x128xf32>
    %32 = arith.select %29, %30, %31 : vector<1x128xi1>, vector<1x128xf32>
    %c0 = arith.constant 0 : index
    %c0_10 = arith.constant 0 : index
    %c0_11 = arith.constant 0 : index
    %33 = vector.load %arg1[%c0, %c0_10, %c0_11] : memref<1x8x128xf32, #tpu.memory_space<vmem>>, vector<1x8x128xf32>
    %34 = vector.shape_cast %33 : vector<1x8x128xf32> to vector<8x128xf32>
    %c0_12 = arith.constant 0 : index
    %c0_13 = arith.constant 0 : index
    %c0_14 = arith.constant 0 : index
    %35 = vector.load %arg2[%c0_12, %c0_13, %c0_14] : memref<1x1x8xf32, #tpu.memory_space<vmem>>, vector<1x1x8xf32>
    %36 = vector.shape_cast %35 : vector<1x1x8xf32> to vector<1x8xf32>
    %c0_15 = arith.constant 0 : index
    %c0_16 = arith.constant 0 : index
    %c0_17 = arith.constant 0 : index
    %37 = vector.load %arg11[%c0_15, %c0_16, %c0_17] : memref<2x4x128xf32, #tpu.memory_space<vmem>>, vector<1x4x128xf32>
    %38 = vector.shape_cast %37 : vector<1x4x128xf32> to vector<4x128xf32>
    %39 = arith.truncf %34 : vector<8x128xf32> to vector<8x128xbf16>
    %c0_18 = arith.constant 0 : index
    %c0_19 = arith.constant 0 : index
    %c0_20 = arith.constant 0 : index
    %40 = vector.load %arg3[%c0_18, %c0_19, %c0_20] : memref<2x128x384xbf16, #tpu.memory_space<vmem>>, vector<1x128x384xbf16>
    %41 = vector.shape_cast %40 : vector<1x128x384xbf16> to vector<128x384xbf16>
    %cst_21 = arith.constant dense<0.000000e+00> : vector<8x384xf32>
    %42 = tpu.matmul %39, %41, %cst_21 {dimension_numbers = #tpu.dot_dimension_numbers<[1], [0], [0], [1], [0, 0, 1, 1], [], []>} : vector<8x128xbf16>, vector<128x384xbf16>, vector<8x384xf32> -> vector<8x384xf32>
    %c0_22 = arith.constant 0 : index
    %c0_23 = arith.constant 0 : index
    %c0_24 = arith.constant 0 : index
    %43 = vector.load %arg4[%c0_22, %c0_23, %c0_24] : memref<2x1x384xf32, #tpu.memory_space<vmem>>, vector<1x1x384xf32>
    %44 = vector.shape_cast %43 : vector<1x1x384xf32> to vector<1x384xf32>
    %45 = vector.broadcast %44 : vector<1x384xf32> to vector<8x384xf32>
    %46 = arith.addf %42, %45 : vector<8x384xf32>
    %47 = vector.extract_strided_slice %46 {offsets = [0, 0], sizes = [8, 128], strides = [1, 1]} : vector<8x384xf32> to vector<8x128xf32>
    %48 = vector.extract_strided_slice %46 {offsets = [0, 128], sizes = [8, 128], strides = [1, 1]} : vector<8x384xf32> to vector<8x128xf32>
    %49 = vector.extract_strided_slice %46 {offsets = [0, 256], sizes = [8, 128], strides = [1, 1]} : vector<8x384xf32> to vector<8x128xf32>
    %50 = vector.broadcast %8 : vector<1x128xf32> to vector<8x128xf32>
    %51 = arith.mulf %47, %50 : vector<8x128xf32>
    %52 = vector.broadcast %16 : vector<1x128xf32> to vector<8x128xf32>
    %53 = arith.mulf %47, %52 : vector<8x128xf32>
    %54 = vector.broadcast %24 : vector<1x128xf32> to vector<8x128xf32>
    %55 = arith.mulf %47, %54 : vector<8x128xf32>
    %56 = vector.broadcast %32 : vector<1x128xf32> to vector<8x128xf32>
    %57 = arith.mulf %47, %56 : vector<8x128xf32>
    %58 = tpu.concatenate %51, %53, %55, %57 in 0 : vector<8x128xf32>, vector<8x128xf32>, vector<8x128xf32>, vector<8x128xf32> -> vector<32x128xf32>
    %59 = arith.truncf %58 : vector<32x128xf32> to vector<32x128xbf16>
    %60 = arith.truncf %48 : vector<8x128xf32> to vector<8x128xbf16>
    %cst_25 = arith.constant dense<0.000000e+00> : vector<32x8xf32>
    %61 = tpu.matmul %59, %60, %cst_25 {dimension_numbers = #tpu.dot_dimension_numbers<[1], [1], [0], [0], [0, 0, 1, 0], [], []>} : vector<32x128xbf16>, vector<8x128xbf16>, vector<32x8xf32> -> vector<32x8xf32>
    %cst_26 = arith.constant 0.176776692 : f32
    %62 = vector.broadcast %cst_26 : f32 to vector<32x8xf32>
    %63 = arith.mulf %61, %62 : vector<32x8xf32>
    %64 = vector.broadcast %36 : vector<1x8xf32> to vector<32x8xf32>
    %65 = arith.addf %63, %64 : vector<32x8xf32>
    %cst_27 = arith.constant dense<0xFF800000> : vector<32xf32>
    %66 = vector.multi_reduction <maximumf>, %65, %cst_27 [1] : vector<32x8xf32> to vector<32xf32>
    %67 = vector.shape_cast %66 : vector<32xf32> to vector<32x1xf32>
    %68 = vector.broadcast %67 : vector<32x1xf32> to vector<32x8xf32>
    %69 = arith.subf %65, %68 : vector<32x8xf32>
    %70 = math.exp %69 : vector<32x8xf32>
    %cst_28 = arith.constant dense<0.000000e+00> : vector<32xf32>
    %71 = vector.multi_reduction <add>, %70, %cst_28 [1] : vector<32x8xf32> to vector<32xf32>
    %72 = vector.shape_cast %71 : vector<32xf32> to vector<32x1xf32>
    %73 = tpu.reciprocal %72 {approx = true} : vector<32x1xf32> -> vector<32x1xf32>
    %74 = vector.broadcast %73 : vector<32x1xf32> to vector<32x8xf32>
    %75 = arith.mulf %70, %74 : vector<32x8xf32>
    %76 = arith.truncf %75 : vector<32x8xf32> to vector<32x8xbf16>
    %77 = arith.truncf %49 : vector<8x128xf32> to vector<8x128xbf16>
    %cst_29 = arith.constant dense<0.000000e+00> : vector<32x128xf32>
    %78 = tpu.matmul %76, %77, %cst_29 {dimension_numbers = #tpu.dot_dimension_numbers<[1], [0], [0], [1], [0, 0, 1, 1], [], []>} : vector<32x8xbf16>, vector<8x128xbf16>, vector<32x128xf32> -> vector<32x128xf32>
    %79 = vector.extract_strided_slice %78 {offsets = [0, 0], sizes = [8, 128], strides = [1, 1]} : vector<32x128xf32> to vector<8x128xf32>
    %80 = vector.broadcast %8 : vector<1x128xf32> to vector<8x128xf32>
    %81 = arith.mulf %79, %80 : vector<8x128xf32>
    %82 = vector.extract_strided_slice %78 {offsets = [8, 0], sizes = [8, 128], strides = [1, 1]} : vector<32x128xf32> to vector<8x128xf32>
    %83 = vector.broadcast %16 : vector<1x128xf32> to vector<8x128xf32>
    %84 = arith.mulf %82, %83 : vector<8x128xf32>
    %85 = arith.addf %81, %84 : vector<8x128xf32>
    %86 = vector.extract_strided_slice %78 {offsets = [16, 0], sizes = [8, 128], strides = [1, 1]} : vector<32x128xf32> to vector<8x128xf32>
    %87 = vector.broadcast %24 : vector<1x128xf32> to vector<8x128xf32>
    %88 = arith.mulf %86, %87 : vector<8x128xf32>
    %89 = arith.addf %85, %88 : vector<8x128xf32>
    %90 = vector.extract_strided_slice %78 {offsets = [24, 0], sizes = [8, 128], strides = [1, 1]} : vector<32x128xf32> to vector<8x128xf32>
    %91 = vector.broadcast %32 : vector<1x128xf32> to vector<8x128xf32>
    %92 = arith.mulf %90, %91 : vector<8x128xf32>
    %93 = arith.addf %89, %92 : vector<8x128xf32>
    %94 = arith.truncf %93 : vector<8x128xf32> to vector<8x128xbf16>
    %c0_30 = arith.constant 0 : index
    %c0_31 = arith.constant 0 : index
    %c0_32 = arith.constant 0 : index
    %95 = vector.load %arg5[%c0_30, %c0_31, %c0_32] : memref<2x128x128xbf16, #tpu.memory_space<vmem>>, vector<1x128x128xbf16>
    %96 = vector.shape_cast %95 : vector<1x128x128xbf16> to vector<128x128xbf16>
    %cst_33 = arith.constant dense<0.000000e+00> : vector<8x128xf32>
    %97 = tpu.matmul %94, %96, %cst_33 {dimension_numbers = #tpu.dot_dimension_numbers<[1], [0], [0], [1], [0, 0, 1, 1], [], []>} : vector<8x128xbf16>, vector<128x128xbf16>, vector<8x128xf32> -> vector<8x128xf32>
    %c0_34 = arith.constant 0 : index
    %c0_35 = arith.constant 0 : index
    %c0_36 = arith.constant 0 : index
    %98 = vector.load %arg6[%c0_34, %c0_35, %c0_36] : memref<2x1x128xf32, #tpu.memory_space<vmem>>, vector<1x1x128xf32>
    %99 = vector.shape_cast %98 : vector<1x1x128xf32> to vector<1x128xf32>
    %100 = vector.broadcast %99 : vector<1x128xf32> to vector<8x128xf32>
    %101 = arith.addf %97, %100 : vector<8x128xf32>
    %102 = arith.addf %34, %101 : vector<8x128xf32>
    %103 = vector.extract_strided_slice %38 {offsets = [0, 0], sizes = [1, 128], strides = [1, 1]} : vector<4x128xf32> to vector<1x128xf32>
    %104 = vector.extract_strided_slice %38 {offsets = [1, 0], sizes = [1, 128], strides = [1, 1]} : vector<4x128xf32> to vector<1x128xf32>
    %cst_37 = arith.constant dense<0.000000e+00> : vector<8xf32>
    %105 = vector.multi_reduction <add>, %102, %cst_37 [1] : vector<8x128xf32> to vector<8xf32>
    %106 = vector.shape_cast %105 : vector<8xf32> to vector<8x1xf32>
    %cst_38 = arith.constant 1.280000e+02 : f32
    %107 = vector.broadcast %cst_38 : f32 to vector<8x1xf32>
    %108 = arith.divf %106, %107 : vector<8x1xf32>
    %109 = vector.broadcast %108 : vector<8x1xf32> to vector<8x128xf32>
    %110 = arith.subf %102, %109 : vector<8x128xf32>
    %111 = arith.mulf %110, %110 : vector<8x128xf32>
    %cst_39 = arith.constant dense<0.000000e+00> : vector<8xf32>
    %112 = vector.multi_reduction <add>, %111, %cst_39 [1] : vector<8x128xf32> to vector<8xf32>
    %113 = vector.shape_cast %112 : vector<8xf32> to vector<8x1xf32>
    %cst_40 = arith.constant 1.280000e+02 : f32
    %114 = vector.broadcast %cst_40 : f32 to vector<8x1xf32>
    %115 = arith.divf %113, %114 : vector<8x1xf32>
    %116 = vector.broadcast %108 : vector<8x1xf32> to vector<8x128xf32>
    %117 = arith.subf %102, %116 : vector<8x128xf32>
    %cst_41 = arith.constant 9.99999974E-6 : f32
    %118 = vector.broadcast %cst_41 : f32 to vector<8x1xf32>
    %119 = arith.addf %115, %118 : vector<8x1xf32>
    %120 = math.rsqrt %119 : vector<8x1xf32>
    %121 = vector.broadcast %120 : vector<8x1xf32> to vector<8x128xf32>
    %122 = arith.mulf %117, %121 : vector<8x128xf32>
    %123 = vector.broadcast %103 : vector<1x128xf32> to vector<8x128xf32>
    %124 = arith.mulf %122, %123 : vector<8x128xf32>
    %125 = vector.broadcast %104 : vector<1x128xf32> to vector<8x128xf32>
    %126 = arith.addf %124, %125 : vector<8x128xf32>
    %127 = arith.truncf %126 : vector<8x128xf32> to vector<8x128xbf16>
    %c0_42 = arith.constant 0 : index
    %c0_43 = arith.constant 0 : index
    %c0_44 = arith.constant 0 : index
    %128 = vector.load %arg7[%c0_42, %c0_43, %c0_44] : memref<2x128x256xbf16, #tpu.memory_space<vmem>>, vector<1x128x256xbf16>
    %129 = vector.shape_cast %128 : vector<1x128x256xbf16> to vector<128x256xbf16>
    %cst_45 = arith.constant dense<0.000000e+00> : vector<8x256xf32>
    %130 = tpu.matmul %127, %129, %cst_45 {dimension_numbers = #tpu.dot_dimension_numbers<[1], [0], [0], [1], [0, 0, 1, 1], [], []>} : vector<8x128xbf16>, vector<128x256xbf16>, vector<8x256xf32> -> vector<8x256xf32>
    %c0_46 = arith.constant 0 : index
    %c0_47 = arith.constant 0 : index
    %c0_48 = arith.constant 0 : index
    %131 = vector.load %arg8[%c0_46, %c0_47, %c0_48] : memref<2x1x256xf32, #tpu.memory_space<vmem>>, vector<1x1x256xf32>
    %132 = vector.shape_cast %131 : vector<1x1x256xf32> to vector<1x256xf32>
    %133 = vector.broadcast %132 : vector<1x256xf32> to vector<8x256xf32>
    %134 = arith.addf %130, %133 : vector<8x256xf32>
    %cst_49 = arith.constant 0.000000e+00 : f32
    %135 = vector.broadcast %cst_49 : f32 to vector<8x256xf32>
    %136 = arith.maximumf %134, %135 : vector<8x256xf32>
    %137 = arith.truncf %136 : vector<8x256xf32> to vector<8x256xbf16>
    %c0_50 = arith.constant 0 : index
    %c0_51 = arith.constant 0 : index
    %c0_52 = arith.constant 0 : index
    %138 = vector.load %arg9[%c0_50, %c0_51, %c0_52] : memref<2x256x128xbf16, #tpu.memory_space<vmem>>, vector<1x256x128xbf16>
    %139 = vector.shape_cast %138 : vector<1x256x128xbf16> to vector<256x128xbf16>
    %cst_53 = arith.constant dense<0.000000e+00> : vector<8x128xf32>
    %140 = tpu.matmul %137, %139, %cst_53 {dimension_numbers = #tpu.dot_dimension_numbers<[1], [0], [0], [1], [0, 0, 1, 1], [], []>} : vector<8x256xbf16>, vector<256x128xbf16>, vector<8x128xf32> -> vector<8x128xf32>
    %141 = arith.addf %126, %140 : vector<8x128xf32>
    %c0_54 = arith.constant 0 : index
    %c0_55 = arith.constant 0 : index
    %c0_56 = arith.constant 0 : index
    %142 = vector.load %arg10[%c0_54, %c0_55, %c0_56] : memref<2x1x128xf32, #tpu.memory_space<vmem>>, vector<1x1x128xf32>
    %143 = vector.shape_cast %142 : vector<1x1x128xf32> to vector<1x128xf32>
    %144 = vector.broadcast %143 : vector<1x128xf32> to vector<8x128xf32>
    %145 = arith.addf %141, %144 : vector<8x128xf32>
    %146 = vector.extract_strided_slice %38 {offsets = [2, 0], sizes = [1, 128], strides = [1, 1]} : vector<4x128xf32> to vector<1x128xf32>
    %147 = vector.extract_strided_slice %38 {offsets = [3, 0], sizes = [1, 128], strides = [1, 1]} : vector<4x128xf32> to vector<1x128xf32>
    %cst_57 = arith.constant dense<0.000000e+00> : vector<8xf32>
    %148 = vector.multi_reduction <add>, %145, %cst_57 [1] : vector<8x128xf32> to vector<8xf32>
    %149 = vector.shape_cast %148 : vector<8xf32> to vector<8x1xf32>
    %cst_58 = arith.constant 1.280000e+02 : f32
    %150 = vector.broadcast %cst_58 : f32 to vector<8x1xf32>
    %151 = arith.divf %149, %150 : vector<8x1xf32>
    %152 = vector.broadcast %151 : vector<8x1xf32> to vector<8x128xf32>
    %153 = arith.subf %145, %152 : vector<8x128xf32>
    %154 = arith.mulf %153, %153 : vector<8x128xf32>
    %cst_59 = arith.constant dense<0.000000e+00> : vector<8xf32>
    %155 = vector.multi_reduction <add>, %154, %cst_59 [1] : vector<8x128xf32> to vector<8xf32>
    %156 = vector.shape_cast %155 : vector<8xf32> to vector<8x1xf32>
    %cst_60 = arith.constant 1.280000e+02 : f32
    %157 = vector.broadcast %cst_60 : f32 to vector<8x1xf32>
    %158 = arith.divf %156, %157 : vector<8x1xf32>
    %159 = vector.broadcast %151 : vector<8x1xf32> to vector<8x128xf32>
    %160 = arith.subf %145, %159 : vector<8x128xf32>
    %cst_61 = arith.constant 9.99999974E-6 : f32
    %161 = vector.broadcast %cst_61 : f32 to vector<8x1xf32>
    %162 = arith.addf %158, %161 : vector<8x1xf32>
    %163 = math.rsqrt %162 : vector<8x1xf32>
    %164 = vector.broadcast %163 : vector<8x1xf32> to vector<8x128xf32>
    %165 = arith.mulf %160, %164 : vector<8x128xf32>
    %166 = vector.broadcast %146 : vector<1x128xf32> to vector<8x128xf32>
    %167 = arith.mulf %165, %166 : vector<8x128xf32>
    %168 = vector.broadcast %147 : vector<1x128xf32> to vector<8x128xf32>
    %169 = arith.addf %167, %168 : vector<8x128xf32>
    %c1 = arith.constant 1 : index
    %c0_62 = arith.constant 0 : index
    %c0_63 = arith.constant 0 : index
    %170 = vector.load %arg11[%c1, %c0_62, %c0_63] : memref<2x4x128xf32, #tpu.memory_space<vmem>>, vector<1x4x128xf32>
    %171 = vector.shape_cast %170 : vector<1x4x128xf32> to vector<4x128xf32>
    %172 = arith.truncf %169 : vector<8x128xf32> to vector<8x128xbf16>
    %c1_64 = arith.constant 1 : index
    %c0_65 = arith.constant 0 : index
    %c0_66 = arith.constant 0 : index
    %173 = vector.load %arg3[%c1_64, %c0_65, %c0_66] : memref<2x128x384xbf16, #tpu.memory_space<vmem>>, vector<1x128x384xbf16>
    %174 = vector.shape_cast %173 : vector<1x128x384xbf16> to vector<128x384xbf16>
    %cst_67 = arith.constant dense<0.000000e+00> : vector<8x384xf32>
    %175 = tpu.matmul %172, %174, %cst_67 {dimension_numbers = #tpu.dot_dimension_numbers<[1], [0], [0], [1], [0, 0, 1, 1], [], []>} : vector<8x128xbf16>, vector<128x384xbf16>, vector<8x384xf32> -> vector<8x384xf32>
    %c1_68 = arith.constant 1 : index
    %c0_69 = arith.constant 0 : index
    %c0_70 = arith.constant 0 : index
    %176 = vector.load %arg4[%c1_68, %c0_69, %c0_70] : memref<2x1x384xf32, #tpu.memory_space<vmem>>, vector<1x1x384xf32>
    %177 = vector.shape_cast %176 : vector<1x1x384xf32> to vector<1x384xf32>
    %178 = vector.broadcast %177 : vector<1x384xf32> to vector<8x384xf32>
    %179 = arith.addf %175, %178 : vector<8x384xf32>
    %180 = vector.extract_strided_slice %179 {offsets = [0, 0], sizes = [8, 128], strides = [1, 1]} : vector<8x384xf32> to vector<8x128xf32>
    %181 = vector.extract_strided_slice %179 {offsets = [0, 128], sizes = [8, 128], strides = [1, 1]} : vector<8x384xf32> to vector<8x128xf32>
    %182 = vector.extract_strided_slice %179 {offsets = [0, 256], sizes = [8, 128], strides = [1, 1]} : vector<8x384xf32> to vector<8x128xf32>
    %183 = vector.broadcast %8 : vector<1x128xf32> to vector<8x128xf32>
    %184 = arith.mulf %180, %183 : vector<8x128xf32>
    %185 = vector.broadcast %16 : vector<1x128xf32> to vector<8x128xf32>
    %186 = arith.mulf %180, %185 : vector<8x128xf32>
    %187 = vector.broadcast %24 : vector<1x128xf32> to vector<8x128xf32>
    %188 = arith.mulf %180, %187 : vector<8x128xf32>
    %189 = vector.broadcast %32 : vector<1x128xf32> to vector<8x128xf32>
    %190 = arith.mulf %180, %189 : vector<8x128xf32>
    %191 = tpu.concatenate %184, %186, %188, %190 in 0 : vector<8x128xf32>, vector<8x128xf32>, vector<8x128xf32>, vector<8x128xf32> -> vector<32x128xf32>
    %192 = arith.truncf %191 : vector<32x128xf32> to vector<32x128xbf16>
    %193 = arith.truncf %181 : vector<8x128xf32> to vector<8x128xbf16>
    %cst_71 = arith.constant dense<0.000000e+00> : vector<32x8xf32>
    %194 = tpu.matmul %192, %193, %cst_71 {dimension_numbers = #tpu.dot_dimension_numbers<[1], [1], [0], [0], [0, 0, 1, 0], [], []>} : vector<32x128xbf16>, vector<8x128xbf16>, vector<32x8xf32> -> vector<32x8xf32>
    %cst_72 = arith.constant 0.176776692 : f32
    %195 = vector.broadcast %cst_72 : f32 to vector<32x8xf32>
    %196 = arith.mulf %194, %195 : vector<32x8xf32>
    %197 = vector.broadcast %36 : vector<1x8xf32> to vector<32x8xf32>
    %198 = arith.addf %196, %197 : vector<32x8xf32>
    %cst_73 = arith.constant dense<0xFF800000> : vector<32xf32>
    %199 = vector.multi_reduction <maximumf>, %198, %cst_73 [1] : vector<32x8xf32> to vector<32xf32>
    %200 = vector.shape_cast %199 : vector<32xf32> to vector<32x1xf32>
    %201 = vector.broadcast %200 : vector<32x1xf32> to vector<32x8xf32>
    %202 = arith.subf %198, %201 : vector<32x8xf32>
    %203 = math.exp %202 : vector<32x8xf32>
    %cst_74 = arith.constant dense<0.000000e+00> : vector<32xf32>
    %204 = vector.multi_reduction <add>, %203, %cst_74 [1] : vector<32x8xf32> to vector<32xf32>
    %205 = vector.shape_cast %204 : vector<32xf32> to vector<32x1xf32>
    %206 = tpu.reciprocal %205 {approx = true} : vector<32x1xf32> -> vector<32x1xf32>
    %207 = vector.broadcast %206 : vector<32x1xf32> to vector<32x8xf32>
    %208 = arith.mulf %203, %207 : vector<32x8xf32>
    %209 = arith.truncf %208 : vector<32x8xf32> to vector<32x8xbf16>
    %210 = arith.truncf %182 : vector<8x128xf32> to vector<8x128xbf16>
    %cst_75 = arith.constant dense<0.000000e+00> : vector<32x128xf32>
    %211 = tpu.matmul %209, %210, %cst_75 {dimension_numbers = #tpu.dot_dimension_numbers<[1], [0], [0], [1], [0, 0, 1, 1], [], []>} : vector<32x8xbf16>, vector<8x128xbf16>, vector<32x128xf32> -> vector<32x128xf32>
    %212 = vector.extract_strided_slice %211 {offsets = [0, 0], sizes = [8, 128], strides = [1, 1]} : vector<32x128xf32> to vector<8x128xf32>
    %213 = vector.broadcast %8 : vector<1x128xf32> to vector<8x128xf32>
    %214 = arith.mulf %212, %213 : vector<8x128xf32>
    %215 = vector.extract_strided_slice %211 {offsets = [8, 0], sizes = [8, 128], strides = [1, 1]} : vector<32x128xf32> to vector<8x128xf32>
    %216 = vector.broadcast %16 : vector<1x128xf32> to vector<8x128xf32>
    %217 = arith.mulf %215, %216 : vector<8x128xf32>
    %218 = arith.addf %214, %217 : vector<8x128xf32>
    %219 = vector.extract_strided_slice %211 {offsets = [16, 0], sizes = [8, 128], strides = [1, 1]} : vector<32x128xf32> to vector<8x128xf32>
    %220 = vector.broadcast %24 : vector<1x128xf32> to vector<8x128xf32>
    %221 = arith.mulf %219, %220 : vector<8x128xf32>
    %222 = arith.addf %218, %221 : vector<8x128xf32>
    %223 = vector.extract_strided_slice %211 {offsets = [24, 0], sizes = [8, 128], strides = [1, 1]} : vector<32x128xf32> to vector<8x128xf32>
    %224 = vector.broadcast %32 : vector<1x128xf32> to vector<8x128xf32>
    %225 = arith.mulf %223, %224 : vector<8x128xf32>
    %226 = arith.addf %222, %225 : vector<8x128xf32>
    %227 = arith.truncf %226 : vector<8x128xf32> to vector<8x128xbf16>
    %c1_76 = arith.constant 1 : index
    %c0_77 = arith.constant 0 : index
    %c0_78 = arith.constant 0 : index
    %228 = vector.load %arg5[%c1_76, %c0_77, %c0_78] : memref<2x128x128xbf16, #tpu.memory_space<vmem>>, vector<1x128x128xbf16>
    %229 = vector.shape_cast %228 : vector<1x128x128xbf16> to vector<128x128xbf16>
    %cst_79 = arith.constant dense<0.000000e+00> : vector<8x128xf32>
    %230 = tpu.matmul %227, %229, %cst_79 {dimension_numbers = #tpu.dot_dimension_numbers<[1], [0], [0], [1], [0, 0, 1, 1], [], []>} : vector<8x128xbf16>, vector<128x128xbf16>, vector<8x128xf32> -> vector<8x128xf32>
    %c1_80 = arith.constant 1 : index
    %c0_81 = arith.constant 0 : index
    %c0_82 = arith.constant 0 : index
    %231 = vector.load %arg6[%c1_80, %c0_81, %c0_82] : memref<2x1x128xf32, #tpu.memory_space<vmem>>, vector<1x1x128xf32>
    %232 = vector.shape_cast %231 : vector<1x1x128xf32> to vector<1x128xf32>
    %233 = vector.broadcast %232 : vector<1x128xf32> to vector<8x128xf32>
    %234 = arith.addf %230, %233 : vector<8x128xf32>
    %235 = arith.addf %169, %234 : vector<8x128xf32>
    %236 = vector.extract_strided_slice %171 {offsets = [0, 0], sizes = [1, 128], strides = [1, 1]} : vector<4x128xf32> to vector<1x128xf32>
    %237 = vector.extract_strided_slice %171 {offsets = [1, 0], sizes = [1, 128], strides = [1, 1]} : vector<4x128xf32> to vector<1x128xf32>
    %cst_83 = arith.constant dense<0.000000e+00> : vector<8xf32>
    %238 = vector.multi_reduction <add>, %235, %cst_83 [1] : vector<8x128xf32> to vector<8xf32>
    %239 = vector.shape_cast %238 : vector<8xf32> to vector<8x1xf32>
    %cst_84 = arith.constant 1.280000e+02 : f32
    %240 = vector.broadcast %cst_84 : f32 to vector<8x1xf32>
    %241 = arith.divf %239, %240 : vector<8x1xf32>
    %242 = vector.broadcast %241 : vector<8x1xf32> to vector<8x128xf32>
    %243 = arith.subf %235, %242 : vector<8x128xf32>
    %244 = arith.mulf %243, %243 : vector<8x128xf32>
    %cst_85 = arith.constant dense<0.000000e+00> : vector<8xf32>
    %245 = vector.multi_reduction <add>, %244, %cst_85 [1] : vector<8x128xf32> to vector<8xf32>
    %246 = vector.shape_cast %245 : vector<8xf32> to vector<8x1xf32>
    %cst_86 = arith.constant 1.280000e+02 : f32
    %247 = vector.broadcast %cst_86 : f32 to vector<8x1xf32>
    %248 = arith.divf %246, %247 : vector<8x1xf32>
    %249 = vector.broadcast %241 : vector<8x1xf32> to vector<8x128xf32>
    %250 = arith.subf %235, %249 : vector<8x128xf32>
    %cst_87 = arith.constant 9.99999974E-6 : f32
    %251 = vector.broadcast %cst_87 : f32 to vector<8x1xf32>
    %252 = arith.addf %248, %251 : vector<8x1xf32>
    %253 = math.rsqrt %252 : vector<8x1xf32>
    %254 = vector.broadcast %253 : vector<8x1xf32> to vector<8x128xf32>
    %255 = arith.mulf %250, %254 : vector<8x128xf32>
    %256 = vector.broadcast %236 : vector<1x128xf32> to vector<8x128xf32>
    %257 = arith.mulf %255, %256 : vector<8x128xf32>
    %258 = vector.broadcast %237 : vector<1x128xf32> to vector<8x128xf32>
    %259 = arith.addf %257, %258 : vector<8x128xf32>
    %260 = arith.truncf %259 : vector<8x128xf32> to vector<8x128xbf16>
    %c1_88 = arith.constant 1 : index
    %c0_89 = arith.constant 0 : index
    %c0_90 = arith.constant 0 : index
    %261 = vector.load %arg7[%c1_88, %c0_89, %c0_90] : memref<2x128x256xbf16, #tpu.memory_space<vmem>>, vector<1x128x256xbf16>
    %262 = vector.shape_cast %261 : vector<1x128x256xbf16> to vector<128x256xbf16>
    %cst_91 = arith.constant dense<0.000000e+00> : vector<8x256xf32>
    %263 = tpu.matmul %260, %262, %cst_91 {dimension_numbers = #tpu.dot_dimension_numbers<[1], [0], [0], [1], [0, 0, 1, 1], [], []>} : vector<8x128xbf16>, vector<128x256xbf16>, vector<8x256xf32> -> vector<8x256xf32>
    %c1_92 = arith.constant 1 : index
    %c0_93 = arith.constant 0 : index
    %c0_94 = arith.constant 0 : index
    %264 = vector.load %arg8[%c1_92, %c0_93, %c0_94] : memref<2x1x256xf32, #tpu.memory_space<vmem>>, vector<1x1x256xf32>
    %265 = vector.shape_cast %264 : vector<1x1x256xf32> to vector<1x256xf32>
    %266 = vector.broadcast %265 : vector<1x256xf32> to vector<8x256xf32>
    %267 = arith.addf %263, %266 : vector<8x256xf32>
    %cst_95 = arith.constant 0.000000e+00 : f32
    %268 = vector.broadcast %cst_95 : f32 to vector<8x256xf32>
    %269 = arith.maximumf %267, %268 : vector<8x256xf32>
    %270 = arith.truncf %269 : vector<8x256xf32> to vector<8x256xbf16>
    %c1_96 = arith.constant 1 : index
    %c0_97 = arith.constant 0 : index
    %c0_98 = arith.constant 0 : index
    %271 = vector.load %arg9[%c1_96, %c0_97, %c0_98] : memref<2x256x128xbf16, #tpu.memory_space<vmem>>, vector<1x256x128xbf16>
    %272 = vector.shape_cast %271 : vector<1x256x128xbf16> to vector<256x128xbf16>
    %cst_99 = arith.constant dense<0.000000e+00> : vector<8x128xf32>
    %273 = tpu.matmul %270, %272, %cst_99 {dimension_numbers = #tpu.dot_dimension_numbers<[1], [0], [0], [1], [0, 0, 1, 1], [], []>} : vector<8x256xbf16>, vector<256x128xbf16>, vector<8x128xf32> -> vector<8x128xf32>
    %274 = arith.addf %259, %273 : vector<8x128xf32>
    %c1_100 = arith.constant 1 : index
    %c0_101 = arith.constant 0 : index
    %c0_102 = arith.constant 0 : index
    %275 = vector.load %arg10[%c1_100, %c0_101, %c0_102] : memref<2x1x128xf32, #tpu.memory_space<vmem>>, vector<1x1x128xf32>
    %276 = vector.shape_cast %275 : vector<1x1x128xf32> to vector<1x128xf32>
    %277 = vector.broadcast %276 : vector<1x128xf32> to vector<8x128xf32>
    %278 = arith.addf %274, %277 : vector<8x128xf32>
    %279 = vector.extract_strided_slice %171 {offsets = [2, 0], sizes = [1, 128], strides = [1, 1]} : vector<4x128xf32> to vector<1x128xf32>
    %280 = vector.extract_strided_slice %171 {offsets = [3, 0], sizes = [1, 128], strides = [1, 1]} : vector<4x128xf32> to vector<1x128xf32>
    %cst_103 = arith.constant dense<0.000000e+00> : vector<8xf32>
    %281 = vector.multi_reduction <add>, %278, %cst_103 [1] : vector<8x128xf32> to vector<8xf32>
    %282 = vector.shape_cast %281 : vector<8xf32> to vector<8x1xf32>
    %cst_104 = arith.constant 1.280000e+02 : f32
    %283 = vector.broadcast %cst_104 : f32 to vector<8x1xf32>
    %284 = arith.divf %282, %283 : vector<8x1xf32>
    %285 = vector.broadcast %284 : vector<8x1xf32> to vector<8x128xf32>
    %286 = arith.subf %278, %285 : vector<8x128xf32>
    %287 = arith.mulf %286, %286 : vector<8x128xf32>
    %cst_105 = arith.constant dense<0.000000e+00> : vector<8xf32>
    %288 = vector.multi_reduction <add>, %287, %cst_105 [1] : vector<8x128xf32> to vector<8xf32>
    %289 = vector.shape_cast %288 : vector<8xf32> to vector<8x1xf32>
    %cst_106 = arith.constant 1.280000e+02 : f32
    %290 = vector.broadcast %cst_106 : f32 to vector<8x1xf32>
    %291 = arith.divf %289, %290 : vector<8x1xf32>
    %292 = vector.broadcast %284 : vector<8x1xf32> to vector<8x128xf32>
    %293 = arith.subf %278, %292 : vector<8x128xf32>
    %cst_107 = arith.constant 9.99999974E-6 : f32
    %294 = vector.broadcast %cst_107 : f32 to vector<8x1xf32>
    %295 = arith.addf %291, %294 : vector<8x1xf32>
    %296 = math.rsqrt %295 : vector<8x1xf32>
    %297 = vector.broadcast %296 : vector<8x1xf32> to vector<8x128xf32>
    %298 = arith.mulf %293, %297 : vector<8x128xf32>
    %299 = vector.broadcast %279 : vector<1x128xf32> to vector<8x128xf32>
    %300 = arith.mulf %298, %299 : vector<8x128xf32>
    %301 = vector.broadcast %280 : vector<1x128xf32> to vector<8x128xf32>
    %302 = arith.addf %300, %301 : vector<8x128xf32>
    %c0_108 = arith.constant 0 : index
    %c0_109 = arith.constant 0 : index
    %c0_110 = arith.constant 0 : index
    %303 = vector.load %arg12[%c0_108, %c0_109, %c0_110] : memref<1x8x128xf32, #tpu.memory_space<vmem>>, vector<1x8x128xf32>
    %304 = vector.shape_cast %303 : vector<1x8x128xf32> to vector<8x128xf32>
    %305 = vector.shape_cast %302 : vector<8x128xf32> to vector<1x8x128xf32>
    tpu.vector_store %arg12[%c0_108, %c0_109, %c0_110], %305 {strides = array<i32>} : memref<1x8x128xf32, #tpu.memory_space<vmem>>, vector<1x8x128xf32>,
    return
  }
  func.func @transform_0(%arg0: i32) -> (i32, i32, i32) {
    %c0_i32 = arith.constant 0 : i32
    %c0_i32_0 = arith.constant 0 : i32
    %c0_i32_1 = arith.constant 0 : i32
    return %arg0, %c0_i32, %c0_i32_0 : i32, i32, i32
  }
  func.func @transform_1(%arg0: i32) -> (i32, i32, i32) {
    %c0_i32 = arith.constant 0 : i32
    %c0_i32_0 = arith.constant 0 : i32
    %c0_i32_1 = arith.constant 0 : i32
    return %arg0, %c0_i32, %c0_i32_0 : i32, i32, i32
  }
  func.func @transform_2(%arg0: i32) -> (i32, i32, i32) {
    %c0_i32 = arith.constant 0 : i32
    %c0_i32_0 = arith.constant 0 : i32
    %c0_i32_1 = arith.constant 0 : i32
    %c0_i32_2 = arith.constant 0 : i32
    return %c0_i32, %c0_i32_0, %c0_i32_1 : i32, i32, i32
  }
  func.func @transform_3(%arg0: i32) -> (i32, i32, i32) {
    %c0_i32 = arith.constant 0 : i32
    %c0_i32_0 = arith.constant 0 : i32
    %c0_i32_1 = arith.constant 0 : i32
    %c0_i32_2 = arith.constant 0 : i32
    return %c0_i32, %c0_i32_0, %c0_i32_1 : i32, i32, i32
  }
  func.func @transform_4(%arg0: i32) -> (i32, i32, i32) {
    %c0_i32 = arith.constant 0 : i32
    %c0_i32_0 = arith.constant 0 : i32
    %c0_i32_1 = arith.constant 0 : i32
    %c0_i32_2 = arith.constant 0 : i32
    return %c0_i32, %c0_i32_0, %c0_i32_1 : i32, i32, i32
  }
  func.func @transform_5(%arg0: i32) -> (i32, i32, i32) {
    %c0_i32 = arith.constant 0 : i32
    %c0_i32_0 = arith.constant 0 : i32
    %c0_i32_1 = arith.constant 0 : i32
    %c0_i32_2 = arith.constant 0 : i32
    return %c0_i32, %c0_i32_0, %c0_i32_1 : i32, i32, i32
  }
  func.func @transform_6(%arg0: i32) -> (i32, i32, i32) {
    %c0_i32 = arith.constant 0 : i32
    %c0_i32_0 = arith.constant 0 : i32
    %c0_i32_1 = arith.constant 0 : i32
    %c0_i32_2 = arith.constant 0 : i32
    return %c0_i32, %c0_i32_0, %c0_i32_1 : i32, i32, i32
  }
  func.func @transform_7(%arg0: i32) -> (i32, i32, i32) {
    %c0_i32 = arith.constant 0 : i32
    %c0_i32_0 = arith.constant 0 : i32
    %c0_i32_1 = arith.constant 0 : i32
    %c0_i32_2 = arith.constant 0 : i32
    return %c0_i32, %c0_i32_0, %c0_i32_1 : i32, i32, i32
  }
  func.func @transform_8(%arg0: i32) -> (i32, i32, i32) {
    %c0_i32 = arith.constant 0 : i32
    %c0_i32_0 = arith.constant 0 : i32
    %c0_i32_1 = arith.constant 0 : i32
    %c0_i32_2 = arith.constant 0 : i32
    return %c0_i32, %c0_i32_0, %c0_i32_1 : i32, i32, i32
  }
  func.func @transform_9(%arg0: i32) -> (i32, i32, i32) {
    %c0_i32 = arith.constant 0 : i32
    %c0_i32_0 = arith.constant 0 : i32
    %c0_i32_1 = arith.constant 0 : i32
    %c0_i32_2 = arith.constant 0 : i32
    return %c0_i32, %c0_i32_0, %c0_i32_1 : i32, i32, i32
  }
  func.func @transform_10(%arg0: i32) -> (i32, i32, i32) {
    %c0_i32 = arith.constant 0 : i32
    %c0_i32_0 = arith.constant 0 : i32
    %c0_i32_1 = arith.constant 0 : i32
    %c0_i32_2 = arith.constant 0 : i32
    return %c0_i32, %c0_i32_0, %c0_i32_1 : i32, i32, i32
  }
  func.func @transform_11(%arg0: i32) -> (i32, i32, i32) {
    %c0_i32 = arith.constant 0 : i32
    %c0_i32_0 = arith.constant 0 : i32
    %c0_i32_1 = arith.constant 0 : i32
    return %arg0, %c0_i32, %c0_i32_0 : i32, i32, i32
  }
}

module attributes {stable_mosaic.version = 11 : i64} {
  func.func @_decode_kernel(%arg0: i32, %arg1: memref<64x128xf32, #tpu.memory_space<vmem>>, %arg2: memref<128x128xf32, #tpu.memory_space<vmem>>, %arg3: memref<2x8x128xf32, #tpu.memory_space<vmem>>, %arg4: memref<2x8xf32, #tpu.memory_space<vmem>>, %arg5: memref<128x384xbf16, #tpu.memory_space<vmem>>, %arg6: memref<1x384xf32, #tpu.memory_space<vmem>>, %arg7: memref<128x128xbf16, #tpu.memory_space<vmem>>, %arg8: memref<1x128xf32, #tpu.memory_space<vmem>>, %arg9: memref<128x128xbf16, #tpu.memory_space<vmem>>, %arg10: memref<1x128xf32, #tpu.memory_space<vmem>>, %arg11: memref<128x256xbf16, #tpu.memory_space<vmem>>, %arg12: memref<1x256xf32, #tpu.memory_space<vmem>>, %arg13: memref<128x128xbf16, #tpu.memory_space<vmem>>, %arg14: memref<1x128xf32, #tpu.memory_space<vmem>>, %arg15: memref<128x256xbf16, #tpu.memory_space<vmem>>, %arg16: memref<1x256xf32, #tpu.memory_space<vmem>>, %arg17: memref<256x128xbf16, #tpu.memory_space<vmem>>, %arg18: memref<1x128xf32, #tpu.memory_space<vmem>>, %arg19: memref<6x128xf32, #tpu.memory_space<vmem>>, %arg20: memref<128x128xbf16, #tpu.memory_space<vmem>>, %arg21: memref<1x128xf32, #tpu.memory_space<vmem>>, %arg22: memref<2x16xi32, #tpu.memory_space<vmem>>, %arg23: memref<2x16x128xf32, #tpu.memory_space<vmem>>, %arg24: memref<2x16x128xf32, #tpu.memory_space<vmem>>, %arg25: memref<2x8x128xf32, #tpu.memory_space<vmem>>, %arg26: memref<2x8x128xf32, #tpu.memory_space<vmem>>) attributes {dimension_semantics = [#tpu.dimension_semantics<arbitrary>], iteration_bounds = array<i64: 10>, scalar_prefetch = 0 : i64, scratch_operands = 4 : i64, tpu.core_type = #tpu.core_type<tc>, window_params = [{pipeline_mode = #tpu.pipeline_mode<synchronous>, transform_indices = @transform_0, window_bounds = array<i64: 64, 128>}, {pipeline_mode = #tpu.pipeline_mode<synchronous>, transform_indices = @transform_1, window_bounds = array<i64: 128, 128>}, {pipeline_mode = #tpu.pipeline_mode<synchronous>, transform_indices = @transform_2, window_bounds = array<i64: 2, 8, 128>}, {pipeline_mode = #tpu.pipeline_mode<synchronous>, transform_indices = @transform_3, window_bounds = array<i64: 2, 8>}, {pipeline_mode = #tpu.pipeline_mode<synchronous>, transform_indices = @transform_4, window_bounds = array<i64: 128, 384>}, {pipeline_mode = #tpu.pipeline_mode<synchronous>, transform_indices = @transform_5, window_bounds = array<i64: 1, 384>}, {pipeline_mode = #tpu.pipeline_mode<synchronous>, transform_indices = @transform_6, window_bounds = array<i64: 128, 128>}, {pipeline_mode = #tpu.pipeline_mode<synchronous>, transform_indices = @transform_7, window_bounds = array<i64: 1, 128>}, {pipeline_mode = #tpu.pipeline_mode<synchronous>, transform_indices = @transform_8, window_bounds = array<i64: 128, 128>}, {pipeline_mode = #tpu.pipeline_mode<synchronous>, transform_indices = @transform_9, window_bounds = array<i64: 1, 128>}, {pipeline_mode = #tpu.pipeline_mode<synchronous>, transform_indices = @transform_10, window_bounds = array<i64: 128, 256>}, {pipeline_mode = #tpu.pipeline_mode<synchronous>, transform_indices = @transform_11, window_bounds = array<i64: 1, 256>}, {pipeline_mode = #tpu.pipeline_mode<synchronous>, transform_indices = @transform_12, window_bounds = array<i64: 128, 128>}, {pipeline_mode = #tpu.pipeline_mode<synchronous>, transform_indices = @transform_13, window_bounds = array<i64: 1, 128>}, {pipeline_mode = #tpu.pipeline_mode<synchronous>, transform_indices = @transform_14, window_bounds = array<i64: 128, 256>}, {pipeline_mode = #tpu.pipeline_mode<synchronous>, transform_indices = @transform_15, window_bounds = array<i64: 1, 256>}, {pipeline_mode = #tpu.pipeline_mode<synchronous>, transform_indices = @transform_16, window_bounds = array<i64: 256, 128>}, {pipeline_mode = #tpu.pipeline_mode<synchronous>, transform_indices = @transform_17, window_bounds = array<i64: 1, 128>}, {pipeline_mode = #tpu.pipeline_mode<synchronous>, transform_indices = @transform_18, window_bounds = array<i64: 6, 128>}, {pipeline_mode = #tpu.pipeline_mode<synchronous>, transform_indices = @transform_19, window_bounds = array<i64: 128, 128>}, {pipeline_mode = #tpu.pipeline_mode<synchronous>, transform_indices = @transform_20, window_bounds = array<i64: 1, 128>}, {pipeline_mode = #tpu.pipeline_mode<synchronous>, transform_indices = @transform_21, window_bounds = array<i64: 2, 16>}]} {
    %0 = tpu.iota {dimensions = array<i32: 1>} : vector<1x128xi32>
    %c0_i32 = arith.constant 0 : i32
    %1 = vector.broadcast %c0_i32 : i32 to vector<1x128xi32>
    %2 = arith.cmpi sge, %0, %1 : vector<1x128xi32>
    %c32_i32 = arith.constant 32 : i32
    %3 = vector.broadcast %c32_i32 : i32 to vector<1x128xi32>
    %4 = arith.cmpi slt, %0, %3 : vector<1x128xi32>
    %5 = arith.andi %2, %4 : vector<1x128xi1>
    %cst = arith.constant 1.000000e+00 : f32
    %cst_0 = arith.constant 0.000000e+00 : f32
    %6 = vector.broadcast %cst : f32 to vector<1x128xf32>
    %7 = vector.broadcast %cst_0 : f32 to vector<1x128xf32>
    %8 = arith.select %5, %6, %7 : vector<1x128xi1>, vector<1x128xf32>
    %c32_i32_1 = arith.constant 32 : i32
    %9 = vector.broadcast %c32_i32_1 : i32 to vector<1x128xi32>
    %10 = arith.cmpi sge, %0, %9 : vector<1x128xi32>
    %c64_i32 = arith.constant 64 : i32
    %11 = vector.broadcast %c64_i32 : i32 to vector<1x128xi32>
    %12 = arith.cmpi slt, %0, %11 : vector<1x128xi32>
    %13 = arith.andi %10, %12 : vector<1x128xi1>
    %cst_2 = arith.constant 1.000000e+00 : f32
    %cst_3 = arith.constant 0.000000e+00 : f32
    %14 = vector.broadcast %cst_2 : f32 to vector<1x128xf32>
    %15 = vector.broadcast %cst_3 : f32 to vector<1x128xf32>
    %16 = arith.select %13, %14, %15 : vector<1x128xi1>, vector<1x128xf32>
    %c64_i32_4 = arith.constant 64 : i32
    %17 = vector.broadcast %c64_i32_4 : i32 to vector<1x128xi32>
    %18 = arith.cmpi sge, %0, %17 : vector<1x128xi32>
    %c96_i32 = arith.constant 96 : i32
    %19 = vector.broadcast %c96_i32 : i32 to vector<1x128xi32>
    %20 = arith.cmpi slt, %0, %19 : vector<1x128xi32>
    %21 = arith.andi %18, %20 : vector<1x128xi1>
    %cst_5 = arith.constant 1.000000e+00 : f32
    %cst_6 = arith.constant 0.000000e+00 : f32
    %22 = vector.broadcast %cst_5 : f32 to vector<1x128xf32>
    %23 = vector.broadcast %cst_6 : f32 to vector<1x128xf32>
    %24 = arith.select %21, %22, %23 : vector<1x128xi1>, vector<1x128xf32>
    %c96_i32_7 = arith.constant 96 : i32
    %25 = vector.broadcast %c96_i32_7 : i32 to vector<1x128xi32>
    %26 = arith.cmpi sge, %0, %25 : vector<1x128xi32>
    %c128_i32 = arith.constant 128 : i32
    %27 = vector.broadcast %c128_i32 : i32 to vector<1x128xi32>
    %28 = arith.cmpi slt, %0, %27 : vector<1x128xi32>
    %29 = arith.andi %26, %28 : vector<1x128xi1>
    %cst_8 = arith.constant 1.000000e+00 : f32
    %cst_9 = arith.constant 0.000000e+00 : f32
    %30 = vector.broadcast %cst_8 : f32 to vector<1x128xf32>
    %31 = vector.broadcast %cst_9 : f32 to vector<1x128xf32>
    %32 = arith.select %29, %30, %31 : vector<1x128xi1>, vector<1x128xf32>
    %c0_i32_10 = arith.constant 0 : i32
    %33 = arith.cmpi eq, %arg0, %c0_i32_10 : i32
    %34 = arith.extui %33 : i1 to i32
    %c0_i32_11 = arith.constant 0 : i32
    %35 = arith.cmpi ne, %34, %c0_i32_11 : i32
    scf.if %35 {
      %449 = tpu.iota {dimensions = array<i32: 1>} : vector<2x16xi32>
      %c0_i32_144 = arith.constant 0 : i32
      %450 = vector.broadcast %c0_i32_144 : i32 to vector<2x16xi32>
      %451 = arith.cmpi eq, %449, %450 : vector<2x16xi32>
      %c2_i32_145 = arith.constant 2 : i32
      %452 = vector.broadcast %c2_i32_145 : i32 to vector<2x16xi32>
      %c1_i32_146 = arith.constant 1 : i32
      %453 = vector.broadcast %c1_i32_146 : i32 to vector<2x16xi32>
      %454 = arith.select %451, %452, %453 : vector<2x16xi1>, vector<2x16xi32>
      %c0_147 = arith.constant 0 : index
      %c0_148 = arith.constant 0 : index
      %455 = vector.load %arg22[%c0_147, %c0_148] : memref<2x16xi32, #tpu.memory_space<vmem>>, vector<2x16xi32>
      tpu.vector_store %arg22[%c0_147, %c0_148], %454 {strides = array<i32>} : memref<2x16xi32, #tpu.memory_space<vmem>>, vector<2x16xi32>,
      %cst_149 = arith.constant 0.000000e+00 : f32
      %456 = vector.broadcast %cst_149 : f32 to vector<2x16x128xf32>
      %c0_150 = arith.constant 0 : index
      %c0_151 = arith.constant 0 : index
      %c0_152 = arith.constant 0 : index
      %457 = vector.load %arg23[%c0_150, %c0_151, %c0_152] : memref<2x16x128xf32, #tpu.memory_space<vmem>>, vector<2x16x128xf32>
      tpu.vector_store %arg23[%c0_150, %c0_151, %c0_152], %456 {strides = array<i32>} : memref<2x16x128xf32, #tpu.memory_space<vmem>>, vector<2x16x128xf32>,
      %cst_153 = arith.constant 0.000000e+00 : f32
      %458 = vector.broadcast %cst_153 : f32 to vector<2x16x128xf32>
      %c0_154 = arith.constant 0 : index
      %c0_155 = arith.constant 0 : index
      %c0_156 = arith.constant 0 : index
      %459 = vector.load %arg24[%c0_154, %c0_155, %c0_156] : memref<2x16x128xf32, #tpu.memory_space<vmem>>, vector<2x16x128xf32>
      tpu.vector_store %arg24[%c0_154, %c0_155, %c0_156], %458 {strides = array<i32>} : memref<2x16x128xf32, #tpu.memory_space<vmem>>, vector<2x16x128xf32>,
      %c0_157 = arith.constant 0 : index
      %c0_158 = arith.constant 0 : index
      %c0_159 = arith.constant 0 : index
      %460 = vector.load %arg3[%c0_157, %c0_158, %c0_159] : memref<2x8x128xf32, #tpu.memory_space<vmem>>, vector<2x8x128xf32>
      %461 = vector.shape_cast %460 : vector<2x8x128xf32> to vector<16x128xf32>
      %462 = arith.truncf %461 : vector<16x128xf32> to vector<16x128xbf16>
      %c0_160 = arith.constant 0 : index
      %c0_161 = arith.constant 0 : index
      %463 = vector.load %arg11[%c0_160, %c0_161] : memref<128x256xbf16, #tpu.memory_space<vmem>>, vector<128x256xbf16>
      %cst_162 = arith.constant dense<0.000000e+00> : vector<16x256xf32>
      %464 = tpu.matmul %462, %463, %cst_162 {dimension_numbers = #tpu.dot_dimension_numbers<[1], [0], [0], [1], [0, 0, 1, 1], [], []>} : vector<16x128xbf16>, vector<128x256xbf16>, vector<16x256xf32> -> vector<16x256xf32>
      %c0_163 = arith.constant 0 : index
      %c0_164 = arith.constant 0 : index
      %465 = vector.load %arg12[%c0_163, %c0_164] : memref<1x256xf32, #tpu.memory_space<vmem>>, vector<1x256xf32>
      %466 = vector.broadcast %465 : vector<1x256xf32> to vector<16x256xf32>
      %467 = arith.addf %464, %466 : vector<16x256xf32>
      %468 = vector.extract_strided_slice %467 {offsets = [0, 0], sizes = [16, 128], strides = [1, 1]} : vector<16x256xf32> to vector<16x128xf32>
      %469 = vector.shape_cast %468 : vector<16x128xf32> to vector<2x8x128xf32>
      %c0_165 = arith.constant 0 : index
      %c0_166 = arith.constant 0 : index
      %c0_167 = arith.constant 0 : index
      %470 = vector.load %arg25[%c0_165, %c0_166, %c0_167] : memref<2x8x128xf32, #tpu.memory_space<vmem>>, vector<2x8x128xf32>
      tpu.vector_store %arg25[%c0_165, %c0_166, %c0_167], %469 {strides = array<i32>} : memref<2x8x128xf32, #tpu.memory_space<vmem>>, vector<2x8x128xf32>,
      %471 = vector.extract_strided_slice %467 {offsets = [0, 128], sizes = [16, 128], strides = [1, 1]} : vector<16x256xf32> to vector<16x128xf32>
      %472 = vector.shape_cast %471 : vector<16x128xf32> to vector<2x8x128xf32>
      %c0_168 = arith.constant 0 : index
      %c0_169 = arith.constant 0 : index
      %c0_170 = arith.constant 0 : index
      %473 = vector.load %arg26[%c0_168, %c0_169, %c0_170] : memref<2x8x128xf32, #tpu.memory_space<vmem>>, vector<2x8x128xf32>
      tpu.vector_store %arg26[%c0_168, %c0_169, %c0_170], %472 {strides = array<i32>} : memref<2x8x128xf32, #tpu.memory_space<vmem>>, vector<2x8x128xf32>,
    } else {
    }
    %c0 = arith.constant 0 : index
    %c0_12 = arith.constant 0 : index
    %36 = vector.load %arg22[%c0, %c0_12] : memref<2x16xi32, #tpu.memory_space<vmem>>, vector<2x16xi32>
    %37 = arith.sitofp %36 : vector<2x16xi32> to vector<2x16xf32>
    %38 = tpu.iota {dimensions = array<i32: 1>} : vector<2x16xi32>
    %39 = vector.broadcast %arg0 : i32 to vector<2x16xi32>
    %40 = arith.cmpi eq, %38, %39 : vector<2x16xi32>
    %cst_13 = arith.constant 0.000000e+00 : f32
    %41 = vector.broadcast %cst_13 : f32 to vector<2x16xf32>
    %42 = arith.select %40, %37, %41 : vector<2x16xi1>, vector<2x16xf32>
    %cst_14 = arith.constant dense<0.000000e+00> : vector<2xf32>
    %43 = vector.multi_reduction <add>, %42, %cst_14 [1] : vector<2x16xf32> to vector<2xf32>
    %44 = vector.shape_cast %43 : vector<2xf32> to vector<2x1xf32>
    %45 = tpu.iota {dimensions = array<i32: 1>} : vector<2x128xi32>
    %46 = arith.sitofp %45 : vector<2x128xi32> to vector<2x128xf32>
    %47 = vector.broadcast %44 : vector<2x1xf32> to vector<2x128xf32>
    %48 = arith.cmpf oeq, %46, %47 : vector<2x128xf32>
    %cst_15 = arith.constant 1.000000e+00 : f32
    %cst_16 = arith.constant 0.000000e+00 : f32
    %49 = vector.broadcast %cst_15 : f32 to vector<2x128xf32>
    %50 = vector.broadcast %cst_16 : f32 to vector<2x128xf32>
    %51 = arith.select %48, %49, %50 : vector<2x128xi1>, vector<2x128xf32>
    %c0_17 = arith.constant 0 : index
    %c0_18 = arith.constant 0 : index
    %52 = vector.load %arg2[%c0_17, %c0_18] : memref<128x128xf32, #tpu.memory_space<vmem>>, vector<128x128xf32>
    %cst_19 = arith.constant dense<0.000000e+00> : vector<2x128xf32>
    %53 = tpu.matmul %51, %52, %cst_19 {dimension_numbers = #tpu.dot_dimension_numbers<[1], [0], [0], [1], [0, 0, 1, 1], [], []>} : vector<2x128xf32>, vector<128x128xf32>, vector<2x128xf32> -> vector<2x128xf32>
    %54 = arith.index_cast %arg0 : i32 to index
    %c0_20 = arith.constant 0 : index
    %55 = vector.load %arg1[%54, %c0_20] : memref<64x128xf32, #tpu.memory_space<vmem>>, vector<1x128xf32>
    %56 = vector.broadcast %55 : vector<1x128xf32> to vector<2x128xf32>
    %57 = arith.addf %53, %56 : vector<2x128xf32>
    %c0_21 = arith.constant 0 : index
    %c0_22 = arith.constant 0 : index
    %58 = vector.load %arg19[%c0_21, %c0_22] : memref<6x128xf32, #tpu.memory_space<vmem>>, vector<6x128xf32>
    %c0_23 = arith.constant 0 : index
    %c0_24 = arith.constant 0 : index
    %59 = vector.load %arg4[%c0_23, %c0_24] : memref<2x8xf32, #tpu.memory_space<vmem>>, vector<2x8xf32>
    %60 = arith.truncf %57 : vector<2x128xf32> to vector<2x128xbf16>
    %c0_25 = arith.constant 0 : index
    %c0_26 = arith.constant 0 : index
    %61 = vector.load %arg5[%c0_25, %c0_26] : memref<128x384xbf16, #tpu.memory_space<vmem>>, vector<128x384xbf16>
    %cst_27 = arith.constant dense<0.000000e+00> : vector<2x384xf32>
    %62 = tpu.matmul %60, %61, %cst_27 {dimension_numbers = #tpu.dot_dimension_numbers<[1], [0], [0], [1], [0, 0, 1, 1], [], []>} : vector<2x128xbf16>, vector<128x384xbf16>, vector<2x384xf32> -> vector<2x384xf32>
    %c0_28 = arith.constant 0 : index
    %c0_29 = arith.constant 0 : index
    %63 = vector.load %arg6[%c0_28, %c0_29] : memref<1x384xf32, #tpu.memory_space<vmem>>, vector<1x384xf32>
    %64 = vector.broadcast %63 : vector<1x384xf32> to vector<2x384xf32>
    %65 = arith.addf %62, %64 : vector<2x384xf32>
    %66 = vector.extract_strided_slice %65 {offsets = [0, 0], sizes = [2, 128], strides = [1, 1]} : vector<2x384xf32> to vector<2x128xf32>
    %67 = vector.extract_strided_slice %65 {offsets = [0, 128], sizes = [2, 128], strides = [1, 1]} : vector<2x384xf32> to vector<2x128xf32>
    %68 = vector.extract_strided_slice %65 {offsets = [0, 256], sizes = [2, 128], strides = [1, 1]} : vector<2x384xf32> to vector<2x128xf32>
    %69 = tpu.iota {dimensions = array<i32: 1>} : vector<2x16x128xi32>
    %70 = vector.broadcast %arg0 : i32 to vector<2x16x128xi32>
    %71 = arith.cmpi eq, %69, %70 : vector<2x16x128xi32>
    %72 = vector.shape_cast %67 : vector<2x128xf32> to vector<2x1x128xf32>
    %c0_30 = arith.constant 0 : index
    %c0_31 = arith.constant 0 : index
    %c0_32 = arith.constant 0 : index
    %73 = vector.load %arg23[%c0_30, %c0_31, %c0_32] : memref<2x16x128xf32, #tpu.memory_space<vmem>>, vector<2x16x128xf32>
    %74 = vector.shape_cast %72 : vector<2x1x128xf32> to vector<2x1x128xf32>
    %75 = vector.broadcast %74 : vector<2x1x128xf32> to vector<2x16x128xf32>
    %76 = arith.select %71, %75, %73 : vector<2x16x128xi1>, vector<2x16x128xf32>
    %77 = vector.shape_cast %68 : vector<2x128xf32> to vector<2x1x128xf32>
    %c0_33 = arith.constant 0 : index
    %c0_34 = arith.constant 0 : index
    %c0_35 = arith.constant 0 : index
    %78 = vector.load %arg24[%c0_33, %c0_34, %c0_35] : memref<2x16x128xf32, #tpu.memory_space<vmem>>, vector<2x16x128xf32>
    %79 = vector.shape_cast %77 : vector<2x1x128xf32> to vector<2x1x128xf32>
    %80 = vector.broadcast %79 : vector<2x1x128xf32> to vector<2x16x128xf32>
    %81 = arith.select %71, %80, %78 : vector<2x16x128xi1>, vector<2x16x128xf32>
    %c0_36 = arith.constant 0 : index
    %c0_37 = arith.constant 0 : index
    %c0_38 = arith.constant 0 : index
    %82 = vector.load %arg23[%c0_36, %c0_37, %c0_38] : memref<2x16x128xf32, #tpu.memory_space<vmem>>, vector<2x16x128xf32>
    tpu.vector_store %arg23[%c0_36, %c0_37, %c0_38], %76 {strides = array<i32>} : memref<2x16x128xf32, #tpu.memory_space<vmem>>, vector<2x16x128xf32>,
    %c0_39 = arith.constant 0 : index
    %c0_40 = arith.constant 0 : index
    %c0_41 = arith.constant 0 : index
    %83 = vector.load %arg24[%c0_39, %c0_40, %c0_41] : memref<2x16x128xf32, #tpu.memory_space<vmem>>, vector<2x16x128xf32>
    tpu.vector_store %arg24[%c0_39, %c0_40, %c0_41], %81 {strides = array<i32>} : memref<2x16x128xf32, #tpu.memory_space<vmem>>, vector<2x16x128xf32>,
    %84 = tpu.iota {dimensions = array<i32: 1>} : vector<1x16xi32>
    %85 = vector.broadcast %arg0 : i32 to vector<1x16xi32>
    %86 = arith.cmpi sle, %84, %85 : vector<1x16xi32>
    %cst_42 = arith.constant 0.000000e+00 : f32
    %cst_43 = arith.constant -1.000000e+09 : f32
    %87 = vector.broadcast %cst_42 : f32 to vector<1x16xf32>
    %88 = vector.broadcast %cst_43 : f32 to vector<1x16xf32>
    %89 = arith.select %86, %87, %88 : vector<1x16xi1>, vector<1x16xf32>
    %90 = vector.extract_strided_slice %66 {offsets = [0, 0], sizes = [1, 128], strides = [1, 1]} : vector<2x128xf32> to vector<1x128xf32>
    %91 = vector.extract_strided_slice %76 {offsets = [0, 0, 0], sizes = [1, 16, 128], strides = [1, 1, 1]} : vector<2x16x128xf32> to vector<1x16x128xf32>
    %92 = vector.shape_cast %91 : vector<1x16x128xf32> to vector<16x128xf32>
    %93 = vector.extract_strided_slice %81 {offsets = [0, 0, 0], sizes = [1, 16, 128], strides = [1, 1, 1]} : vector<2x16x128xf32> to vector<1x16x128xf32>
    %94 = vector.shape_cast %93 : vector<1x16x128xf32> to vector<16x128xf32>
    %95 = arith.mulf %90, %8 : vector<1x128xf32>
    %96 = arith.mulf %90, %16 : vector<1x128xf32>
    %97 = arith.mulf %90, %24 : vector<1x128xf32>
    %98 = arith.mulf %90, %32 : vector<1x128xf32>
    %99 = tpu.concatenate %95, %96, %97, %98 in 0 : vector<1x128xf32>, vector<1x128xf32>, vector<1x128xf32>, vector<1x128xf32> -> vector<4x128xf32>
    %100 = arith.truncf %99 : vector<4x128xf32> to vector<4x128xbf16>
    %101 = arith.truncf %92 : vector<16x128xf32> to vector<16x128xbf16>
    %cst_44 = arith.constant dense<0.000000e+00> : vector<4x16xf32>
    %102 = tpu.matmul %100, %101, %cst_44 {dimension_numbers = #tpu.dot_dimension_numbers<[1], [1], [0], [0], [0, 0, 1, 0], [], []>} : vector<4x128xbf16>, vector<16x128xbf16>, vector<4x16xf32> -> vector<4x16xf32>
    %cst_45 = arith.constant 0.176776692 : f32
    %103 = vector.broadcast %cst_45 : f32 to vector<4x16xf32>
    %104 = arith.mulf %102, %103 : vector<4x16xf32>
    %105 = vector.broadcast %89 : vector<1x16xf32> to vector<4x16xf32>
    %106 = arith.addf %104, %105 : vector<4x16xf32>
    %cst_46 = arith.constant dense<0xFF800000> : vector<4xf32>
    %107 = vector.multi_reduction <maximumf>, %106, %cst_46 [1] : vector<4x16xf32> to vector<4xf32>
    %108 = vector.shape_cast %107 : vector<4xf32> to vector<4x1xf32>
    %109 = vector.broadcast %108 : vector<4x1xf32> to vector<4x16xf32>
    %110 = arith.subf %106, %109 : vector<4x16xf32>
    %111 = math.exp %110 : vector<4x16xf32>
    %cst_47 = arith.constant dense<0.000000e+00> : vector<4xf32>
    %112 = vector.multi_reduction <add>, %111, %cst_47 [1] : vector<4x16xf32> to vector<4xf32>
    %113 = vector.shape_cast %112 : vector<4xf32> to vector<4x1xf32>
    %114 = tpu.reciprocal %113 {approx = true} : vector<4x1xf32> -> vector<4x1xf32>
    %115 = vector.broadcast %114 : vector<4x1xf32> to vector<4x16xf32>
    %116 = arith.mulf %111, %115 : vector<4x16xf32>
    %117 = arith.truncf %116 : vector<4x16xf32> to vector<4x16xbf16>
    %118 = arith.truncf %94 : vector<16x128xf32> to vector<16x128xbf16>
    %cst_48 = arith.constant dense<0.000000e+00> : vector<4x128xf32>
    %119 = tpu.matmul %117, %118, %cst_48 {dimension_numbers = #tpu.dot_dimension_numbers<[1], [0], [0], [1], [0, 0, 1, 1], [], []>} : vector<4x16xbf16>, vector<16x128xbf16>, vector<4x128xf32> -> vector<4x128xf32>
    %120 = vector.extract_strided_slice %119 {offsets = [0, 0], sizes = [1, 128], strides = [1, 1]} : vector<4x128xf32> to vector<1x128xf32>
    %121 = arith.mulf %120, %8 : vector<1x128xf32>
    %122 = vector.extract_strided_slice %119 {offsets = [1, 0], sizes = [1, 128], strides = [1, 1]} : vector<4x128xf32> to vector<1x128xf32>
    %123 = arith.mulf %122, %16 : vector<1x128xf32>
    %124 = arith.addf %121, %123 : vector<1x128xf32>
    %125 = vector.extract_strided_slice %119 {offsets = [2, 0], sizes = [1, 128], strides = [1, 1]} : vector<4x128xf32> to vector<1x128xf32>
    %126 = arith.mulf %125, %24 : vector<1x128xf32>
    %127 = arith.addf %124, %126 : vector<1x128xf32>
    %128 = vector.extract_strided_slice %119 {offsets = [3, 0], sizes = [1, 128], strides = [1, 1]} : vector<4x128xf32> to vector<1x128xf32>
    %129 = arith.mulf %128, %32 : vector<1x128xf32>
    %130 = arith.addf %127, %129 : vector<1x128xf32>
    %131 = vector.extract_strided_slice %66 {offsets = [1, 0], sizes = [1, 128], strides = [1, 1]} : vector<2x128xf32> to vector<1x128xf32>
    %132 = vector.extract_strided_slice %76 {offsets = [1, 0, 0], sizes = [1, 16, 128], strides = [1, 1, 1]} : vector<2x16x128xf32> to vector<1x16x128xf32>
    %133 = vector.shape_cast %132 : vector<1x16x128xf32> to vector<16x128xf32>
    %134 = vector.extract_strided_slice %81 {offsets = [1, 0, 0], sizes = [1, 16, 128], strides = [1, 1, 1]} : vector<2x16x128xf32> to vector<1x16x128xf32>
    %135 = vector.shape_cast %134 : vector<1x16x128xf32> to vector<16x128xf32>
    %136 = arith.mulf %131, %8 : vector<1x128xf32>
    %137 = arith.mulf %131, %16 : vector<1x128xf32>
    %138 = arith.mulf %131, %24 : vector<1x128xf32>
    %139 = arith.mulf %131, %32 : vector<1x128xf32>
    %140 = tpu.concatenate %136, %137, %138, %139 in 0 : vector<1x128xf32>, vector<1x128xf32>, vector<1x128xf32>, vector<1x128xf32> -> vector<4x128xf32>
    %141 = arith.truncf %140 : vector<4x128xf32> to vector<4x128xbf16>
    %142 = arith.truncf %133 : vector<16x128xf32> to vector<16x128xbf16>
    %cst_49 = arith.constant dense<0.000000e+00> : vector<4x16xf32>
    %143 = tpu.matmul %141, %142, %cst_49 {dimension_numbers = #tpu.dot_dimension_numbers<[1], [1], [0], [0], [0, 0, 1, 0], [], []>} : vector<4x128xbf16>, vector<16x128xbf16>, vector<4x16xf32> -> vector<4x16xf32>
    %cst_50 = arith.constant 0.176776692 : f32
    %144 = vector.broadcast %cst_50 : f32 to vector<4x16xf32>
    %145 = arith.mulf %143, %144 : vector<4x16xf32>
    %146 = vector.broadcast %89 : vector<1x16xf32> to vector<4x16xf32>
    %147 = arith.addf %145, %146 : vector<4x16xf32>
    %cst_51 = arith.constant dense<0xFF800000> : vector<4xf32>
    %148 = vector.multi_reduction <maximumf>, %147, %cst_51 [1] : vector<4x16xf32> to vector<4xf32>
    %149 = vector.shape_cast %148 : vector<4xf32> to vector<4x1xf32>
    %150 = vector.broadcast %149 : vector<4x1xf32> to vector<4x16xf32>
    %151 = arith.subf %147, %150 : vector<4x16xf32>
    %152 = math.exp %151 : vector<4x16xf32>
    %cst_52 = arith.constant dense<0.000000e+00> : vector<4xf32>
    %153 = vector.multi_reduction <add>, %152, %cst_52 [1] : vector<4x16xf32> to vector<4xf32>
    %154 = vector.shape_cast %153 : vector<4xf32> to vector<4x1xf32>
    %155 = tpu.reciprocal %154 {approx = true} : vector<4x1xf32> -> vector<4x1xf32>
    %156 = vector.broadcast %155 : vector<4x1xf32> to vector<4x16xf32>
    %157 = arith.mulf %152, %156 : vector<4x16xf32>
    %158 = arith.truncf %157 : vector<4x16xf32> to vector<4x16xbf16>
    %159 = arith.truncf %135 : vector<16x128xf32> to vector<16x128xbf16>
    %cst_53 = arith.constant dense<0.000000e+00> : vector<4x128xf32>
    %160 = tpu.matmul %158, %159, %cst_53 {dimension_numbers = #tpu.dot_dimension_numbers<[1], [0], [0], [1], [0, 0, 1, 1], [], []>} : vector<4x16xbf16>, vector<16x128xbf16>, vector<4x128xf32> -> vector<4x128xf32>
    %161 = vector.extract_strided_slice %160 {offsets = [0, 0], sizes = [1, 128], strides = [1, 1]} : vector<4x128xf32> to vector<1x128xf32>
    %162 = arith.mulf %161, %8 : vector<1x128xf32>
    %163 = vector.extract_strided_slice %160 {offsets = [1, 0], sizes = [1, 128], strides = [1, 1]} : vector<4x128xf32> to vector<1x128xf32>
    %164 = arith.mulf %163, %16 : vector<1x128xf32>
    %165 = arith.addf %162, %164 : vector<1x128xf32>
    %166 = vector.extract_strided_slice %160 {offsets = [2, 0], sizes = [1, 128], strides = [1, 1]} : vector<4x128xf32> to vector<1x128xf32>
    %167 = arith.mulf %166, %24 : vector<1x128xf32>
    %168 = arith.addf %165, %167 : vector<1x128xf32>
    %169 = vector.extract_strided_slice %160 {offsets = [3, 0], sizes = [1, 128], strides = [1, 1]} : vector<4x128xf32> to vector<1x128xf32>
    %170 = arith.mulf %169, %32 : vector<1x128xf32>
    %171 = arith.addf %168, %170 : vector<1x128xf32>
    %172 = tpu.concatenate %130, %171 in 0 : vector<1x128xf32>, vector<1x128xf32> -> vector<2x128xf32>
    %173 = arith.truncf %172 : vector<2x128xf32> to vector<2x128xbf16>
    %c0_54 = arith.constant 0 : index
    %c0_55 = arith.constant 0 : index
    %174 = vector.load %arg7[%c0_54, %c0_55] : memref<128x128xbf16, #tpu.memory_space<vmem>>, vector<128x128xbf16>
    %cst_56 = arith.constant dense<0.000000e+00> : vector<2x128xf32>
    %175 = tpu.matmul %173, %174, %cst_56 {dimension_numbers = #tpu.dot_dimension_numbers<[1], [0], [0], [1], [0, 0, 1, 1], [], []>} : vector<2x128xbf16>, vector<128x128xbf16>, vector<2x128xf32> -> vector<2x128xf32>
    %c0_57 = arith.constant 0 : index
    %c0_58 = arith.constant 0 : index
    %176 = vector.load %arg8[%c0_57, %c0_58] : memref<1x128xf32, #tpu.memory_space<vmem>>, vector<1x128xf32>
    %177 = vector.broadcast %176 : vector<1x128xf32> to vector<2x128xf32>
    %178 = arith.addf %175, %177 : vector<2x128xf32>
    %179 = arith.addf %57, %178 : vector<2x128xf32>
    %180 = vector.extract_strided_slice %58 {offsets = [0, 0], sizes = [1, 128], strides = [1, 1]} : vector<6x128xf32> to vector<1x128xf32>
    %181 = vector.extract_strided_slice %58 {offsets = [1, 0], sizes = [1, 128], strides = [1, 1]} : vector<6x128xf32> to vector<1x128xf32>
    %cst_59 = arith.constant dense<0.000000e+00> : vector<2xf32>
    %182 = vector.multi_reduction <add>, %179, %cst_59 [1] : vector<2x128xf32> to vector<2xf32>
    %183 = vector.shape_cast %182 : vector<2xf32> to vector<2x1xf32>
    %cst_60 = arith.constant 1.280000e+02 : f32
    %184 = vector.broadcast %cst_60 : f32 to vector<2x1xf32>
    %185 = arith.divf %183, %184 : vector<2x1xf32>
    %186 = vector.broadcast %185 : vector<2x1xf32> to vector<2x128xf32>
    %187 = arith.subf %179, %186 : vector<2x128xf32>
    %188 = arith.mulf %187, %187 : vector<2x128xf32>
    %cst_61 = arith.constant dense<0.000000e+00> : vector<2xf32>
    %189 = vector.multi_reduction <add>, %188, %cst_61 [1] : vector<2x128xf32> to vector<2xf32>
    %190 = vector.shape_cast %189 : vector<2xf32> to vector<2x1xf32>
    %cst_62 = arith.constant 1.280000e+02 : f32
    %191 = vector.broadcast %cst_62 : f32 to vector<2x1xf32>
    %192 = arith.divf %190, %191 : vector<2x1xf32>
    %193 = vector.broadcast %185 : vector<2x1xf32> to vector<2x128xf32>
    %194 = arith.subf %179, %193 : vector<2x128xf32>
    %cst_63 = arith.constant 9.99999974E-6 : f32
    %195 = vector.broadcast %cst_63 : f32 to vector<2x1xf32>
    %196 = arith.addf %192, %195 : vector<2x1xf32>
    %197 = math.rsqrt %196 : vector<2x1xf32>
    %198 = vector.broadcast %197 : vector<2x1xf32> to vector<2x128xf32>
    %199 = arith.mulf %194, %198 : vector<2x128xf32>
    %200 = vector.broadcast %180 : vector<1x128xf32> to vector<2x128xf32>
    %201 = arith.mulf %199, %200 : vector<2x128xf32>
    %202 = vector.broadcast %181 : vector<1x128xf32> to vector<2x128xf32>
    %203 = arith.addf %201, %202 : vector<2x128xf32>
    %204 = arith.truncf %203 : vector<2x128xf32> to vector<2x128xbf16>
    %c0_64 = arith.constant 0 : index
    %c0_65 = arith.constant 0 : index
    %205 = vector.load %arg9[%c0_64, %c0_65] : memref<128x128xbf16, #tpu.memory_space<vmem>>, vector<128x128xbf16>
    %cst_66 = arith.constant dense<0.000000e+00> : vector<2x128xf32>
    %206 = tpu.matmul %204, %205, %cst_66 {dimension_numbers = #tpu.dot_dimension_numbers<[1], [0], [0], [1], [0, 0, 1, 1], [], []>} : vector<2x128xbf16>, vector<128x128xbf16>, vector<2x128xf32> -> vector<2x128xf32>
    %c0_67 = arith.constant 0 : index
    %c0_68 = arith.constant 0 : index
    %207 = vector.load %arg10[%c0_67, %c0_68] : memref<1x128xf32, #tpu.memory_space<vmem>>, vector<1x128xf32>
    %208 = vector.broadcast %207 : vector<1x128xf32> to vector<2x128xf32>
    %209 = arith.addf %206, %208 : vector<2x128xf32>
    %210 = vector.extract_strided_slice %209 {offsets = [0, 0], sizes = [1, 128], strides = [1, 1]} : vector<2x128xf32> to vector<1x128xf32>
    %c0_69 = arith.constant 0 : index
    %c0_70 = arith.constant 0 : index
    %c0_71 = arith.constant 0 : index
    %211 = vector.load %arg25[%c0_69, %c0_70, %c0_71] : memref<2x8x128xf32, #tpu.memory_space<vmem>>, vector<1x8x128xf32>
    %212 = vector.shape_cast %211 : vector<1x8x128xf32> to vector<8x128xf32>
    %c0_72 = arith.constant 0 : index
    %c0_73 = arith.constant 0 : index
    %c0_74 = arith.constant 0 : index
    %213 = vector.load %arg26[%c0_72, %c0_73, %c0_74] : memref<2x8x128xf32, #tpu.memory_space<vmem>>, vector<1x8x128xf32>
    %214 = vector.shape_cast %213 : vector<1x8x128xf32> to vector<8x128xf32>
    %215 = vector.extract_strided_slice %59 {offsets = [0, 0], sizes = [1, 8], strides = [1, 1]} : vector<2x8xf32> to vector<1x8xf32>
    %216 = arith.mulf %210, %8 : vector<1x128xf32>
    %217 = arith.mulf %210, %16 : vector<1x128xf32>
    %218 = arith.mulf %210, %24 : vector<1x128xf32>
    %219 = arith.mulf %210, %32 : vector<1x128xf32>
    %220 = tpu.concatenate %216, %217, %218, %219 in 0 : vector<1x128xf32>, vector<1x128xf32>, vector<1x128xf32>, vector<1x128xf32> -> vector<4x128xf32>
    %221 = arith.truncf %220 : vector<4x128xf32> to vector<4x128xbf16>
    %222 = arith.truncf %212 : vector<8x128xf32> to vector<8x128xbf16>
    %cst_75 = arith.constant dense<0.000000e+00> : vector<4x8xf32>
    %223 = tpu.matmul %221, %222, %cst_75 {dimension_numbers = #tpu.dot_dimension_numbers<[1], [1], [0], [0], [0, 0, 1, 0], [], []>} : vector<4x128xbf16>, vector<8x128xbf16>, vector<4x8xf32> -> vector<4x8xf32>
    %cst_76 = arith.constant 0.176776692 : f32
    %224 = vector.broadcast %cst_76 : f32 to vector<4x8xf32>
    %225 = arith.mulf %223, %224 : vector<4x8xf32>
    %226 = vector.broadcast %215 : vector<1x8xf32> to vector<4x8xf32>
    %227 = arith.addf %225, %226 : vector<4x8xf32>
    %cst_77 = arith.constant dense<0xFF800000> : vector<4xf32>
    %228 = vector.multi_reduction <maximumf>, %227, %cst_77 [1] : vector<4x8xf32> to vector<4xf32>
    %229 = vector.shape_cast %228 : vector<4xf32> to vector<4x1xf32>
    %230 = vector.broadcast %229 : vector<4x1xf32> to vector<4x8xf32>
    %231 = arith.subf %227, %230 : vector<4x8xf32>
    %232 = math.exp %231 : vector<4x8xf32>
    %cst_78 = arith.constant dense<0.000000e+00> : vector<4xf32>
    %233 = vector.multi_reduction <add>, %232, %cst_78 [1] : vector<4x8xf32> to vector<4xf32>
    %234 = vector.shape_cast %233 : vector<4xf32> to vector<4x1xf32>
    %235 = tpu.reciprocal %234 {approx = true} : vector<4x1xf32> -> vector<4x1xf32>
    %236 = vector.broadcast %235 : vector<4x1xf32> to vector<4x8xf32>
    %237 = arith.mulf %232, %236 : vector<4x8xf32>
    %238 = arith.truncf %237 : vector<4x8xf32> to vector<4x8xbf16>
    %239 = arith.truncf %214 : vector<8x128xf32> to vector<8x128xbf16>
    %cst_79 = arith.constant dense<0.000000e+00> : vector<4x128xf32>
    %240 = tpu.matmul %238, %239, %cst_79 {dimension_numbers = #tpu.dot_dimension_numbers<[1], [0], [0], [1], [0, 0, 1, 1], [], []>} : vector<4x8xbf16>, vector<8x128xbf16>, vector<4x128xf32> -> vector<4x128xf32>
    %241 = vector.extract_strided_slice %240 {offsets = [0, 0], sizes = [1, 128], strides = [1, 1]} : vector<4x128xf32> to vector<1x128xf32>
    %242 = arith.mulf %241, %8 : vector<1x128xf32>
    %243 = vector.extract_strided_slice %240 {offsets = [1, 0], sizes = [1, 128], strides = [1, 1]} : vector<4x128xf32> to vector<1x128xf32>
    %244 = arith.mulf %243, %16 : vector<1x128xf32>
    %245 = arith.addf %242, %244 : vector<1x128xf32>
    %246 = vector.extract_strided_slice %240 {offsets = [2, 0], sizes = [1, 128], strides = [1, 1]} : vector<4x128xf32> to vector<1x128xf32>
    %247 = arith.mulf %246, %24 : vector<1x128xf32>
    %248 = arith.addf %245, %247 : vector<1x128xf32>
    %249 = vector.extract_strided_slice %240 {offsets = [3, 0], sizes = [1, 128], strides = [1, 1]} : vector<4x128xf32> to vector<1x128xf32>
    %250 = arith.mulf %249, %32 : vector<1x128xf32>
    %251 = arith.addf %248, %250 : vector<1x128xf32>
    %252 = vector.extract_strided_slice %209 {offsets = [1, 0], sizes = [1, 128], strides = [1, 1]} : vector<2x128xf32> to vector<1x128xf32>
    %c1 = arith.constant 1 : index
    %c0_80 = arith.constant 0 : index
    %c0_81 = arith.constant 0 : index
    %253 = vector.load %arg25[%c1, %c0_80, %c0_81] : memref<2x8x128xf32, #tpu.memory_space<vmem>>, vector<1x8x128xf32>
    %254 = vector.shape_cast %253 : vector<1x8x128xf32> to vector<8x128xf32>
    %c1_82 = arith.constant 1 : index
    %c0_83 = arith.constant 0 : index
    %c0_84 = arith.constant 0 : index
    %255 = vector.load %arg26[%c1_82, %c0_83, %c0_84] : memref<2x8x128xf32, #tpu.memory_space<vmem>>, vector<1x8x128xf32>
    %256 = vector.shape_cast %255 : vector<1x8x128xf32> to vector<8x128xf32>
    %257 = vector.extract_strided_slice %59 {offsets = [1, 0], sizes = [1, 8], strides = [1, 1]} : vector<2x8xf32> to vector<1x8xf32>
    %258 = arith.mulf %252, %8 : vector<1x128xf32>
    %259 = arith.mulf %252, %16 : vector<1x128xf32>
    %260 = arith.mulf %252, %24 : vector<1x128xf32>
    %261 = arith.mulf %252, %32 : vector<1x128xf32>
    %262 = tpu.concatenate %258, %259, %260, %261 in 0 : vector<1x128xf32>, vector<1x128xf32>, vector<1x128xf32>, vector<1x128xf32> -> vector<4x128xf32>
    %263 = arith.truncf %262 : vector<4x128xf32> to vector<4x128xbf16>
    %264 = arith.truncf %254 : vector<8x128xf32> to vector<8x128xbf16>
    %cst_85 = arith.constant dense<0.000000e+00> : vector<4x8xf32>
    %265 = tpu.matmul %263, %264, %cst_85 {dimension_numbers = #tpu.dot_dimension_numbers<[1], [1], [0], [0], [0, 0, 1, 0], [], []>} : vector<4x128xbf16>, vector<8x128xbf16>, vector<4x8xf32> -> vector<4x8xf32>
    %cst_86 = arith.constant 0.176776692 : f32
    %266 = vector.broadcast %cst_86 : f32 to vector<4x8xf32>
    %267 = arith.mulf %265, %266 : vector<4x8xf32>
    %268 = vector.broadcast %257 : vector<1x8xf32> to vector<4x8xf32>
    %269 = arith.addf %267, %268 : vector<4x8xf32>
    %cst_87 = arith.constant dense<0xFF800000> : vector<4xf32>
    %270 = vector.multi_reduction <maximumf>, %269, %cst_87 [1] : vector<4x8xf32> to vector<4xf32>
    %271 = vector.shape_cast %270 : vector<4xf32> to vector<4x1xf32>
    %272 = vector.broadcast %271 : vector<4x1xf32> to vector<4x8xf32>
    %273 = arith.subf %269, %272 : vector<4x8xf32>
    %274 = math.exp %273 : vector<4x8xf32>
    %cst_88 = arith.constant dense<0.000000e+00> : vector<4xf32>
    %275 = vector.multi_reduction <add>, %274, %cst_88 [1] : vector<4x8xf32> to vector<4xf32>
    %276 = vector.shape_cast %275 : vector<4xf32> to vector<4x1xf32>
    %277 = tpu.reciprocal %276 {approx = true} : vector<4x1xf32> -> vector<4x1xf32>
    %278 = vector.broadcast %277 : vector<4x1xf32> to vector<4x8xf32>
    %279 = arith.mulf %274, %278 : vector<4x8xf32>
    %280 = arith.truncf %279 : vector<4x8xf32> to vector<4x8xbf16>
    %281 = arith.truncf %256 : vector<8x128xf32> to vector<8x128xbf16>
    %cst_89 = arith.constant dense<0.000000e+00> : vector<4x128xf32>
    %282 = tpu.matmul %280, %281, %cst_89 {dimension_numbers = #tpu.dot_dimension_numbers<[1], [0], [0], [1], [0, 0, 1, 1], [], []>} : vector<4x8xbf16>, vector<8x128xbf16>, vector<4x128xf32> -> vector<4x128xf32>
    %283 = vector.extract_strided_slice %282 {offsets = [0, 0], sizes = [1, 128], strides = [1, 1]} : vector<4x128xf32> to vector<1x128xf32>
    %284 = arith.mulf %283, %8 : vector<1x128xf32>
    %285 = vector.extract_strided_slice %282 {offsets = [1, 0], sizes = [1, 128], strides = [1, 1]} : vector<4x128xf32> to vector<1x128xf32>
    %286 = arith.mulf %285, %16 : vector<1x128xf32>
    %287 = arith.addf %284, %286 : vector<1x128xf32>
    %288 = vector.extract_strided_slice %282 {offsets = [2, 0], sizes = [1, 128], strides = [1, 1]} : vector<4x128xf32> to vector<1x128xf32>
    %289 = arith.mulf %288, %24 : vector<1x128xf32>
    %290 = arith.addf %287, %289 : vector<1x128xf32>
    %291 = vector.extract_strided_slice %282 {offsets = [3, 0], sizes = [1, 128], strides = [1, 1]} : vector<4x128xf32> to vector<1x128xf32>
    %292 = arith.mulf %291, %32 : vector<1x128xf32>
    %293 = arith.addf %290, %292 : vector<1x128xf32>
    %294 = tpu.concatenate %251, %293 in 0 : vector<1x128xf32>, vector<1x128xf32> -> vector<2x128xf32>
    %295 = arith.truncf %294 : vector<2x128xf32> to vector<2x128xbf16>
    %c0_90 = arith.constant 0 : index
    %c0_91 = arith.constant 0 : index
    %296 = vector.load %arg13[%c0_90, %c0_91] : memref<128x128xbf16, #tpu.memory_space<vmem>>, vector<128x128xbf16>
    %cst_92 = arith.constant dense<0.000000e+00> : vector<2x128xf32>
    %297 = tpu.matmul %295, %296, %cst_92 {dimension_numbers = #tpu.dot_dimension_numbers<[1], [0], [0], [1], [0, 0, 1, 1], [], []>} : vector<2x128xbf16>, vector<128x128xbf16>, vector<2x128xf32> -> vector<2x128xf32>
    %c0_93 = arith.constant 0 : index
    %c0_94 = arith.constant 0 : index
    %298 = vector.load %arg14[%c0_93, %c0_94] : memref<1x128xf32, #tpu.memory_space<vmem>>, vector<1x128xf32>
    %299 = vector.broadcast %298 : vector<1x128xf32> to vector<2x128xf32>
    %300 = arith.addf %297, %299 : vector<2x128xf32>
    %301 = arith.addf %203, %300 : vector<2x128xf32>
    %302 = vector.extract_strided_slice %58 {offsets = [2, 0], sizes = [1, 128], strides = [1, 1]} : vector<6x128xf32> to vector<1x128xf32>
    %303 = vector.extract_strided_slice %58 {offsets = [3, 0], sizes = [1, 128], strides = [1, 1]} : vector<6x128xf32> to vector<1x128xf32>
    %cst_95 = arith.constant dense<0.000000e+00> : vector<2xf32>
    %304 = vector.multi_reduction <add>, %301, %cst_95 [1] : vector<2x128xf32> to vector<2xf32>
    %305 = vector.shape_cast %304 : vector<2xf32> to vector<2x1xf32>
    %cst_96 = arith.constant 1.280000e+02 : f32
    %306 = vector.broadcast %cst_96 : f32 to vector<2x1xf32>
    %307 = arith.divf %305, %306 : vector<2x1xf32>
    %308 = vector.broadcast %307 : vector<2x1xf32> to vector<2x128xf32>
    %309 = arith.subf %301, %308 : vector<2x128xf32>
    %310 = arith.mulf %309, %309 : vector<2x128xf32>
    %cst_97 = arith.constant dense<0.000000e+00> : vector<2xf32>
    %311 = vector.multi_reduction <add>, %310, %cst_97 [1] : vector<2x128xf32> to vector<2xf32>
    %312 = vector.shape_cast %311 : vector<2xf32> to vector<2x1xf32>
    %cst_98 = arith.constant 1.280000e+02 : f32
    %313 = vector.broadcast %cst_98 : f32 to vector<2x1xf32>
    %314 = arith.divf %312, %313 : vector<2x1xf32>
    %315 = vector.broadcast %307 : vector<2x1xf32> to vector<2x128xf32>
    %316 = arith.subf %301, %315 : vector<2x128xf32>
    %cst_99 = arith.constant 9.99999974E-6 : f32
    %317 = vector.broadcast %cst_99 : f32 to vector<2x1xf32>
    %318 = arith.addf %314, %317 : vector<2x1xf32>
    %319 = math.rsqrt %318 : vector<2x1xf32>
    %320 = vector.broadcast %319 : vector<2x1xf32> to vector<2x128xf32>
    %321 = arith.mulf %316, %320 : vector<2x128xf32>
    %322 = vector.broadcast %302 : vector<1x128xf32> to vector<2x128xf32>
    %323 = arith.mulf %321, %322 : vector<2x128xf32>
    %324 = vector.broadcast %303 : vector<1x128xf32> to vector<2x128xf32>
    %325 = arith.addf %323, %324 : vector<2x128xf32>
    %326 = arith.truncf %325 : vector<2x128xf32> to vector<2x128xbf16>
    %c0_100 = arith.constant 0 : index
    %c0_101 = arith.constant 0 : index
    %327 = vector.load %arg15[%c0_100, %c0_101] : memref<128x256xbf16, #tpu.memory_space<vmem>>, vector<128x256xbf16>
    %cst_102 = arith.constant dense<0.000000e+00> : vector<2x256xf32>
    %328 = tpu.matmul %326, %327, %cst_102 {dimension_numbers = #tpu.dot_dimension_numbers<[1], [0], [0], [1], [0, 0, 1, 1], [], []>} : vector<2x128xbf16>, vector<128x256xbf16>, vector<2x256xf32> -> vector<2x256xf32>
    %c0_103 = arith.constant 0 : index
    %c0_104 = arith.constant 0 : index
    %329 = vector.load %arg16[%c0_103, %c0_104] : memref<1x256xf32, #tpu.memory_space<vmem>>, vector<1x256xf32>
    %330 = vector.broadcast %329 : vector<1x256xf32> to vector<2x256xf32>
    %331 = arith.addf %328, %330 : vector<2x256xf32>
    %cst_105 = arith.constant 0.000000e+00 : f32
    %332 = vector.broadcast %cst_105 : f32 to vector<2x256xf32>
    %333 = arith.maximumf %331, %332 : vector<2x256xf32>
    %334 = arith.truncf %333 : vector<2x256xf32> to vector<2x256xbf16>
    %c0_106 = arith.constant 0 : index
    %c0_107 = arith.constant 0 : index
    %335 = vector.load %arg17[%c0_106, %c0_107] : memref<256x128xbf16, #tpu.memory_space<vmem>>, vector<256x128xbf16>
    %cst_108 = arith.constant dense<0.000000e+00> : vector<2x128xf32>
    %336 = tpu.matmul %334, %335, %cst_108 {dimension_numbers = #tpu.dot_dimension_numbers<[1], [0], [0], [1], [0, 0, 1, 1], [], []>} : vector<2x256xbf16>, vector<256x128xbf16>, vector<2x128xf32> -> vector<2x128xf32>
    %337 = arith.addf %325, %336 : vector<2x128xf32>
    %c0_109 = arith.constant 0 : index
    %c0_110 = arith.constant 0 : index
    %338 = vector.load %arg18[%c0_109, %c0_110] : memref<1x128xf32, #tpu.memory_space<vmem>>, vector<1x128xf32>
    %339 = vector.broadcast %338 : vector<1x128xf32> to vector<2x128xf32>
    %340 = arith.addf %337, %339 : vector<2x128xf32>
    %341 = vector.extract_strided_slice %58 {offsets = [4, 0], sizes = [1, 128], strides = [1, 1]} : vector<6x128xf32> to vector<1x128xf32>
    %342 = vector.extract_strided_slice %58 {offsets = [5, 0], sizes = [1, 128], strides = [1, 1]} : vector<6x128xf32> to vector<1x128xf32>
    %cst_111 = arith.constant dense<0.000000e+00> : vector<2xf32>
    %343 = vector.multi_reduction <add>, %340, %cst_111 [1] : vector<2x128xf32> to vector<2xf32>
    %344 = vector.shape_cast %343 : vector<2xf32> to vector<2x1xf32>
    %cst_112 = arith.constant 1.280000e+02 : f32
    %345 = vector.broadcast %cst_112 : f32 to vector<2x1xf32>
    %346 = arith.divf %344, %345 : vector<2x1xf32>
    %347 = vector.broadcast %346 : vector<2x1xf32> to vector<2x128xf32>
    %348 = arith.subf %340, %347 : vector<2x128xf32>
    %349 = arith.mulf %348, %348 : vector<2x128xf32>
    %cst_113 = arith.constant dense<0.000000e+00> : vector<2xf32>
    %350 = vector.multi_reduction <add>, %349, %cst_113 [1] : vector<2x128xf32> to vector<2xf32>
    %351 = vector.shape_cast %350 : vector<2xf32> to vector<2x1xf32>
    %cst_114 = arith.constant 1.280000e+02 : f32
    %352 = vector.broadcast %cst_114 : f32 to vector<2x1xf32>
    %353 = arith.divf %351, %352 : vector<2x1xf32>
    %354 = vector.broadcast %346 : vector<2x1xf32> to vector<2x128xf32>
    %355 = arith.subf %340, %354 : vector<2x128xf32>
    %cst_115 = arith.constant 9.99999974E-6 : f32
    %356 = vector.broadcast %cst_115 : f32 to vector<2x1xf32>
    %357 = arith.addf %353, %356 : vector<2x1xf32>
    %358 = math.rsqrt %357 : vector<2x1xf32>
    %359 = vector.broadcast %358 : vector<2x1xf32> to vector<2x128xf32>
    %360 = arith.mulf %355, %359 : vector<2x128xf32>
    %361 = vector.broadcast %341 : vector<1x128xf32> to vector<2x128xf32>
    %362 = arith.mulf %360, %361 : vector<2x128xf32>
    %363 = vector.broadcast %342 : vector<1x128xf32> to vector<2x128xf32>
    %364 = arith.addf %362, %363 : vector<2x128xf32>
    %365 = arith.truncf %364 : vector<2x128xf32> to vector<2x128xbf16>
    %c0_116 = arith.constant 0 : index
    %c0_117 = arith.constant 0 : index
    %366 = vector.load %arg20[%c0_116, %c0_117] : memref<128x128xbf16, #tpu.memory_space<vmem>>, vector<128x128xbf16>
    %cst_118 = arith.constant dense<0.000000e+00> : vector<2x128xf32>
    %367 = tpu.matmul %365, %366, %cst_118 {dimension_numbers = #tpu.dot_dimension_numbers<[1], [0], [0], [1], [0, 0, 1, 1], [], []>} : vector<2x128xbf16>, vector<128x128xbf16>, vector<2x128xf32> -> vector<2x128xf32>
    %c0_119 = arith.constant 0 : index
    %c0_120 = arith.constant 0 : index
    %368 = vector.load %arg21[%c0_119, %c0_120] : memref<1x128xf32, #tpu.memory_space<vmem>>, vector<1x128xf32>
    %369 = vector.broadcast %368 : vector<1x128xf32> to vector<2x128xf32>
    %370 = arith.addf %367, %369 : vector<2x128xf32>
    %c1_i32 = arith.constant 1 : i32
    %371 = vector.broadcast %c1_i32 : i32 to vector<2x128xi32>
    %372 = arith.cmpi eq, %45, %371 : vector<2x128xi32>
    %c104_i32 = arith.constant 104 : i32
    %373 = vector.broadcast %c104_i32 : i32 to vector<2x128xi32>
    %374 = arith.cmpi sge, %45, %373 : vector<2x128xi32>
    %375 = arith.ori %372, %374 : vector<2x128xi1>
    %cst_121 = arith.constant -1.000000e+09 : f32
    %376 = vector.broadcast %cst_121 : f32 to vector<2x128xf32>
    %377 = arith.select %375, %376, %370 : vector<2x128xi1>, vector<2x128xf32>
    %378 = tpu.iota {dimensions = array<i32: 0>} : vector<16x16xi32>
    %379 = tpu.iota {dimensions = array<i32: 1>} : vector<16x16xi32>
    %c1_i32_122 = arith.constant 1 : i32
    %380 = vector.broadcast %c1_i32_122 : i32 to vector<16x16xi32>
    %381 = arith.addi %378, %380 : vector<16x16xi32>
    %382 = arith.cmpi eq, %379, %381 : vector<16x16xi32>
    %cst_123 = arith.constant 1.000000e+00 : f32
    %cst_124 = arith.constant 0.000000e+00 : f32
    %383 = vector.broadcast %cst_123 : f32 to vector<16x16xf32>
    %384 = vector.broadcast %cst_124 : f32 to vector<16x16xf32>
    %385 = arith.select %382, %383, %384 : vector<16x16xi1>, vector<16x16xf32>
    %386 = arith.truncf %37 : vector<2x16xf32> to vector<2x16xbf16>
    %387 = arith.truncf %385 : vector<16x16xf32> to vector<16x16xbf16>
    %cst_125 = arith.constant dense<0.000000e+00> : vector<2x16xf32>
    %388 = tpu.matmul %386, %387, %cst_125 {dimension_numbers = #tpu.dot_dimension_numbers<[1], [0], [0], [1], [0, 0, 1, 1], [], []>} : vector<2x16xbf16>, vector<16x16xbf16>, vector<2x16xf32> -> vector<2x16xf32>
    %389 = vector.broadcast %44 : vector<2x1xf32> to vector<2x16xf32>
    %390 = arith.cmpf oeq, %388, %389 : vector<2x16xf32>
    %c1_i32_126 = arith.constant 1 : i32
    %391 = vector.broadcast %c1_i32_126 : i32 to vector<2x16xi32>
    %392 = arith.cmpi sge, %38, %391 : vector<2x16xi32>
    %393 = arith.andi %390, %392 : vector<2x16xi1>
    %394 = vector.broadcast %arg0 : i32 to vector<2x16xi32>
    %395 = arith.cmpi sle, %38, %394 : vector<2x16xi32>
    %396 = arith.andi %393, %395 : vector<2x16xi1>
    %397 = arith.extui %396 : vector<2x16xi1> to vector<2x16xi32>
    %398 = arith.sitofp %397 : vector<2x16xi32> to vector<2x16xf32>
    %399 = vector.shape_cast %36 : vector<2x16xi32> to vector<2x16x1xi32>
    %400 = tpu.iota {dimensions = array<i32: 2>} : vector<2x16x128xi32>
    %401 = vector.broadcast %399 : vector<2x16x1xi32> to vector<2x16x128xi32>
    %402 = arith.cmpi eq, %401, %400 : vector<2x16x128xi32>
    %403 = vector.shape_cast %398 : vector<2x16xf32> to vector<2x16x1xf32>
    %cst_127 = arith.constant 0.000000e+00 : f32
    %404 = vector.shape_cast %403 : vector<2x16x1xf32> to vector<2x16x1xf32>
    %405 = vector.broadcast %404 : vector<2x16x1xf32> to vector<2x16x128xf32>
    %406 = vector.broadcast %cst_127 : f32 to vector<2x16x128xf32>
    %407 = arith.select %402, %405, %406 : vector<2x16x128xi1>, vector<2x16x128xf32>
    %cst_128 = arith.constant dense<0.000000e+00> : vector<2x128xf32>
    %408 = vector.multi_reduction <add>, %407, %cst_128 [1] : vector<2x16x128xf32> to vector<2x128xf32>
    %cst_129 = arith.constant 0.000000e+00 : f32
    %409 = vector.broadcast %cst_129 : f32 to vector<2x128xf32>
    %410 = arith.cmpf ogt, %408, %409 : vector<2x128xf32>
    %cst_130 = arith.constant -1.000000e+09 : f32
    %411 = vector.broadcast %cst_130 : f32 to vector<2x128xf32>
    %412 = arith.select %410, %411, %377 : vector<2x128xi1>, vector<2x128xf32>
    %cst_131 = arith.constant dense<0xFF800000> : vector<2xf32>
    %413 = vector.multi_reduction <maximumf>, %412, %cst_131 [1] : vector<2x128xf32> to vector<2xf32>
    %414 = vector.shape_cast %413 : vector<2xf32> to vector<2x1xf32>
    %415 = vector.broadcast %414 : vector<2x1xf32> to vector<2x128xf32>
    %416 = arith.cmpf oge, %412, %415 : vector<2x128xf32>
    %cst_132 = arith.constant 1.280000e+02 : f32
    %417 = vector.broadcast %cst_132 : f32 to vector<2x128xf32>
    %418 = arith.select %416, %46, %417 : vector<2x128xi1>, vector<2x128xf32>
    %cst_133 = arith.constant dense<0x7F800000> : vector<2xf32>
    %419 = vector.multi_reduction <minimumf>, %418, %cst_133 [1] : vector<2x128xf32> to vector<2xf32>
    %420 = vector.shape_cast %419 : vector<2xf32> to vector<2x1xf32>
    %c2_i32 = arith.constant 2 : i32
    %421 = vector.broadcast %c2_i32 : i32 to vector<2x16xi32>
    %422 = arith.cmpi eq, %36, %421 : vector<2x16xi32>
    %c1_i32_134 = arith.constant 1 : i32
    %423 = vector.broadcast %c1_i32_134 : i32 to vector<2x16xi32>
    %424 = arith.cmpi sge, %38, %423 : vector<2x16xi32>
    %425 = arith.andi %422, %424 : vector<2x16xi1>
    %426 = vector.broadcast %arg0 : i32 to vector<2x16xi32>
    %427 = arith.cmpi sle, %38, %426 : vector<2x16xi32>
    %428 = arith.andi %425, %427 : vector<2x16xi1>
    %cst_135 = arith.constant 1.000000e+00 : f32
    %cst_136 = arith.constant 0.000000e+00 : f32
    %429 = vector.broadcast %cst_135 : f32 to vector<2x16xf32>
    %430 = vector.broadcast %cst_136 : f32 to vector<2x16xf32>
    %431 = arith.select %428, %429, %430 : vector<2x16xi1>, vector<2x16xf32>
    %cst_137 = arith.constant dense<0.000000e+00> : vector<2xf32>
    %432 = vector.multi_reduction <add>, %431, %cst_137 [1] : vector<2x16xf32> to vector<2xf32>
    %433 = vector.shape_cast %432 : vector<2xf32> to vector<2x1xf32>
    %cst_138 = arith.constant 0.000000e+00 : f32
    %434 = vector.broadcast %cst_138 : f32 to vector<2x1xf32>
    %435 = arith.cmpf ogt, %433, %434 : vector<2x1xf32>
    %c9_i32 = arith.constant 9 : i32
    %436 = arith.cmpi eq, %arg0, %c9_i32 : i32
    %cst_139 = arith.constant 2.000000e+00 : f32
    %437 = vector.broadcast %cst_139 : f32 to vector<2x1xf32>
    %438 = arith.select %436, %437, %420 : vector<2x1xf32>
    %cst_140 = arith.constant 1.000000e+00 : f32
    %439 = vector.broadcast %cst_140 : f32 to vector<2x1xf32>
    %440 = arith.select %435, %439, %438 : vector<2x1xi1>, vector<2x1xf32>
    %c1_i32_141 = arith.constant 1 : i32
    %441 = arith.addi %arg0, %c1_i32_141 : i32
    %442 = vector.broadcast %441 : i32 to vector<2x16xi32>
    %443 = arith.cmpi eq, %38, %442 : vector<2x16xi32>
    %444 = arith.fptosi %440 : vector<2x1xf32> to vector<2x1xi32>
    %445 = vector.shape_cast %444 : vector<2x1xi32> to vector<2x1xi32>
    %446 = vector.broadcast %445 : vector<2x1xi32> to vector<2x16xi32>
    %447 = arith.select %443, %446, %36 : vector<2x16xi1>, vector<2x16xi32>
    %c0_142 = arith.constant 0 : index
    %c0_143 = arith.constant 0 : index
    %448 = vector.load %arg22[%c0_142, %c0_143] : memref<2x16xi32, #tpu.memory_space<vmem>>, vector<2x16xi32>
    tpu.vector_store %arg22[%c0_142, %c0_143], %447 {strides = array<i32>} : memref<2x16xi32, #tpu.memory_space<vmem>>, vector<2x16xi32>,
    return
  }
  func.func @transform_0(%arg0: i32) -> (i32, i32) {
    %c0_i32 = arith.constant 0 : i32
    %c0_i32_0 = arith.constant 0 : i32
    %c0_i32_1 = arith.constant 0 : i32
    return %c0_i32, %c0_i32_0 : i32, i32
  }
  func.func @transform_1(%arg0: i32) -> (i32, i32) {
    %c0_i32 = arith.constant 0 : i32
    %c0_i32_0 = arith.constant 0 : i32
    %c0_i32_1 = arith.constant 0 : i32
    return %c0_i32, %c0_i32_0 : i32, i32
  }
  func.func @transform_2(%arg0: i32) -> (i32, i32, i32) {
    %c0_i32 = arith.constant 0 : i32
    %c0_i32_0 = arith.constant 0 : i32
    %c0_i32_1 = arith.constant 0 : i32
    %c0_i32_2 = arith.constant 0 : i32
    return %c0_i32, %c0_i32_0, %c0_i32_1 : i32, i32, i32
  }
  func.func @transform_3(%arg0: i32) -> (i32, i32) {
    %c0_i32 = arith.constant 0 : i32
    %c0_i32_0 = arith.constant 0 : i32
    %c0_i32_1 = arith.constant 0 : i32
    return %c0_i32, %c0_i32_0 : i32, i32
  }
  func.func @transform_4(%arg0: i32) -> (i32, i32) {
    %c0_i32 = arith.constant 0 : i32
    %c0_i32_0 = arith.constant 0 : i32
    %c0_i32_1 = arith.constant 0 : i32
    return %c0_i32, %c0_i32_0 : i32, i32
  }
  func.func @transform_5(%arg0: i32) -> (i32, i32) {
    %c0_i32 = arith.constant 0 : i32
    %c0_i32_0 = arith.constant 0 : i32
    %c0_i32_1 = arith.constant 0 : i32
    return %c0_i32, %c0_i32_0 : i32, i32
  }
  func.func @transform_6(%arg0: i32) -> (i32, i32) {
    %c0_i32 = arith.constant 0 : i32
    %c0_i32_0 = arith.constant 0 : i32
    %c0_i32_1 = arith.constant 0 : i32
    return %c0_i32, %c0_i32_0 : i32, i32
  }
  func.func @transform_7(%arg0: i32) -> (i32, i32) {
    %c0_i32 = arith.constant 0 : i32
    %c0_i32_0 = arith.constant 0 : i32
    %c0_i32_1 = arith.constant 0 : i32
    return %c0_i32, %c0_i32_0 : i32, i32
  }
  func.func @transform_8(%arg0: i32) -> (i32, i32) {
    %c0_i32 = arith.constant 0 : i32
    %c0_i32_0 = arith.constant 0 : i32
    %c0_i32_1 = arith.constant 0 : i32
    return %c0_i32, %c0_i32_0 : i32, i32
  }
  func.func @transform_9(%arg0: i32) -> (i32, i32) {
    %c0_i32 = arith.constant 0 : i32
    %c0_i32_0 = arith.constant 0 : i32
    %c0_i32_1 = arith.constant 0 : i32
    return %c0_i32, %c0_i32_0 : i32, i32
  }
  func.func @transform_10(%arg0: i32) -> (i32, i32) {
    %c0_i32 = arith.constant 0 : i32
    %c0_i32_0 = arith.constant 0 : i32
    %c0_i32_1 = arith.constant 0 : i32
    return %c0_i32, %c0_i32_0 : i32, i32
  }
  func.func @transform_11(%arg0: i32) -> (i32, i32) {
    %c0_i32 = arith.constant 0 : i32
    %c0_i32_0 = arith.constant 0 : i32
    %c0_i32_1 = arith.constant 0 : i32
    return %c0_i32, %c0_i32_0 : i32, i32
  }
  func.func @transform_12(%arg0: i32) -> (i32, i32) {
    %c0_i32 = arith.constant 0 : i32
    %c0_i32_0 = arith.constant 0 : i32
    %c0_i32_1 = arith.constant 0 : i32
    return %c0_i32, %c0_i32_0 : i32, i32
  }
  func.func @transform_13(%arg0: i32) -> (i32, i32) {
    %c0_i32 = arith.constant 0 : i32
    %c0_i32_0 = arith.constant 0 : i32
    %c0_i32_1 = arith.constant 0 : i32
    return %c0_i32, %c0_i32_0 : i32, i32
  }
  func.func @transform_14(%arg0: i32) -> (i32, i32) {
    %c0_i32 = arith.constant 0 : i32
    %c0_i32_0 = arith.constant 0 : i32
    %c0_i32_1 = arith.constant 0 : i32
    return %c0_i32, %c0_i32_0 : i32, i32
  }
  func.func @transform_15(%arg0: i32) -> (i32, i32) {
    %c0_i32 = arith.constant 0 : i32
    %c0_i32_0 = arith.constant 0 : i32
    %c0_i32_1 = arith.constant 0 : i32
    return %c0_i32, %c0_i32_0 : i32, i32
  }
  func.func @transform_16(%arg0: i32) -> (i32, i32) {
    %c0_i32 = arith.constant 0 : i32
    %c0_i32_0 = arith.constant 0 : i32
    %c0_i32_1 = arith.constant 0 : i32
    return %c0_i32, %c0_i32_0 : i32, i32
  }
  func.func @transform_17(%arg0: i32) -> (i32, i32) {
    %c0_i32 = arith.constant 0 : i32
    %c0_i32_0 = arith.constant 0 : i32
    %c0_i32_1 = arith.constant 0 : i32
    return %c0_i32, %c0_i32_0 : i32, i32
  }
  func.func @transform_18(%arg0: i32) -> (i32, i32) {
    %c0_i32 = arith.constant 0 : i32
    %c0_i32_0 = arith.constant 0 : i32
    %c0_i32_1 = arith.constant 0 : i32
    return %c0_i32, %c0_i32_0 : i32, i32
  }
  func.func @transform_19(%arg0: i32) -> (i32, i32) {
    %c0_i32 = arith.constant 0 : i32
    %c0_i32_0 = arith.constant 0 : i32
    %c0_i32_1 = arith.constant 0 : i32
    return %c0_i32, %c0_i32_0 : i32, i32
  }
  func.func @transform_20(%arg0: i32) -> (i32, i32) {
    %c0_i32 = arith.constant 0 : i32
    %c0_i32_0 = arith.constant 0 : i32
    %c0_i32_1 = arith.constant 0 : i32
    return %c0_i32, %c0_i32_0 : i32, i32
  }
  func.func @transform_21(%arg0: i32) -> (i32, i32) {
    %c0_i32 = arith.constant 0 : i32
    %c0_i32_0 = arith.constant 0 : i32
    %c0_i32_1 = arith.constant 0 : i32
    return %c0_i32, %c0_i32_0 : i32, i32
  }
}

</mosaic_0001>

<llo_original>
// kernel: _generate_impl.2
$region0: #{_generate_impl.2}
  #allocation0 [shape = 'u32[]', space=smem, size = 0x4, offset = 0x4, fixed_abs, tag = 'smem constant byte address 0x4 - core index']
  #allocation1 [shape = 'u32[144,128]{1,0:T(1,128)}', space=vmem, size = 0x12000, scoped, tag = 'internal scratch']
  %s0 = inlined_call_operand.vmem [shape: f32[2,8,128], index: 0, kind: input, shape index: {}]
  %s1 = inlined_call_operand.vmem [shape: f32[2,1,8], index: 1, kind: input, shape index: {}]
  %s2 = inlined_call_operand.hbm [shape: bf16[2,128,384], index: 2, kind: input, shape index: {}]
  %s3 = inlined_call_operand.vmem [shape: f32[2,1,384], index: 3, kind: input, shape index: {}]
  %s4 = inlined_call_operand.hbm [shape: bf16[2,128,128], index: 4, kind: input, shape index: {}]
  %s5 = inlined_call_operand.vmem [shape: f32[2,1,128], index: 5, kind: input, shape index: {}]
  %s6 = inlined_call_operand.vmem [shape: bf16[2,128,256], index: 6, kind: input, shape index: {}]
  %s7 = inlined_call_operand.vmem [shape: f32[2,1,256], index: 7, kind: input, shape index: {}]
  %s8 = inlined_call_operand.hbm [shape: bf16[2,256,128], index: 8, kind: input, shape index: {}]
  %s9 = inlined_call_operand.vmem [shape: f32[2,1,128], index: 9, kind: input, shape index: {}]
  %s10 = inlined_call_operand.vmem [shape: f32[2,4,128], index: 10, kind: input, shape index: {}]
  %s11 = inlined_call_operand.vmem [shape: f32[2,8,128], index: 11, kind: output, shape index: {}]
  %s12 = sld [smem:[#allocation0]]
  $region89: #{_generate_impl.2} parent=0
    _
  %s14 = ssub.s32 1, %s12
  %s15 = scalar_select 0, %s14, %s12
  $region1: #{_generate_impl.2} parent=0
    #allocation2 [shape = 'u8[196608]{0}', space=vmem, size = 0x30000, scoped, tag = 'input window, operand 2, single buffered']
    #allocation3 [shape = 's32[2]{0}', space=sflag, size = 0x8, scoped, tag = 'scoped memory for _generate_impl.2']
    #allocation4 [shape = 'u8[65536]{0}', space=vmem, size = 0x10000, scoped, tag = 'input window, operand 4, single buffered']
    #allocation5 [shape = 's32[1]{0}', space=sflag, size = 0x4, scoped, tag = 'scoped memory for _generate_impl.2']
    #allocation6 [shape = 'u8[131072]{0}', space=vmem, size = 0x20000, scoped, tag = 'input window, operand 8, single buffered']
    %16 = vsyncpa [#allocation3], 0
    %17 = vsyncpa [#allocation5], 0
    loop: start=0, step=1, limit=4
    $region2: #{_generate_impl.2} parent=1 // loop_pre_header
      _
    $region3: #{_generate_impl.2} parent=1 // loop_header
      %s19 = sphi 0, %s23
      %p20 = scmp.ge.s32.totalorder %s19, 4
      %s29 = sphi 0, %s31
      %s32 = sphi 0, %s29
      %s33 = sphi 0, %s32
      %s49 = sphi 0, %s33
      %s55 = sphi 0, %s57
      %s58 = sphi 0, %s55
      %s59 = sphi 0, %s58
      %s75 = sphi 0, %s59
      %s79 = sphi 0, %s79
      %s81 = sphi 0, %s79
      %s82 = sphi 0, %s81
      %s96 = sphi 0, %s82
      %s100 = sphi 0, %s100
      %s102 = sphi 0, %s100
      %s103 = sphi 0, %s102
      %s117 = sphi 0, %s103
      %s121 = sphi 0, %s121
      %s123 = sphi 0, %s121
      %s124 = sphi 0, %s123
      %s138 = sphi 0, %s124
      %s142 = sphi 0, %s142
      %s144 = sphi 0, %s142
      %s145 = sphi 0, %s144
      %s159 = sphi 0, %s145
      %s163 = sphi 0, %s163
      %s165 = sphi 0, %s163
      %s166 = sphi 0, %s165
      %s180 = sphi 0, %s166
      %s184 = sphi 0, %s184
      %s186 = sphi 0, %s184
      %s187 = sphi 0, %s186
      %s201 = sphi 0, %s187
      %s205 = sphi 0, %s205
      %s207 = sphi 0, %s205
      %s208 = sphi 0, %s207
      %s222 = sphi 0, %s208
      %s226 = sphi 0, %s226
      %s228 = sphi 0, %s226
      %s229 = sphi 0, %s228
      %s243 = sphi 0, %s229
      %s247 = sphi 0, %s247
      %s249 = sphi 0, %s247
      %s250 = sphi 0, %s249
      %s264 = sphi 0, %s250
      %s270 = sphi 0, %s272
      %s273 = sphi 0, %s270
      %s274 = sphi 0, %s273
      %s290 = sphi 0, %s274
    $region4: #{_generate_impl.2} parent=1 // loop_header_branch
      %22 = sbr.rel (%p20) target = $region8
    $region5: #{_generate_impl.2} parent=1 // loop_body
      %s24 = ssub.s32 %s19, 1
      %s25 = ssub.s32 %s19, 2
      %s26 = sadd.s32 %s19, 1
      %s27 = ssub.s32 %s19, %s26
      %p28 = scmp.eq.s32.totalorder %s27, 0
      %s30 = sadd.s32 %s29, 1
      %s31 = scalar_select %p28, %s29, %s30
      %p34 = pneg %p28
      %p35 = scmp.eq.s32.totalorder %s19, 1
      %p36 = por %p34, %p35
      %p37 = scmp.ne.s32.totalorder %s29, %s32
      %p38 = scmp.eq.s32.totalorder %s19, 0
      %p39 = por %p37, %p38
      %p40 = scmp.ne.s32.totalorder %s29, %s32
      %p41 = scmp.eq.s32.totalorder %s24, 1
      %p42 = por %p40, %p41
      %p43 = scmp.ne.s32.totalorder %s32, %s33
      %p44 = scmp.eq.s32.totalorder %s24, 0
      %p45 = por %p43, %p44
      %p46 = scmp.ne.s32.totalorder %s32, %s33
      %p47 = scmp.eq.s32.totalorder %s25, 1
      %p48 = por %p46, %p47
      %p50 = scmp.ne.s32.totalorder %s33, %s49
      %p51 = scmp.eq.s32.totalorder %s25, 0
      %p52 = por %p50, %p51
      %s53 = ssub.s32 %s19, %s26
      %p54 = scmp.eq.s32.totalorder %s53, 0
      %s56 = sadd.s32 %s55, 1
      %s57 = scalar_select %p54, %s55, %s56
      %p60 = pneg %p54
      %p61 = scmp.eq.s32.totalorder %s19, 1
      %p62 = por %p60, %p61
      %p63 = scmp.ne.s32.totalorder %s55, %s58
      %p64 = scmp.eq.s32.totalorder %s19, 0
      %p65 = por %p63, %p64
      %p66 = scmp.ne.s32.totalorder %s55, %s58
      %p67 = scmp.eq.s32.totalorder %s24, 1
      %p68 = por %p66, %p67
      %p69 = scmp.ne.s32.totalorder %s58, %s59
      %p70 = scmp.eq.s32.totalorder %s24, 0
      %p71 = por %p69, %p70
      %p72 = scmp.ne.s32.totalorder %s58, %s59
      %p73 = scmp.eq.s32.totalorder %s25, 1
      %p74 = por %p72, %p73
      %p76 = scmp.ne.s32.totalorder %s59, %s75
      %p77 = scmp.eq.s32.totalorder %s25, 0
      %p78 = por %p76, %p77
      %s80 = sadd.s32 %s79, 1
      %p83 = scmp.eq.s32.totalorder %s19, 1
      %p84 = scmp.ne.s32.totalorder %s79, %s81
      %p85 = scmp.eq.s32.totalorder %s19, 0
      %p86 = por %p84, %p85
      %p87 = scmp.ne.s32.totalorder %s79, %s81
      %p88 = scmp.eq.s32.totalorder %s24, 1
      %p89 = por %p87, %p88
      %p90 = scmp.ne.s32.totalorder %s81, %s82
      %p91 = scmp.eq.s32.totalorder %s24, 0
      %p92 = por %p90, %p91
      %p93 = scmp.ne.s32.totalorder %s81, %s82
      %p94 = scmp.eq.s32.totalorder %s25, 1
      %p95 = por %p93, %p94
      %p97 = scmp.ne.s32.totalorder %s82, %s96
      %p98 = scmp.eq.s32.totalorder %s25, 0
      %p99 = por %p97, %p98
      %s101 = sadd.s32 %s100, 1
      %p104 = scmp.eq.s32.totalorder %s19, 1
      %p105 = scmp.ne.s32.totalorder %s100, %s102
      %p106 = scmp.eq.s32.totalorder %s19, 0
      %p107 = por %p105, %p106
      %p108 = scmp.ne.s32.totalorder %s100, %s102
      %p109 = scmp.eq.s32.totalorder %s24, 1
      %p110 = por %p108, %p109
      %p111 = scmp.ne.s32.totalorder %s102, %s103
      %p112 = scmp.eq.s32.totalorder %s24, 0
      %p113 = por %p111, %p112
      %p114 = scmp.ne.s32.totalorder %s102, %s103
      %p115 = scmp.eq.s32.totalorder %s25, 1
      %p116 = por %p114, %p115
      %p118 = scmp.ne.s32.totalorder %s103, %s117
      %p119 = scmp.eq.s32.totalorder %s25, 0
      %p120 = por %p118, %p119
      %s122 = sadd.s32 %s121, 1
      %p125 = scmp.eq.s32.totalorder %s19, 1
      %p126 = scmp.ne.s32.totalorder %s121, %s123
      %p127 = scmp.eq.s32.totalorder %s19, 0
      %p128 = por %p126, %p127
      %p129 = scmp.ne.s32.totalorder %s121, %s123
      %p130 = scmp.eq.s32.totalorder %s24, 1
      %p131 = por %p129, %p130
      %p132 = scmp.ne.s32.totalorder %s123, %s124
      %p133 = scmp.eq.s32.totalorder %s24, 0
      %p134 = por %p132, %p133
      %p135 = scmp.ne.s32.totalorder %s123, %s124
      %p136 = scmp.eq.s32.totalorder %s25, 1
      %p137 = por %p135, %p136
      %p139 = scmp.ne.s32.totalorder %s124, %s138
      %p140 = scmp.eq.s32.totalorder %s25, 0
      %p141 = por %p139, %p140
      %s143 = sadd.s32 %s142, 1
      %p146 = scmp.eq.s32.totalorder %s19, 1
      %p147 = scmp.ne.s32.totalorder %s142, %s144
      %p148 = scmp.eq.s32.totalorder %s19, 0
      %p149 = por %p147, %p148
      %p150 = scmp.ne.s32.totalorder %s142, %s144
      %p151 = scmp.eq.s32.totalorder %s24, 1
      %p152 = por %p150, %p151
      %p153 = scmp.ne.s32.totalorder %s144, %s145
      %p154 = scmp.eq.s32.totalorder %s24, 0
      %p155 = por %p153, %p154
      %p156 = scmp.ne.s32.totalorder %s144, %s145
      %p157 = scmp.eq.s32.totalorder %s25, 1
      %p158 = por %p156, %p157
      %p160 = scmp.ne.s32.totalorder %s145, %s159
      %p161 = scmp.eq.s32.totalorder %s25, 0
      %p162 = por %p160, %p161
      %s164 = sadd.s32 %s163, 1
      %p167 = scmp.eq.s32.totalorder %s19, 1
      %p168 = scmp.ne.s32.totalorder %s163, %s165
      %p169 = scmp.eq.s32.totalorder %s19, 0
      %p170 = por %p168, %p169
      %p171 = scmp.ne.s32.totalorder %s163, %s165
      %p172 = scmp.eq.s32.totalorder %s24, 1
      %p173 = por %p171, %p172
      %p174 = scmp.ne.s32.totalorder %s165, %s166
      %p175 = scmp.eq.s32.totalorder %s24, 0
      %p176 = por %p174, %p175
      %p177 = scmp.ne.s32.totalorder %s165, %s166
      %p178 = scmp.eq.s32.totalorder %s25, 1
      %p179 = por %p177, %p178
      %p181 = scmp.ne.s32.totalorder %s166, %s180
      %p182 = scmp.eq.s32.totalorder %s25, 0
      %p183 = por %p181, %p182
      %s185 = sadd.s32 %s184, 1
      %p188 = scmp.eq.s32.totalorder %s19, 1
      %p189 = scmp.ne.s32.totalorder %s184, %s186
      %p190 = scmp.eq.s32.totalorder %s19, 0
      %p191 = por %p189, %p190
      %p192 = scmp.ne.s32.totalorder %s184, %s186
      %p193 = scmp.eq.s32.totalorder %s24, 1
      %p194 = por %p192, %p193
      %p195 = scmp.ne.s32.totalorder %s186, %s187
      %p196 = scmp.eq.s32.totalorder %s24, 0
      %p197 = por %p195, %p196
      %p198 = scmp.ne.s32.totalorder %s186, %s187
      %p199 = scmp.eq.s32.totalorder %s25, 1
      %p200 = por %p198, %p199
      %p202 = scmp.ne.s32.totalorder %s187, %s201
      %p203 = scmp.eq.s32.totalorder %s25, 0
      %p204 = por %p202, %p203
      %s206 = sadd.s32 %s205, 1
      %p209 = scmp.eq.s32.totalorder %s19, 1
      %p210 = scmp.ne.s32.totalorder %s205, %s207
      %p211 = scmp.eq.s32.totalorder %s19, 0
      %p212 = por %p210, %p211
      %p213 = scmp.ne.s32.totalorder %s205, %s207
      %p214 = scmp.eq.s32.totalorder %s24, 1
      %p215 = por %p213, %p214
      %p216 = scmp.ne.s32.totalorder %s207, %s208
      %p217 = scmp.eq.s32.totalorder %s24, 0
      %p218 = por %p216, %p217
      %p219 = scmp.ne.s32.totalorder %s207, %s208
      %p220 = scmp.eq.s32.totalorder %s25, 1
      %p221 = por %p219, %p220
      %p223 = scmp.ne.s32.totalorder %s208, %s222
      %p224 = scmp.eq.s32.totalorder %s25, 0
      %p225 = por %p223, %p224
      %s227 = sadd.s32 %s226, 1
      %p230 = scmp.eq.s32.totalorder %s19, 1
      %p231 = scmp.ne.s32.totalorder %s226, %s228
      %p232 = scmp.eq.s32.totalorder %s19, 0
      %p233 = por %p231, %p232
      %p234 = scmp.ne.s32.totalorder %s226, %s228
      %p235 = scmp.eq.s32.totalorder %s24, 1
      %p236 = por %p234, %p235
      %p237 = scmp.ne.s32.totalorder %s228, %s229
      %p238 = scmp.eq.s32.totalorder %s24, 0
      %p239 = por %p237, %p238
      %p240 = scmp.ne.s32.totalorder %s228, %s229
      %p241 = scmp.eq.s32.totalorder %s25, 1
      %p242 = por %p240, %p241
      %p244 = scmp.ne.s32.totalorder %s229, %s243
      %p245 = scmp.eq.s32.totalorder %s25, 0
      %p246 = por %p244, %p245
      %s248 = sadd.s32 %s247, 1
      %p251 = scmp.eq.s32.totalorder %s19, 1
      %p252 = scmp.ne.s32.totalorder %s247, %s249
      %p253 = scmp.eq.s32.totalorder %s19, 0
      %p254 = por %p252, %p253
      %p255 = scmp.ne.s32.totalorder %s247, %s249
      %p256 = scmp.eq.s32.totalorder %s24, 1
      %p257 = por %p255, %p256
      %p258 = scmp.ne.s32.totalorder %s249, %s250
      %p259 = scmp.eq.s32.totalorder %s24, 0
      %p260 = por %p258, %p259
      %p261 = scmp.ne.s32.totalorder %s249, %s250
      %p262 = scmp.eq.s32.totalorder %s25, 1
      %p263 = por %p261, %p262
      %p265 = scmp.ne.s32.totalorder %s250, %s264
      %p266 = scmp.eq.s32.totalorder %s25, 0
      %p267 = por %p265, %p266
      %s268 = ssub.s32 %s19, %s26
      %p269 = scmp.eq.s32.totalorder %s268, 0
      %s271 = sadd.s32 %s270, 1
      %s272 = scalar_select %p269, %s270, %s271
      %p275 = pneg %p269
      %p276 = scmp.eq.s32.totalorder %s19, 1
      %p277 = por %p275, %p276
      %p278 = scmp.ne.s32.totalorder %s270, %s273
      %p279 = scmp.eq.s32.totalorder %s19, 0
      %p280 = por %p278, %p279
      %p281 = scmp.ne.s32.totalorder %s270, %s273
      %p282 = scmp.eq.s32.totalorder %s24, 1
      %p283 = por %p281, %p282
      %p284 = scmp.ne.s32.totalorder %s273, %s274
      %p285 = scmp.eq.s32.totalorder %s24, 0
      %p286 = por %p284, %p285
      %p287 = scmp.ne.s32.totalorder %s273, %s274
      %p288 = scmp.eq.s32.totalorder %s25, 1
      %p289 = por %p287, %p288
      %p291 = scmp.ne.s32.totalorder %s274, %s290
      %p292 = scmp.eq.s32.totalorder %s25, 0
      %p293 = por %p291, %p292
      %p294 = scmp.le.s32.totalorder 1, %s19
      %p295 = scmp.lt.s32.totalorder %s19, 3
      %p296 = pnand %p294, %p295
      %p297 = pneg %p296
      // Predicated region
      $region9: #{_generate_impl.2} parent=5 // pred_check
        _
      $region10: #{_generate_impl.2} parent=5 // pred_check_branch
        %299 = sbr.rel (%p296) target = $region12
      $region11: #{_generate_impl.2} parent=5 // pred_region
        %s300 = ssub.s32 %s19, 1
        // Predicated region
        $region13: #{_generate_impl.2} parent=11 // pred_check
          %p301 = pneg %p92
        $region14: #{_generate_impl.2} parent=11 // pred_check_branch
          %303 = sbr.rel (%p301) target = $region16
        $region15: #{_generate_impl.2} parent=11 // pred_region
          %s305 = ssub.s32 6144, 6144
          %306 = vsyncadd [#allocation3], %s305
          %s307 = sshll.u32 [#allocation2], 4
          %s308 = int_to_ptr.vmem [resolvable:$true] %s307
          %313 = dma.hbm_to_vmem [thread:$0]  %s2, 6144, %s308, [#allocation3], 192, 192, 12
        $region16: #{_generate_impl.2} parent=11 // pred_fallthru
          _
        // Predicated region
        $region17: #{_generate_impl.2} parent=11 // pred_check
          %p314 = pneg %p113
        $region18: #{_generate_impl.2} parent=11 // pred_check_branch
          %316 = sbr.rel (%p314) target = $region20
        $region19: #{_generate_impl.2} parent=11 // pred_region
          _
        $region20: #{_generate_impl.2} parent=11 // pred_fallthru
          _
        // Predicated region
        $region21: #{_generate_impl.2} parent=11 // pred_check
          %p317 = pneg %p134
        $region22: #{_generate_impl.2} parent=11 // pred_check_branch
          %319 = sbr.rel (%p317) target = $region24
        $region23: #{_generate_impl.2} parent=11 // pred_region
          %s321 = ssub.s32 2048, 2048
          %322 = vsyncadd [#allocation5], %s321
          %s323 = sshll.u32 [#allocation4], 4
          %s324 = int_to_ptr.vmem [resolvable:$true] %s323
          %329 = dma.hbm_to_vmem [thread:$0]  %s4, 2048, %s324, [#allocation5], 64, 64, 4
        $region24: #{_generate_impl.2} parent=11 // pred_fallthru
          _
        // Predicated region
        $region25: #{_generate_impl.2} parent=11 // pred_check
          %p330 = pneg %p155
        $region26: #{_generate_impl.2} parent=11 // pred_check_branch
          %332 = sbr.rel (%p330) target = $region28
        $region27: #{_generate_impl.2} parent=11 // pred_region
          _
        $region28: #{_generate_impl.2} parent=11 // pred_fallthru
          _
        // Predicated region
        $region29: #{_generate_impl.2} parent=11 // pred_check
          %p333 = pneg %p176
        $region30: #{_generate_impl.2} parent=11 // pred_check_branch
          %335 = sbr.rel (%p333) target = $region32
        $region31: #{_generate_impl.2} parent=11 // pred_region
          _
        $region32: #{_generate_impl.2} parent=11 // pred_fallthru
          _
        // Predicated region
        $region33: #{_generate_impl.2} parent=11 // pred_check
          %p336 = pneg %p197
        $region34: #{_generate_impl.2} parent=11 // pred_check_branch
          %338 = sbr.rel (%p336) target = $region36
        $region35: #{_generate_impl.2} parent=11 // pred_region
          _
        $region36: #{_generate_impl.2} parent=11 // pred_fallthru
          _
        // Predicated region
        $region37: #{_generate_impl.2} parent=11 // pred_check
          %p339 = pneg %p218
        $region38: #{_generate_impl.2} parent=11 // pred_check_branch
          %341 = sbr.rel (%p339) target = $region40
        $region39: #{_generate_impl.2} parent=11 // pred_region
          %s343 = ssub.s32 4096, 4096
          %344 = vsyncadd [#allocation5], %s343
          %s345 = sshll.u32 [#allocation6], 4
          %s346 = int_to_ptr.vmem [resolvable:$true] %s345
          %351 = dma.hbm_to_vmem [thread:$0]  %s8, 4096, %s346, [#allocation5], 64, 64, 4
        $region40: #{_generate_impl.2} parent=11 // pred_fallthru
          _
        // Predicated region
        $region41: #{_generate_impl.2} parent=11 // pred_check
          %p352 = pneg %p239
        $region42: #{_generate_impl.2} parent=11 // pred_check_branch
          %354 = sbr.rel (%p352) target = $region44
        $region43: #{_generate_impl.2} parent=11 // pred_region
          _
        $region44: #{_generate_impl.2} parent=11 // pred_fallthru
          _
        // Predicated region
        $region45: #{_generate_impl.2} parent=11 // pred_check
          %p355 = pneg %p260
        $region46: #{_generate_impl.2} parent=11 // pred_check_branch
          %357 = sbr.rel (%p355) target = $region48
        $region47: #{_generate_impl.2} parent=11 // pred_region
          _
        $region48: #{_generate_impl.2} parent=11 // pred_fallthru
          _
      $region12: #{_generate_impl.2} parent=5 // pred_fallthru
        _
      %p358 = scmp.lt.s32.totalorder %s19, 2
      // Predicated region
      $region49: #{_generate_impl.2} parent=5 // pred_check
        %p359 = pneg %p358
      $region50: #{_generate_impl.2} parent=5 // pred_check_branch
        %361 = sbr.rel (%p359) target = $region52
      $region51: #{_generate_impl.2} parent=5 // pred_region
        // Predicated region
        $region53: #{_generate_impl.2} parent=51 // pred_check
          %p362 = pneg %p39
        $region54: #{_generate_impl.2} parent=51 // pred_check_branch
          %364 = sbr.rel (%p362) target = $region56
        $region55: #{_generate_impl.2} parent=51 // pred_region
          %p365 = scmp.lt.s32.totalorder %s19, 1
          %s366 = scalar_select %p365, %s19, 1
          %s367 = smul.addr %s366, 8
          %s368 = scalar_lea.vmem %s0, %s367
        $region56: #{_generate_impl.2} parent=51 // pred_fallthru
          _
        // Predicated region
        $region57: #{_generate_impl.2} parent=51 // pred_check
          %p369 = pneg %p65
        $region58: #{_generate_impl.2} parent=51 // pred_check_branch
          %371 = sbr.rel (%p369) target = $region60
        $region59: #{_generate_impl.2} parent=51 // pred_region
          %p372 = scmp.lt.s32.totalorder %s19, 1
          %s373 = scalar_select %p372, %s19, 1
          %s374 = scalar_lea.vmem %s1, %s373
        $region60: #{_generate_impl.2} parent=51 // pred_fallthru
          _
      $region52: #{_generate_impl.2} parent=5 // pred_fallthru
        _
      %p375 = scmp.le.s32.totalorder 1, %s19
      %p376 = scmp.lt.s32.totalorder %s19, 3
      %p377 = pnand %p375, %p376
      %p378 = pneg %p377
      // Predicated region
      $region61: #{_generate_impl.2} parent=5 // pred_check
        _
      $region62: #{_generate_impl.2} parent=5 // pred_check_branch
        %380 = sbr.rel (%p377) target = $region64
      $region63: #{_generate_impl.2} parent=5 // pred_region
        %s381 = ssub.s32 %s19, 1
        // Predicated region
        $region65: #{_generate_impl.2} parent=63 // pred_check
          %p382 = pneg %p92
        $region66: #{_generate_impl.2} parent=63 // pred_check_branch
          %384 = sbr.rel (%p382) target = $region68
        $region67: #{_generate_impl.2} parent=63 // pred_region
          %385 = dma.done [#allocation3], 6144
        $region68: #{_generate_impl.2} parent=63 // pred_fallthru
          _
        // Predicated region
        $region69: #{_generate_impl.2} parent=63 // pred_check
          %p386 = pneg %p134
        $region70: #{_generate_impl.2} parent=63 // pred_check_branch
          %388 = sbr.rel (%p386) target = $region72
        $region71: #{_generate_impl.2} parent=63 // pred_region
          %389 = dma.done [#allocation5], 2048
        $region72: #{_generate_impl.2} parent=63 // pred_fallthru
          _
        // Predicated region
        $region73: #{_generate_impl.2} parent=63 // pred_check
          %p390 = pneg %p218
        $region74: #{_generate_impl.2} parent=63 // pred_check_branch
          %392 = sbr.rel (%p390) target = $region76
        $region75: #{_generate_impl.2} parent=63 // pred_region
          %393 = dma.done [#allocation5], 4096
        $region76: #{_generate_impl.2} parent=63 // pred_fallthru
          _
        %p394 = scmp.lt.s32.totalorder %s24, 1
        %s395 = scalar_select %p394, %s24, 1
        %s396 = smul.addr %s395, 8
        %s397 = scalar_lea.vmem %s0, %s396
        %p398 = pneg %p45
        %p399 = pneg %p42
        %p400 = scmp.lt.s32.totalorder %s24, 1
        %s401 = scalar_select %p400, %s24, 1
        %s402 = scalar_lea.vmem %s1, %s401
        %p403 = pneg %p71
        %p404 = pneg %p68
        %p405 = pneg %p92
        %p406 = pneg %p89
        %p407 = pneg %p113
        %p408 = pneg %p110
        %p409 = pneg %p134
        %p410 = pneg %p131
        %p411 = pneg %p155
        %p412 = pneg %p152
        %p413 = pneg %p176
        %p414 = pneg %p173
        %p415 = pneg %p197
        %p416 = pneg %p194
        %p417 = pneg %p218
        %p418 = pneg %p215
        %p419 = pneg %p239
        %p420 = pneg %p236
        %p421 = pneg %p260
        %p422 = pneg %p257
        %p423 = pneg %p286
        %p424 = pneg %p283
        %p425 = scmp.lt.s32.totalorder %s24, 1
        %s426 = scalar_select %p425, %s24, 1
        %s427 = smul.addr %s426, 8
        %s428 = scalar_lea.vmem %s11, %s427
        %p429 = scmp.lt.s32.totalorder %s24, 1
        %s430 = scalar_select %p429, %s24, 1
        %s431 = smul.addr %s430, 8
        %s432 = scalar_lea.vmem %s0, %s431
        %p433 = scmp.lt.s32.totalorder %s24, 1
        %s434 = scalar_select %p433, %s24, 1
        %s435 = scalar_lea.vmem %s1, %s434
        %p436 = scmp.lt.s32.totalorder %s24, 1
        %s437 = scalar_select %p436, %s24, 1
        %s438 = smul.addr %s437, 8
        %s439 = scalar_lea.vmem %s11, %s438
        %v441 = vlaneseq
        %v442 = vand.u32 %v441, 127
        %vm443 = vcmp.ge.s32.totalorder %v442, 0
        %vm444 = vcmp.lt.s32.totalorder %v442, 32
        %vm445 = vmand %vm443, %vm444
        %v446 = vsel %vm445, 1.0, 0.0
        %vm447 = vcmp.ge.s32.totalorder %v442, 32
        %vm448 = vcmp.lt.s32.totalorder %v442, 64
        %vm449 = vmand %vm447, %vm448
        %v450 = vsel %vm449, 1.0, 0.0
        %vm451 = vcmp.ge.s32.totalorder %v442, 64
        %vm452 = vcmp.lt.s32.totalorder %v442, 96
        %vm453 = vmand %vm451, %vm452
        %v454 = vsel %vm453, 1.0, 0.0
        %vm455 = vcmp.ge.s32.totalorder %v442, 96
        %vm456 = vcmp.lt.s32.totalorder %v442, 128
        %vm457 = vmand %vm455, %vm456
        %v458 = vsel %vm457, 1.0, 0.0
        %v459 = vld [vmem:[%s432] sm:$0xff]
        %v460 = vld [vmem:[%s435] sm:$0x1]
        %v461 = vld [vmem:[%s10] sm:$0xf]
        %v462 = vpack.c.bf16 %v459, %v459
        %v463 = vld [vmem:[#allocation2] sm:$0xff]
        %v464 = vld [vmem:[#allocation2 + $0x8] sm:$0xf]
        %v465 = vld [vmem:[#allocation2 + $0xc] sm:$0xff]
        %v466 = vld [vmem:[#allocation2 + $0x14] sm:$0xf]
        %v467 = vld [vmem:[#allocation2 + $0x18] sm:$0xff]
        %v468 = vld [vmem:[#allocation2 + $0x20] sm:$0xf]
        %v469 = vld [vmem:[#allocation2 + $0x24] sm:$0xff]
        %v470 = vld [vmem:[#allocation2 + $0x2c] sm:$0xf]
        %v471 = vld [vmem:[#allocation2 + $0x30] sm:$0xff]
        %v472 = vld [vmem:[#allocation2 + $0x38] sm:$0xf]
        %v473 = vld [vmem:[#allocation2 + $0x3c] sm:$0xff]
        %v474 = vld [vmem:[#allocation2 + $0x44] sm:$0xf]
        %v475 = vld [vmem:[#allocation2 + $0x48] sm:$0xff]
        %v476 = vld [vmem:[#allocation2 + $0x50] sm:$0xf]
        %v477 = vld [vmem:[#allocation2 + $0x54] sm:$0xff]
        %v478 = vld [vmem:[#allocation2 + $0x5c] sm:$0xf]
        %v479 = vld [vmem:[#allocation2 + $0x60] sm:$0xff]
        %v480 = vld [vmem:[#allocation2 + $0x68] sm:$0xf]
        %v481 = vld [vmem:[#allocation2 + $0x6c] sm:$0xff]
        %v482 = vld [vmem:[#allocation2 + $0x74] sm:$0xf]
        %v483 = vld [vmem:[#allocation2 + $0x78] sm:$0xff]
        %v484 = vld [vmem:[#allocation2 + $0x80] sm:$0xf]
        %v485 = vld [vmem:[#allocation2 + $0x84] sm:$0xff]
        %v486 = vld [vmem:[#allocation2 + $0x8c] sm:$0xf]
        %v487 = vld [vmem:[#allocation2 + $0x90] sm:$0xff]
        %v488 = vld [vmem:[#allocation2 + $0x98] sm:$0xf]
        %v489 = vld [vmem:[#allocation2 + $0x9c] sm:$0xff]
        %v490 = vld [vmem:[#allocation2 + $0xa4] sm:$0xf]
        %v491 = vld [vmem:[#allocation2 + $0xa8] sm:$0xff]
        %v492 = vld [vmem:[#allocation2 + $0xb0] sm:$0xf]
        %v493 = vld [vmem:[#allocation2 + $0xb4] sm:$0xff]
        %v494 = vld [vmem:[#allocation2 + $0xbc] sm:$0xf]
        %v495 = vld [vmem:[%s3] sm:$0x7]
        %v497 = vlaneseq
        %v498 = vshrl.u32 %v497, 7
        %v499 = vsub.s32 0, %v498
        %v500 = vrot.slane %v495, %v499
        %v501 = vlaneseq
        %v502 = vshrl.u32 %v501, 7
        %v503 = vsub.s32 1, %v502
        %v504 = vrot.slane %v495, %v503
        %v505 = vlaneseq
        %v506 = vshrl.u32 %v505, 7
        %v507 = vsub.s32 2, %v506
        %v508 = vrot.slane %v495, %v507
        %v544 = vunpack.c.l.b16 %v463
        %v545 = vunpack.c.h.b16 %v463
        %v546 = vunpack.c.l.b16 %v464
        %v547 = vunpack.c.l.b16 %v465
        %v548 = vunpack.c.h.b16 %v465
        %v549 = vunpack.c.l.b16 %v466
        %v550 = vunpack.c.l.b16 %v467
        %v551 = vunpack.c.h.b16 %v467
        %v552 = vunpack.c.l.b16 %v468
        %v553 = vunpack.c.l.b16 %v469
        %v554 = vunpack.c.h.b16 %v469
        %v555 = vunpack.c.l.b16 %v470
        %v556 = vunpack.c.l.b16 %v471
        %v557 = vunpack.c.h.b16 %v471
        %v558 = vunpack.c.l.b16 %v472
        %v559 = vunpack.c.l.b16 %v473
        %v560 = vunpack.c.h.b16 %v473
        %v561 = vunpack.c.l.b16 %v474
        %v562 = vunpack.c.l.b16 %v475
        %v563 = vunpack.c.h.b16 %v475
        %v564 = vunpack.c.l.b16 %v476
        %v565 = vunpack.c.l.b16 %v477
        %v566 = vunpack.c.h.b16 %v477
        %v567 = vunpack.c.l.b16 %v478
        %v568 = vunpack.c.l.b16 %v479
        %v569 = vunpack.c.h.b16 %v479
        %v570 = vunpack.c.l.b16 %v480
        %v571 = vunpack.c.l.b16 %v481
        %v572 = vunpack.c.h.b16 %v481
        %v573 = vunpack.c.l.b16 %v482
        %v574 = vunpack.c.l.b16 %v483
        %v575 = vunpack.c.h.b16 %v483
        %v576 = vunpack.c.l.b16 %v484
        %v577 = vunpack.c.l.b16 %v485
        %v578 = vunpack.c.h.b16 %v485
        %v579 = vunpack.c.l.b16 %v486
        %v580 = vunpack.c.l.b16 %v487
        %v581 = vunpack.c.h.b16 %v487
        %v582 = vunpack.c.l.b16 %v488
        %v583 = vunpack.c.l.b16 %v489
        %v584 = vunpack.c.h.b16 %v489
        %v585 = vunpack.c.l.b16 %v490
        %v586 = vunpack.c.l.b16 %v491
        %v587 = vunpack.c.h.b16 %v491
        %v588 = vunpack.c.l.b16 %v492
        %v589 = vunpack.c.l.b16 %v493
        %v590 = vunpack.c.h.b16 %v493
        %v591 = vunpack.c.l.b16 %v494
        %v592 = vpack.c.b16 %v547, %v544
        %v593 = vpack.c.b16 %v548, %v545
        %v594 = vpack.c.b16 %v549, %v546
        %v595 = vpack.c.b16 %v553, %v550
        %v596 = vpack.c.b16 %v554, %v551
        %v597 = vpack.c.b16 %v555, %v552
        %v598 = vpack.c.b16 %v559, %v556
        %v599 = vpack.c.b16 %v560, %v557
        %v600 = vpack.c.b16 %v561, %v558
        %v601 = vpack.c.b16 %v565, %v562
        %v602 = vpack.c.b16 %v566, %v563
        %v603 = vpack.c.b16 %v567, %v564
        %v604 = vpack.c.b16 %v571, %v568
        %v605 = vpack.c.b16 %v572, %v569
        %v606 = vpack.c.b16 %v573, %v570
        %v607 = vpack.c.b16 %v577, %v574
        %v608 = vpack.c.b16 %v578, %v575
        %v609 = vpack.c.b16 %v579, %v576
        %v610 = vpack.c.b16 %v583, %v580
        %v611 = vpack.c.b16 %v584, %v581
        %v612 = vpack.c.b16 %v585, %v582
        %v613 = vpack.c.b16 %v589, %v586
        %v614 = vpack.c.b16 %v590, %v587
        %v615 = vpack.c.b16 %v591, %v588
        %640 = vmatprep.subr.bf16.mxu0 %v593
        %641 = vmatpush1.bf16.msra.mxu0 %v592
        %642 = vmatprep.subr.bf16.mxu0 %v596
        %643 = vmatpush1.bf16.msra.mxu0 %v595
        %644 = vmatprep.subr.bf16.mxu0 %v599
        %645 = vmatpush1.bf16.msra.mxu0 %v598
        %646 = vmatprep.subr.bf16.mxu0 %v602
        %647 = vmatpush1.bf16.msra.mxu0 %v601
        %648 = vmatprep.subr.bf16.mxu0 %v605
        %649 = vmatpush1.bf16.msra.mxu0 %v604
        %650 = vmatprep.subr.bf16.mxu0 %v608
        %651 = vmatpush1.bf16.msra.mxu0 %v607
        %652 = vmatprep.subr.bf16.mxu0 %v611
        %653 = vmatpush1.bf16.msra.mxu0 %v610
        %654 = vmatprep.subr.bf16.mxu0 %v614
        %655 = vmatpush1.bf16.msra.mxu0 %v613
        %656 = vmatprep.subr.bf16.mxu0 0
        %657 = vmatpush1.bf16.msra.mxu0 0
        %658 = vmatprep.subr.bf16.mxu0 0
        %659 = vmatpush1.bf16.msra.mxu0 0
        %660 = vmatprep.subr.bf16.mxu0 0
        %661 = vmatpush1.bf16.msra.mxu0 0
        %662 = vmatprep.subr.bf16.mxu0 0
        %663 = vmatpush1.bf16.msra.mxu0 0
        %664 = vmatprep.subr.bf16.mxu0 0
        %665 = vmatpush1.bf16.msra.mxu0 0
        %666 = vmatprep.subr.bf16.mxu0 0
        %667 = vmatpush1.bf16.msra.mxu0 0
        %668 = vmatprep.subr.bf16.mxu0 0
        %669 = vmatpush1.bf16.msra.mxu0 0
        %670 = vmatprep.subr.bf16.mxu0 0
        %671 = vmatpush1.bf16.msra.mxu0 0
        %672 = vmatprep.mubr.bf16.mxu0 0
        %673 = vmatmul.mubr.bf16.gmra.mrb[0].mxu0 %v462
        %v674 = vpop.f32.mrb[0].mxu0
        %v675 = vadd.f32 %v500, %v674
        %v676 = vpop.f32.mrb[0].mxu0
        %v677 = vadd.f32 %v504, %v676
        %v678 = vpop.f32.mrb[0].mxu0
        %v679 = vpop.f32.mrb[0].mxu0
        %680 = vdwg.mxu0
        %681 = vmatprep.subr.bf16.mxu0 0
        %682 = vmatpush1.bf16.msra.mxu0 %v594
        %683 = vmatprep.subr.bf16.mxu0 0
        %684 = vmatpush1.bf16.msra.mxu0 %v597
        %685 = vmatprep.subr.bf16.mxu0 0
        %686 = vmatpush1.bf16.msra.mxu0 %v600
        %687 = vmatprep.subr.bf16.mxu0 0
        %688 = vmatpush1.bf16.msra.mxu0 %v603
        %689 = vmatprep.subr.bf16.mxu0 0
        %690 = vmatpush1.bf16.msra.mxu0 %v606
        %691 = vmatprep.subr.bf16.mxu0 0
        %692 = vmatpush1.bf16.msra.mxu0 %v609
        %693 = vmatprep.subr.bf16.mxu0 0
        %694 = vmatpush1.bf16.msra.mxu0 %v612
        %695 = vmatprep.subr.bf16.mxu0 0
        %696 = vmatpush1.bf16.msra.mxu0 %v615
        %697 = vmatprep.subr.bf16.mxu0 0
        %698 = vmatpush1.bf16.msra.mxu0 0
        %699 = vmatprep.subr.bf16.mxu0 0
        %700 = vmatpush1.bf16.msra.mxu0 0
        %701 = vmatprep.subr.bf16.mxu0 0
        %702 = vmatpush1.bf16.msra.mxu0 0
        %703 = vmatprep.subr.bf16.mxu0 0
        %704 = vmatpush1.bf16.msra.mxu0 0
        %705 = vmatprep.subr.bf16.mxu0 0
        %706 = vmatpush1.bf16.msra.mxu0 0
        %707 = vmatprep.subr.bf16.mxu0 0
        %708 = vmatpush1.bf16.msra.mxu0 0
        %709 = vmatprep.subr.bf16.mxu0 0
        %710 = vmatpush1.bf16.msra.mxu0 0
        %711 = vmatprep.subr.bf16.mxu0 0
        %712 = vmatpush1.bf16.msra.mxu0 0
        %713 = vmatprep.mubr.bf16.mxu0 0
        %714 = vmatmul.mubr.bf16.gmra.mrb[0].mxu0 %v462
        %v715 = vpop.f32.mrb[0].mxu0
        %v716 = vadd.f32 %v508, %v715
        %v717 = vpop.f32.mrb[0].mxu0
        %v718 = vpop.f32.mrb[0].mxu0
        %v719 = vpop.f32.mrb[0].mxu0
        %720 = vdwg.mxu0
        %v721 = vmul.f32 %v675, %v446
        %v722 = vmul.f32 %v675, %v450
        %v723 = vmul.f32 %v675, %v454
        %v724 = vmul.f32 %v675, %v458
        %v725 = vpack.c.bf16 %v722, %v721
        %v726 = vpack.c.bf16 %v724, %v723
        %v727 = vpack.c.bf16 %v677, %v677
        %728 = vmatprep.subr.bf16.mxu0 0
        %729 = vmatpush1.bf16.xpose.msra.mxu0 %v727
        %730 = vmatprep.subr.bf16.mxu0 0
        %731 = vmatpush1.bf16.xpose.msra.mxu0 0
        %732 = vmatprep.subr.bf16.mxu0 0
        %733 = vmatpush1.bf16.xpose.msra.mxu0 0
        %734 = vmatprep.subr.bf16.mxu0 0
        %735 = vmatpush1.bf16.xpose.msra.mxu0 0
        %736 = vmatprep.subr.bf16.mxu0 0
        %737 = vmatpush1.bf16.xpose.msra.mxu0 0
        %738 = vmatprep.subr.bf16.mxu0 0
        %739 = vmatpush1.bf16.xpose.msra.mxu0 0
        %740 = vmatprep.subr.bf16.mxu0 0
        %741 = vmatpush1.bf16.xpose.msra.mxu0 0
        %742 = vmatprep.subr.bf16.mxu0 0
        %743 = vmatpush1.bf16.xpose.msra.mxu0 0
        %744 = vmatprep.subr.bf16.mxu0 0
        %745 = vmatpush1.bf16.xpose.msra.mxu0 0
        %746 = vmatprep.subr.bf16.mxu0 0
        %747 = vmatpush1.bf16.xpose.msra.mxu0 0
        %748 = vmatprep.subr.bf16.mxu0 0
        %749 = vmatpush1.bf16.xpose.msra.mxu0 0
        %750 = vmatprep.subr.bf16.mxu0 0
        %751 = vmatpush1.bf16.xpose.msra.mxu0 0
        %752 = vmatprep.subr.bf16.mxu0 0
        %753 = vmatpush1.bf16.xpose.msra.mxu0 0
        %754 = vmatprep.subr.bf16.mxu0 0
        %755 = vmatpush1.bf16.xpose.msra.mxu0 0
        %756 = vmatprep.subr.bf16.mxu0 0
        %757 = vmatpush1.bf16.xpose.msra.mxu0 0
        %758 = vmatprep.subr.bf16.mxu0 0
        %759 = vmatpush1.bf16.xpose.msra.mxu0 0
        %760 = vmatprep.mubr.bf16.mxu0 0
        %761 = vmatmul.mubr.bf16.gmra.mrb[0].mxu0 %v725
        %v762 = vpop.f32.mrb[0].mxu0
        %v763 = vadd.f32 0.0, %v762
        %v764 = vpop.f32.mrb[0].mxu0
        %v765 = vpop.f32.mrb[0].mxu0
        %v766 = vadd.f32 0.0, %v765
        %v767 = vpop.f32.mrb[0].mxu0
        %768 = vmatprep.mubr.bf16.mxu0 0
        %769 = vmatmul.mubr.bf16.gmra.mrb[0].mxu0 %v726
        %v770 = vpop.f32.mrb[0].mxu0
        %v771 = vadd.f32 0.0, %v770
        %v772 = vpop.f32.mrb[0].mxu0
        %v773 = vpop.f32.mrb[0].mxu0
        %v774 = vadd.f32 0.0, %v773
        %v775 = vpop.f32.mrb[0].mxu0
        %776 = vdwg.mxu0
        %v777 = vmul.f32 %v763, 0.17677669
        %v778 = vmul.f32 %v766, 0.17677669
        %v779 = vmul.f32 %v771, 0.17677669
        %v780 = vmul.f32 %v774, 0.17677669
        %v782 = vlaneseq
        %v783 = vshrl.u32 %v782, 7
        %v784 = vsub.s32 0, %v783
        %v785 = vrot.slane %v460, %v784
        %v787 = vadd.f32 %v777, %v785
        %v788 = vadd.f32 %v778, %v785
        %v789 = vadd.f32 %v779, %v785
        %v790 = vadd.f32 %v780, %v785
        %vm791 = vcmask 64512
        %v792 = vsel %vm791, %v787, -inf
        %793 = vmax.xlane.f32.xlu0 %v792
        %v794 = vpop.xlane.xlu0 %793
        %v795 = vsel %vm791, %v788, -inf
        %796 = vmax.xlane.f32.xlu0 %v795
        %v797 = vpop.xlane.xlu0 %796
        %v798 = vsel %vm791, %v789, -inf
        %799 = vmax.xlane.f32.xlu0 %v798
        %v800 = vpop.xlane.xlu0 %799
        %v801 = vsel %vm791, %v790, -inf
        %802 = vmax.xlane.f32.xlu0 %v801
        %v803 = vpop.xlane.xlu0 %802
        %v804 = vsub.f32 %v787, %v794
        %v805 = vsub.f32 %v788, %v797
        %v806 = vsub.f32 %v789, %v800
        %v807 = vsub.f32 %v790, %v803
        %v808 = vmul.f32 %v804, 1.442695
        %v809 = vpow.pop %v808
        %v810 = vmul.f32 %v805, 1.442695
        %v811 = vpow.pop %v810
        %v812 = vmul.f32 %v806, 1.442695
        %v813 = vpow.pop %v812
        %v814 = vmul.f32 %v807, 1.442695
        %v815 = vpow.pop %v814
        %v816 = vsel %vm791, %v809, 0.0
        %817 = vadd.xlane.f32.xlu0 %v816
        %v818 = vpop.xlane.xlu0 %817
        %v819 = vsel %vm791, %v811, 0.0
        %820 = vadd.xlane.f32.xlu0 %v819
        %v821 = vpop.xlane.xlu0 %820
        %v822 = vsel %vm791, %v813, 0.0
        %823 = vadd.xlane.f32.xlu0 %v822
        %v824 = vpop.xlane.xlu0 %823
        %v825 = vsel %vm791, %v815, 0.0
        %826 = vadd.xlane.f32.xlu0 %v825
        %v827 = vpop.xlane.xlu0 %826
        %v828 = vrcp.pop %v818
        %v829 = vrcp.pop %v821
        %v830 = vrcp.pop %v824
        %v831 = vrcp.pop %v827
        %v832 = vmul.f32 %v809, %v828
        %v833 = vmul.f32 %v811, %v829
        %v834 = vmul.f32 %v813, %v830
        %v835 = vmul.f32 %v815, %v831
        %v836 = vpack.c.bf16 %v833, %v832
        %v837 = vpack.c.bf16 %v835, %v834
        %v838 = vpack.c.bf16 %v716, %v716
        %v840 = vsel %vm791, %v836, 0
        %v843 = vsel %vm791, %v837, 0
        %vm845 = vcmask 1043456
        %v847 = vsel %vm845, %v838, 0
        %849 = vmatprep.subr.bf16.mxu0 0
        %850 = vmatpush1.bf16.msra.mxu0 %v847
        %851 = vmatprep.subr.bf16.mxu0 0
        %852 = vmatpush1.bf16.msra.mxu0 0
        %853 = vmatprep.subr.bf16.mxu0 0
        %854 = vmatpush1.bf16.msra.mxu0 0
        %855 = vmatprep.subr.bf16.mxu0 0
        %856 = vmatpush1.bf16.msra.mxu0 0
        %857 = vmatprep.subr.bf16.mxu0 0
        %858 = vmatpush1.bf16.msra.mxu0 0
        %859 = vmatprep.subr.bf16.mxu0 0
        %860 = vmatpush1.bf16.msra.mxu0 0
        %861 = vmatprep.subr.bf16.mxu0 0
        %862 = vmatpush1.bf16.msra.mxu0 0
        %863 = vmatprep.subr.bf16.mxu0 0
        %864 = vmatpush1.bf16.msra.mxu0 0
        %865 = vmatprep.subr.bf16.mxu0 0
        %866 = vmatpush1.bf16.msra.mxu0 0
        %867 = vmatprep.subr.bf16.mxu0 0
        %868 = vmatpush1.bf16.msra.mxu0 0
        %869 = vmatprep.subr.bf16.mxu0 0
        %870 = vmatpush1.bf16.msra.mxu0 0
        %871 = vmatprep.subr.bf16.mxu0 0
        %872 = vmatpush1.bf16.msra.mxu0 0
        %873 = vmatprep.subr.bf16.mxu0 0
        %874 = vmatpush1.bf16.msra.mxu0 0
        %875 = vmatprep.subr.bf16.mxu0 0
        %876 = vmatpush1.bf16.msra.mxu0 0
        %877 = vmatprep.subr.bf16.mxu0 0
        %878 = vmatpush1.bf16.msra.mxu0 0
        %879 = vmatprep.subr.bf16.mxu0 0
        %880 = vmatpush1.bf16.msra.mxu0 0
        %881 = vmatprep.mubr.bf16.mxu0 0
        %882 = vmatmul.mubr.bf16.gmra.mrb[0].mxu0 %v840
        %v883 = vpop.f32.mrb[0].mxu0
        %v884 = vadd.f32 0.0, %v883
        %v885 = vpop.f32.mrb[0].mxu0
        %v886 = vpop.f32.mrb[0].mxu0
        %v887 = vadd.f32 0.0, %v886
        %v888 = vpop.f32.mrb[0].mxu0
        %889 = vmatprep.mubr.bf16.mxu0 0
        %890 = vmatmul.mubr.bf16.gmra.mrb[0].mxu0 %v843
        %v891 = vpop.f32.mrb[0].mxu0
        %v892 = vadd.f32 0.0, %v891
        %v893 = vpop.f32.mrb[0].mxu0
        %v894 = vpop.f32.mrb[0].mxu0
        %v895 = vadd.f32 0.0, %v894
        %v896 = vpop.f32.mrb[0].mxu0
        %897 = vdwg.mxu0
        %v898 = vmul.f32 %v884, %v446
        %v899 = vmul.f32 %v887, %v450
        %v900 = vadd.f32 %v898, %v899
        %v901 = vmul.f32 %v892, %v454
        %v902 = vadd.f32 %v900, %v901
        %v903 = vmul.f32 %v895, %v458
        %v904 = vadd.f32 %v902, %v903
        %v905 = vpack.c.bf16 %v904, %v904
        %v906 = vld [vmem:[#allocation4] sm:$0xf]
        %v907 = vld [vmem:[#allocation4 + $0x4] sm:$0xf]
        %v908 = vld [vmem:[#allocation4 + $0x8] sm:$0xf]
        %v909 = vld [vmem:[#allocation4 + $0xc] sm:$0xf]
        %v910 = vld [vmem:[#allocation4 + $0x10] sm:$0xf]
        %v911 = vld [vmem:[#allocation4 + $0x14] sm:$0xf]
        %v912 = vld [vmem:[#allocation4 + $0x18] sm:$0xf]
        %v913 = vld [vmem:[#allocation4 + $0x1c] sm:$0xf]
        %v914 = vld [vmem:[#allocation4 + $0x20] sm:$0xf]
        %v915 = vld [vmem:[#allocation4 + $0x24] sm:$0xf]
        %v916 = vld [vmem:[#allocation4 + $0x28] sm:$0xf]
        %v917 = vld [vmem:[#allocation4 + $0x2c] sm:$0xf]
        %v918 = vld [vmem:[#allocation4 + $0x30] sm:$0xf]
        %v919 = vld [vmem:[#allocation4 + $0x34] sm:$0xf]
        %v920 = vld [vmem:[#allocation4 + $0x38] sm:$0xf]
        %v921 = vld [vmem:[#allocation4 + $0x3c] sm:$0xf]
        %v922 = vld [vmem:[%s5] sm:$0x1]
        %v924 = vlaneseq
        %v925 = vshrl.u32 %v924, 7
        %v926 = vsub.s32 0, %v925
        %v927 = vrot.slane %v922, %v926
        %v945 = vunpack.c.l.b16 %v906
        %v946 = vunpack.c.l.b16 %v907
        %v947 = vunpack.c.l.b16 %v908
        %v948 = vunpack.c.l.b16 %v909
        %v949 = vunpack.c.l.b16 %v910
        %v950 = vunpack.c.l.b16 %v911
        %v951 = vunpack.c.l.b16 %v912
        %v952 = vunpack.c.l.b16 %v913
        %v953 = vunpack.c.l.b16 %v914
        %v954 = vunpack.c.l.b16 %v915
        %v955 = vunpack.c.l.b16 %v916
        %v956 = vunpack.c.l.b16 %v917
        %v957 = vunpack.c.l.b16 %v918
        %v958 = vunpack.c.l.b16 %v919
        %v959 = vunpack.c.l.b16 %v920
        %v960 = vunpack.c.l.b16 %v921
        %v961 = vpack.c.b16 %v946, %v945
        %v962 = vpack.c.b16 %v948, %v947
        %v963 = vpack.c.b16 %v950, %v949
        %v964 = vpack.c.b16 %v952, %v951
        %v965 = vpack.c.b16 %v954, %v953
        %v966 = vpack.c.b16 %v956, %v955
        %v967 = vpack.c.b16 %v958, %v957
        %v968 = vpack.c.b16 %v960, %v959
        %977 = vmatprep.subr.bf16.mxu0 0
        %978 = vmatpush1.bf16.msra.mxu0 %v961
        %979 = vmatprep.subr.bf16.mxu0 0
        %980 = vmatpush1.bf16.msra.mxu0 %v962
        %981 = vmatprep.subr.bf16.mxu0 0
        %982 = vmatpush1.bf16.msra.mxu0 %v963
        %983 = vmatprep.subr.bf16.mxu0 0
        %984 = vmatpush1.bf16.msra.mxu0 %v964
        %985 = vmatprep.subr.bf16.mxu0 0
        %986 = vmatpush1.bf16.msra.mxu0 %v965
        %987 = vmatprep.subr.bf16.mxu0 0
        %988 = vmatpush1.bf16.msra.mxu0 %v966
        %989 = vmatprep.subr.bf16.mxu0 0
        %990 = vmatpush1.bf16.msra.mxu0 %v967
        %991 = vmatprep.subr.bf16.mxu0 0
        %992 = vmatpush1.bf16.msra.mxu0 %v968
        %993 = vmatprep.subr.bf16.mxu0 0
        %994 = vmatpush1.bf16.msra.mxu0 0
        %995 = vmatprep.subr.bf16.mxu0 0
        %996 = vmatpush1.bf16.msra.mxu0 0
        %997 = vmatprep.subr.bf16.mxu0 0
        %998 = vmatpush1.bf16.msra.mxu0 0
        %999 = vmatprep.subr.bf16.mxu0 0
        %1000 = vmatpush1.bf16.msra.mxu0 0
        %1001 = vmatprep.subr.bf16.mxu0 0
        %1002 = vmatpush1.bf16.msra.mxu0 0
        %1003 = vmatprep.subr.bf16.mxu0 0
        %1004 = vmatpush1.bf16.msra.mxu0 0
        %1005 = vmatprep.subr.bf16.mxu0 0
        %1006 = vmatpush1.bf16.msra.mxu0 0
        %1007 = vmatprep.subr.bf16.mxu0 0
        %1008 = vmatpush1.bf16.msra.mxu0 0
        %1009 = vmatprep.mubr.bf16.mxu0 0
        %1010 = vmatmul.mubr.bf16.gmra.mrb[0].mxu0 %v905
        %v1011 = vpop.f32.mrb[0].mxu0
        %v1012 = vadd.f32 %v927, %v1011
        %v1013 = vpop.f32.mrb[0].mxu0
        %v1014 = vpop.f32.mrb[0].mxu0
        %v1015 = vpop.f32.mrb[0].mxu0
        %1016 = vdwg.mxu0
        %v1017 = vadd.f32 %v459, %v1012
        %1018 = vadd.xlane.f32.xlu0 %v1017
        %v1019 = vpop.xlane.xlu0 %1018
        %v1020 = vrcp.pop 128.0
        %v1021 = vmul.f32 %v1019, %v1020
        %v1022 = vsub.f32 %v1017, %v1021
        %v1023 = vmul.f32 %v1022, %v1022
        %1024 = vadd.xlane.f32.xlu0 %v1023
        %v1025 = vpop.xlane.xlu0 %1024
        %v1026 = vmul.f32 %v1025, %v1020
        %v1027 = vadd.f32 %v1026, 1e-05
        %v1028 = vrsqrt.pop %v1027
        %v1029 = vmul.f32 %v1022, %v1028
        %v1030 = vlaneseq
        %v1031 = vshrl.u32 %v1030, 7
        %v1032 = vsub.s32 0, %v1031
        %v1033 = vrot.slane %v461, %v1032
        %v1034 = vmul.f32 %v1029, %v1033
        %v1035 = vlaneseq
        %v1036 = vshrl.u32 %v1035, 7
        %v1037 = vsub.s32 1, %v1036
        %v1038 = vrot.slane %v461, %v1037
        %v1039 = vadd.f32 %v1034, %v1038
        %v1040 = vpack.c.bf16 %v1039, %v1039
        %v1041 = vld [vmem:[%s6] sm:$0xff]
        %v1042 = vld [vmem:[%s6 + $0x8] sm:$0xff]
        %v1043 = vld [vmem:[%s6 + $0x10] sm:$0xff]
        %v1044 = vld [vmem:[%s6 + $0x18] sm:$0xff]
        %v1045 = vld [vmem:[%s6 + $0x20] sm:$0xff]
        %v1046 = vld [vmem:[%s6 + $0x28] sm:$0xff]
        %v1047 = vld [vmem:[%s6 + $0x30] sm:$0xff]
        %v1048 = vld [vmem:[%s6 + $0x38] sm:$0xff]
        %v1049 = vld [vmem:[%s6 + $0x40] sm:$0xff]
        %v1050 = vld [vmem:[%s6 + $0x48] sm:$0xff]
        %v1051 = vld [vmem:[%s6 + $0x50] sm:$0xff]
        %v1052 = vld [vmem:[%s6 + $0x58] sm:$0xff]
        %v1053 = vld [vmem:[%s6 + $0x60] sm:$0xff]
        %v1054 = vld [vmem:[%s6 + $0x68] sm:$0xff]
        %v1055 = vld [vmem:[%s6 + $0x70] sm:$0xff]
        %v1056 = vld [vmem:[%s6 + $0x78] sm:$0xff]
        %v1057 = vld [vmem:[%s7] sm:$0x3]
        %v1059 = vlaneseq
        %v1060 = vshrl.u32 %v1059, 7
        %v1061 = vsub.s32 0, %v1060
        %v1062 = vrot.slane %v1057, %v1061
        %v1063 = vlaneseq
        %v1064 = vshrl.u32 %v1063, 7
        %v1065 = vsub.s32 1, %v1064
        %v1066 = vrot.slane %v1057, %v1065
        %v1085 = vunpack.c.l.b16 %v1041
        %v1086 = vunpack.c.h.b16 %v1041
        %v1087 = vunpack.c.l.b16 %v1042
        %v1088 = vunpack.c.h.b16 %v1042
        %v1089 = vunpack.c.l.b16 %v1043
        %v1090 = vunpack.c.h.b16 %v1043
        %v1091 = vunpack.c.l.b16 %v1044
        %v1092 = vunpack.c.h.b16 %v1044
        %v1093 = vunpack.c.l.b16 %v1045
        %v1094 = vunpack.c.h.b16 %v1045
        %v1095 = vunpack.c.l.b16 %v1046
        %v1096 = vunpack.c.h.b16 %v1046
        %v1097 = vunpack.c.l.b16 %v1047
        %v1098 = vunpack.c.h.b16 %v1047
        %v1099 = vunpack.c.l.b16 %v1048
        %v1100 = vunpack.c.h.b16 %v1048
        %v1101 = vunpack.c.l.b16 %v1049
        %v1102 = vunpack.c.h.b16 %v1049
        %v1103 = vunpack.c.l.b16 %v1050
        %v1104 = vunpack.c.h.b16 %v1050
        %v1105 = vunpack.c.l.b16 %v1051
        %v1106 = vunpack.c.h.b16 %v1051
        %v1107 = vunpack.c.l.b16 %v1052
        %v1108 = vunpack.c.h.b16 %v1052
        %v1109 = vunpack.c.l.b16 %v1053
        %v1110 = vunpack.c.h.b16 %v1053
        %v1111 = vunpack.c.l.b16 %v1054
        %v1112 = vunpack.c.h.b16 %v1054
        %v1113 = vunpack.c.l.b16 %v1055
        %v1114 = vunpack.c.h.b16 %v1055
        %v1115 = vunpack.c.l.b16 %v1056
        %v1116 = vunpack.c.h.b16 %v1056
        %v1117 = vpack.c.b16 %v1087, %v1085
        %v1118 = vpack.c.b16 %v1088, %v1086
        %v1119 = vpack.c.b16 %v1091, %v1089
        %v1120 = vpack.c.b16 %v1092, %v1090
        %v1121 = vpack.c.b16 %v1095, %v1093
        %v1122 = vpack.c.b16 %v1096, %v1094
        %v1123 = vpack.c.b16 %v1099, %v1097
        %v1124 = vpack.c.b16 %v1100, %v1098
        %v1125 = vpack.c.b16 %v1103, %v1101
        %v1126 = vpack.c.b16 %v1104, %v1102
        %v1127 = vpack.c.b16 %v1107, %v1105
        %v1128 = vpack.c.b16 %v1108, %v1106
        %v1129 = vpack.c.b16 %v1111, %v1109
        %v1130 = vpack.c.b16 %v1112, %v1110
        %v1131 = vpack.c.b16 %v1115, %v1113
        %v1132 = vpack.c.b16 %v1116, %v1114
        %1149 = vmatprep.subr.bf16.mxu0 %v1118
        %1150 = vmatpush1.bf16.msra.mxu0 %v1117
        %1151 = vmatprep.subr.bf16.mxu0 %v1120
        %1152 = vmatpush1.bf16.msra.mxu0 %v1119
        %1153 = vmatprep.subr.bf16.mxu0 %v1122
        %1154 = vmatpush1.bf16.msra.mxu0 %v1121
        %1155 = vmatprep.subr.bf16.mxu0 %v1124
        %1156 = vmatpush1.bf16.msra.mxu0 %v1123
        %1157 = vmatprep.subr.bf16.mxu0 %v1126
        %1158 = vmatpush1.bf16.msra.mxu0 %v1125
        %1159 = vmatprep.subr.bf16.mxu0 %v1128
        %1160 = vmatpush1.bf16.msra.mxu0 %v1127
        %1161 = vmatprep.subr.bf16.mxu0 %v1130
        %1162 = vmatpush1.bf16.msra.mxu0 %v1129
        %1163 = vmatprep.subr.bf16.mxu0 %v1132
        %1164 = vmatpush1.bf16.msra.mxu0 %v1131
        %1165 = vmatprep.subr.bf16.mxu0 0
        %1166 = vmatpush1.bf16.msra.mxu0 0
        %1167 = vmatprep.subr.bf16.mxu0 0
        %1168 = vmatpush1.bf16.msra.mxu0 0
        %1169 = vmatprep.subr.bf16.mxu0 0
        %1170 = vmatpush1.bf16.msra.mxu0 0
        %1171 = vmatprep.subr.bf16.mxu0 0
        %1172 = vmatpush1.bf16.msra.mxu0 0
        %1173 = vmatprep.subr.bf16.mxu0 0
        %1174 = vmatpush1.bf16.msra.mxu0 0
        %1175 = vmatprep.subr.bf16.mxu0 0
        %1176 = vmatpush1.bf16.msra.mxu0 0
        %1177 = vmatprep.subr.bf16.mxu0 0
        %1178 = vmatpush1.bf16.msra.mxu0 0
        %1179 = vmatprep.subr.bf16.mxu0 0
        %1180 = vmatpush1.bf16.msra.mxu0 0
        %1181 = vmatprep.mubr.bf16.mxu0 0
        %1182 = vmatmul.mubr.bf16.gmra.mrb[0].mxu0 %v1040
        %v1183 = vpop.f32.mrb[0].mxu0
        %v1184 = vadd.f32 %v1062, %v1183
        %v1185 = vpop.f32.mrb[0].mxu0
        %v1186 = vadd.f32 %v1066, %v1185
        %v1187 = vpop.f32.mrb[0].mxu0
        %v1188 = vpop.f32.mrb[0].mxu0
        %1189 = vdwg.mxu0
        %v1190 = vmax.f32 %v1184, 0.0
        %v1191 = vmax.f32 %v1186, 0.0
        %v1192 = vpack.c.bf16 %v1190, %v1190
        %v1193 = vpack.c.bf16 %v1191, %v1191
        %v1194 = vld [vmem:[#allocation6] sm:$0xf]
        %v1195 = vld [vmem:[#allocation6 + $0x4] sm:$0xf]
        %v1196 = vld [vmem:[#allocation6 + $0x8] sm:$0xf]
        %v1197 = vld [vmem:[#allocation6 + $0xc] sm:$0xf]
        %v1198 = vld [vmem:[#allocation6 + $0x10] sm:$0xf]
        %v1199 = vld [vmem:[#allocation6 + $0x14] sm:$0xf]
        %v1200 = vld [vmem:[#allocation6 + $0x18] sm:$0xf]
        %v1201 = vld [vmem:[#allocation6 + $0x1c] sm:$0xf]
        %v1202 = vld [vmem:[#allocation6 + $0x20] sm:$0xf]
        %v1203 = vld [vmem:[#allocation6 + $0x24] sm:$0xf]
        %v1204 = vld [vmem:[#allocation6 + $0x28] sm:$0xf]
        %v1205 = vld [vmem:[#allocation6 + $0x2c] sm:$0xf]
        %v1206 = vld [vmem:[#allocation6 + $0x30] sm:$0xf]
        %v1207 = vld [vmem:[#allocation6 + $0x34] sm:$0xf]
        %v1208 = vld [vmem:[#allocation6 + $0x38] sm:$0xf]
        %v1209 = vld [vmem:[#allocation6 + $0x3c] sm:$0xf]
        %v1210 = vld [vmem:[#allocation6 + $0x40] sm:$0xf]
        %v1211 = vld [vmem:[#allocation6 + $0x44] sm:$0xf]
        %v1212 = vld [vmem:[#allocation6 + $0x48] sm:$0xf]
        %v1213 = vld [vmem:[#allocation6 + $0x4c] sm:$0xf]
        %v1214 = vld [vmem:[#allocation6 + $0x50] sm:$0xf]
        %v1215 = vld [vmem:[#allocation6 + $0x54] sm:$0xf]
        %v1216 = vld [vmem:[#allocation6 + $0x58] sm:$0xf]
        %v1217 = vld [vmem:[#allocation6 + $0x5c] sm:$0xf]
        %v1218 = vld [vmem:[#allocation6 + $0x60] sm:$0xf]
        %v1219 = vld [vmem:[#allocation6 + $0x64] sm:$0xf]
        %v1220 = vld [vmem:[#allocation6 + $0x68] sm:$0xf]
        %v1221 = vld [vmem:[#allocation6 + $0x6c] sm:$0xf]
        %v1222 = vld [vmem:[#allocation6 + $0x70] sm:$0xf]
        %v1223 = vld [vmem:[#allocation6 + $0x74] sm:$0xf]
        %v1224 = vld [vmem:[#allocation6 + $0x78] sm:$0xf]
        %v1225 = vld [vmem:[#allocation6 + $0x7c] sm:$0xf]
        %v1258 = vunpack.c.l.b16 %v1194
        %v1259 = vunpack.c.l.b16 %v1195
        %v1260 = vunpack.c.l.b16 %v1196
        %v1261 = vunpack.c.l.b16 %v1197
        %v1262 = vunpack.c.l.b16 %v1198
        %v1263 = vunpack.c.l.b16 %v1199
        %v1264 = vunpack.c.l.b16 %v1200
        %v1265 = vunpack.c.l.b16 %v1201
        %v1266 = vunpack.c.l.b16 %v1202
        %v1267 = vunpack.c.l.b16 %v1203
        %v1268 = vunpack.c.l.b16 %v1204
        %v1269 = vunpack.c.l.b16 %v1205
        %v1270 = vunpack.c.l.b16 %v1206
        %v1271 = vunpack.c.l.b16 %v1207
        %v1272 = vunpack.c.l.b16 %v1208
        %v1273 = vunpack.c.l.b16 %v1209
        %v1274 = vunpack.c.l.b16 %v1210
        %v1275 = vunpack.c.l.b16 %v1211
        %v1276 = vunpack.c.l.b16 %v1212
        %v1277 = vunpack.c.l.b16 %v1213
        %v1278 = vunpack.c.l.b16 %v1214
        %v1279 = vunpack.c.l.b16 %v1215
        %v1280 = vunpack.c.l.b16 %v1216
        %v1281 = vunpack.c.l.b16 %v1217
        %v1282 = vunpack.c.l.b16 %v1218
        %v1283 = vunpack.c.l.b16 %v1219
        %v1284 = vunpack.c.l.b16 %v1220
        %v1285 = vunpack.c.l.b16 %v1221
        %v1286 = vunpack.c.l.b16 %v1222
        %v1287 = vunpack.c.l.b16 %v1223
        %v1288 = vunpack.c.l.b16 %v1224
        %v1289 = vunpack.c.l.b16 %v1225
        %v1290 = vpack.c.b16 %v1259, %v1258
        %v1291 = vpack.c.b16 %v1261, %v1260
        %v1292 = vpack.c.b16 %v1263, %v1262
        %v1293 = vpack.c.b16 %v1265, %v1264
        %v1294 = vpack.c.b16 %v1267, %v1266
        %v1295 = vpack.c.b16 %v1269, %v1268
        %v1296 = vpack.c.b16 %v1271, %v1270
        %v1297 = vpack.c.b16 %v1273, %v1272
        %v1298 = vpack.c.b16 %v1275, %v1274
        %v1299 = vpack.c.b16 %v1277, %v1276
        %v1300 = vpack.c.b16 %v1279, %v1278
        %v1301 = vpack.c.b16 %v1281, %v1280
        %v1302 = vpack.c.b16 %v1283, %v1282
        %v1303 = vpack.c.b16 %v1285, %v1284
        %v1304 = vpack.c.b16 %v1287, %v1286
        %v1305 = vpack.c.b16 %v1289, %v1288
        %1322 = vmatprep.subr.bf16.mxu0 0
        %1323 = vmatpush1.bf16.msra.mxu0 %v1290
        %1324 = vmatprep.subr.bf16.mxu0 0
        %1325 = vmatpush1.bf16.msra.mxu0 %v1291
        %1326 = vmatprep.subr.bf16.mxu0 0
        %1327 = vmatpush1.bf16.msra.mxu0 %v1292
        %1328 = vmatprep.subr.bf16.mxu0 0
        %1329 = vmatpush1.bf16.msra.mxu0 %v1293
        %1330 = vmatprep.subr.bf16.mxu0 0
        %1331 = vmatpush1.bf16.msra.mxu0 %v1294
        %1332 = vmatprep.subr.bf16.mxu0 0
        %1333 = vmatpush1.bf16.msra.mxu0 %v1295
        %1334 = vmatprep.subr.bf16.mxu0 0
        %1335 = vmatpush1.bf16.msra.mxu0 %v1296
        %1336 = vmatprep.subr.bf16.mxu0 0
        %1337 = vmatpush1.bf16.msra.mxu0 %v1297
        %1338 = vmatprep.subr.bf16.mxu0 0
        %1339 = vmatpush1.bf16.msra.mxu0 %v1298
        %1340 = vmatprep.subr.bf16.mxu0 0
        %1341 = vmatpush1.bf16.msra.mxu0 %v1299
        %1342 = vmatprep.subr.bf16.mxu0 0
        %1343 = vmatpush1.bf16.msra.mxu0 %v1300
        %1344 = vmatprep.subr.bf16.mxu0 0
        %1345 = vmatpush1.bf16.msra.mxu0 %v1301
        %1346 = vmatprep.subr.bf16.mxu0 0
        %1347 = vmatpush1.bf16.msra.mxu0 %v1302
        %1348 = vmatprep.subr.bf16.mxu0 0
        %1349 = vmatpush1.bf16.msra.mxu0 %v1303
        %1350 = vmatprep.subr.bf16.mxu0 0
        %1351 = vmatpush1.bf16.msra.mxu0 %v1304
        %1352 = vmatprep.subr.bf16.mxu0 0
        %1353 = vmatpush1.bf16.msra.mxu0 %v1305
        %1354 = vmatprep.mubr.bf16.mxu0 %v1193
        %1355 = vmatmul.mubr.bf16.gmra.mrb[0].mxu0 %v1192
        %v1356 = vpop.f32.mrb[0].mxu0
        %v1357 = vadd.f32 0.0, %v1356
        %v1358 = vpop.f32.mrb[0].mxu0
        %v1359 = vpop.f32.mrb[0].mxu0
        %v1360 = vpop.f32.mrb[0].mxu0
        %1361 = vdwg.mxu0
        %v1362 = vadd.f32 %v1039, %v1357
        %v1363 = vld [vmem:[%s9] sm:$0x1]
        %v1365 = vlaneseq
        %v1366 = vshrl.u32 %v1365, 7
        %v1367 = vsub.s32 0, %v1366
        %v1368 = vrot.slane %v1363, %v1367
        %v1370 = vadd.f32 %v1362, %v1368
        %1371 = vadd.xlane.f32.xlu0 %v1370
        %v1372 = vpop.xlane.xlu0 %1371
        %v1373 = vmul.f32 %v1372, %v1020
        %v1374 = vsub.f32 %v1370, %v1373
        %v1375 = vmul.f32 %v1374, %v1374
        %1376 = vadd.xlane.f32.xlu0 %v1375
        %v1377 = vpop.xlane.xlu0 %1376
        %v1378 = vmul.f32 %v1377, %v1020
        %v1379 = vadd.f32 %v1378, 1e-05
        %v1380 = vrsqrt.pop %v1379
        %v1381 = vmul.f32 %v1374, %v1380
        %v1382 = vlaneseq
        %v1383 = vshrl.u32 %v1382, 7
        %v1384 = vsub.s32 2, %v1383
        %v1385 = vrot.slane %v461, %v1384
        %v1386 = vmul.f32 %v1381, %v1385
        %v1387 = vlaneseq
        %v1388 = vshrl.u32 %v1387, 7
        %v1389 = vsub.s32 3, %v1388
        %v1390 = vrot.slane %v461, %v1389
        %v1391 = vadd.f32 %v1386, %v1390
        %s1392 = scalar_lea.vmem %s10, 4
        %v1393 = vld [vmem:[%s1392] sm:$0xf]
        %v1394 = vpack.c.bf16 %v1391, %v1391
        %s1395 = scalar_lea.vmem [#allocation2], 192
        %v1396 = vld [vmem:[%s1395] sm:$0xff]
        %v1397 = vld [vmem:[%s1395 + $0x8] sm:$0xf]
        %v1398 = vld [vmem:[%s1395 + $0xc] sm:$0xff]
        %v1399 = vld [vmem:[%s1395 + $0x14] sm:$0xf]
        %v1400 = vld [vmem:[%s1395 + $0x18] sm:$0xff]
        %v1401 = vld [vmem:[%s1395 + $0x20] sm:$0xf]
        %v1402 = vld [vmem:[%s1395 + $0x24] sm:$0xff]
        %v1403 = vld [vmem:[%s1395 + $0x2c] sm:$0xf]
        %v1404 = vld [vmem:[%s1395 + $0x30] sm:$0xff]
        %v1405 = vld [vmem:[%s1395 + $0x38] sm:$0xf]
        %v1406 = vld [vmem:[%s1395 + $0x3c] sm:$0xff]
        %v1407 = vld [vmem:[%s1395 + $0x44] sm:$0xf]
        %v1408 = vld [vmem:[%s1395 + $0x48] sm:$0xff]
        %v1409 = vld [vmem:[%s1395 + $0x50] sm:$0xf]
        %v1410 = vld [vmem:[%s1395 + $0x54] sm:$0xff]
        %v1411 = vld [vmem:[%s1395 + $0x5c] sm:$0xf]
        %v1412 = vld [vmem:[%s1395 + $0x60] sm:$0xff]
        %v1413 = vld [vmem:[%s1395 + $0x68] sm:$0xf]
        %v1414 = vld [vmem:[%s1395 + $0x6c] sm:$0xff]
        %v1415 = vld [vmem:[%s1395 + $0x74] sm:$0xf]
        %v1416 = vld [vmem:[%s1395 + $0x78] sm:$0xff]
        %v1417 = vld [vmem:[%s1395 + $0x80] sm:$0xf]
        %v1418 = vld [vmem:[%s1395 + $0x84] sm:$0xff]
        %v1419 = vld [vmem:[%s1395 + $0x8c] sm:$0xf]
        %v1420 = vld [vmem:[%s1395 + $0x90] sm:$0xff]
        %v1421 = vld [vmem:[%s1395 + $0x98] sm:$0xf]
        %v1422 = vld [vmem:[%s1395 + $0x9c] sm:$0xff]
        %v1423 = vld [vmem:[%s1395 + $0xa4] sm:$0xf]
        %v1424 = vld [vmem:[%s1395 + $0xa8] sm:$0xff]
        %v1425 = vld [vmem:[%s1395 + $0xb0] sm:$0xf]
        %v1426 = vld [vmem:[%s1395 + $0xb4] sm:$0xff]
        %v1427 = vld [vmem:[%s1395 + $0xbc] sm:$0xf]
        %s1428 = scalar_lea.vmem %s3, 3
        %v1429 = vld [vmem:[%s1428] sm:$0x7]
        %v1431 = vlaneseq
        %v1432 = vshrl.u32 %v1431, 7
        %v1433 = vsub.s32 0, %v1432
        %v1434 = vrot.slane %v1429, %v1433
        %v1435 = vlaneseq
        %v1436 = vshrl.u32 %v1435, 7
        %v1437 = vsub.s32 1, %v1436
        %v1438 = vrot.slane %v1429, %v1437
        %v1439 = vlaneseq
        %v1440 = vshrl.u32 %v1439, 7
        %v1441 = vsub.s32 2, %v1440
        %v1442 = vrot.slane %v1429, %v1441
        %v1478 = vunpack.c.l.b16 %v1396
        %v1479 = vunpack.c.h.b16 %v1396
        %v1480 = vunpack.c.l.b16 %v1397
        %v1481 = vunpack.c.l.b16 %v1398
        %v1482 = vunpack.c.h.b16 %v1398
        %v1483 = vunpack.c.l.b16 %v1399
        %v1484 = vunpack.c.l.b16 %v1400
        %v1485 = vunpack.c.h.b16 %v1400
        %v1486 = vunpack.c.l.b16 %v1401
        %v1487 = vunpack.c.l.b16 %v1402
        %v1488 = vunpack.c.h.b16 %v1402
        %v1489 = vunpack.c.l.b16 %v1403
        %v1490 = vunpack.c.l.b16 %v1404
        %v1491 = vunpack.c.h.b16 %v1404
        %v1492 = vunpack.c.l.b16 %v1405
        %v1493 = vunpack.c.l.b16 %v1406
        %v1494 = vunpack.c.h.b16 %v1406
        %v1495 = vunpack.c.l.b16 %v1407
        %v1496 = vunpack.c.l.b16 %v1408
        %v1497 = vunpack.c.h.b16 %v1408
        %v1498 = vunpack.c.l.b16 %v1409
        %v1499 = vunpack.c.l.b16 %v1410
        %v1500 = vunpack.c.h.b16 %v1410
        %v1501 = vunpack.c.l.b16 %v1411
        %v1502 = vunpack.c.l.b16 %v1412
        %v1503 = vunpack.c.h.b16 %v1412
        %v1504 = vunpack.c.l.b16 %v1413
        %v1505 = vunpack.c.l.b16 %v1414
        %v1506 = vunpack.c.h.b16 %v1414
        %v1507 = vunpack.c.l.b16 %v1415
        %v1508 = vunpack.c.l.b16 %v1416
        %v1509 = vunpack.c.h.b16 %v1416
        %v1510 = vunpack.c.l.b16 %v1417
        %v1511 = vunpack.c.l.b16 %v1418
        %v1512 = vunpack.c.h.b16 %v1418
        %v1513 = vunpack.c.l.b16 %v1419
        %v1514 = vunpack.c.l.b16 %v1420
        %v1515 = vunpack.c.h.b16 %v1420
        %v1516 = vunpack.c.l.b16 %v1421
        %v1517 = vunpack.c.l.b16 %v1422
        %v1518 = vunpack.c.h.b16 %v1422
        %v1519 = vunpack.c.l.b16 %v1423
        %v1520 = vunpack.c.l.b16 %v1424
        %v1521 = vunpack.c.h.b16 %v1424
        %v1522 = vunpack.c.l.b16 %v1425
        %v1523 = vunpack.c.l.b16 %v1426
        %v1524 = vunpack.c.h.b16 %v1426
        %v1525 = vunpack.c.l.b16 %v1427
        %v1526 = vpack.c.b16 %v1481, %v1478
        %v1527 = vpack.c.b16 %v1482, %v1479
        %v1528 = vpack.c.b16 %v1483, %v1480
        %v1529 = vpack.c.b16 %v1487, %v1484
        %v1530 = vpack.c.b16 %v1488, %v1485
        %v1531 = vpack.c.b16 %v1489, %v1486
        %v1532 = vpack.c.b16 %v1493, %v1490
        %v1533 = vpack.c.b16 %v1494, %v1491
        %v1534 = vpack.c.b16 %v1495, %v1492
        %v1535 = vpack.c.b16 %v1499, %v1496
        %v1536 = vpack.c.b16 %v1500, %v1497
        %v1537 = vpack.c.b16 %v1501, %v1498
        %v1538 = vpack.c.b16 %v1505, %v1502
        %v1539 = vpack.c.b16 %v1506, %v1503
        %v1540 = vpack.c.b16 %v1507, %v1504
        %v1541 = vpack.c.b16 %v1511, %v1508
        %v1542 = vpack.c.b16 %v1512, %v1509
        %v1543 = vpack.c.b16 %v1513, %v1510
        %v1544 = vpack.c.b16 %v1517, %v1514
        %v1545 = vpack.c.b16 %v1518, %v1515
        %v1546 = vpack.c.b16 %v1519, %v1516
        %v1547 = vpack.c.b16 %v1523, %v1520
        %v1548 = vpack.c.b16 %v1524, %v1521
        %v1549 = vpack.c.b16 %v1525, %v1522
        %1574 = vmatprep.subr.bf16.mxu0 %v1527
        %1575 = vmatpush1.bf16.msra.mxu0 %v1526
        %1576 = vmatprep.subr.bf16.mxu0 %v1530
        %1577 = vmatpush1.bf16.msra.mxu0 %v1529
        %1578 = vmatprep.subr.bf16.mxu0 %v1533
        %1579 = vmatpush1.bf16.msra.mxu0 %v1532
        %1580 = vmatprep.subr.bf16.mxu0 %v1536
        %1581 = vmatpush1.bf16.msra.mxu0 %v1535
        %1582 = vmatprep.subr.bf16.mxu0 %v1539
        %1583 = vmatpush1.bf16.msra.mxu0 %v1538
        %1584 = vmatprep.subr.bf16.mxu0 %v1542
        %1585 = vmatpush1.bf16.msra.mxu0 %v1541
        %1586 = vmatprep.subr.bf16.mxu0 %v1545
        %1587 = vmatpush1.bf16.msra.mxu0 %v1544
        %1588 = vmatprep.subr.bf16.mxu0 %v1548
        %1589 = vmatpush1.bf16.msra.mxu0 %v1547
        %1590 = vmatprep.subr.bf16.mxu0 0
        %1591 = vmatpush1.bf16.msra.mxu0 0
        %1592 = vmatprep.subr.bf16.mxu0 0
        %1593 = vmatpush1.bf16.msra.mxu0 0
        %1594 = vmatprep.subr.bf16.mxu0 0
        %1595 = vmatpush1.bf16.msra.mxu0 0
        %1596 = vmatprep.subr.bf16.mxu0 0
        %1597 = vmatpush1.bf16.msra.mxu0 0
        %1598 = vmatprep.subr.bf16.mxu0 0
        %1599 = vmatpush1.bf16.msra.mxu0 0
        %1600 = vmatprep.subr.bf16.mxu0 0
        %1601 = vmatpush1.bf16.msra.mxu0 0
        %1602 = vmatprep.subr.bf16.mxu0 0
        %1603 = vmatpush1.bf16.msra.mxu0 0
        %1604 = vmatprep.subr.bf16.mxu0 0
        %1605 = vmatpush1.bf16.msra.mxu0 0
        %1606 = vmatprep.mubr.bf16.mxu0 0
        %1607 = vmatmul.mubr.bf16.gmra.mrb[0].mxu0 %v1394
        %v1608 = vpop.f32.mrb[0].mxu0
        %v1609 = vadd.f32 %v1434, %v1608
        %v1610 = vpop.f32.mrb[0].mxu0
        %v1611 = vadd.f32 %v1438, %v1610
        %v1612 = vpop.f32.mrb[0].mxu0
        %v1613 = vpop.f32.mrb[0].mxu0
        %1614 = vdwg.mxu0
        %1615 = vmatprep.subr.bf16.mxu0 0
        %1616 = vmatpush1.bf16.msra.mxu0 %v1528
        %1617 = vmatprep.subr.bf16.mxu0 0
        %1618 = vmatpush1.bf16.msra.mxu0 %v1531
        %1619 = vmatprep.subr.bf16.mxu0 0
        %1620 = vmatpush1.bf16.msra.mxu0 %v1534
        %1621 = vmatprep.subr.bf16.mxu0 0
        %1622 = vmatpush1.bf16.msra.mxu0 %v1537
        %1623 = vmatprep.subr.bf16.mxu0 0
        %1624 = vmatpush1.bf16.msra.mxu0 %v1540
        %1625 = vmatprep.subr.bf16.mxu0 0
        %1626 = vmatpush1.bf16.msra.mxu0 %v1543
        %1627 = vmatprep.subr.bf16.mxu0 0
        %1628 = vmatpush1.bf16.msra.mxu0 %v1546
        %1629 = vmatprep.subr.bf16.mxu0 0
        %1630 = vmatpush1.bf16.msra.mxu0 %v1549
        %1631 = vmatprep.subr.bf16.mxu0 0
        %1632 = vmatpush1.bf16.msra.mxu0 0
        %1633 = vmatprep.subr.bf16.mxu0 0
        %1634 = vmatpush1.bf16.msra.mxu0 0
        %1635 = vmatprep.subr.bf16.mxu0 0
        %1636 = vmatpush1.bf16.msra.mxu0 0
        %1637 = vmatprep.subr.bf16.mxu0 0
        %1638 = vmatpush1.bf16.msra.mxu0 0
        %1639 = vmatprep.subr.bf16.mxu0 0
        %1640 = vmatpush1.bf16.msra.mxu0 0
        %1641 = vmatprep.subr.bf16.mxu0 0
        %1642 = vmatpush1.bf16.msra.mxu0 0
        %1643 = vmatprep.subr.bf16.mxu0 0
        %1644 = vmatpush1.bf16.msra.mxu0 0
        %1645 = vmatprep.subr.bf16.mxu0 0
        %1646 = vmatpush1.bf16.msra.mxu0 0
        %1647 = vmatprep.mubr.bf16.mxu0 0
        %1648 = vmatmul.mubr.bf16.gmra.mrb[0].mxu0 %v1394
        %v1649 = vpop.f32.mrb[0].mxu0
        %v1650 = vadd.f32 %v1442, %v1649
        %v1651 = vpop.f32.mrb[0].mxu0
        %v1652 = vpop.f32.mrb[0].mxu0
        %v1653 = vpop.f32.mrb[0].mxu0
        %1654 = vdwg.mxu0
        %v1655 = vmul.f32 %v1609, %v446
        %v1656 = vmul.f32 %v1609, %v450
        %v1657 = vmul.f32 %v1609, %v454
        %v1658 = vmul.f32 %v1609, %v458
        %v1659 = vpack.c.bf16 %v1656, %v1655
        %v1660 = vpack.c.bf16 %v1658, %v1657
        %v1661 = vpack.c.bf16 %v1611, %v1611
        %1662 = vmatprep.subr.bf16.mxu0 0
        %1663 = vmatpush1.bf16.xpose.msra.mxu0 %v1661
        %1664 = vmatprep.subr.bf16.mxu0 0
        %1665 = vmatpush1.bf16.xpose.msra.mxu0 0
        %1666 = vmatprep.subr.bf16.mxu0 0
        %1667 = vmatpush1.bf16.xpose.msra.mxu0 0
        %1668 = vmatprep.subr.bf16.mxu0 0
        %1669 = vmatpush1.bf16.xpose.msra.mxu0 0
        %1670 = vmatprep.subr.bf16.mxu0 0
        %1671 = vmatpush1.bf16.xpose.msra.mxu0 0
        %1672 = vmatprep.subr.bf16.mxu0 0
        %1673 = vmatpush1.bf16.xpose.msra.mxu0 0
        %1674 = vmatprep.subr.bf16.mxu0 0
        %1675 = vmatpush1.bf16.xpose.msra.mxu0 0
        %1676 = vmatprep.subr.bf16.mxu0 0
        %1677 = vmatpush1.bf16.xpose.msra.mxu0 0
        %1678 = vmatprep.subr.bf16.mxu0 0
        %1679 = vmatpush1.bf16.xpose.msra.mxu0 0
        %1680 = vmatprep.subr.bf16.mxu0 0
        %1681 = vmatpush1.bf16.xpose.msra.mxu0 0
        %1682 = vmatprep.subr.bf16.mxu0 0
        %1683 = vmatpush1.bf16.xpose.msra.mxu0 0
        %1684 = vmatprep.subr.bf16.mxu0 0
        %1685 = vmatpush1.bf16.xpose.msra.mxu0 0
        %1686 = vmatprep.subr.bf16.mxu0 0
        %1687 = vmatpush1.bf16.xpose.msra.mxu0 0
        %1688 = vmatprep.subr.bf16.mxu0 0
        %1689 = vmatpush1.bf16.xpose.msra.mxu0 0
        %1690 = vmatprep.subr.bf16.mxu0 0
        %1691 = vmatpush1.bf16.xpose.msra.mxu0 0
        %1692 = vmatprep.subr.bf16.mxu0 0
        %1693 = vmatpush1.bf16.xpose.msra.mxu0 0
        %1694 = vmatprep.mubr.bf16.mxu0 0
        %1695 = vmatmul.mubr.bf16.gmra.mrb[0].mxu0 %v1659
        %v1696 = vpop.f32.mrb[0].mxu0
        %v1697 = vadd.f32 0.0, %v1696
        %v1698 = vpop.f32.mrb[0].mxu0
        %v1699 = vpop.f32.mrb[0].mxu0
        %v1700 = vadd.f32 0.0, %v1699
        %v1701 = vpop.f32.mrb[0].mxu0
        %1702 = vmatprep.mubr.bf16.mxu0 0
        %1703 = vmatmul.mubr.bf16.gmra.mrb[0].mxu0 %v1660
        %v1704 = vpop.f32.mrb[0].mxu0
        %v1705 = vadd.f32 0.0, %v1704
        %v1706 = vpop.f32.mrb[0].mxu0
        %v1707 = vpop.f32.mrb[0].mxu0
        %v1708 = vadd.f32 0.0, %v1707
        %v1709 = vpop.f32.mrb[0].mxu0
        %1710 = vdwg.mxu0
        %v1711 = vmul.f32 %v1697, 0.17677669
        %v1712 = vmul.f32 %v1700, 0.17677669
        %v1713 = vmul.f32 %v1705, 0.17677669
        %v1714 = vmul.f32 %v1708, 0.17677669
        %v1715 = vadd.f32 %v1711, %v785
        %v1716 = vadd.f32 %v1712, %v785
        %v1717 = vadd.f32 %v1713, %v785
        %v1718 = vadd.f32 %v1714, %v785
        %v1719 = vsel %vm791, %v1715, -inf
        %1720 = vmax.xlane.f32.xlu0 %v1719
        %v1721 = vpop.xlane.xlu0 %1720
        %v1722 = vsel %vm791, %v1716, -inf
        %1723 = vmax.xlane.f32.xlu0 %v1722
        %v1724 = vpop.xlane.xlu0 %1723
        %v1725 = vsel %vm791, %v1717, -inf
        %1726 = vmax.xlane.f32.xlu0 %v1725
        %v1727 = vpop.xlane.xlu0 %1726
        %v1728 = vsel %vm791, %v1718, -inf
        %1729 = vmax.xlane.f32.xlu0 %v1728
        %v1730 = vpop.xlane.xlu0 %1729
        %v1731 = vsub.f32 %v1715, %v1721
        %v1732 = vsub.f32 %v1716, %v1724
        %v1733 = vsub.f32 %v1717, %v1727
        %v1734 = vsub.f32 %v1718, %v1730
        %v1735 = vmul.f32 %v1731, 1.442695
        %v1736 = vpow.pop %v1735
        %v1737 = vmul.f32 %v1732, 1.442695
        %v1738 = vpow.pop %v1737
        %v1739 = vmul.f32 %v1733, 1.442695
        %v1740 = vpow.pop %v1739
        %v1741 = vmul.f32 %v1734, 1.442695
        %v1742 = vpow.pop %v1741
        %v1743 = vsel %vm791, %v1736, 0.0
        %1744 = vadd.xlane.f32.xlu0 %v1743
        %v1745 = vpop.xlane.xlu0 %1744
        %v1746 = vsel %vm791, %v1738, 0.0
        %1747 = vadd.xlane.f32.xlu0 %v1746
        %v1748 = vpop.xlane.xlu0 %1747
        %v1749 = vsel %vm791, %v1740, 0.0
        %1750 = vadd.xlane.f32.xlu0 %v1749
        %v1751 = vpop.xlane.xlu0 %1750
        %v1752 = vsel %vm791, %v1742, 0.0
        %1753 = vadd.xlane.f32.xlu0 %v1752
        %v1754 = vpop.xlane.xlu0 %1753
        %v1755 = vrcp.pop %v1745
        %v1756 = vrcp.pop %v1748
        %v1757 = vrcp.pop %v1751
        %v1758 = vrcp.pop %v1754
        %v1759 = vmul.f32 %v1736, %v1755
        %v1760 = vmul.f32 %v1738, %v1756
        %v1761 = vmul.f32 %v1740, %v1757
        %v1762 = vmul.f32 %v1742, %v1758
        %v1763 = vpack.c.bf16 %v1760, %v1759
        %v1764 = vpack.c.bf16 %v1762, %v1761
        %v1765 = vpack.c.bf16 %v1650, %v1650
        %v1767 = vsel %vm791, %v1763, 0
        %v1770 = vsel %vm791, %v1764, 0
        %v1773 = vsel %vm845, %v1765, 0
        %1775 = vmatprep.subr.bf16.mxu0 0
        %1776 = vmatpush1.bf16.msra.mxu0 %v1773
        %1777 = vmatprep.subr.bf16.mxu0 0
        %1778 = vmatpush1.bf16.msra.mxu0 0
        %1779 = vmatprep.subr.bf16.mxu0 0
        %1780 = vmatpush1.bf16.msra.mxu0 0
        %1781 = vmatprep.subr.bf16.mxu0 0
        %1782 = vmatpush1.bf16.msra.mxu0 0
        %1783 = vmatprep.subr.bf16.mxu0 0
        %1784 = vmatpush1.bf16.msra.mxu0 0
        %1785 = vmatprep.subr.bf16.mxu0 0
        %1786 = vmatpush1.bf16.msra.mxu0 0
        %1787 = vmatprep.subr.bf16.mxu0 0
        %1788 = vmatpush1.bf16.msra.mxu0 0
        %1789 = vmatprep.subr.bf16.mxu0 0
        %1790 = vmatpush1.bf16.msra.mxu0 0
        %1791 = vmatprep.subr.bf16.mxu0 0
        %1792 = vmatpush1.bf16.msra.mxu0 0
        %1793 = vmatprep.subr.bf16.mxu0 0
        %1794 = vmatpush1.bf16.msra.mxu0 0
        %1795 = vmatprep.subr.bf16.mxu0 0
        %1796 = vmatpush1.bf16.msra.mxu0 0
        %1797 = vmatprep.subr.bf16.mxu0 0
        %1798 = vmatpush1.bf16.msra.mxu0 0
        %1799 = vmatprep.subr.bf16.mxu0 0
        %1800 = vmatpush1.bf16.msra.mxu0 0
        %1801 = vmatprep.subr.bf16.mxu0 0
        %1802 = vmatpush1.bf16.msra.mxu0 0
        %1803 = vmatprep.subr.bf16.mxu0 0
        %1804 = vmatpush1.bf16.msra.mxu0 0
        %1805 = vmatprep.subr.bf16.mxu0 0
        %1806 = vmatpush1.bf16.msra.mxu0 0
        %1807 = vmatprep.mubr.bf16.mxu0 0
        %1808 = vmatmul.mubr.bf16.gmra.mrb[0].mxu0 %v1767
        %v1809 = vpop.f32.mrb[0].mxu0
        %v1810 = vadd.f32 0.0, %v1809
        %v1811 = vpop.f32.mrb[0].mxu0
        %v1812 = vpop.f32.mrb[0].mxu0
        %v1813 = vadd.f32 0.0, %v1812
        %v1814 = vpop.f32.mrb[0].mxu0
        %1815 = vmatprep.mubr.bf16.mxu0 0
        %1816 = vmatmul.mubr.bf16.gmra.mrb[0].mxu0 %v1770
        %v1817 = vpop.f32.mrb[0].mxu0
        %v1818 = vadd.f32 0.0, %v1817
        %v1819 = vpop.f32.mrb[0].mxu0
        %v1820 = vpop.f32.mrb[0].mxu0
        %v1821 = vadd.f32 0.0, %v1820
        %v1822 = vpop.f32.mrb[0].mxu0
        %1823 = vdwg.mxu0
        %v1824 = vmul.f32 %v1810, %v446
        %v1825 = vmul.f32 %v1813, %v450
        %v1826 = vadd.f32 %v1824, %v1825
        %v1827 = vmul.f32 %v1818, %v454
        %v1828 = vadd.f32 %v1826, %v1827
        %v1829 = vmul.f32 %v1821, %v458
        %v1830 = vadd.f32 %v1828, %v1829
        %v1831 = vpack.c.bf16 %v1830, %v1830
        %s1832 = scalar_lea.vmem [#allocation4], 64
        %v1833 = vld [vmem:[%s1832] sm:$0xf]
        %v1834 = vld [vmem:[%s1832 + $0x4] sm:$0xf]
        %v1835 = vld [vmem:[%s1832 + $0x8] sm:$0xf]
        %v1836 = vld [vmem:[%s1832 + $0xc] sm:$0xf]
        %v1837 = vld [vmem:[%s1832 + $0x10] sm:$0xf]
        %v1838 = vld [vmem:[%s1832 + $0x14] sm:$0xf]
        %v1839 = vld [vmem:[%s1832 + $0x18] sm:$0xf]
        %v1840 = vld [vmem:[%s1832 + $0x1c] sm:$0xf]
        %v1841 = vld [vmem:[%s1832 + $0x20] sm:$0xf]
        %v1842 = vld [vmem:[%s1832 + $0x24] sm:$0xf]
        %v1843 = vld [vmem:[%s1832 + $0x28] sm:$0xf]
        %v1844 = vld [vmem:[%s1832 + $0x2c] sm:$0xf]
        %v1845 = vld [vmem:[%s1832 + $0x30] sm:$0xf]
        %v1846 = vld [vmem:[%s1832 + $0x34] sm:$0xf]
        %v1847 = vld [vmem:[%s1832 + $0x38] sm:$0xf]
        %v1848 = vld [vmem:[%s1832 + $0x3c] sm:$0xf]
        %s1849 = scalar_lea.vmem %s5, 1
        %v1850 = vld [vmem:[%s1849] sm:$0x1]
        %v1852 = vlaneseq
        %v1853 = vshrl.u32 %v1852, 7
        %v1854 = vsub.s32 0, %v1853
        %v1855 = vrot.slane %v1850, %v1854
        %v1873 = vunpack.c.l.b16 %v1833
        %v1874 = vunpack.c.l.b16 %v1834
        %v1875 = vunpack.c.l.b16 %v1835
        %v1876 = vunpack.c.l.b16 %v1836
        %v1877 = vunpack.c.l.b16 %v1837
        %v1878 = vunpack.c.l.b16 %v1838
        %v1879 = vunpack.c.l.b16 %v1839
        %v1880 = vunpack.c.l.b16 %v1840
        %v1881 = vunpack.c.l.b16 %v1841
        %v1882 = vunpack.c.l.b16 %v1842
        %v1883 = vunpack.c.l.b16 %v1843
        %v1884 = vunpack.c.l.b16 %v1844
        %v1885 = vunpack.c.l.b16 %v1845
        %v1886 = vunpack.c.l.b16 %v1846
        %v1887 = vunpack.c.l.b16 %v1847
        %v1888 = vunpack.c.l.b16 %v1848
        %v1889 = vpack.c.b16 %v1874, %v1873
        %v1890 = vpack.c.b16 %v1876, %v1875
        %v1891 = vpack.c.b16 %v1878, %v1877
        %v1892 = vpack.c.b16 %v1880, %v1879
        %v1893 = vpack.c.b16 %v1882, %v1881
        %v1894 = vpack.c.b16 %v1884, %v1883
        %v1895 = vpack.c.b16 %v1886, %v1885
        %v1896 = vpack.c.b16 %v1888, %v1887
        %1905 = vmatprep.subr.bf16.mxu0 0
        %1906 = vmatpush1.bf16.msra.mxu0 %v1889
        %1907 = vmatprep.subr.bf16.mxu0 0
        %1908 = vmatpush1.bf16.msra.mxu0 %v1890
        %1909 = vmatprep.subr.bf16.mxu0 0
        %1910 = vmatpush1.bf16.msra.mxu0 %v1891
        %1911 = vmatprep.subr.bf16.mxu0 0
        %1912 = vmatpush1.bf16.msra.mxu0 %v1892
        %1913 = vmatprep.subr.bf16.mxu0 0
        %1914 = vmatpush1.bf16.msra.mxu0 %v1893
        %1915 = vmatprep.subr.bf16.mxu0 0
        %1916 = vmatpush1.bf16.msra.mxu0 %v1894
        %1917 = vmatprep.subr.bf16.mxu0 0
        %1918 = vmatpush1.bf16.msra.mxu0 %v1895
        %1919 = vmatprep.subr.bf16.mxu0 0
        %1920 = vmatpush1.bf16.msra.mxu0 %v1896
        %1921 = vmatprep.subr.bf16.mxu0 0
        %1922 = vmatpush1.bf16.msra.mxu0 0
        %1923 = vmatprep.subr.bf16.mxu0 0
        %1924 = vmatpush1.bf16.msra.mxu0 0
        %1925 = vmatprep.subr.bf16.mxu0 0
        %1926 = vmatpush1.bf16.msra.mxu0 0
        %1927 = vmatprep.subr.bf16.mxu0 0
        %1928 = vmatpush1.bf16.msra.mxu0 0
        %1929 = vmatprep.subr.bf16.mxu0 0
        %1930 = vmatpush1.bf16.msra.mxu0 0
        %1931 = vmatprep.subr.bf16.mxu0 0
        %1932 = vmatpush1.bf16.msra.mxu0 0
        %1933 = vmatprep.subr.bf16.mxu0 0
        %1934 = vmatpush1.bf16.msra.mxu0 0
        %1935 = vmatprep.subr.bf16.mxu0 0
        %1936 = vmatpush1.bf16.msra.mxu0 0
        %1937 = vmatprep.mubr.bf16.mxu0 0
        %1938 = vmatmul.mubr.bf16.gmra.mrb[0].mxu0 %v1831
        %v1939 = vpop.f32.mrb[0].mxu0
        %v1940 = vadd.f32 %v1855, %v1939
        %v1941 = vpop.f32.mrb[0].mxu0
        %v1942 = vpop.f32.mrb[0].mxu0
        %v1943 = vpop.f32.mrb[0].mxu0
        %1944 = vdwg.mxu0
        %v1945 = vadd.f32 %v1391, %v1940
        %1946 = vadd.xlane.f32.xlu0 %v1945
        %v1947 = vpop.xlane.xlu0 %1946
        %v1948 = vmul.f32 %v1947, %v1020
        %v1949 = vsub.f32 %v1945, %v1948
        %v1950 = vmul.f32 %v1949, %v1949
        %1951 = vadd.xlane.f32.xlu0 %v1950
        %v1952 = vpop.xlane.xlu0 %1951
        %v1953 = vmul.f32 %v1952, %v1020
        %v1954 = vadd.f32 %v1953, 1e-05
        %v1955 = vrsqrt.pop %v1954
        %v1956 = vmul.f32 %v1949, %v1955
        %v1957 = vlaneseq
        %v1958 = vshrl.u32 %v1957, 7
        %v1959 = vsub.s32 0, %v1958
        %v1960 = vrot.slane %v1393, %v1959
        %v1961 = vmul.f32 %v1956, %v1960
        %v1962 = vlaneseq
        %v1963 = vshrl.u32 %v1962, 7
        %v1964 = vsub.s32 1, %v1963
        %v1965 = vrot.slane %v1393, %v1964
        %v1966 = vadd.f32 %v1961, %v1965
        %v1967 = vpack.c.bf16 %v1966, %v1966
        %s1968 = scalar_lea.vmem %s6, 128
        %v1969 = vld [vmem:[%s1968] sm:$0xff]
        %v1970 = vld [vmem:[%s1968 + $0x8] sm:$0xff]
        %v1971 = vld [vmem:[%s1968 + $0x10] sm:$0xff]
        %v1972 = vld [vmem:[%s1968 + $0x18] sm:$0xff]
        %v1973 = vld [vmem:[%s1968 + $0x20] sm:$0xff]
        %v1974 = vld [vmem:[%s1968 + $0x28] sm:$0xff]
        %v1975 = vld [vmem:[%s1968 + $0x30] sm:$0xff]
        %v1976 = vld [vmem:[%s1968 + $0x38] sm:$0xff]
        %v1977 = vld [vmem:[%s1968 + $0x40] sm:$0xff]
        %v1978 = vld [vmem:[%s1968 + $0x48] sm:$0xff]
        %v1979 = vld [vmem:[%s1968 + $0x50] sm:$0xff]
        %v1980 = vld [vmem:[%s1968 + $0x58] sm:$0xff]
        %v1981 = vld [vmem:[%s1968 + $0x60] sm:$0xff]
        %v1982 = vld [vmem:[%s1968 + $0x68] sm:$0xff]
        %v1983 = vld [vmem:[%s1968 + $0x70] sm:$0xff]
        %v1984 = vld [vmem:[%s1968 + $0x78] sm:$0xff]
        %s1985 = scalar_lea.vmem %s7, 2
        %v1986 = vld [vmem:[%s1985] sm:$0x3]
        %v1988 = vlaneseq
        %v1989 = vshrl.u32 %v1988, 7
        %v1990 = vsub.s32 0, %v1989
        %v1991 = vrot.slane %v1986, %v1990
        %v1992 = vlaneseq
        %v1993 = vshrl.u32 %v1992, 7
        %v1994 = vsub.s32 1, %v1993
        %v1995 = vrot.slane %v1986, %v1994
        %v2014 = vunpack.c.l.b16 %v1969
        %v2015 = vunpack.c.h.b16 %v1969
        %v2016 = vunpack.c.l.b16 %v1970
        %v2017 = vunpack.c.h.b16 %v1970
        %v2018 = vunpack.c.l.b16 %v1971
        %v2019 = vunpack.c.h.b16 %v1971
        %v2020 = vunpack.c.l.b16 %v1972
        %v2021 = vunpack.c.h.b16 %v1972
        %v2022 = vunpack.c.l.b16 %v1973
        %v2023 = vunpack.c.h.b16 %v1973
        %v2024 = vunpack.c.l.b16 %v1974
        %v2025 = vunpack.c.h.b16 %v1974
        %v2026 = vunpack.c.l.b16 %v1975
        %v2027 = vunpack.c.h.b16 %v1975
        %v2028 = vunpack.c.l.b16 %v1976
        %v2029 = vunpack.c.h.b16 %v1976
        %v2030 = vunpack.c.l.b16 %v1977
        %v2031 = vunpack.c.h.b16 %v1977
        %v2032 = vunpack.c.l.b16 %v1978
        %v2033 = vunpack.c.h.b16 %v1978
        %v2034 = vunpack.c.l.b16 %v1979
        %v2035 = vunpack.c.h.b16 %v1979
        %v2036 = vunpack.c.l.b16 %v1980
        %v2037 = vunpack.c.h.b16 %v1980
        %v2038 = vunpack.c.l.b16 %v1981
        %v2039 = vunpack.c.h.b16 %v1981
        %v2040 = vunpack.c.l.b16 %v1982
        %v2041 = vunpack.c.h.b16 %v1982
        %v2042 = vunpack.c.l.b16 %v1983
        %v2043 = vunpack.c.h.b16 %v1983
        %v2044 = vunpack.c.l.b16 %v1984
        %v2045 = vunpack.c.h.b16 %v1984
        %v2046 = vpack.c.b16 %v2016, %v2014
        %v2047 = vpack.c.b16 %v2017, %v2015
        %v2048 = vpack.c.b16 %v2020, %v2018
        %v2049 = vpack.c.b16 %v2021, %v2019
        %v2050 = vpack.c.b16 %v2024, %v2022
        %v2051 = vpack.c.b16 %v2025, %v2023
        %v2052 = vpack.c.b16 %v2028, %v2026
        %v2053 = vpack.c.b16 %v2029, %v2027
        %v2054 = vpack.c.b16 %v2032, %v2030
        %v2055 = vpack.c.b16 %v2033, %v2031
        %v2056 = vpack.c.b16 %v2036, %v2034
        %v2057 = vpack.c.b16 %v2037, %v2035
        %v2058 = vpack.c.b16 %v2040, %v2038
        %v2059 = vpack.c.b16 %v2041, %v2039
        %v2060 = vpack.c.b16 %v2044, %v2042
        %v2061 = vpack.c.b16 %v2045, %v2043
        %2078 = vmatprep.subr.bf16.mxu0 %v2047
        %2079 = vmatpush1.bf16.msra.mxu0 %v2046
        %2080 = vmatprep.subr.bf16.mxu0 %v2049
        %2081 = vmatpush1.bf16.msra.mxu0 %v2048
        %2082 = vmatprep.subr.bf16.mxu0 %v2051
        %2083 = vmatpush1.bf16.msra.mxu0 %v2050
        %2084 = vmatprep.subr.bf16.mxu0 %v2053
        %2085 = vmatpush1.bf16.msra.mxu0 %v2052
        %2086 = vmatprep.subr.bf16.mxu0 %v2055
        %2087 = vmatpush1.bf16.msra.mxu0 %v2054
        %2088 = vmatprep.subr.bf16.mxu0 %v2057
        %2089 = vmatpush1.bf16.msra.mxu0 %v2056
        %2090 = vmatprep.subr.bf16.mxu0 %v2059
        %2091 = vmatpush1.bf16.msra.mxu0 %v2058
        %2092 = vmatprep.subr.bf16.mxu0 %v2061
        %2093 = vmatpush1.bf16.msra.mxu0 %v2060
        %2094 = vmatprep.subr.bf16.mxu0 0
        %2095 = vmatpush1.bf16.msra.mxu0 0
        %2096 = vmatprep.subr.bf16.mxu0 0
        %2097 = vmatpush1.bf16.msra.mxu0 0
        %2098 = vmatprep.subr.bf16.mxu0 0
        %2099 = vmatpush1.bf16.msra.mxu0 0
        %2100 = vmatprep.subr.bf16.mxu0 0
        %2101 = vmatpush1.bf16.msra.mxu0 0
        %2102 = vmatprep.subr.bf16.mxu0 0
        %2103 = vmatpush1.bf16.msra.mxu0 0
        %2104 = vmatprep.subr.bf16.mxu0 0
        %2105 = vmatpush1.bf16.msra.mxu0 0
        %2106 = vmatprep.subr.bf16.mxu0 0
        %2107 = vmatpush1.bf16.msra.mxu0 0
        %2108 = vmatprep.subr.bf16.mxu0 0
        %2109 = vmatpush1.bf16.msra.mxu0 0
        %2110 = vmatprep.mubr.bf16.mxu0 0
        %2111 = vmatmul.mubr.bf16.gmra.mrb[0].mxu0 %v1967
        %v2112 = vpop.f32.mrb[0].mxu0
        %v2113 = vadd.f32 %v1991, %v2112
        %v2114 = vpop.f32.mrb[0].mxu0
        %v2115 = vadd.f32 %v1995, %v2114
        %v2116 = vpop.f32.mrb[0].mxu0
        %v2117 = vpop.f32.mrb[0].mxu0
        %2118 = vdwg.mxu0
        %v2119 = vmax.f32 %v2113, 0.0
        %v2120 = vmax.f32 %v2115, 0.0
        %v2121 = vpack.c.bf16 %v2119, %v2119
        %v2122 = vpack.c.bf16 %v2120, %v2120
        %s2123 = scalar_lea.vmem [#allocation6], 128
        %v2124 = vld [vmem:[%s2123] sm:$0xf]
        %v2125 = vld [vmem:[%s2123 + $0x4] sm:$0xf]
        %v2126 = vld [vmem:[%s2123 + $0x8] sm:$0xf]
        %v2127 = vld [vmem:[%s2123 + $0xc] sm:$0xf]
        %v2128 = vld [vmem:[%s2123 + $0x10] sm:$0xf]
        %v2129 = vld [vmem:[%s2123 + $0x14] sm:$0xf]
        %v2130 = vld [vmem:[%s2123 + $0x18] sm:$0xf]
        %v2131 = vld [vmem:[%s2123 + $0x1c] sm:$0xf]
        %v2132 = vld [vmem:[%s2123 + $0x20] sm:$0xf]
        %v2133 = vld [vmem:[%s2123 + $0x24] sm:$0xf]
        %v2134 = vld [vmem:[%s2123 + $0x28] sm:$0xf]
        %v2135 = vld [vmem:[%s2123 + $0x2c] sm:$0xf]
        %v2136 = vld [vmem:[%s2123 + $0x30] sm:$0xf]
        %v2137 = vld [vmem:[%s2123 + $0x34] sm:$0xf]
        %v2138 = vld [vmem:[%s2123 + $0x38] sm:$0xf]
        %v2139 = vld [vmem:[%s2123 + $0x3c] sm:$0xf]
        %v2140 = vld [vmem:[%s2123 + $0x40] sm:$0xf]
        %v2141 = vld [vmem:[%s2123 + $0x44] sm:$0xf]
        %v2142 = vld [vmem:[%s2123 + $0x48] sm:$0xf]
        %v2143 = vld [vmem:[%s2123 + $0x4c] sm:$0xf]
        %v2144 = vld [vmem:[%s2123 + $0x50] sm:$0xf]
        %v2145 = vld [vmem:[%s2123 + $0x54] sm:$0xf]
        %v2146 = vld [vmem:[%s2123 + $0x58] sm:$0xf]
        %v2147 = vld [vmem:[%s2123 + $0x5c] sm:$0xf]
        %v2148 = vld [vmem:[%s2123 + $0x60] sm:$0xf]
        %v2149 = vld [vmem:[%s2123 + $0x64] sm:$0xf]
        %v2150 = vld [vmem:[%s2123 + $0x68] sm:$0xf]
        %v2151 = vld [vmem:[%s2123 + $0x6c] sm:$0xf]
        %v2152 = vld [vmem:[%s2123 + $0x70] sm:$0xf]
        %v2153 = vld [vmem:[%s2123 + $0x74] sm:$0xf]
        %v2154 = vld [vmem:[%s2123 + $0x78] sm:$0xf]
        %v2155 = vld [vmem:[%s2123 + $0x7c] sm:$0xf]
        %v2188 = vunpack.c.l.b16 %v2124
        %v2189 = vunpack.c.l.b16 %v2125
        %v2190 = vunpack.c.l.b16 %v2126
        %v2191 = vunpack.c.l.b16 %v2127
        %v2192 = vunpack.c.l.b16 %v2128
        %v2193 = vunpack.c.l.b16 %v2129
        %v2194 = vunpack.c.l.b16 %v2130
        %v2195 = vunpack.c.l.b16 %v2131
        %v2196 = vunpack.c.l.b16 %v2132
        %v2197 = vunpack.c.l.b16 %v2133
        %v2198 = vunpack.c.l.b16 %v2134
        %v2199 = vunpack.c.l.b16 %v2135
        %v2200 = vunpack.c.l.b16 %v2136
        %v2201 = vunpack.c.l.b16 %v2137
        %v2202 = vunpack.c.l.b16 %v2138
        %v2203 = vunpack.c.l.b16 %v2139
        %v2204 = vunpack.c.l.b16 %v2140
        %v2205 = vunpack.c.l.b16 %v2141
        %v2206 = vunpack.c.l.b16 %v2142
        %v2207 = vunpack.c.l.b16 %v2143
        %v2208 = vunpack.c.l.b16 %v2144
        %v2209 = vunpack.c.l.b16 %v2145
        %v2210 = vunpack.c.l.b16 %v2146
        %v2211 = vunpack.c.l.b16 %v2147
        %v2212 = vunpack.c.l.b16 %v2148
        %v2213 = vunpack.c.l.b16 %v2149
        %v2214 = vunpack.c.l.b16 %v2150
        %v2215 = vunpack.c.l.b16 %v2151
        %v2216 = vunpack.c.l.b16 %v2152
        %v2217 = vunpack.c.l.b16 %v2153
        %v2218 = vunpack.c.l.b16 %v2154
        %v2219 = vunpack.c.l.b16 %v2155
        %v2220 = vpack.c.b16 %v2189, %v2188
        %v2221 = vpack.c.b16 %v2191, %v2190
        %v2222 = vpack.c.b16 %v2193, %v2192
        %v2223 = vpack.c.b16 %v2195, %v2194
        %v2224 = vpack.c.b16 %v2197, %v2196
        %v2225 = vpack.c.b16 %v2199, %v2198
        %v2226 = vpack.c.b16 %v2201, %v2200
        %v2227 = vpack.c.b16 %v2203, %v2202
        %v2228 = vpack.c.b16 %v2205, %v2204
        %v2229 = vpack.c.b16 %v2207, %v2206
        %v2230 = vpack.c.b16 %v2209, %v2208
        %v2231 = vpack.c.b16 %v2211, %v2210
        %v2232 = vpack.c.b16 %v2213, %v2212
        %v2233 = vpack.c.b16 %v2215, %v2214
        %v2234 = vpack.c.b16 %v2217, %v2216
        %v2235 = vpack.c.b16 %v2219, %v2218
        %2252 = vmatprep.subr.bf16.mxu0 0
        %2253 = vmatpush1.bf16.msra.mxu0 %v2220
        %2254 = vmatprep.subr.bf16.mxu0 0
        %2255 = vmatpush1.bf16.msra.mxu0 %v2221
        %2256 = vmatprep.subr.bf16.mxu0 0
        %2257 = vmatpush1.bf16.msra.mxu0 %v2222
        %2258 = vmatprep.subr.bf16.mxu0 0
        %2259 = vmatpush1.bf16.msra.mxu0 %v2223
        %2260 = vmatprep.subr.bf16.mxu0 0
        %2261 = vmatpush1.bf16.msra.mxu0 %v2224
        %2262 = vmatprep.subr.bf16.mxu0 0
        %2263 = vmatpush1.bf16.msra.mxu0 %v2225
        %2264 = vmatprep.subr.bf16.mxu0 0
        %2265 = vmatpush1.bf16.msra.mxu0 %v2226
        %2266 = vmatprep.subr.bf16.mxu0 0
        %2267 = vmatpush1.bf16.msra.mxu0 %v2227
        %2268 = vmatprep.subr.bf16.mxu0 0
        %2269 = vmatpush1.bf16.msra.mxu0 %v2228
        %2270 = vmatprep.subr.bf16.mxu0 0
        %2271 = vmatpush1.bf16.msra.mxu0 %v2229
        %2272 = vmatprep.subr.bf16.mxu0 0
        %2273 = vmatpush1.bf16.msra.mxu0 %v2230
        %2274 = vmatprep.subr.bf16.mxu0 0
        %2275 = vmatpush1.bf16.msra.mxu0 %v2231
        %2276 = vmatprep.subr.bf16.mxu0 0
        %2277 = vmatpush1.bf16.msra.mxu0 %v2232
        %2278 = vmatprep.subr.bf16.mxu0 0
        %2279 = vmatpush1.bf16.msra.mxu0 %v2233
        %2280 = vmatprep.subr.bf16.mxu0 0
        %2281 = vmatpush1.bf16.msra.mxu0 %v2234
        %2282 = vmatprep.subr.bf16.mxu0 0
        %2283 = vmatpush1.bf16.msra.mxu0 %v2235
        %2284 = vmatprep.mubr.bf16.mxu0 %v2122
        %2285 = vmatmul.mubr.bf16.gmra.mrb[0].mxu0 %v2121
        %v2286 = vpop.f32.mrb[0].mxu0
        %v2287 = vadd.f32 0.0, %v2286
        %v2288 = vpop.f32.mrb[0].mxu0
        %v2289 = vpop.f32.mrb[0].mxu0
        %v2290 = vpop.f32.mrb[0].mxu0
        %2291 = vdwg.mxu0
        %v2292 = vadd.f32 %v1966, %v2287
        %s2293 = scalar_lea.vmem %s9, 1
        %v2294 = vld [vmem:[%s2293] sm:$0x1]
        %v2296 = vlaneseq
        %v2297 = vshrl.u32 %v2296, 7
        %v2298 = vsub.s32 0, %v2297
        %v2299 = vrot.slane %v2294, %v2298
        %v2301 = vadd.f32 %v2292, %v2299
        %2302 = vadd.xlane.f32.xlu0 %v2301
        %v2303 = vpop.xlane.xlu0 %2302
        %v2304 = vmul.f32 %v2303, %v1020
        %v2305 = vsub.f32 %v2301, %v2304
        %v2306 = vmul.f32 %v2305, %v2305
        %2307 = vadd.xlane.f32.xlu0 %v2306
        %v2308 = vpop.xlane.xlu0 %2307
        %v2309 = vmul.f32 %v2308, %v1020
        %v2310 = vadd.f32 %v2309, 1e-05
        %v2311 = vrsqrt.pop %v2310
        %v2312 = vmul.f32 %v2305, %v2311
        %v2313 = vlaneseq
        %v2314 = vshrl.u32 %v2313, 7
        %v2315 = vsub.s32 2, %v2314
        %v2316 = vrot.slane %v1393, %v2315
        %v2317 = vmul.f32 %v2312, %v2316
        %v2318 = vlaneseq
        %v2319 = vshrl.u32 %v2318, 7
        %v2320 = vsub.s32 3, %v2319
        %v2321 = vrot.slane %v1393, %v2320
        %v2322 = vadd.f32 %v2317, %v2321
        %2323 = vst [vmem:[%s439] sm:$0xff] %v2322
        %p2324 = scmp.lt.s32.totalorder %s24, 1
        %s2325 = scalar_select %p2324, %s24, 1
        %s2326 = smul.addr %s2325, 8
        %s2327 = scalar_lea.vmem %s11, %s2326
        // Predicated region
        $region77: #{_generate_impl.2} parent=63 // pred_check
          %p2328 = pneg %p283
        $region78: #{_generate_impl.2} parent=63 // pred_check_branch
          %2330 = sbr.rel (%p2328) target = $region80
        $region79: #{_generate_impl.2} parent=63 // pred_region
          _
        $region80: #{_generate_impl.2} parent=63 // pred_fallthru
          _
      $region64: #{_generate_impl.2} parent=5 // pred_fallthru
        _
      %p2331 = scmp.le.s32.totalorder 2, %s19
      // Predicated region
      $region81: #{_generate_impl.2} parent=5 // pred_check
        %p2332 = pneg %p2331
      $region82: #{_generate_impl.2} parent=5 // pred_check_branch
        %2334 = sbr.rel (%p2332) target = $region84
      $region83: #{_generate_impl.2} parent=5 // pred_region
        %s2335 = ssub.s32 %s19, 2
        // Predicated region
        $region85: #{_generate_impl.2} parent=83 // pred_check
          %p2336 = pneg %p289
        $region86: #{_generate_impl.2} parent=83 // pred_check_branch
          %2338 = sbr.rel (%p2336) target = $region88
        $region87: #{_generate_impl.2} parent=83 // pred_region
          %p2339 = scmp.lt.s32.totalorder %s25, 1
          %s2340 = scalar_select %p2339, %s25, 1
          %s2341 = smul.addr %s2340, 8
          %s2342 = scalar_lea.vmem %s11, %s2341
        $region88: #{_generate_impl.2} parent=83 // pred_fallthru
          _
      $region84: #{_generate_impl.2} parent=5 // pred_fallthru
        _
    $region6: #{_generate_impl.2} parent=1 // loop_footer
      %s23 = sadd.s32 1, %s19
    $region7: #{_generate_impl.2} parent=1 // loop_footer_branch
      %18 = sbr.rel target = $region3
    $region8: #{_generate_impl.2} parent=1 // loop_exit
      _
    %2343 = vsyncpa [#allocation3], 1
    %s2344 = scalar_lea.sflag [#allocation3], 1
    %2345 = vsyncpa %s2344, 1
    %2346 = vsyncpa [#allocation5], 1

// kernel: _generate_impl.3
$region0: #{_generate_impl.3}
  #allocation0 [shape = 'u32[]', space=smem, size = 0x4, offset = 0x4, fixed_abs, tag = 'smem constant byte address 0x4 - core index']
  #allocation1 [shape = 'u32[144,128]{1,0:T(1,128)}', space=vmem, size = 0x12000, scoped, tag = 'internal scratch']
  #allocation2 [shape = 'f32[2,16,128]{2,1,0:T(8,128)}', space=vmem, size = 0x4000, scoped, tag = 'scratch operand']
  #allocation3 [shape = 'f32[2,16,128]{2,1,0:T(8,128)}', space=vmem, size = 0x4000, scoped, tag = 'scratch operand']
  #allocation4 [shape = 'f32[2,8,128]{2,1,0:T(8,128)}', space=vmem, size = 0x2000, scoped, tag = 'scratch operand']
  #allocation5 [shape = 'f32[2,8,128]{2,1,0:T(8,128)}', space=vmem, size = 0x2000, scoped, tag = 'scratch operand']
  %s0 = inlined_call_operand.vmem [shape: f32[64,128], index: 0, kind: input, shape index: {}]
  %s1 = inlined_call_operand.vmem [shape: f32[128,128], index: 1, kind: input, shape index: {}]
  %s2 = inlined_call_operand.vmem [shape: f32[2,8,128], index: 2, kind: input, shape index: {}]
  %s3 = inlined_call_operand.vmem [shape: f32[2,8], index: 3, kind: input, shape index: {}]
  %s4 = inlined_call_operand.vmem [shape: bf16[128,384], index: 4, kind: input, shape index: {}]
  %s5 = inlined_call_operand.vmem [shape: f32[1,384], index: 5, kind: input, shape index: {}]
  %s6 = inlined_call_operand.vmem [shape: bf16[128,128], index: 6, kind: input, shape index: {}]
  %s7 = inlined_call_operand.vmem [shape: f32[1,128], index: 7, kind: input, shape index: {}]
  %s8 = inlined_call_operand.vmem [shape: bf16[128,128], index: 8, kind: input, shape index: {}]
  %s9 = inlined_call_operand.vmem [shape: f32[1,128], index: 9, kind: input, shape index: {}]
  %s10 = inlined_call_operand.vmem [shape: bf16[128,256], index: 10, kind: input, shape index: {}]
  %s11 = inlined_call_operand.vmem [shape: f32[1,256], index: 11, kind: input, shape index: {}]
  %s12 = inlined_call_operand.vmem [shape: bf16[128,128], index: 12, kind: input, shape index: {}]
  %s13 = inlined_call_operand.vmem [shape: f32[1,128], index: 13, kind: input, shape index: {}]
  %s14 = inlined_call_operand.vmem [shape: bf16[128,256], index: 14, kind: input, shape index: {}]
  %s15 = inlined_call_operand.vmem [shape: f32[1,256], index: 15, kind: input, shape index: {}]
  %s16 = inlined_call_operand.vmem [shape: bf16[256,128], index: 16, kind: input, shape index: {}]
  %s17 = inlined_call_operand.vmem [shape: f32[1,128], index: 17, kind: input, shape index: {}]
  %s18 = inlined_call_operand.vmem [shape: f32[6,128], index: 18, kind: input, shape index: {}]
  %s19 = inlined_call_operand.vmem [shape: bf16[128,128], index: 19, kind: input, shape index: {}]
  %s20 = inlined_call_operand.vmem [shape: f32[1,128], index: 20, kind: input, shape index: {}]
  %s21 = inlined_call_operand.hbm [shape: s32[2,16], index: 21, kind: output, shape index: {}]
  %s22 = sld [smem:[#allocation0]]
  $region121: #{_generate_impl.3} parent=0
    _
  %s24 = ssub.s32 1, %s22
  %s25 = scalar_select 0, %s24, %s22
  $region1: #{_generate_impl.3} parent=0
    #allocation6 [shape = 'u8[1024]{0}', space=vmem, size = 0x400, scoped, tag = 'output window, operand 0, single buffered']
    #allocation7 [shape = 's32[2]{0}', space=sflag, size = 0x8, scoped, tag = 'scoped memory for _generate_impl.3']
    %26 = vsyncpa [#allocation7], 0
    loop: start=0, step=1, limit=12
    $region2: #{_generate_impl.3} parent=1 // loop_pre_header
      _
    $region3: #{_generate_impl.3} parent=1 // loop_header
      %s28 = sphi 0, %s32
      %p29 = scmp.ge.s32.totalorder %s28, 12
      %s36 = sphi 0, %s36
      %s38 = sphi 0, %s36
      %s39 = sphi 0, %s38
      %s53 = sphi 0, %s39
      %s57 = sphi 0, %s57
      %s59 = sphi 0, %s57
      %s60 = sphi 0, %s59
      %s74 = sphi 0, %s60
      %s78 = sphi 0, %s78
      %s80 = sphi 0, %s78
      %s81 = sphi 0, %s80
      %s95 = sphi 0, %s81
      %s99 = sphi 0, %s99
      %s101 = sphi 0, %s99
      %s102 = sphi 0, %s101
      %s116 = sphi 0, %s102
      %s120 = sphi 0, %s120
      %s122 = sphi 0, %s120
      %s123 = sphi 0, %s122
      %s137 = sphi 0, %s123
      %s141 = sphi 0, %s141
      %s143 = sphi 0, %s141
      %s144 = sphi 0, %s143
      %s158 = sphi 0, %s144
      %s162 = sphi 0, %s162
      %s164 = sphi 0, %s162
      %s165 = sphi 0, %s164
      %s179 = sphi 0, %s165
      %s183 = sphi 0, %s183
      %s185 = sphi 0, %s183
      %s186 = sphi 0, %s185
      %s200 = sphi 0, %s186
      %s204 = sphi 0, %s204
      %s206 = sphi 0, %s204
      %s207 = sphi 0, %s206
      %s221 = sphi 0, %s207
      %s225 = sphi 0, %s225
      %s227 = sphi 0, %s225
      %s228 = sphi 0, %s227
      %s242 = sphi 0, %s228
      %s246 = sphi 0, %s246
      %s248 = sphi 0, %s246
      %s249 = sphi 0, %s248
      %s263 = sphi 0, %s249
      %s267 = sphi 0, %s267
      %s269 = sphi 0, %s267
      %s270 = sphi 0, %s269
      %s284 = sphi 0, %s270
      %s288 = sphi 0, %s288
      %s290 = sphi 0, %s288
      %s291 = sphi 0, %s290
      %s305 = sphi 0, %s291
      %s309 = sphi 0, %s309
      %s311 = sphi 0, %s309
      %s312 = sphi 0, %s311
      %s326 = sphi 0, %s312
      %s330 = sphi 0, %s330
      %s332 = sphi 0, %s330
      %s333 = sphi 0, %s332
      %s347 = sphi 0, %s333
      %s351 = sphi 0, %s351
      %s353 = sphi 0, %s351
      %s354 = sphi 0, %s353
      %s368 = sphi 0, %s354
      %s372 = sphi 0, %s372
      %s374 = sphi 0, %s372
      %s375 = sphi 0, %s374
      %s389 = sphi 0, %s375
      %s393 = sphi 0, %s393
      %s395 = sphi 0, %s393
      %s396 = sphi 0, %s395
      %s410 = sphi 0, %s396
      %s414 = sphi 0, %s414
      %s416 = sphi 0, %s414
      %s417 = sphi 0, %s416
      %s431 = sphi 0, %s417
      %s435 = sphi 0, %s435
      %s437 = sphi 0, %s435
      %s438 = sphi 0, %s437
      %s452 = sphi 0, %s438
      %s456 = sphi 0, %s456
      %s458 = sphi 0, %s456
      %s459 = sphi 0, %s458
      %s473 = sphi 0, %s459
      %s477 = sphi 0, %s477
      %s479 = sphi 0, %s477
      %s480 = sphi 0, %s479
      %s494 = sphi 0, %s480
    $region4: #{_generate_impl.3} parent=1 // loop_header_branch
      %31 = sbr.rel (%p29) target = $region8
    $region5: #{_generate_impl.3} parent=1 // loop_body
      %s33 = ssub.s32 %s28, 1
      %s34 = ssub.s32 %s28, 2
      %s35 = sadd.s32 %s28, 1
      %s37 = sadd.s32 %s36, 1
      %p40 = scmp.eq.s32.totalorder %s28, 9
      %p41 = scmp.ne.s32.totalorder %s36, %s38
      %p42 = scmp.eq.s32.totalorder %s28, 0
      %p43 = por %p41, %p42
      %p44 = scmp.ne.s32.totalorder %s36, %s38
      %p45 = scmp.eq.s32.totalorder %s33, 9
      %p46 = por %p44, %p45
      %p47 = scmp.ne.s32.totalorder %s38, %s39
      %p48 = scmp.eq.s32.totalorder %s33, 0
      %p49 = por %p47, %p48
      %p50 = scmp.ne.s32.totalorder %s38, %s39
      %p51 = scmp.eq.s32.totalorder %s34, 9
      %p52 = por %p50, %p51
      %p54 = scmp.ne.s32.totalorder %s39, %s53
      %p55 = scmp.eq.s32.totalorder %s34, 0
      %p56 = por %p54, %p55
      %s58 = sadd.s32 %s57, 1
      %p61 = scmp.eq.s32.totalorder %s28, 9
      %p62 = scmp.ne.s32.totalorder %s57, %s59
      %p63 = scmp.eq.s32.totalorder %s28, 0
      %p64 = por %p62, %p63
      %p65 = scmp.ne.s32.totalorder %s57, %s59
      %p66 = scmp.eq.s32.totalorder %s33, 9
      %p67 = por %p65, %p66
      %p68 = scmp.ne.s32.totalorder %s59, %s60
      %p69 = scmp.eq.s32.totalorder %s33, 0
      %p70 = por %p68, %p69
      %p71 = scmp.ne.s32.totalorder %s59, %s60
      %p72 = scmp.eq.s32.totalorder %s34, 9
      %p73 = por %p71, %p72
      %p75 = scmp.ne.s32.totalorder %s60, %s74
      %p76 = scmp.eq.s32.totalorder %s34, 0
      %p77 = por %p75, %p76
      %s79 = sadd.s32 %s78, 1
      %p82 = scmp.eq.s32.totalorder %s28, 9
      %p83 = scmp.ne.s32.totalorder %s78, %s80
      %p84 = scmp.eq.s32.totalorder %s28, 0
      %p85 = por %p83, %p84
      %p86 = scmp.ne.s32.totalorder %s78, %s80
      %p87 = scmp.eq.s32.totalorder %s33, 9
      %p88 = por %p86, %p87
      %p89 = scmp.ne.s32.totalorder %s80, %s81
      %p90 = scmp.eq.s32.totalorder %s33, 0
      %p91 = por %p89, %p90
      %p92 = scmp.ne.s32.totalorder %s80, %s81
      %p93 = scmp.eq.s32.totalorder %s34, 9
      %p94 = por %p92, %p93
      %p96 = scmp.ne.s32.totalorder %s81, %s95
      %p97 = scmp.eq.s32.totalorder %s34, 0
      %p98 = por %p96, %p97
      %s100 = sadd.s32 %s99, 1
      %p103 = scmp.eq.s32.totalorder %s28, 9
      %p104 = scmp.ne.s32.totalorder %s99, %s101
      %p105 = scmp.eq.s32.totalorder %s28, 0
      %p106 = por %p104, %p105
      %p107 = scmp.ne.s32.totalorder %s99, %s101
      %p108 = scmp.eq.s32.totalorder %s33, 9
      %p109 = por %p107, %p108
      %p110 = scmp.ne.s32.totalorder %s101, %s102
      %p111 = scmp.eq.s32.totalorder %s33, 0
      %p112 = por %p110, %p111
      %p113 = scmp.ne.s32.totalorder %s101, %s102
      %p114 = scmp.eq.s32.totalorder %s34, 9
      %p115 = por %p113, %p114
      %p117 = scmp.ne.s32.totalorder %s102, %s116
      %p118 = scmp.eq.s32.totalorder %s34, 0
      %p119 = por %p117, %p118
      %s121 = sadd.s32 %s120, 1
      %p124 = scmp.eq.s32.totalorder %s28, 9
      %p125 = scmp.ne.s32.totalorder %s120, %s122
      %p126 = scmp.eq.s32.totalorder %s28, 0
      %p127 = por %p125, %p126
      %p128 = scmp.ne.s32.totalorder %s120, %s122
      %p129 = scmp.eq.s32.totalorder %s33, 9
      %p130 = por %p128, %p129
      %p131 = scmp.ne.s32.totalorder %s122, %s123
      %p132 = scmp.eq.s32.totalorder %s33, 0
      %p133 = por %p131, %p132
      %p134 = scmp.ne.s32.totalorder %s122, %s123
      %p135 = scmp.eq.s32.totalorder %s34, 9
      %p136 = por %p134, %p135
      %p138 = scmp.ne.s32.totalorder %s123, %s137
      %p139 = scmp.eq.s32.totalorder %s34, 0
      %p140 = por %p138, %p139
      %s142 = sadd.s32 %s141, 1
      %p145 = scmp.eq.s32.totalorder %s28, 9
      %p146 = scmp.ne.s32.totalorder %s141, %s143
      %p147 = scmp.eq.s32.totalorder %s28, 0
      %p148 = por %p146, %p147
      %p149 = scmp.ne.s32.totalorder %s141, %s143
      %p150 = scmp.eq.s32.totalorder %s33, 9
      %p151 = por %p149, %p150
      %p152 = scmp.ne.s32.totalorder %s143, %s144
      %p153 = scmp.eq.s32.totalorder %s33, 0
      %p154 = por %p152, %p153
      %p155 = scmp.ne.s32.totalorder %s143, %s144
      %p156 = scmp.eq.s32.totalorder %s34, 9
      %p157 = por %p155, %p156
      %p159 = scmp.ne.s32.totalorder %s144, %s158
      %p160 = scmp.eq.s32.totalorder %s34, 0
      %p161 = por %p159, %p160
      %s163 = sadd.s32 %s162, 1
      %p166 = scmp.eq.s32.totalorder %s28, 9
      %p167 = scmp.ne.s32.totalorder %s162, %s164
      %p168 = scmp.eq.s32.totalorder %s28, 0
      %p169 = por %p167, %p168
      %p170 = scmp.ne.s32.totalorder %s162, %s164
      %p171 = scmp.eq.s32.totalorder %s33, 9
      %p172 = por %p170, %p171
      %p173 = scmp.ne.s32.totalorder %s164, %s165
      %p174 = scmp.eq.s32.totalorder %s33, 0
      %p175 = por %p173, %p174
      %p176 = scmp.ne.s32.totalorder %s164, %s165
      %p177 = scmp.eq.s32.totalorder %s34, 9
      %p178 = por %p176, %p177
      %p180 = scmp.ne.s32.totalorder %s165, %s179
      %p181 = scmp.eq.s32.totalorder %s34, 0
      %p182 = por %p180, %p181
      %s184 = sadd.s32 %s183, 1
      %p187 = scmp.eq.s32.totalorder %s28, 9
      %p188 = scmp.ne.s32.totalorder %s183, %s185
      %p189 = scmp.eq.s32.totalorder %s28, 0
      %p190 = por %p188, %p189
      %p191 = scmp.ne.s32.totalorder %s183, %s185
      %p192 = scmp.eq.s32.totalorder %s33, 9
      %p193 = por %p191, %p192
      %p194 = scmp.ne.s32.totalorder %s185, %s186
      %p195 = scmp.eq.s32.totalorder %s33, 0
      %p196 = por %p194, %p195
      %p197 = scmp.ne.s32.totalorder %s185, %s186
      %p198 = scmp.eq.s32.totalorder %s34, 9
      %p199 = por %p197, %p198
      %p201 = scmp.ne.s32.totalorder %s186, %s200
      %p202 = scmp.eq.s32.totalorder %s34, 0
      %p203 = por %p201, %p202
      %s205 = sadd.s32 %s204, 1
      %p208 = scmp.eq.s32.totalorder %s28, 9
      %p209 = scmp.ne.s32.totalorder %s204, %s206
      %p210 = scmp.eq.s32.totalorder %s28, 0
      %p211 = por %p209, %p210
      %p212 = scmp.ne.s32.totalorder %s204, %s206
      %p213 = scmp.eq.s32.totalorder %s33, 9
      %p214 = por %p212, %p213
      %p215 = scmp.ne.s32.totalorder %s206, %s207
      %p216 = scmp.eq.s32.totalorder %s33, 0
      %p217 = por %p215, %p216
      %p218 = scmp.ne.s32.totalorder %s206, %s207
      %p219 = scmp.eq.s32.totalorder %s34, 9
      %p220 = por %p218, %p219
      %p222 = scmp.ne.s32.totalorder %s207, %s221
      %p223 = scmp.eq.s32.totalorder %s34, 0
      %p224 = por %p222, %p223
      %s226 = sadd.s32 %s225, 1
      %p229 = scmp.eq.s32.totalorder %s28, 9
      %p230 = scmp.ne.s32.totalorder %s225, %s227
      %p231 = scmp.eq.s32.totalorder %s28, 0
      %p232 = por %p230, %p231
      %p233 = scmp.ne.s32.totalorder %s225, %s227
      %p234 = scmp.eq.s32.totalorder %s33, 9
      %p235 = por %p233, %p234
      %p236 = scmp.ne.s32.totalorder %s227, %s228
      %p237 = scmp.eq.s32.totalorder %s33, 0
      %p238 = por %p236, %p237
      %p239 = scmp.ne.s32.totalorder %s227, %s228
      %p240 = scmp.eq.s32.totalorder %s34, 9
      %p241 = por %p239, %p240
      %p243 = scmp.ne.s32.totalorder %s228, %s242
      %p244 = scmp.eq.s32.totalorder %s34, 0
      %p245 = por %p243, %p244
      %s247 = sadd.s32 %s246, 1
      %p250 = scmp.eq.s32.totalorder %s28, 9
      %p251 = scmp.ne.s32.totalorder %s246, %s248
      %p252 = scmp.eq.s32.totalorder %s28, 0
      %p253 = por %p251, %p252
      %p254 = scmp.ne.s32.totalorder %s246, %s248
      %p255 = scmp.eq.s32.totalorder %s33, 9
      %p256 = por %p254, %p255
      %p257 = scmp.ne.s32.totalorder %s248, %s249
      %p258 = scmp.eq.s32.totalorder %s33, 0
      %p259 = por %p257, %p258
      %p260 = scmp.ne.s32.totalorder %s248, %s249
      %p261 = scmp.eq.s32.totalorder %s34, 9
      %p262 = por %p260, %p261
      %p264 = scmp.ne.s32.totalorder %s249, %s263
      %p265 = scmp.eq.s32.totalorder %s34, 0
      %p266 = por %p264, %p265
      %s268 = sadd.s32 %s267, 1
      %p271 = scmp.eq.s32.totalorder %s28, 9
      %p272 = scmp.ne.s32.totalorder %s267, %s269
      %p273 = scmp.eq.s32.totalorder %s28, 0
      %p274 = por %p272, %p273
      %p275 = scmp.ne.s32.totalorder %s267, %s269
      %p276 = scmp.eq.s32.totalorder %s33, 9
      %p277 = por %p275, %p276
      %p278 = scmp.ne.s32.totalorder %s269, %s270
      %p279 = scmp.eq.s32.totalorder %s33, 0
      %p280 = por %p278, %p279
      %p281 = scmp.ne.s32.totalorder %s269, %s270
      %p282 = scmp.eq.s32.totalorder %s34, 9
      %p283 = por %p281, %p282
      %p285 = scmp.ne.s32.totalorder %s270, %s284
      %p286 = scmp.eq.s32.totalorder %s34, 0
      %p287 = por %p285, %p286
      %s289 = sadd.s32 %s288, 1
      %p292 = scmp.eq.s32.totalorder %s28, 9
      %p293 = scmp.ne.s32.totalorder %s288, %s290
      %p294 = scmp.eq.s32.totalorder %s28, 0
      %p295 = por %p293, %p294
      %p296 = scmp.ne.s32.totalorder %s288, %s290
      %p297 = scmp.eq.s32.totalorder %s33, 9
      %p298 = por %p296, %p297
      %p299 = scmp.ne.s32.totalorder %s290, %s291
      %p300 = scmp.eq.s32.totalorder %s33, 0
      %p301 = por %p299, %p300
      %p302 = scmp.ne.s32.totalorder %s290, %s291
      %p303 = scmp.eq.s32.totalorder %s34, 9
      %p304 = por %p302, %p303
      %p306 = scmp.ne.s32.totalorder %s291, %s305
      %p307 = scmp.eq.s32.totalorder %s34, 0
      %p308 = por %p306, %p307
      %s310 = sadd.s32 %s309, 1
      %p313 = scmp.eq.s32.totalorder %s28, 9
      %p314 = scmp.ne.s32.totalorder %s309, %s311
      %p315 = scmp.eq.s32.totalorder %s28, 0
      %p316 = por %p314, %p315
      %p317 = scmp.ne.s32.totalorder %s309, %s311
      %p318 = scmp.eq.s32.totalorder %s33, 9
      %p319 = por %p317, %p318
      %p320 = scmp.ne.s32.totalorder %s311, %s312
      %p321 = scmp.eq.s32.totalorder %s33, 0
      %p322 = por %p320, %p321
      %p323 = scmp.ne.s32.totalorder %s311, %s312
      %p324 = scmp.eq.s32.totalorder %s34, 9
      %p325 = por %p323, %p324
      %p327 = scmp.ne.s32.totalorder %s312, %s326
      %p328 = scmp.eq.s32.totalorder %s34, 0
      %p329 = por %p327, %p328
      %s331 = sadd.s32 %s330, 1
      %p334 = scmp.eq.s32.totalorder %s28, 9
      %p335 = scmp.ne.s32.totalorder %s330, %s332
      %p336 = scmp.eq.s32.totalorder %s28, 0
      %p337 = por %p335, %p336
      %p338 = scmp.ne.s32.totalorder %s330, %s332
      %p339 = scmp.eq.s32.totalorder %s33, 9
      %p340 = por %p338, %p339
      %p341 = scmp.ne.s32.totalorder %s332, %s333
      %p342 = scmp.eq.s32.totalorder %s33, 0
      %p343 = por %p341, %p342
      %p344 = scmp.ne.s32.totalorder %s332, %s333
      %p345 = scmp.eq.s32.totalorder %s34, 9
      %p346 = por %p344, %p345
      %p348 = scmp.ne.s32.totalorder %s333, %s347
      %p349 = scmp.eq.s32.totalorder %s34, 0
      %p350 = por %p348, %p349
      %s352 = sadd.s32 %s351, 1
      %p355 = scmp.eq.s32.totalorder %s28, 9
      %p356 = scmp.ne.s32.totalorder %s351, %s353
      %p357 = scmp.eq.s32.totalorder %s28, 0
      %p358 = por %p356, %p357
      %p359 = scmp.ne.s32.totalorder %s351, %s353
      %p360 = scmp.eq.s32.totalorder %s33, 9
      %p361 = por %p359, %p360
      %p362 = scmp.ne.s32.totalorder %s353, %s354
      %p363 = scmp.eq.s32.totalorder %s33, 0
      %p364 = por %p362, %p363
      %p365 = scmp.ne.s32.totalorder %s353, %s354
      %p366 = scmp.eq.s32.totalorder %s34, 9
      %p367 = por %p365, %p366
      %p369 = scmp.ne.s32.totalorder %s354, %s368
      %p370 = scmp.eq.s32.totalorder %s34, 0
      %p371 = por %p369, %p370
      %s373 = sadd.s32 %s372, 1
      %p376 = scmp.eq.s32.totalorder %s28, 9
      %p377 = scmp.ne.s32.totalorder %s372, %s374
      %p378 = scmp.eq.s32.totalorder %s28, 0
      %p379 = por %p377, %p378
      %p380 = scmp.ne.s32.totalorder %s372, %s374
      %p381 = scmp.eq.s32.totalorder %s33, 9
      %p382 = por %p380, %p381
      %p383 = scmp.ne.s32.totalorder %s374, %s375
      %p384 = scmp.eq.s32.totalorder %s33, 0
      %p385 = por %p383, %p384
      %p386 = scmp.ne.s32.totalorder %s374, %s375
      %p387 = scmp.eq.s32.totalorder %s34, 9
      %p388 = por %p386, %p387
      %p390 = scmp.ne.s32.totalorder %s375, %s389
      %p391 = scmp.eq.s32.totalorder %s34, 0
      %p392 = por %p390, %p391
      %s394 = sadd.s32 %s393, 1
      %p397 = scmp.eq.s32.totalorder %s28, 9
      %p398 = scmp.ne.s32.totalorder %s393, %s395
      %p399 = scmp.eq.s32.totalorder %s28, 0
      %p400 = por %p398, %p399
      %p401 = scmp.ne.s32.totalorder %s393, %s395
      %p402 = scmp.eq.s32.totalorder %s33, 9
      %p403 = por %p401, %p402
      %p404 = scmp.ne.s32.totalorder %s395, %s396
      %p405 = scmp.eq.s32.totalorder %s33, 0
      %p406 = por %p404, %p405
      %p407 = scmp.ne.s32.totalorder %s395, %s396
      %p408 = scmp.eq.s32.totalorder %s34, 9
      %p409 = por %p407, %p408
      %p411 = scmp.ne.s32.totalorder %s396, %s410
      %p412 = scmp.eq.s32.totalorder %s34, 0
      %p413 = por %p411, %p412
      %s415 = sadd.s32 %s414, 1
      %p418 = scmp.eq.s32.totalorder %s28, 9
      %p419 = scmp.ne.s32.totalorder %s414, %s416
      %p420 = scmp.eq.s32.totalorder %s28, 0
      %p421 = por %p419, %p420
      %p422 = scmp.ne.s32.totalorder %s414, %s416
      %p423 = scmp.eq.s32.totalorder %s33, 9
      %p424 = por %p422, %p423
      %p425 = scmp.ne.s32.totalorder %s416, %s417
      %p426 = scmp.eq.s32.totalorder %s33, 0
      %p427 = por %p425, %p426
      %p428 = scmp.ne.s32.totalorder %s416, %s417
      %p429 = scmp.eq.s32.totalorder %s34, 9
      %p430 = por %p428, %p429
      %p432 = scmp.ne.s32.totalorder %s417, %s431
      %p433 = scmp.eq.s32.totalorder %s34, 0
      %p434 = por %p432, %p433
      %s436 = sadd.s32 %s435, 1
      %p439 = scmp.eq.s32.totalorder %s28, 9
      %p440 = scmp.ne.s32.totalorder %s435, %s437
      %p441 = scmp.eq.s32.totalorder %s28, 0
      %p442 = por %p440, %p441
      %p443 = scmp.ne.s32.totalorder %s435, %s437
      %p444 = scmp.eq.s32.totalorder %s33, 9
      %p445 = por %p443, %p444
      %p446 = scmp.ne.s32.totalorder %s437, %s438
      %p447 = scmp.eq.s32.totalorder %s33, 0
      %p448 = por %p446, %p447
      %p449 = scmp.ne.s32.totalorder %s437, %s438
      %p450 = scmp.eq.s32.totalorder %s34, 9
      %p451 = por %p449, %p450
      %p453 = scmp.ne.s32.totalorder %s438, %s452
      %p454 = scmp.eq.s32.totalorder %s34, 0
      %p455 = por %p453, %p454
      %s457 = sadd.s32 %s456, 1
      %p460 = scmp.eq.s32.totalorder %s28, 9
      %p461 = scmp.ne.s32.totalorder %s456, %s458
      %p462 = scmp.eq.s32.totalorder %s28, 0
      %p463 = por %p461, %p462
      %p464 = scmp.ne.s32.totalorder %s456, %s458
      %p465 = scmp.eq.s32.totalorder %s33, 9
      %p466 = por %p464, %p465
      %p467 = scmp.ne.s32.totalorder %s458, %s459
      %p468 = scmp.eq.s32.totalorder %s33, 0
      %p469 = por %p467, %p468
      %p470 = scmp.ne.s32.totalorder %s458, %s459
      %p471 = scmp.eq.s32.totalorder %s34, 9
      %p472 = por %p470, %p471
      %p474 = scmp.ne.s32.totalorder %s459, %s473
      %p475 = scmp.eq.s32.totalorder %s34, 0
      %p476 = por %p474, %p475
      %s478 = sadd.s32 %s477, 1
      %p481 = scmp.eq.s32.totalorder %s28, 9
      %p482 = scmp.ne.s32.totalorder %s477, %s479
      %p483 = scmp.eq.s32.totalorder %s28, 0
      %p484 = por %p482, %p483
      %p485 = scmp.ne.s32.totalorder %s477, %s479
      %p486 = scmp.eq.s32.totalorder %s33, 9
      %p487 = por %p485, %p486
      %p488 = scmp.ne.s32.totalorder %s479, %s480
      %p489 = scmp.eq.s32.totalorder %s33, 0
      %p490 = por %p488, %p489
      %p491 = scmp.ne.s32.totalorder %s479, %s480
      %p492 = scmp.eq.s32.totalorder %s34, 9
      %p493 = por %p491, %p492
      %p495 = scmp.ne.s32.totalorder %s480, %s494
      %p496 = scmp.eq.s32.totalorder %s34, 0
      %p497 = por %p495, %p496
      %p498 = scmp.le.s32.totalorder 1, %s28
      %p499 = scmp.lt.s32.totalorder %s28, 11
      %p500 = pnand %p498, %p499
      %p501 = pneg %p500
      // Predicated region
      $region9: #{_generate_impl.3} parent=5 // pred_check
        _
      $region10: #{_generate_impl.3} parent=5 // pred_check_branch
        %503 = sbr.rel (%p500) target = $region12
      $region11: #{_generate_impl.3} parent=5 // pred_region
        %s504 = ssub.s32 %s28, 1
        // Predicated region
        $region13: #{_generate_impl.3} parent=11 // pred_check
          %p505 = pneg %p49
        $region14: #{_generate_impl.3} parent=11 // pred_check_branch
          %507 = sbr.rel (%p505) target = $region16
        $region15: #{_generate_impl.3} parent=11 // pred_region
          _
        $region16: #{_generate_impl.3} parent=11 // pred_fallthru
          _
        // Predicated region
        $region17: #{_generate_impl.3} parent=11 // pred_check
          %p508 = pneg %p70
        $region18: #{_generate_impl.3} parent=11 // pred_check_branch
          %510 = sbr.rel (%p508) target = $region20
        $region19: #{_generate_impl.3} parent=11 // pred_region
          _
        $region20: #{_generate_impl.3} parent=11 // pred_fallthru
          _
        // Predicated region
        $region21: #{_generate_impl.3} parent=11 // pred_check
          %p511 = pneg %p91
        $region22: #{_generate_impl.3} parent=11 // pred_check_branch
          %513 = sbr.rel (%p511) target = $region24
        $region23: #{_generate_impl.3} parent=11 // pred_region
          _
        $region24: #{_generate_impl.3} parent=11 // pred_fallthru
          _
        // Predicated region
        $region25: #{_generate_impl.3} parent=11 // pred_check
          %p514 = pneg %p112
        $region26: #{_generate_impl.3} parent=11 // pred_check_branch
          %516 = sbr.rel (%p514) target = $region28
        $region27: #{_generate_impl.3} parent=11 // pred_region
          _
        $region28: #{_generate_impl.3} parent=11 // pred_fallthru
          _
        // Predicated region
        $region29: #{_generate_impl.3} parent=11 // pred_check
          %p517 = pneg %p133
        $region30: #{_generate_impl.3} parent=11 // pred_check_branch
          %519 = sbr.rel (%p517) target = $region32
        $region31: #{_generate_impl.3} parent=11 // pred_region
          _
        $region32: #{_generate_impl.3} parent=11 // pred_fallthru
          _
        // Predicated region
        $region33: #{_generate_impl.3} parent=11 // pred_check
          %p520 = pneg %p154
        $region34: #{_generate_impl.3} parent=11 // pred_check_branch
          %522 = sbr.rel (%p520) target = $region36
        $region35: #{_generate_impl.3} parent=11 // pred_region
          _
        $region36: #{_generate_impl.3} parent=11 // pred_fallthru
          _
        // Predicated region
        $region37: #{_generate_impl.3} parent=11 // pred_check
          %p523 = pneg %p175
        $region38: #{_generate_impl.3} parent=11 // pred_check_branch
          %525 = sbr.rel (%p523) target = $region40
        $region39: #{_generate_impl.3} parent=11 // pred_region
          _
        $region40: #{_generate_impl.3} parent=11 // pred_fallthru
          _
        // Predicated region
        $region41: #{_generate_impl.3} parent=11 // pred_check
          %p526 = pneg %p196
        $region42: #{_generate_impl.3} parent=11 // pred_check_branch
          %528 = sbr.rel (%p526) target = $region44
        $region43: #{_generate_impl.3} parent=11 // pred_region
          _
        $region44: #{_generate_impl.3} parent=11 // pred_fallthru
          _
        // Predicated region
        $region45: #{_generate_impl.3} parent=11 // pred_check
          %p529 = pneg %p217
        $region46: #{_generate_impl.3} parent=11 // pred_check_branch
          %531 = sbr.rel (%p529) target = $region48
        $region47: #{_generate_impl.3} parent=11 // pred_region
          _
        $region48: #{_generate_impl.3} parent=11 // pred_fallthru
          _
        // Predicated region
        $region49: #{_generate_impl.3} parent=11 // pred_check
          %p532 = pneg %p238
        $region50: #{_generate_impl.3} parent=11 // pred_check_branch
          %534 = sbr.rel (%p532) target = $region52
        $region51: #{_generate_impl.3} parent=11 // pred_region
          _
        $region52: #{_generate_impl.3} parent=11 // pred_fallthru
          _
        // Predicated region
        $region53: #{_generate_impl.3} parent=11 // pred_check
          %p535 = pneg %p259
        $region54: #{_generate_impl.3} parent=11 // pred_check_branch
          %537 = sbr.rel (%p535) target = $region56
        $region55: #{_generate_impl.3} parent=11 // pred_region
          _
        $region56: #{_generate_impl.3} parent=11 // pred_fallthru
          _
        // Predicated region
        $region57: #{_generate_impl.3} parent=11 // pred_check
          %p538 = pneg %p280
        $region58: #{_generate_impl.3} parent=11 // pred_check_branch
          %540 = sbr.rel (%p538) target = $region60
        $region59: #{_generate_impl.3} parent=11 // pred_region
          _
        $region60: #{_generate_impl.3} parent=11 // pred_fallthru
          _
        // Predicated region
        $region61: #{_generate_impl.3} parent=11 // pred_check
          %p541 = pneg %p301
        $region62: #{_generate_impl.3} parent=11 // pred_check_branch
          %543 = sbr.rel (%p541) target = $region64
        $region63: #{_generate_impl.3} parent=11 // pred_region
          _
        $region64: #{_generate_impl.3} parent=11 // pred_fallthru
          _
        // Predicated region
        $region65: #{_generate_impl.3} parent=11 // pred_check
          %p544 = pneg %p322
        $region66: #{_generate_impl.3} parent=11 // pred_check_branch
          %546 = sbr.rel (%p544) target = $region68
        $region67: #{_generate_impl.3} parent=11 // pred_region
          _
        $region68: #{_generate_impl.3} parent=11 // pred_fallthru
          _
        // Predicated region
        $region69: #{_generate_impl.3} parent=11 // pred_check
          %p547 = pneg %p343
        $region70: #{_generate_impl.3} parent=11 // pred_check_branch
          %549 = sbr.rel (%p547) target = $region72
        $region71: #{_generate_impl.3} parent=11 // pred_region
          _
        $region72: #{_generate_impl.3} parent=11 // pred_fallthru
          _
        // Predicated region
        $region73: #{_generate_impl.3} parent=11 // pred_check
          %p550 = pneg %p364
        $region74: #{_generate_impl.3} parent=11 // pred_check_branch
          %552 = sbr.rel (%p550) target = $region76
        $region75: #{_generate_impl.3} parent=11 // pred_region
          _
        $region76: #{_generate_impl.3} parent=11 // pred_fallthru
          _
        // Predicated region
        $region77: #{_generate_impl.3} parent=11 // pred_check
          %p553 = pneg %p385
        $region78: #{_generate_impl.3} parent=11 // pred_check_branch
          %555 = sbr.rel (%p553) target = $region80
        $region79: #{_generate_impl.3} parent=11 // pred_region
          _
        $region80: #{_generate_impl.3} parent=11 // pred_fallthru
          _
        // Predicated region
        $region81: #{_generate_impl.3} parent=11 // pred_check
          %p556 = pneg %p406
        $region82: #{_generate_impl.3} parent=11 // pred_check_branch
          %558 = sbr.rel (%p556) target = $region84
        $region83: #{_generate_impl.3} parent=11 // pred_region
          _
        $region84: #{_generate_impl.3} parent=11 // pred_fallthru
          _
        // Predicated region
        $region85: #{_generate_impl.3} parent=11 // pred_check
          %p559 = pneg %p427
        $region86: #{_generate_impl.3} parent=11 // pred_check_branch
          %561 = sbr.rel (%p559) target = $region88
        $region87: #{_generate_impl.3} parent=11 // pred_region
          _
        $region88: #{_generate_impl.3} parent=11 // pred_fallthru
          _
        // Predicated region
        $region89: #{_generate_impl.3} parent=11 // pred_check
          %p562 = pneg %p448
        $region90: #{_generate_impl.3} parent=11 // pred_check_branch
          %564 = sbr.rel (%p562) target = $region92
        $region91: #{_generate_impl.3} parent=11 // pred_region
          _
        $region92: #{_generate_impl.3} parent=11 // pred_fallthru
          _
        // Predicated region
        $region93: #{_generate_impl.3} parent=11 // pred_check
          %p565 = pneg %p469
        $region94: #{_generate_impl.3} parent=11 // pred_check_branch
          %567 = sbr.rel (%p565) target = $region96
        $region95: #{_generate_impl.3} parent=11 // pred_region
          _
        $region96: #{_generate_impl.3} parent=11 // pred_fallthru
          _
      $region12: #{_generate_impl.3} parent=5 // pred_fallthru
        _
      %p568 = scmp.lt.s32.totalorder %s28, 10
      // Predicated region
      $region97: #{_generate_impl.3} parent=5 // pred_check
        %p569 = pneg %p568
      $region98: #{_generate_impl.3} parent=5 // pred_check_branch
        %571 = sbr.rel (%p569) target = $region100
      $region99: #{_generate_impl.3} parent=5 // pred_region
        _
      $region100: #{_generate_impl.3} parent=5 // pred_fallthru
        _
      %p572 = scmp.le.s32.totalorder 1, %s28
      %p573 = scmp.lt.s32.totalorder %s28, 11
      %p574 = pnand %p572, %p573
      %p575 = pneg %p574
      // Predicated region
      $region101: #{_generate_impl.3} parent=5 // pred_check
        _
      $region102: #{_generate_impl.3} parent=5 // pred_check_branch
        %577 = sbr.rel (%p574) target = $region104
      $region103: #{_generate_impl.3} parent=5 // pred_region
        %s578 = ssub.s32 %s28, 1
        %p579 = pneg %p49
        %p580 = pneg %p46
        %p581 = pneg %p70
        %p582 = pneg %p67
        %p583 = pneg %p91
        %p584 = pneg %p88
        %p585 = pneg %p112
        %p586 = pneg %p109
        %p587 = pneg %p133
        %p588 = pneg %p130
        %p589 = pneg %p154
        %p590 = pneg %p151
        %p591 = pneg %p175
        %p592 = pneg %p172
        %p593 = pneg %p196
        %p594 = pneg %p193
        %p595 = pneg %p217
        %p596 = pneg %p214
        %p597 = pneg %p238
        %p598 = pneg %p235
        %p599 = pneg %p259
        %p600 = pneg %p256
        %p601 = pneg %p280
        %p602 = pneg %p277
        %p603 = pneg %p301
        %p604 = pneg %p298
        %p605 = pneg %p322
        %p606 = pneg %p319
        %p607 = pneg %p343
        %p608 = pneg %p340
        %p609 = pneg %p364
        %p610 = pneg %p361
        %p611 = pneg %p385
        %p612 = pneg %p382
        %p613 = pneg %p406
        %p614 = pneg %p403
        %p615 = pneg %p427
        %p616 = pneg %p424
        %p617 = pneg %p448
        %p618 = pneg %p445
        %p619 = pneg %p469
        %p620 = pneg %p466
        %p621 = pneg %p490
        %p622 = pneg %p487
        %v624 = vlaneseq
        %v625 = vand.u32 %v624, 127
        %vm626 = vcmp.ge.s32.totalorder %v625, 0
        %vm627 = vcmp.lt.s32.totalorder %v625, 32
        %vm628 = vmand %vm626, %vm627
        %v629 = vsel %vm628, 1.0, 0.0
        %vm630 = vcmp.ge.s32.totalorder %v625, 32
        %vm631 = vcmp.lt.s32.totalorder %v625, 64
        %vm632 = vmand %vm630, %vm631
        %v633 = vsel %vm632, 1.0, 0.0
        %vm634 = vcmp.ge.s32.totalorder %v625, 64
        %vm635 = vcmp.lt.s32.totalorder %v625, 96
        %vm636 = vmand %vm634, %vm635
        %v637 = vsel %vm636, 1.0, 0.0
        %vm638 = vcmp.ge.s32.totalorder %v625, 96
        %vm639 = vcmp.lt.s32.totalorder %v625, 128
        %vm640 = vmand %vm638, %vm639
        %v641 = vsel %vm640, 1.0, 0.0
        %p642 = scmp.eq.s32.totalorder %s33, 0
        // Predicated region
        $region105: #{_generate_impl.3} parent=103 // pred_check
          %p643 = pneg %p642
        $region106: #{_generate_impl.3} parent=103 // pred_check_branch
          %645 = sbr.rel (%p643) target = $region108
        $region107: #{_generate_impl.3} parent=103 // pred_region
          %vm646 = vcmp.eq.s32.totalorder %v625, 0
          %v647 = vsel %vm646, 2, 1
          %vm648 = vcmask 123904
          %649 = vst.msk [vmem:[#allocation6] sm:$0x3] %vm648, %v647
          %650 = vst [vmem:[#allocation2] sm:$0xff] 0.0
          %651 = vst [vmem:[#allocation2 + $0x8] sm:$0xff] 0.0
          %652 = vst [vmem:[#allocation2 + $0x10] sm:$0xff] 0.0
          %653 = vst [vmem:[#allocation2 + $0x18] sm:$0xff] 0.0
          %654 = vst [vmem:[#allocation3] sm:$0xff] 0.0
          %655 = vst [vmem:[#allocation3 + $0x8] sm:$0xff] 0.0
          %656 = vst [vmem:[#allocation3 + $0x10] sm:$0xff] 0.0
          %657 = vst [vmem:[#allocation3 + $0x18] sm:$0xff] 0.0
          %v658 = vld [vmem:[%s2] sm:$0xff]
          %v659 = vld [vmem:[%s2 + $0x8] sm:$0xff]
          %v660 = vpack.c.bf16 %v659, %v658
          %v661 = vld [vmem:[%s10] sm:$0xff]
          %v662 = vld [vmem:[%s10 + $0x8] sm:$0xff]
          %v663 = vld [vmem:[%s10 + $0x10] sm:$0xff]
          %v664 = vld [vmem:[%s10 + $0x18] sm:$0xff]
          %v665 = vld [vmem:[%s10 + $0x20] sm:$0xff]
          %v666 = vld [vmem:[%s10 + $0x28] sm:$0xff]
          %v667 = vld [vmem:[%s10 + $0x30] sm:$0xff]
          %v668 = vld [vmem:[%s10 + $0x38] sm:$0xff]
          %v669 = vld [vmem:[%s10 + $0x40] sm:$0xff]
          %v670 = vld [vmem:[%s10 + $0x48] sm:$0xff]
          %v671 = vld [vmem:[%s10 + $0x50] sm:$0xff]
          %v672 = vld [vmem:[%s10 + $0x58] sm:$0xff]
          %v673 = vld [vmem:[%s10 + $0x60] sm:$0xff]
          %v674 = vld [vmem:[%s10 + $0x68] sm:$0xff]
          %v675 = vld [vmem:[%s10 + $0x70] sm:$0xff]
          %v676 = vld [vmem:[%s10 + $0x78] sm:$0xff]
          %v677 = vld [vmem:[%s11] sm:$0x3]
          %v679 = vlaneseq
          %v680 = vshrl.u32 %v679, 7
          %v681 = vsub.s32 0, %v680
          %v682 = vrot.slane %v677, %v681
          %v683 = vlaneseq
          %v684 = vshrl.u32 %v683, 7
          %v685 = vsub.s32 1, %v684
          %v686 = vrot.slane %v677, %v685
          %v705 = vunpack.c.l.b16 %v661
          %v706 = vunpack.c.h.b16 %v661
          %v707 = vunpack.c.l.b16 %v662
          %v708 = vunpack.c.h.b16 %v662
          %v709 = vunpack.c.l.b16 %v663
          %v710 = vunpack.c.h.b16 %v663
          %v711 = vunpack.c.l.b16 %v664
          %v712 = vunpack.c.h.b16 %v664
          %v713 = vunpack.c.l.b16 %v665
          %v714 = vunpack.c.h.b16 %v665
          %v715 = vunpack.c.l.b16 %v666
          %v716 = vunpack.c.h.b16 %v666
          %v717 = vunpack.c.l.b16 %v667
          %v718 = vunpack.c.h.b16 %v667
          %v719 = vunpack.c.l.b16 %v668
          %v720 = vunpack.c.h.b16 %v668
          %v721 = vunpack.c.l.b16 %v669
          %v722 = vunpack.c.h.b16 %v669
          %v723 = vunpack.c.l.b16 %v670
          %v724 = vunpack.c.h.b16 %v670
          %v725 = vunpack.c.l.b16 %v671
          %v726 = vunpack.c.h.b16 %v671
          %v727 = vunpack.c.l.b16 %v672
          %v728 = vunpack.c.h.b16 %v672
          %v729 = vunpack.c.l.b16 %v673
          %v730 = vunpack.c.h.b16 %v673
          %v731 = vunpack.c.l.b16 %v674
          %v732 = vunpack.c.h.b16 %v674
          %v733 = vunpack.c.l.b16 %v675
          %v734 = vunpack.c.h.b16 %v675
          %v735 = vunpack.c.l.b16 %v676
          %v736 = vunpack.c.h.b16 %v676
          %v737 = vpack.c.b16 %v707, %v705
          %v738 = vpack.c.b16 %v708, %v706
          %v739 = vpack.c.b16 %v711, %v709
          %v740 = vpack.c.b16 %v712, %v710
          %v741 = vpack.c.b16 %v715, %v713
          %v742 = vpack.c.b16 %v716, %v714
          %v743 = vpack.c.b16 %v719, %v717
          %v744 = vpack.c.b16 %v720, %v718
          %v745 = vpack.c.b16 %v723, %v721
          %v746 = vpack.c.b16 %v724, %v722
          %v747 = vpack.c.b16 %v727, %v725
          %v748 = vpack.c.b16 %v728, %v726
          %v749 = vpack.c.b16 %v731, %v729
          %v750 = vpack.c.b16 %v732, %v730
          %v751 = vpack.c.b16 %v735, %v733
          %v752 = vpack.c.b16 %v736, %v734
          %769 = vmatprep.subr.bf16.mxu0 %v738
          %770 = vmatpush1.bf16.msra.mxu0 %v737
          %771 = vmatprep.subr.bf16.mxu0 %v740
          %772 = vmatpush1.bf16.msra.mxu0 %v739
          %773 = vmatprep.subr.bf16.mxu0 %v742
          %774 = vmatpush1.bf16.msra.mxu0 %v741
          %775 = vmatprep.subr.bf16.mxu0 %v744
          %776 = vmatpush1.bf16.msra.mxu0 %v743
          %777 = vmatprep.subr.bf16.mxu0 %v746
          %778 = vmatpush1.bf16.msra.mxu0 %v745
          %779 = vmatprep.subr.bf16.mxu0 %v748
          %780 = vmatpush1.bf16.msra.mxu0 %v747
          %781 = vmatprep.subr.bf16.mxu0 %v750
          %782 = vmatpush1.bf16.msra.mxu0 %v749
          %783 = vmatprep.subr.bf16.mxu0 %v752
          %784 = vmatpush1.bf16.msra.mxu0 %v751
          %785 = vmatprep.subr.bf16.mxu0 0
          %786 = vmatpush1.bf16.msra.mxu0 0
          %787 = vmatprep.subr.bf16.mxu0 0
          %788 = vmatpush1.bf16.msra.mxu0 0
          %789 = vmatprep.subr.bf16.mxu0 0
          %790 = vmatpush1.bf16.msra.mxu0 0
          %791 = vmatprep.subr.bf16.mxu0 0
          %792 = vmatpush1.bf16.msra.mxu0 0
          %793 = vmatprep.subr.bf16.mxu0 0
          %794 = vmatpush1.bf16.msra.mxu0 0
          %795 = vmatprep.subr.bf16.mxu0 0
          %796 = vmatpush1.bf16.msra.mxu0 0
          %797 = vmatprep.subr.bf16.mxu0 0
          %798 = vmatpush1.bf16.msra.mxu0 0
          %799 = vmatprep.subr.bf16.mxu0 0
          %800 = vmatpush1.bf16.msra.mxu0 0
          %801 = vmatprep.mubr.bf16.mxu0 0
          %802 = vmatmul.mubr.bf16.gmra.mrb[0].mxu0 %v660
          %v803 = vpop.f32.mrb[0].mxu0
          %v804 = vadd.f32 %v682, %v803
          %v805 = vpop.f32.mrb[0].mxu0
          %v806 = vadd.f32 %v686, %v805
          %v807 = vpop.f32.mrb[0].mxu0
          %v808 = vadd.f32 %v682, %v807
          %v809 = vpop.f32.mrb[0].mxu0
          %v810 = vadd.f32 %v686, %v809
          %811 = vdwg.mxu0
          %812 = vst [vmem:[#allocation4] sm:$0xff] %v804
          %813 = vst [vmem:[#allocation4 + $0x8] sm:$0xff] %v808
          %814 = vst [vmem:[#allocation5] sm:$0xff] %v806
          %815 = vst [vmem:[#allocation5 + $0x8] sm:$0xff] %v810
        $region108: #{_generate_impl.3} parent=103 // pred_fallthru
          _
        %v816 = vld [vmem:[#allocation6] sm:$0x3]
        %v817 = vcvt.s32.f32 %v816
        %v818 = vstv %s33
        %vm819 = vcmp.eq.s32.totalorder %v625, %v818
        %v820 = vsel %vm819, %v817, 0.0
        %vm821 = vcmask 123904
        %v822 = vsel %vm821, %v820, 0.0
        %823 = vadd.xlane.f32.xlu0 %v822
        %v824 = vpop.xlane.xlu0 %823
        %v825 = vcvt.s32.f32 %v625
        %vm826 = vcmp.eq.f32.partialorder %v825, %v824
        %v827 = vsel %vm826, 1.0, 0.0
        %v828 = vld [vmem:[%s1] sm:$0xff]
        %v829 = vld [vmem:[%s1 + $0x8] sm:$0xff]
        %v830 = vld [vmem:[%s1 + $0x10] sm:$0xff]
        %v831 = vld [vmem:[%s1 + $0x18] sm:$0xff]
        %v832 = vld [vmem:[%s1 + $0x20] sm:$0xff]
        %v833 = vld [vmem:[%s1 + $0x28] sm:$0xff]
        %v834 = vld [vmem:[%s1 + $0x30] sm:$0xff]
        %v835 = vld [vmem:[%s1 + $0x38] sm:$0xff]
        %v836 = vld [vmem:[%s1 + $0x40] sm:$0xff]
        %v837 = vld [vmem:[%s1 + $0x48] sm:$0xff]
        %v838 = vld [vmem:[%s1 + $0x50] sm:$0xff]
        %v839 = vld [vmem:[%s1 + $0x58] sm:$0xff]
        %v840 = vld [vmem:[%s1 + $0x60] sm:$0xff]
        %v841 = vld [vmem:[%s1 + $0x68] sm:$0xff]
        %v842 = vld [vmem:[%s1 + $0x70] sm:$0xff]
        %v843 = vld [vmem:[%s1 + $0x78] sm:$0xff]
        %s844 = scalar_lea.vmem %s0, %s33
        %v845 = vld [vmem:[%s844] sm:$0x1]
        %v846 = vlaneseq
        %v847 = vshrl.u32 %v846, 7
        %v848 = vsub.s32 0, %v847
        %v849 = vrot.slane %v845, %v848
        %850 = vmatprep.subr.mxu0 0.0
        %851 = vmatpush1.msra.mxu0 %v828
        %852 = vmatprep.subr.mxu0 0.0
        %853 = vmatpush1.msra.mxu0 %v829
        %854 = vmatprep.subr.mxu0 0.0
        %855 = vmatpush1.msra.mxu0 %v830
        %856 = vmatprep.subr.mxu0 0.0
        %857 = vmatpush1.msra.mxu0 %v831
        %858 = vmatprep.subr.mxu0 0.0
        %859 = vmatpush1.msra.mxu0 %v832
        %860 = vmatprep.subr.mxu0 0.0
        %861 = vmatpush1.msra.mxu0 %v833
        %862 = vmatprep.subr.mxu0 0.0
        %863 = vmatpush1.msra.mxu0 %v834
        %864 = vmatprep.subr.mxu0 0.0
        %865 = vmatpush1.msra.mxu0 %v835
        %866 = vmatprep.subr.mxu0 0.0
        %867 = vmatpush1.msra.mxu0 %v836
        %868 = vmatprep.subr.mxu0 0.0
        %869 = vmatpush1.msra.mxu0 %v837
        %870 = vmatprep.subr.mxu0 0.0
        %871 = vmatpush1.msra.mxu0 %v838
        %872 = vmatprep.subr.mxu0 0.0
        %873 = vmatpush1.msra.mxu0 %v839
        %874 = vmatprep.subr.mxu0 0.0
        %875 = vmatpush1.msra.mxu0 %v840
        %876 = vmatprep.subr.mxu0 0.0
        %877 = vmatpush1.msra.mxu0 %v841
        %878 = vmatprep.subr.mxu0 0.0
        %879 = vmatpush1.msra.mxu0 %v842
        %880 = vmatprep.subr.mxu0 0.0
        %881 = vmatpush1.msra.mxu0 %v843
        %882 = vmatprep.subr.mxu0 0.0
        %883 = vmatpush1.msra.mxu0 0.0
        %884 = vmatprep.subr.mxu0 0.0
        %885 = vmatpush1.msra.mxu0 0.0
        %886 = vmatprep.subr.mxu0 0.0
        %887 = vmatpush1.msra.mxu0 0.0
        %888 = vmatprep.subr.mxu0 0.0
        %889 = vmatpush1.msra.mxu0 0.0
        %890 = vmatprep.subr.mxu0 0.0
        %891 = vmatpush1.msra.mxu0 0.0
        %892 = vmatprep.subr.mxu0 0.0
        %893 = vmatpush1.msra.mxu0 0.0
        %894 = vmatprep.subr.mxu0 0.0
        %895 = vmatpush1.msra.mxu0 0.0
        %896 = vmatprep.subr.mxu0 0.0
        %897 = vmatpush1.msra.mxu0 0.0
        %898 = vmatprep.subr.mxu0 0.0
        %899 = vmatpush1.msra.mxu0 0.0
        %900 = vmatprep.subr.mxu0 0.0
        %901 = vmatpush1.msra.mxu0 0.0
        %902 = vmatprep.subr.mxu0 0.0
        %903 = vmatpush1.msra.mxu0 0.0
        %904 = vmatprep.subr.mxu0 0.0
        %905 = vmatpush1.msra.mxu0 0.0
        %906 = vmatprep.subr.mxu0 0.0
        %907 = vmatpush1.msra.mxu0 0.0
        %908 = vmatprep.subr.mxu0 0.0
        %909 = vmatpush1.msra.mxu0 0.0
        %910 = vmatprep.subr.mxu0 0.0
        %911 = vmatpush1.msra.mxu0 0.0
        %912 = vmatprep.subr.mxu0 0.0
        %913 = vmatpush1.msra.mxu0 0.0
        %914 = vmatprep.mubr.f32.mxu0 0.0
        %915 = vmatmul.mubr.f32.gmra.mrb[0].mxu0 %v827
        %v916 = vpop.f32.mrb[0].mxu0
        %v917 = vadd.f32 %v849, %v916
        %v918 = vpop.f32.mrb[0].mxu0
        %919 = vdwg.mxu0
        %v920 = vld [vmem:[%s18] sm:$0x3f]
        %v921 = vld [vmem:[%s3] sm:$0x3]
        %v922 = vpack.c.bf16 %v917, %v917
        %v923 = vld [vmem:[%s4] sm:$0xff]
        %v924 = vld [vmem:[%s4 + $0x8] sm:$0xf]
        %v925 = vld [vmem:[%s4 + $0xc] sm:$0xff]
        %v926 = vld [vmem:[%s4 + $0x14] sm:$0xf]
        %v927 = vld [vmem:[%s4 + $0x18] sm:$0xff]
        %v928 = vld [vmem:[%s4 + $0x20] sm:$0xf]
        %v929 = vld [vmem:[%s4 + $0x24] sm:$0xff]
        %v930 = vld [vmem:[%s4 + $0x2c] sm:$0xf]
        %v931 = vld [vmem:[%s4 + $0x30] sm:$0xff]
        %v932 = vld [vmem:[%s4 + $0x38] sm:$0xf]
        %v933 = vld [vmem:[%s4 + $0x3c] sm:$0xff]
        %v934 = vld [vmem:[%s4 + $0x44] sm:$0xf]
        %v935 = vld [vmem:[%s4 + $0x48] sm:$0xff]
        %v936 = vld [vmem:[%s4 + $0x50] sm:$0xf]
        %v937 = vld [vmem:[%s4 + $0x54] sm:$0xff]
        %v938 = vld [vmem:[%s4 + $0x5c] sm:$0xf]
        %v939 = vld [vmem:[%s4 + $0x60] sm:$0xff]
        %v940 = vld [vmem:[%s4 + $0x68] sm:$0xf]
        %v941 = vld [vmem:[%s4 + $0x6c] sm:$0xff]
        %v942 = vld [vmem:[%s4 + $0x74] sm:$0xf]
        %v943 = vld [vmem:[%s4 + $0x78] sm:$0xff]
        %v944 = vld [vmem:[%s4 + $0x80] sm:$0xf]
        %v945 = vld [vmem:[%s4 + $0x84] sm:$0xff]
        %v946 = vld [vmem:[%s4 + $0x8c] sm:$0xf]
        %v947 = vld [vmem:[%s4 + $0x90] sm:$0xff]
        %v948 = vld [vmem:[%s4 + $0x98] sm:$0xf]
        %v949 = vld [vmem:[%s4 + $0x9c] sm:$0xff]
        %v950 = vld [vmem:[%s4 + $0xa4] sm:$0xf]
        %v951 = vld [vmem:[%s4 + $0xa8] sm:$0xff]
        %v952 = vld [vmem:[%s4 + $0xb0] sm:$0xf]
        %v953 = vld [vmem:[%s4 + $0xb4] sm:$0xff]
        %v954 = vld [vmem:[%s4 + $0xbc] sm:$0xf]
        %v955 = vld [vmem:[%s5] sm:$0x7]
        %v957 = vlaneseq
        %v958 = vshrl.u32 %v957, 7
        %v959 = vsub.s32 0, %v958
        %v960 = vrot.slane %v955, %v959
        %v961 = vlaneseq
        %v962 = vshrl.u32 %v961, 7
        %v963 = vsub.s32 1, %v962
        %v964 = vrot.slane %v955, %v963
        %v965 = vlaneseq
        %v966 = vshrl.u32 %v965, 7
        %v967 = vsub.s32 2, %v966
        %v968 = vrot.slane %v955, %v967
        %v1004 = vunpack.c.l.b16 %v923
        %v1005 = vunpack.c.h.b16 %v923
        %v1006 = vunpack.c.l.b16 %v924
        %v1007 = vunpack.c.l.b16 %v925
        %v1008 = vunpack.c.h.b16 %v925
        %v1009 = vunpack.c.l.b16 %v926
        %v1010 = vunpack.c.l.b16 %v927
        %v1011 = vunpack.c.h.b16 %v927
        %v1012 = vunpack.c.l.b16 %v928
        %v1013 = vunpack.c.l.b16 %v929
        %v1014 = vunpack.c.h.b16 %v929
        %v1015 = vunpack.c.l.b16 %v930
        %v1016 = vunpack.c.l.b16 %v931
        %v1017 = vunpack.c.h.b16 %v931
        %v1018 = vunpack.c.l.b16 %v932
        %v1019 = vunpack.c.l.b16 %v933
        %v1020 = vunpack.c.h.b16 %v933
        %v1021 = vunpack.c.l.b16 %v934
        %v1022 = vunpack.c.l.b16 %v935
        %v1023 = vunpack.c.h.b16 %v935
        %v1024 = vunpack.c.l.b16 %v936
        %v1025 = vunpack.c.l.b16 %v937
        %v1026 = vunpack.c.h.b16 %v937
        %v1027 = vunpack.c.l.b16 %v938
        %v1028 = vunpack.c.l.b16 %v939
        %v1029 = vunpack.c.h.b16 %v939
        %v1030 = vunpack.c.l.b16 %v940
        %v1031 = vunpack.c.l.b16 %v941
        %v1032 = vunpack.c.h.b16 %v941
        %v1033 = vunpack.c.l.b16 %v942
        %v1034 = vunpack.c.l.b16 %v943
        %v1035 = vunpack.c.h.b16 %v943
        %v1036 = vunpack.c.l.b16 %v944
        %v1037 = vunpack.c.l.b16 %v945
        %v1038 = vunpack.c.h.b16 %v945
        %v1039 = vunpack.c.l.b16 %v946
        %v1040 = vunpack.c.l.b16 %v947
        %v1041 = vunpack.c.h.b16 %v947
        %v1042 = vunpack.c.l.b16 %v948
        %v1043 = vunpack.c.l.b16 %v949
        %v1044 = vunpack.c.h.b16 %v949
        %v1045 = vunpack.c.l.b16 %v950
        %v1046 = vunpack.c.l.b16 %v951
        %v1047 = vunpack.c.h.b16 %v951
        %v1048 = vunpack.c.l.b16 %v952
        %v1049 = vunpack.c.l.b16 %v953
        %v1050 = vunpack.c.h.b16 %v953
        %v1051 = vunpack.c.l.b16 %v954
        %v1052 = vpack.c.b16 %v1007, %v1004
        %v1053 = vpack.c.b16 %v1008, %v1005
        %v1054 = vpack.c.b16 %v1009, %v1006
        %v1055 = vpack.c.b16 %v1013, %v1010
        %v1056 = vpack.c.b16 %v1014, %v1011
        %v1057 = vpack.c.b16 %v1015, %v1012
        %v1058 = vpack.c.b16 %v1019, %v1016
        %v1059 = vpack.c.b16 %v1020, %v1017
        %v1060 = vpack.c.b16 %v1021, %v1018
        %v1061 = vpack.c.b16 %v1025, %v1022
        %v1062 = vpack.c.b16 %v1026, %v1023
        %v1063 = vpack.c.b16 %v1027, %v1024
        %v1064 = vpack.c.b16 %v1031, %v1028
        %v1065 = vpack.c.b16 %v1032, %v1029
        %v1066 = vpack.c.b16 %v1033, %v1030
        %v1067 = vpack.c.b16 %v1037, %v1034
        %v1068 = vpack.c.b16 %v1038, %v1035
        %v1069 = vpack.c.b16 %v1039, %v1036
        %v1070 = vpack.c.b16 %v1043, %v1040
        %v1071 = vpack.c.b16 %v1044, %v1041
        %v1072 = vpack.c.b16 %v1045, %v1042
        %v1073 = vpack.c.b16 %v1049, %v1046
        %v1074 = vpack.c.b16 %v1050, %v1047
        %v1075 = vpack.c.b16 %v1051, %v1048
        %1100 = vmatprep.subr.bf16.mxu0 %v1053
        %1101 = vmatpush1.bf16.msra.mxu0 %v1052
        %1102 = vmatprep.subr.bf16.mxu0 %v1056
        %1103 = vmatpush1.bf16.msra.mxu0 %v1055
        %1104 = vmatprep.subr.bf16.mxu0 %v1059
        %1105 = vmatpush1.bf16.msra.mxu0 %v1058
        %1106 = vmatprep.subr.bf16.mxu0 %v1062
        %1107 = vmatpush1.bf16.msra.mxu0 %v1061
        %1108 = vmatprep.subr.bf16.mxu0 %v1065
        %1109 = vmatpush1.bf16.msra.mxu0 %v1064
        %1110 = vmatprep.subr.bf16.mxu0 %v1068
        %1111 = vmatpush1.bf16.msra.mxu0 %v1067
        %1112 = vmatprep.subr.bf16.mxu0 %v1071
        %1113 = vmatpush1.bf16.msra.mxu0 %v1070
        %1114 = vmatprep.subr.bf16.mxu0 %v1074
        %1115 = vmatpush1.bf16.msra.mxu0 %v1073
        %1116 = vmatprep.subr.bf16.mxu0 0
        %1117 = vmatpush1.bf16.msra.mxu0 0
        %1118 = vmatprep.subr.bf16.mxu0 0
        %1119 = vmatpush1.bf16.msra.mxu0 0
        %1120 = vmatprep.subr.bf16.mxu0 0
        %1121 = vmatpush1.bf16.msra.mxu0 0
        %1122 = vmatprep.subr.bf16.mxu0 0
        %1123 = vmatpush1.bf16.msra.mxu0 0
        %1124 = vmatprep.subr.bf16.mxu0 0
        %1125 = vmatpush1.bf16.msra.mxu0 0
        %1126 = vmatprep.subr.bf16.mxu0 0
        %1127 = vmatpush1.bf16.msra.mxu0 0
        %1128 = vmatprep.subr.bf16.mxu0 0
        %1129 = vmatpush1.bf16.msra.mxu0 0
        %1130 = vmatprep.subr.bf16.mxu0 0
        %1131 = vmatpush1.bf16.msra.mxu0 0
        %1132 = vmatprep.mubr.bf16.mxu0 0
        %1133 = vmatmul.mubr.bf16.gmra.mrb[0].mxu0 %v922
        %v1134 = vpop.f32.mrb[0].mxu0
        %v1135 = vadd.f32 %v960, %v1134
        %v1136 = vpop.f32.mrb[0].mxu0
        %v1137 = vadd.f32 %v964, %v1136
        %v1138 = vpop.f32.mrb[0].mxu0
        %v1139 = vpop.f32.mrb[0].mxu0
        %1140 = vdwg.mxu0
        %1141 = vmatprep.subr.bf16.mxu0 0
        %1142 = vmatpush1.bf16.msra.mxu0 %v1054
        %1143 = vmatprep.subr.bf16.mxu0 0
        %1144 = vmatpush1.bf16.msra.mxu0 %v1057
        %1145 = vmatprep.subr.bf16.mxu0 0
        %1146 = vmatpush1.bf16.msra.mxu0 %v1060
        %1147 = vmatprep.subr.bf16.mxu0 0
        %1148 = vmatpush1.bf16.msra.mxu0 %v1063
        %1149 = vmatprep.subr.bf16.mxu0 0
        %1150 = vmatpush1.bf16.msra.mxu0 %v1066
        %1151 = vmatprep.subr.bf16.mxu0 0
        %1152 = vmatpush1.bf16.msra.mxu0 %v1069
        %1153 = vmatprep.subr.bf16.mxu0 0
        %1154 = vmatpush1.bf16.msra.mxu0 %v1072
        %1155 = vmatprep.subr.bf16.mxu0 0
        %1156 = vmatpush1.bf16.msra.mxu0 %v1075
        %1157 = vmatprep.subr.bf16.mxu0 0
        %1158 = vmatpush1.bf16.msra.mxu0 0
        %1159 = vmatprep.subr.bf16.mxu0 0
        %1160 = vmatpush1.bf16.msra.mxu0 0
        %1161 = vmatprep.subr.bf16.mxu0 0
        %1162 = vmatpush1.bf16.msra.mxu0 0
        %1163 = vmatprep.subr.bf16.mxu0 0
        %1164 = vmatpush1.bf16.msra.mxu0 0
        %1165 = vmatprep.subr.bf16.mxu0 0
        %1166 = vmatpush1.bf16.msra.mxu0 0
        %1167 = vmatprep.subr.bf16.mxu0 0
        %1168 = vmatpush1.bf16.msra.mxu0 0
        %1169 = vmatprep.subr.bf16.mxu0 0
        %1170 = vmatpush1.bf16.msra.mxu0 0
        %1171 = vmatprep.subr.bf16.mxu0 0
        %1172 = vmatpush1.bf16.msra.mxu0 0
        %1173 = vmatprep.mubr.bf16.mxu0 0
        %1174 = vmatmul.mubr.bf16.gmra.mrb[0].mxu0 %v922
        %v1175 = vpop.f32.mrb[0].mxu0
        %v1176 = vadd.f32 %v968, %v1175
        %v1177 = vpop.f32.mrb[0].mxu0
        %v1178 = vpop.f32.mrb[0].mxu0
        %v1179 = vpop.f32.mrb[0].mxu0
        %1180 = vdwg.mxu0
        %v1181 = vlaneseq
        %v1182 = vshrl.u32 %v1181, 7
        %v1183 = vadd.s32 %v1182, 8
        %vm1184 = vcmp.eq.s32.totalorder %v1182, %v818
        %vm1185 = vcmp.eq.s32.totalorder %v1183, %v818
        %v1188 = vunpack.c.l.s4 1966171168
        %v1189 = vunpack.c.0.s8 %v1188
        %v1190 = vlaneseq
        %v1191 = vshrl.u32 %v1190, 7
        %v1192 = vsub.s32 %v1189, %v1191
        %v1193 = vrot.slane %v1137, %v1192
        %v1194 = vcombine.high %v1193, %v1193
        %v1196 = vunpack.c.l.s4 1966171168
        %v1197 = vunpack.c.0.s8 %v1196
        %v1198 = vlaneseq
        %v1199 = vshrl.u32 %v1198, 7
        %v1200 = vsub.s32 %v1197, %v1199
        %v1201 = vrot.slane %v1193, %v1200
        %v1203 = vunpack.c.l.s4 1966171168
        %v1204 = vunpack.c.0.s8 %v1203
        %v1205 = vlaneseq
        %v1206 = vshrl.u32 %v1205, 7
        %v1207 = vsub.s32 %v1204, %v1206
        %v1208 = vrot.slane %v1194, %v1207
        %v1209 = vld [vmem:[#allocation2] sm:$0xff]
        %v1210 = vld [vmem:[#allocation2 + $0x8] sm:$0xff]
        %v1211 = vld [vmem:[#allocation2 + $0x10] sm:$0xff]
        %v1212 = vld [vmem:[#allocation2 + $0x18] sm:$0xff]
        %v1213 = vlaneseq
        %v1214 = vshrl.u32 %v1213, 7
        %v1215 = vsub.s32 0, %v1214
        %v1216 = vrot.slane %v1201, %v1215
        %v1217 = vlaneseq
        %v1218 = vshrl.u32 %v1217, 7
        %v1219 = vsub.s32 0, %v1218
        %v1220 = vrot.slane %v1208, %v1219
        %v1223 = vsel %vm1184, %v1216, %v1209
        %v1224 = vsel %vm1185, %v1216, %v1210
        %v1225 = vsel %vm1184, %v1220, %v1211
        %v1226 = vsel %vm1185, %v1220, %v1212
        %v1229 = vunpack.c.l.s4 1966171168
        %v1230 = vunpack.c.0.s8 %v1229
        %v1231 = vlaneseq
        %v1232 = vshrl.u32 %v1231, 7
        %v1233 = vsub.s32 %v1230, %v1232
        %v1234 = vrot.slane %v1176, %v1233
        %v1235 = vcombine.high %v1234, %v1234
        %v1237 = vunpack.c.l.s4 1966171168
        %v1238 = vunpack.c.0.s8 %v1237
        %v1239 = vlaneseq
        %v1240 = vshrl.u32 %v1239, 7
        %v1241 = vsub.s32 %v1238, %v1240
        %v1242 = vrot.slane %v1234, %v1241
        %v1244 = vunpack.c.l.s4 1966171168
        %v1245 = vunpack.c.0.s8 %v1244
        %v1246 = vlaneseq
        %v1247 = vshrl.u32 %v1246, 7
        %v1248 = vsub.s32 %v1245, %v1247
        %v1249 = vrot.slane %v1235, %v1248
        %v1250 = vld [vmem:[#allocation3] sm:$0xff]
        %v1251 = vld [vmem:[#allocation3 + $0x8] sm:$0xff]
        %v1252 = vld [vmem:[#allocation3 + $0x10] sm:$0xff]
        %v1253 = vld [vmem:[#allocation3 + $0x18] sm:$0xff]
        %v1254 = vlaneseq
        %v1255 = vshrl.u32 %v1254, 7
        %v1256 = vsub.s32 0, %v1255
        %v1257 = vrot.slane %v1242, %v1256
        %v1258 = vlaneseq
        %v1259 = vshrl.u32 %v1258, 7
        %v1260 = vsub.s32 0, %v1259
        %v1261 = vrot.slane %v1249, %v1260
        %v1264 = vsel %vm1184, %v1257, %v1250
        %v1265 = vsel %vm1185, %v1257, %v1251
        %v1266 = vsel %vm1184, %v1261, %v1252
        %v1267 = vsel %vm1185, %v1261, %v1253
        %1268 = vst [vmem:[#allocation2] sm:$0xff] %v1223
        %1269 = vst [vmem:[#allocation2 + $0x8] sm:$0xff] %v1224
        %1270 = vst [vmem:[#allocation2 + $0x10] sm:$0xff] %v1225
        %1271 = vst [vmem:[#allocation2 + $0x18] sm:$0xff] %v1226
        %1272 = vst [vmem:[#allocation3] sm:$0xff] %v1264
        %1273 = vst [vmem:[#allocation3 + $0x8] sm:$0xff] %v1265
        %1274 = vst [vmem:[#allocation3 + $0x10] sm:$0xff] %v1266
        %1275 = vst [vmem:[#allocation3 + $0x18] sm:$0xff] %v1267
        %vm1276 = vcmp.le.s32.totalorder %v625, %v818
        %v1277 = vsel %vm1276, 0.0, -1e+09
        %v1278 = vmul.f32 %v1135, %v629
        %v1279 = vmul.f32 %v1135, %v633
        %v1280 = vmul.f32 %v1135, %v637
        %v1281 = vmul.f32 %v1135, %v641
        %v1283 = vrot.slane %v1279, 7
        %v1286 = vrot.slane %v1280, 6
        %v1289 = vrot.slane %v1281, 5
        %vm1291 = vcmask 1040384
        %v1292 = vsel %vm1291, %v1278, %v1283
        %vm1293 = vcmask 1041408
        %v1294 = vsel %vm1293, %v1292, %v1286
        %vm1295 = vcmask 1042432
        %v1296 = vsel %vm1295, %v1294, %v1289
        %v1297 = vpack.c.bf16 %v1296, %v1296
        %v1298 = vpack.c.bf16 %v1224, %v1223
        %1299 = vmatprep.subr.bf16.mxu0 0
        %1300 = vmatpush1.bf16.xpose.msra.mxu0 %v1298
        %1301 = vmatprep.subr.bf16.mxu0 0
        %1302 = vmatpush1.bf16.xpose.msra.mxu0 0
        %1303 = vmatprep.subr.bf16.mxu0 0
        %1304 = vmatpush1.bf16.xpose.msra.mxu0 0
        %1305 = vmatprep.subr.bf16.mxu0 0
        %1306 = vmatpush1.bf16.xpose.msra.mxu0 0
        %1307 = vmatprep.subr.bf16.mxu0 0
        %1308 = vmatpush1.bf16.xpose.msra.mxu0 0
        %1309 = vmatprep.subr.bf16.mxu0 0
        %1310 = vmatpush1.bf16.xpose.msra.mxu0 0
        %1311 = vmatprep.subr.bf16.mxu0 0
        %1312 = vmatpush1.bf16.xpose.msra.mxu0 0
        %1313 = vmatprep.subr.bf16.mxu0 0
        %1314 = vmatpush1.bf16.xpose.msra.mxu0 0
        %1315 = vmatprep.subr.bf16.mxu0 0
        %1316 = vmatpush1.bf16.xpose.msra.mxu0 0
        %1317 = vmatprep.subr.bf16.mxu0 0
        %1318 = vmatpush1.bf16.xpose.msra.mxu0 0
        %1319 = vmatprep.subr.bf16.mxu0 0
        %1320 = vmatpush1.bf16.xpose.msra.mxu0 0
        %1321 = vmatprep.subr.bf16.mxu0 0
        %1322 = vmatpush1.bf16.xpose.msra.mxu0 0
        %1323 = vmatprep.subr.bf16.mxu0 0
        %1324 = vmatpush1.bf16.xpose.msra.mxu0 0
        %1325 = vmatprep.subr.bf16.mxu0 0
        %1326 = vmatpush1.bf16.xpose.msra.mxu0 0
        %1327 = vmatprep.subr.bf16.mxu0 0
        %1328 = vmatpush1.bf16.xpose.msra.mxu0 0
        %1329 = vmatprep.subr.bf16.mxu0 0
        %1330 = vmatpush1.bf16.xpose.msra.mxu0 0
        %1331 = vmatprep.mubr.bf16.mxu0 0
        %1332 = vmatmul.mubr.bf16.gmra.mrb[0].mxu0 %v1297
        %v1333 = vpop.f32.mrb[0].mxu0
        %v1334 = vadd.f32 0.0, %v1333
        %v1335 = vpop.f32.mrb[0].mxu0
        %v1336 = vpop.f32.mrb[0].mxu0
        %v1337 = vpop.f32.mrb[0].mxu0
        %1338 = vdwg.mxu0
        %v1339 = vmul.f32 %v1334, 0.17677669
        %v1340 = vadd.f32 %v1339, %v1277
        %vm1341 = vcmask 125952
        %v1342 = vsel %vm1341, %v1340, -inf
        %1343 = vmax.xlane.f32.xlu0 %v1342
        %v1344 = vpop.xlane.xlu0 %1343
        %v1345 = vsub.f32 %v1340, %v1344
        %v1346 = vmul.f32 %v1345, 1.442695
        %v1347 = vpow.pop %v1346
        %v1348 = vsel %vm1341, %v1347, 0.0
        %1349 = vadd.xlane.f32.xlu0 %v1348
        %v1350 = vpop.xlane.xlu0 %1349
        %v1351 = vrcp.pop %v1350
        %v1352 = vmul.f32 %v1347, %v1351
        %v1353 = vpack.c.bf16 %v1352, %v1352
        %v1354 = vpack.c.bf16 %v1265, %v1264
        %vm1355 = vcmask 130048
        %v1357 = vsel %vm1355, %v1353, 0
        %1359 = vmatprep.subr.bf16.mxu0 0
        %1360 = vmatpush1.bf16.msra.mxu0 %v1354
        %1361 = vmatprep.subr.bf16.mxu0 0
        %1362 = vmatpush1.bf16.msra.mxu0 0
        %1363 = vmatprep.subr.bf16.mxu0 0
        %1364 = vmatpush1.bf16.msra.mxu0 0
        %1365 = vmatprep.subr.bf16.mxu0 0
        %1366 = vmatpush1.bf16.msra.mxu0 0
        %1367 = vmatprep.subr.bf16.mxu0 0
        %1368 = vmatpush1.bf16.msra.mxu0 0
        %1369 = vmatprep.subr.bf16.mxu0 0
        %1370 = vmatpush1.bf16.msra.mxu0 0
        %1371 = vmatprep.subr.bf16.mxu0 0
        %1372 = vmatpush1.bf16.msra.mxu0 0
        %1373 = vmatprep.subr.bf16.mxu0 0
        %1374 = vmatpush1.bf16.msra.mxu0 0
        %1375 = vmatprep.subr.bf16.mxu0 0
        %1376 = vmatpush1.bf16.msra.mxu0 0
        %1377 = vmatprep.subr.bf16.mxu0 0
        %1378 = vmatpush1.bf16.msra.mxu0 0
        %1379 = vmatprep.subr.bf16.mxu0 0
        %1380 = vmatpush1.bf16.msra.mxu0 0
        %1381 = vmatprep.subr.bf16.mxu0 0
        %1382 = vmatpush1.bf16.msra.mxu0 0
        %1383 = vmatprep.subr.bf16.mxu0 0
        %1384 = vmatpush1.bf16.msra.mxu0 0
        %1385 = vmatprep.subr.bf16.mxu0 0
        %1386 = vmatpush1.bf16.msra.mxu0 0
        %1387 = vmatprep.subr.bf16.mxu0 0
        %1388 = vmatpush1.bf16.msra.mxu0 0
        %1389 = vmatprep.subr.bf16.mxu0 0
        %1390 = vmatpush1.bf16.msra.mxu0 0
        %1391 = vmatprep.mubr.bf16.mxu0 0
        %1392 = vmatmul.mubr.bf16.gmra.mrb[0].mxu0 %v1357
        %v1393 = vpop.f32.mrb[0].mxu0
        %v1394 = vadd.f32 0.0, %v1393
        %v1395 = vpop.f32.mrb[0].mxu0
        %v1396 = vpop.f32.mrb[0].mxu0
        %v1397 = vpop.f32.mrb[0].mxu0
        %1398 = vdwg.mxu0
        %v1399 = vmul.f32 %v1394, %v629
        %v1400 = vmul.f32 %v1394, %v633
        %v1402 = vrot.slane %v1400, 1
        %v1404 = vadd.f32 %v1399, %v1402
        %v1405 = vmul.f32 %v1394, %v637
        %v1407 = vrot.slane %v1405, 2
        %v1409 = vadd.f32 %v1404, %v1407
        %v1410 = vmul.f32 %v1394, %v641
        %v1412 = vrot.slane %v1410, 3
        %v1414 = vadd.f32 %v1409, %v1412
        %v1416 = vrot.slane %v1278, 1
        %v1418 = vrot.slane %v1280, 7
        %v1420 = vrot.slane %v1281, 6
        %v1422 = vsel %vm1291, %v1416, %v1279
        %v1423 = vsel %vm1293, %v1422, %v1418
        %v1424 = vsel %vm1295, %v1423, %v1420
        %v1425 = vpack.c.bf16 %v1424, %v1424
        %v1426 = vpack.c.bf16 %v1226, %v1225
        %1427 = vmatprep.subr.bf16.mxu0 0
        %1428 = vmatpush1.bf16.xpose.msra.mxu0 %v1426
        %1429 = vmatprep.subr.bf16.mxu0 0
        %1430 = vmatpush1.bf16.xpose.msra.mxu0 0
        %1431 = vmatprep.subr.bf16.mxu0 0
        %1432 = vmatpush1.bf16.xpose.msra.mxu0 0
        %1433 = vmatprep.subr.bf16.mxu0 0
        %1434 = vmatpush1.bf16.xpose.msra.mxu0 0
        %1435 = vmatprep.subr.bf16.mxu0 0
        %1436 = vmatpush1.bf16.xpose.msra.mxu0 0
        %1437 = vmatprep.subr.bf16.mxu0 0
        %1438 = vmatpush1.bf16.xpose.msra.mxu0 0
        %1439 = vmatprep.subr.bf16.mxu0 0
        %1440 = vmatpush1.bf16.xpose.msra.mxu0 0
        %1441 = vmatprep.subr.bf16.mxu0 0
        %1442 = vmatpush1.bf16.xpose.msra.mxu0 0
        %1443 = vmatprep.subr.bf16.mxu0 0
        %1444 = vmatpush1.bf16.xpose.msra.mxu0 0
        %1445 = vmatprep.subr.bf16.mxu0 0
        %1446 = vmatpush1.bf16.xpose.msra.mxu0 0
        %1447 = vmatprep.subr.bf16.mxu0 0
        %1448 = vmatpush1.bf16.xpose.msra.mxu0 0
        %1449 = vmatprep.subr.bf16.mxu0 0
        %1450 = vmatpush1.bf16.xpose.msra.mxu0 0
        %1451 = vmatprep.subr.bf16.mxu0 0
        %1452 = vmatpush1.bf16.xpose.msra.mxu0 0
        %1453 = vmatprep.subr.bf16.mxu0 0
        %1454 = vmatpush1.bf16.xpose.msra.mxu0 0
        %1455 = vmatprep.subr.bf16.mxu0 0
        %1456 = vmatpush1.bf16.xpose.msra.mxu0 0
        %1457 = vmatprep.subr.bf16.mxu0 0
        %1458 = vmatpush1.bf16.xpose.msra.mxu0 0
        %1459 = vmatprep.mubr.bf16.mxu0 0
        %1460 = vmatmul.mubr.bf16.gmra.mrb[0].mxu0 %v1425
        %v1461 = vpop.f32.mrb[0].mxu0
        %v1462 = vadd.f32 0.0, %v1461
        %v1463 = vpop.f32.mrb[0].mxu0
        %v1464 = vpop.f32.mrb[0].mxu0
        %v1465 = vpop.f32.mrb[0].mxu0
        %1466 = vdwg.mxu0
        %v1467 = vmul.f32 %v1462, 0.17677669
        %v1468 = vadd.f32 %v1467, %v1277
        %v1469 = vsel %vm1341, %v1468, -inf
        %1470 = vmax.xlane.f32.xlu0 %v1469
        %v1471 = vpop.xlane.xlu0 %1470
        %v1472 = vsub.f32 %v1468, %v1471
        %v1473 = vmul.f32 %v1472, 1.442695
        %v1474 = vpow.pop %v1473
        %v1475 = vsel %vm1341, %v1474, 0.0
        %1476 = vadd.xlane.f32.xlu0 %v1475
        %v1477 = vpop.xlane.xlu0 %1476
        %v1478 = vrcp.pop %v1477
        %v1479 = vmul.f32 %v1474, %v1478
        %v1480 = vpack.c.bf16 %v1479, %v1479
        %v1481 = vpack.c.bf16 %v1267, %v1266
        %v1483 = vsel %vm1355, %v1480, 0
        %1485 = vmatprep.subr.bf16.mxu0 0
        %1486 = vmatpush1.bf16.msra.mxu0 %v1481
        %1487 = vmatprep.subr.bf16.mxu0 0
        %1488 = vmatpush1.bf16.msra.mxu0 0
        %1489 = vmatprep.subr.bf16.mxu0 0
        %1490 = vmatpush1.bf16.msra.mxu0 0
        %1491 = vmatprep.subr.bf16.mxu0 0
        %1492 = vmatpush1.bf16.msra.mxu0 0
        %1493 = vmatprep.subr.bf16.mxu0 0
        %1494 = vmatpush1.bf16.msra.mxu0 0
        %1495 = vmatprep.subr.bf16.mxu0 0
        %1496 = vmatpush1.bf16.msra.mxu0 0
        %1497 = vmatprep.subr.bf16.mxu0 0
        %1498 = vmatpush1.bf16.msra.mxu0 0
        %1499 = vmatprep.subr.bf16.mxu0 0
        %1500 = vmatpush1.bf16.msra.mxu0 0
        %1501 = vmatprep.subr.bf16.mxu0 0
        %1502 = vmatpush1.bf16.msra.mxu0 0
        %1503 = vmatprep.subr.bf16.mxu0 0
        %1504 = vmatpush1.bf16.msra.mxu0 0
        %1505 = vmatprep.subr.bf16.mxu0 0
        %1506 = vmatpush1.bf16.msra.mxu0 0
        %1507 = vmatprep.subr.bf16.mxu0 0
        %1508 = vmatpush1.bf16.msra.mxu0 0
        %1509 = vmatprep.subr.bf16.mxu0 0
        %1510 = vmatpush1.bf16.msra.mxu0 0
        %1511 = vmatprep.subr.bf16.mxu0 0
        %1512 = vmatpush1.bf16.msra.mxu0 0
        %1513 = vmatprep.subr.bf16.mxu0 0
        %1514 = vmatpush1.bf16.msra.mxu0 0
        %1515 = vmatprep.subr.bf16.mxu0 0
        %1516 = vmatpush1.bf16.msra.mxu0 0
        %1517 = vmatprep.mubr.bf16.mxu0 0
        %1518 = vmatmul.mubr.bf16.gmra.mrb[0].mxu0 %v1483
        %v1519 = vpop.f32.mrb[0].mxu0
        %v1520 = vadd.f32 0.0, %v1519
        %v1521 = vpop.f32.mrb[0].mxu0
        %v1522 = vpop.f32.mrb[0].mxu0
        %v1523 = vpop.f32.mrb[0].mxu0
        %1524 = vdwg.mxu0
        %v1525 = vmul.f32 %v1520, %v629
        %v1526 = vmul.f32 %v1520, %v633
        %v1528 = vrot.slane %v1526, 1
        %v1530 = vadd.f32 %v1525, %v1528
        %v1531 = vmul.f32 %v1520, %v637
        %v1533 = vrot.slane %v1531, 2
        %v1535 = vadd.f32 %v1530, %v1533
        %v1536 = vmul.f32 %v1520, %v641
        %v1538 = vrot.slane %v1536, 3
        %v1540 = vadd.f32 %v1535, %v1538
        %v1542 = vrot.slane %v1540, 7
        %v1544 = vsel %vm1291, %v1414, %v1542
        %v1545 = vpack.c.bf16 %v1544, %v1544
        %v1546 = vld [vmem:[%s6] sm:$0xf]
        %v1547 = vld [vmem:[%s6 + $0x4] sm:$0xf]
        %v1548 = vld [vmem:[%s6 + $0x8] sm:$0xf]
        %v1549 = vld [vmem:[%s6 + $0xc] sm:$0xf]
        %v1550 = vld [vmem:[%s6 + $0x10] sm:$0xf]
        %v1551 = vld [vmem:[%s6 + $0x14] sm:$0xf]
        %v1552 = vld [vmem:[%s6 + $0x18] sm:$0xf]
        %v1553 = vld [vmem:[%s6 + $0x1c] sm:$0xf]
        %v1554 = vld [vmem:[%s6 + $0x20] sm:$0xf]
        %v1555 = vld [vmem:[%s6 + $0x24] sm:$0xf]
        %v1556 = vld [vmem:[%s6 + $0x28] sm:$0xf]
        %v1557 = vld [vmem:[%s6 + $0x2c] sm:$0xf]
        %v1558 = vld [vmem:[%s6 + $0x30] sm:$0xf]
        %v1559 = vld [vmem:[%s6 + $0x34] sm:$0xf]
        %v1560 = vld [vmem:[%s6 + $0x38] sm:$0xf]
        %v1561 = vld [vmem:[%s6 + $0x3c] sm:$0xf]
        %v1562 = vld [vmem:[%s7] sm:$0x1]
        %v1564 = vlaneseq
        %v1565 = vshrl.u32 %v1564, 7
        %v1566 = vsub.s32 0, %v1565
        %v1567 = vrot.slane %v1562, %v1566
        %v1585 = vunpack.c.l.b16 %v1546
        %v1586 = vunpack.c.l.b16 %v1547
        %v1587 = vunpack.c.l.b16 %v1548
        %v1588 = vunpack.c.l.b16 %v1549
        %v1589 = vunpack.c.l.b16 %v1550
        %v1590 = vunpack.c.l.b16 %v1551
        %v1591 = vunpack.c.l.b16 %v1552
        %v1592 = vunpack.c.l.b16 %v1553
        %v1593 = vunpack.c.l.b16 %v1554
        %v1594 = vunpack.c.l.b16 %v1555
        %v1595 = vunpack.c.l.b16 %v1556
        %v1596 = vunpack.c.l.b16 %v1557
        %v1597 = vunpack.c.l.b16 %v1558
        %v1598 = vunpack.c.l.b16 %v1559
        %v1599 = vunpack.c.l.b16 %v1560
        %v1600 = vunpack.c.l.b16 %v1561
        %v1601 = vpack.c.b16 %v1586, %v1585
        %v1602 = vpack.c.b16 %v1588, %v1587
        %v1603 = vpack.c.b16 %v1590, %v1589
        %v1604 = vpack.c.b16 %v1592, %v1591
        %v1605 = vpack.c.b16 %v1594, %v1593
        %v1606 = vpack.c.b16 %v1596, %v1595
        %v1607 = vpack.c.b16 %v1598, %v1597
        %v1608 = vpack.c.b16 %v1600, %v1599
        %1617 = vmatprep.subr.bf16.mxu0 0
        %1618 = vmatpush1.bf16.msra.mxu0 %v1601
        %1619 = vmatprep.subr.bf16.mxu0 0
        %1620 = vmatpush1.bf16.msra.mxu0 %v1602
        %1621 = vmatprep.subr.bf16.mxu0 0
        %1622 = vmatpush1.bf16.msra.mxu0 %v1603
        %1623 = vmatprep.subr.bf16.mxu0 0
        %1624 = vmatpush1.bf16.msra.mxu0 %v1604
        %1625 = vmatprep.subr.bf16.mxu0 0
        %1626 = vmatpush1.bf16.msra.mxu0 %v1605
        %1627 = vmatprep.subr.bf16.mxu0 0
        %1628 = vmatpush1.bf16.msra.mxu0 %v1606
        %1629 = vmatprep.subr.bf16.mxu0 0
        %1630 = vmatpush1.bf16.msra.mxu0 %v1607
        %1631 = vmatprep.subr.bf16.mxu0 0
        %1632 = vmatpush1.bf16.msra.mxu0 %v1608
        %1633 = vmatprep.subr.bf16.mxu0 0
        %1634 = vmatpush1.bf16.msra.mxu0 0
        %1635 = vmatprep.subr.bf16.mxu0 0
        %1636 = vmatpush1.bf16.msra.mxu0 0
        %1637 = vmatprep.subr.bf16.mxu0 0
        %1638 = vmatpush1.bf16.msra.mxu0 0
        %1639 = vmatprep.subr.bf16.mxu0 0
        %1640 = vmatpush1.bf16.msra.mxu0 0
        %1641 = vmatprep.subr.bf16.mxu0 0
        %1642 = vmatpush1.bf16.msra.mxu0 0
        %1643 = vmatprep.subr.bf16.mxu0 0
        %1644 = vmatpush1.bf16.msra.mxu0 0
        %1645 = vmatprep.subr.bf16.mxu0 0
        %1646 = vmatpush1.bf16.msra.mxu0 0
        %1647 = vmatprep.subr.bf16.mxu0 0
        %1648 = vmatpush1.bf16.msra.mxu0 0
        %1649 = vmatprep.mubr.bf16.mxu0 0
        %1650 = vmatmul.mubr.bf16.gmra.mrb[0].mxu0 %v1545
        %v1651 = vpop.f32.mrb[0].mxu0
        %v1652 = vadd.f32 %v1567, %v1651
        %v1653 = vpop.f32.mrb[0].mxu0
        %v1654 = vpop.f32.mrb[0].mxu0
        %v1655 = vpop.f32.mrb[0].mxu0
        %1656 = vdwg.mxu0
        %v1657 = vadd.f32 %v917, %v1652
        %v1658 = vsel %vm1293, %v1657, 0.0
        %1659 = vadd.xlane.f32.xlu0 %v1658
        %v1660 = vpop.xlane.xlu0 %1659
        %v1661 = vrcp.pop 128.0
        %v1662 = vmul.f32 %v1660, %v1661
        %v1663 = vsub.f32 %v1657, %v1662
        %v1664 = vmul.f32 %v1663, %v1663
        %v1665 = vsel %vm1293, %v1664, 0.0
        %1666 = vadd.xlane.f32.xlu0 %v1665
        %v1667 = vpop.xlane.xlu0 %1666
        %v1668 = vmul.f32 %v1667, %v1661
        %v1669 = vadd.f32 %v1668, 1e-05
        %v1670 = vrsqrt.pop %v1669
        %v1671 = vmul.f32 %v1663, %v1670
        %v1672 = vlaneseq
        %v1673 = vshrl.u32 %v1672, 7
        %v1674 = vsub.s32 0, %v1673
        %v1675 = vrot.slane %v920, %v1674
        %v1676 = vmul.f32 %v1671, %v1675
        %v1677 = vlaneseq
        %v1678 = vshrl.u32 %v1677, 7
        %v1679 = vsub.s32 1, %v1678
        %v1680 = vrot.slane %v920, %v1679
        %v1681 = vadd.f32 %v1676, %v1680
        %v1682 = vpack.c.bf16 %v1681, %v1681
        %v1683 = vld [vmem:[%s8] sm:$0xf]
        %v1684 = vld [vmem:[%s8 + $0x4] sm:$0xf]
        %v1685 = vld [vmem:[%s8 + $0x8] sm:$0xf]
        %v1686 = vld [vmem:[%s8 + $0xc] sm:$0xf]
        %v1687 = vld [vmem:[%s8 + $0x10] sm:$0xf]
        %v1688 = vld [vmem:[%s8 + $0x14] sm:$0xf]
        %v1689 = vld [vmem:[%s8 + $0x18] sm:$0xf]
        %v1690 = vld [vmem:[%s8 + $0x1c] sm:$0xf]
        %v1691 = vld [vmem:[%s8 + $0x20] sm:$0xf]
        %v1692 = vld [vmem:[%s8 + $0x24] sm:$0xf]
        %v1693 = vld [vmem:[%s8 + $0x28] sm:$0xf]
        %v1694 = vld [vmem:[%s8 + $0x2c] sm:$0xf]
        %v1695 = vld [vmem:[%s8 + $0x30] sm:$0xf]
        %v1696 = vld [vmem:[%s8 + $0x34] sm:$0xf]
        %v1697 = vld [vmem:[%s8 + $0x38] sm:$0xf]
        %v1698 = vld [vmem:[%s8 + $0x3c] sm:$0xf]
        %v1699 = vld [vmem:[%s9] sm:$0x1]
        %v1701 = vlaneseq
        %v1702 = vshrl.u32 %v1701, 7
        %v1703 = vsub.s32 0, %v1702
        %v1704 = vrot.slane %v1699, %v1703
        %v1722 = vunpack.c.l.b16 %v1683
        %v1723 = vunpack.c.l.b16 %v1684
        %v1724 = vunpack.c.l.b16 %v1685
        %v1725 = vunpack.c.l.b16 %v1686
        %v1726 = vunpack.c.l.b16 %v1687
        %v1727 = vunpack.c.l.b16 %v1688
        %v1728 = vunpack.c.l.b16 %v1689
        %v1729 = vunpack.c.l.b16 %v1690
        %v1730 = vunpack.c.l.b16 %v1691
        %v1731 = vunpack.c.l.b16 %v1692
        %v1732 = vunpack.c.l.b16 %v1693
        %v1733 = vunpack.c.l.b16 %v1694
        %v1734 = vunpack.c.l.b16 %v1695
        %v1735 = vunpack.c.l.b16 %v1696
        %v1736 = vunpack.c.l.b16 %v1697
        %v1737 = vunpack.c.l.b16 %v1698
        %v1738 = vpack.c.b16 %v1723, %v1722
        %v1739 = vpack.c.b16 %v1725, %v1724
        %v1740 = vpack.c.b16 %v1727, %v1726
        %v1741 = vpack.c.b16 %v1729, %v1728
        %v1742 = vpack.c.b16 %v1731, %v1730
        %v1743 = vpack.c.b16 %v1733, %v1732
        %v1744 = vpack.c.b16 %v1735, %v1734
        %v1745 = vpack.c.b16 %v1737, %v1736
        %1754 = vmatprep.subr.bf16.mxu0 0
        %1755 = vmatpush1.bf16.msra.mxu0 %v1738
        %1756 = vmatprep.subr.bf16.mxu0 0
        %1757 = vmatpush1.bf16.msra.mxu0 %v1739
        %1758 = vmatprep.subr.bf16.mxu0 0
        %1759 = vmatpush1.bf16.msra.mxu0 %v1740
        %1760 = vmatprep.subr.bf16.mxu0 0
        %1761 = vmatpush1.bf16.msra.mxu0 %v1741
        %1762 = vmatprep.subr.bf16.mxu0 0
        %1763 = vmatpush1.bf16.msra.mxu0 %v1742
        %1764 = vmatprep.subr.bf16.mxu0 0
        %1765 = vmatpush1.bf16.msra.mxu0 %v1743
        %1766 = vmatprep.subr.bf16.mxu0 0
        %1767 = vmatpush1.bf16.msra.mxu0 %v1744
        %1768 = vmatprep.subr.bf16.mxu0 0
        %1769 = vmatpush1.bf16.msra.mxu0 %v1745
        %1770 = vmatprep.subr.bf16.mxu0 0
        %1771 = vmatpush1.bf16.msra.mxu0 0
        %1772 = vmatprep.subr.bf16.mxu0 0
        %1773 = vmatpush1.bf16.msra.mxu0 0
        %1774 = vmatprep.subr.bf16.mxu0 0
        %1775 = vmatpush1.bf16.msra.mxu0 0
        %1776 = vmatprep.subr.bf16.mxu0 0
        %1777 = vmatpush1.bf16.msra.mxu0 0
        %1778 = vmatprep.subr.bf16.mxu0 0
        %1779 = vmatpush1.bf16.msra.mxu0 0
        %1780 = vmatprep.subr.bf16.mxu0 0
        %1781 = vmatpush1.bf16.msra.mxu0 0
        %1782 = vmatprep.subr.bf16.mxu0 0
        %1783 = vmatpush1.bf16.msra.mxu0 0
        %1784 = vmatprep.subr.bf16.mxu0 0
        %1785 = vmatpush1.bf16.msra.mxu0 0
        %1786 = vmatprep.mubr.bf16.mxu0 0
        %1787 = vmatmul.mubr.bf16.gmra.mrb[0].mxu0 %v1682
        %v1788 = vpop.f32.mrb[0].mxu0
        %v1789 = vadd.f32 %v1704, %v1788
        %v1790 = vpop.f32.mrb[0].mxu0
        %v1791 = vpop.f32.mrb[0].mxu0
        %v1792 = vpop.f32.mrb[0].mxu0
        %1793 = vdwg.mxu0
        %v1794 = vld [vmem:[#allocation4] sm:$0xff]
        %v1795 = vld [vmem:[#allocation5] sm:$0xff]
        %v1796 = vmul.f32 %v1789, %v629
        %v1797 = vmul.f32 %v1789, %v633
        %v1798 = vmul.f32 %v1789, %v637
        %v1799 = vmul.f32 %v1789, %v641
        %v1801 = vrot.slane %v1797, 7
        %v1804 = vrot.slane %v1798, 6
        %v1807 = vrot.slane %v1799, 5
        %v1809 = vsel %vm1291, %v1796, %v1801
        %v1810 = vsel %vm1293, %v1809, %v1804
        %v1811 = vsel %vm1295, %v1810, %v1807
        %v1812 = vpack.c.bf16 %v1811, %v1811
        %v1813 = vpack.c.bf16 %v1794, %v1794
        %1814 = vmatprep.subr.bf16.mxu0 0
        %1815 = vmatpush1.bf16.xpose.msra.mxu0 %v1813
        %1816 = vmatprep.subr.bf16.mxu0 0
        %1817 = vmatpush1.bf16.xpose.msra.mxu0 0
        %1818 = vmatprep.subr.bf16.mxu0 0
        %1819 = vmatpush1.bf16.xpose.msra.mxu0 0
        %1820 = vmatprep.subr.bf16.mxu0 0
        %1821 = vmatpush1.bf16.xpose.msra.mxu0 0
        %1822 = vmatprep.subr.bf16.mxu0 0
        %1823 = vmatpush1.bf16.xpose.msra.mxu0 0
        %1824 = vmatprep.subr.bf16.mxu0 0
        %1825 = vmatpush1.bf16.xpose.msra.mxu0 0
        %1826 = vmatprep.subr.bf16.mxu0 0
        %1827 = vmatpush1.bf16.xpose.msra.mxu0 0
        %1828 = vmatprep.subr.bf16.mxu0 0
        %1829 = vmatpush1.bf16.xpose.msra.mxu0 0
        %1830 = vmatprep.subr.bf16.mxu0 0
        %1831 = vmatpush1.bf16.xpose.msra.mxu0 0
        %1832 = vmatprep.subr.bf16.mxu0 0
        %1833 = vmatpush1.bf16.xpose.msra.mxu0 0
        %1834 = vmatprep.subr.bf16.mxu0 0
        %1835 = vmatpush1.bf16.xpose.msra.mxu0 0
        %1836 = vmatprep.subr.bf16.mxu0 0
        %1837 = vmatpush1.bf16.xpose.msra.mxu0 0
        %1838 = vmatprep.subr.bf16.mxu0 0
        %1839 = vmatpush1.bf16.xpose.msra.mxu0 0
        %1840 = vmatprep.subr.bf16.mxu0 0
        %1841 = vmatpush1.bf16.xpose.msra.mxu0 0
        %1842 = vmatprep.subr.bf16.mxu0 0
        %1843 = vmatpush1.bf16.xpose.msra.mxu0 0
        %1844 = vmatprep.subr.bf16.mxu0 0
        %1845 = vmatpush1.bf16.xpose.msra.mxu0 0
        %1846 = vmatprep.mubr.bf16.mxu0 0
        %1847 = vmatmul.mubr.bf16.gmra.mrb[0].mxu0 %v1812
        %v1848 = vpop.f32.mrb[0].mxu0
        %v1849 = vadd.f32 0.0, %v1848
        %v1850 = vpop.f32.mrb[0].mxu0
        %v1851 = vpop.f32.mrb[0].mxu0
        %v1852 = vpop.f32.mrb[0].mxu0
        %1853 = vdwg.mxu0
        %v1854 = vmul.f32 %v1849, 0.17677669
        %v1855 = vlaneseq
        %v1856 = vshrl.u32 %v1855, 7
        %v1857 = vsub.s32 0, %v1856
        %v1858 = vrot.slane %v921, %v1857
        %v1859 = vadd.f32 %v1854, %v1858
        %vm1860 = vcmask 60416
        %v1861 = vsel %vm1860, %v1859, -inf
        %1862 = vmax.xlane.f32.xlu0 %v1861
        %v1863 = vpop.xlane.xlu0 %1862
        %v1864 = vsub.f32 %v1859, %v1863
        %v1865 = vmul.f32 %v1864, 1.442695
        %v1866 = vpow.pop %v1865
        %v1867 = vsel %vm1860, %v1866, 0.0
        %1868 = vadd.xlane.f32.xlu0 %v1867
        %v1869 = vpop.xlane.xlu0 %1868
        %v1870 = vrcp.pop %v1869
        %v1871 = vmul.f32 %v1866, %v1870
        %v1872 = vpack.c.bf16 %v1871, %v1871
        %v1873 = vpack.c.bf16 %v1795, %v1795
        %vm1874 = vcmask 64512
        %v1876 = vsel %vm1874, %v1872, 0
        %vm1878 = vcmask 1043456
        %v1880 = vsel %vm1878, %v1873, 0
        %1882 = vmatprep.subr.bf16.mxu0 0
        %1883 = vmatpush1.bf16.msra.mxu0 %v1880
        %1884 = vmatprep.subr.bf16.mxu0 0
        %1885 = vmatpush1.bf16.msra.mxu0 0
        %1886 = vmatprep.subr.bf16.mxu0 0
        %1887 = vmatpush1.bf16.msra.mxu0 0
        %1888 = vmatprep.subr.bf16.mxu0 0
        %1889 = vmatpush1.bf16.msra.mxu0 0
        %1890 = vmatprep.subr.bf16.mxu0 0
        %1891 = vmatpush1.bf16.msra.mxu0 0
        %1892 = vmatprep.subr.bf16.mxu0 0
        %1893 = vmatpush1.bf16.msra.mxu0 0
        %1894 = vmatprep.subr.bf16.mxu0 0
        %1895 = vmatpush1.bf16.msra.mxu0 0
        %1896 = vmatprep.subr.bf16.mxu0 0
        %1897 = vmatpush1.bf16.msra.mxu0 0
        %1898 = vmatprep.subr.bf16.mxu0 0
        %1899 = vmatpush1.bf16.msra.mxu0 0
        %1900 = vmatprep.subr.bf16.mxu0 0
        %1901 = vmatpush1.bf16.msra.mxu0 0
        %1902 = vmatprep.subr.bf16.mxu0 0
        %1903 = vmatpush1.bf16.msra.mxu0 0
        %1904 = vmatprep.subr.bf16.mxu0 0
        %1905 = vmatpush1.bf16.msra.mxu0 0
        %1906 = vmatprep.subr.bf16.mxu0 0
        %1907 = vmatpush1.bf16.msra.mxu0 0
        %1908 = vmatprep.subr.bf16.mxu0 0
        %1909 = vmatpush1.bf16.msra.mxu0 0
        %1910 = vmatprep.subr.bf16.mxu0 0
        %1911 = vmatpush1.bf16.msra.mxu0 0
        %1912 = vmatprep.subr.bf16.mxu0 0
        %1913 = vmatpush1.bf16.msra.mxu0 0
        %1914 = vmatprep.mubr.bf16.mxu0 0
        %1915 = vmatmul.mubr.bf16.gmra.mrb[0].mxu0 %v1876
        %v1916 = vpop.f32.mrb[0].mxu0
        %v1917 = vadd.f32 0.0, %v1916
        %v1918 = vpop.f32.mrb[0].mxu0
        %v1919 = vpop.f32.mrb[0].mxu0
        %v1920 = vpop.f32.mrb[0].mxu0
        %1921 = vdwg.mxu0
        %v1922 = vmul.f32 %v1917, %v629
        %v1923 = vmul.f32 %v1917, %v633
        %v1925 = vrot.slane %v1923, 1
        %v1927 = vadd.f32 %v1922, %v1925
        %v1928 = vmul.f32 %v1917, %v637
        %v1930 = vrot.slane %v1928, 2
        %v1932 = vadd.f32 %v1927, %v1930
        %v1933 = vmul.f32 %v1917, %v641
        %v1935 = vrot.slane %v1933, 3
        %v1937 = vadd.f32 %v1932, %v1935
        %s1938 = scalar_lea.vmem [#allocation4], 8
        %v1939 = vld [vmem:[%s1938] sm:$0xff]
        %s1940 = scalar_lea.vmem [#allocation5], 8
        %v1941 = vld [vmem:[%s1940] sm:$0xff]
        %v1943 = vrot.slane %v1796, 1
        %v1945 = vrot.slane %v1798, 7
        %v1947 = vrot.slane %v1799, 6
        %v1949 = vsel %vm1291, %v1943, %v1797
        %v1950 = vsel %vm1293, %v1949, %v1945
        %v1951 = vsel %vm1295, %v1950, %v1947
        %v1952 = vpack.c.bf16 %v1951, %v1951
        %v1953 = vpack.c.bf16 %v1939, %v1939
        %1954 = vmatprep.subr.bf16.mxu0 0
        %1955 = vmatpush1.bf16.xpose.msra.mxu0 %v1953
        %1956 = vmatprep.subr.bf16.mxu0 0
        %1957 = vmatpush1.bf16.xpose.msra.mxu0 0
        %1958 = vmatprep.subr.bf16.mxu0 0
        %1959 = vmatpush1.bf16.xpose.msra.mxu0 0
        %1960 = vmatprep.subr.bf16.mxu0 0
        %1961 = vmatpush1.bf16.xpose.msra.mxu0 0
        %1962 = vmatprep.subr.bf16.mxu0 0
        %1963 = vmatpush1.bf16.xpose.msra.mxu0 0
        %1964 = vmatprep.subr.bf16.mxu0 0
        %1965 = vmatpush1.bf16.xpose.msra.mxu0 0
        %1966 = vmatprep.subr.bf16.mxu0 0
        %1967 = vmatpush1.bf16.xpose.msra.mxu0 0
        %1968 = vmatprep.subr.bf16.mxu0 0
        %1969 = vmatpush1.bf16.xpose.msra.mxu0 0
        %1970 = vmatprep.subr.bf16.mxu0 0
        %1971 = vmatpush1.bf16.xpose.msra.mxu0 0
        %1972 = vmatprep.subr.bf16.mxu0 0
        %1973 = vmatpush1.bf16.xpose.msra.mxu0 0
        %1974 = vmatprep.subr.bf16.mxu0 0
        %1975 = vmatpush1.bf16.xpose.msra.mxu0 0
        %1976 = vmatprep.subr.bf16.mxu0 0
        %1977 = vmatpush1.bf16.xpose.msra.mxu0 0
        %1978 = vmatprep.subr.bf16.mxu0 0
        %1979 = vmatpush1.bf16.xpose.msra.mxu0 0
        %1980 = vmatprep.subr.bf16.mxu0 0
        %1981 = vmatpush1.bf16.xpose.msra.mxu0 0
        %1982 = vmatprep.subr.bf16.mxu0 0
        %1983 = vmatpush1.bf16.xpose.msra.mxu0 0
        %1984 = vmatprep.subr.bf16.mxu0 0
        %1985 = vmatpush1.bf16.xpose.msra.mxu0 0
        %1986 = vmatprep.mubr.bf16.mxu0 0
        %1987 = vmatmul.mubr.bf16.gmra.mrb[0].mxu0 %v1952
        %v1988 = vpop.f32.mrb[0].mxu0
        %v1989 = vadd.f32 0.0, %v1988
        %v1990 = vpop.f32.mrb[0].mxu0
        %v1991 = vpop.f32.mrb[0].mxu0
        %v1992 = vpop.f32.mrb[0].mxu0
        %1993 = vdwg.mxu0
        %v1994 = vmul.f32 %v1989, 0.17677669
        %v1995 = vlaneseq
        %v1996 = vshrl.u32 %v1995, 7
        %v1997 = vsub.s32 1, %v1996
        %v1998 = vrot.slane %v921, %v1997
        %v1999 = vadd.f32 %v1994, %v1998
        %v2000 = vsel %vm1860, %v1999, -inf
        %2001 = vmax.xlane.f32.xlu0 %v2000
        %v2002 = vpop.xlane.xlu0 %2001
        %v2003 = vsub.f32 %v1999, %v2002
        %v2004 = vmul.f32 %v2003, 1.442695
        %v2005 = vpow.pop %v2004
        %v2006 = vsel %vm1860, %v2005, 0.0
        %2007 = vadd.xlane.f32.xlu0 %v2006
        %v2008 = vpop.xlane.xlu0 %2007
        %v2009 = vrcp.pop %v2008
        %v2010 = vmul.f32 %v2005, %v2009
        %v2011 = vpack.c.bf16 %v2010, %v2010
        %v2012 = vpack.c.bf16 %v1941, %v1941
        %v2014 = vsel %vm1874, %v2011, 0
        %v2017 = vsel %vm1878, %v2012, 0
        %2019 = vmatprep.subr.bf16.mxu0 0
        %2020 = vmatpush1.bf16.msra.mxu0 %v2017
        %2021 = vmatprep.subr.bf16.mxu0 0
        %2022 = vmatpush1.bf16.msra.mxu0 0
        %2023 = vmatprep.subr.bf16.mxu0 0
        %2024 = vmatpush1.bf16.msra.mxu0 0
        %2025 = vmatprep.subr.bf16.mxu0 0
        %2026 = vmatpush1.bf16.msra.mxu0 0
        %2027 = vmatprep.subr.bf16.mxu0 0
        %2028 = vmatpush1.bf16.msra.mxu0 0
        %2029 = vmatprep.subr.bf16.mxu0 0
        %2030 = vmatpush1.bf16.msra.mxu0 0
        %2031 = vmatprep.subr.bf16.mxu0 0
        %2032 = vmatpush1.bf16.msra.mxu0 0
        %2033 = vmatprep.subr.bf16.mxu0 0
        %2034 = vmatpush1.bf16.msra.mxu0 0
        %2035 = vmatprep.subr.bf16.mxu0 0
        %2036 = vmatpush1.bf16.msra.mxu0 0
        %2037 = vmatprep.subr.bf16.mxu0 0
        %2038 = vmatpush1.bf16.msra.mxu0 0
        %2039 = vmatprep.subr.bf16.mxu0 0
        %2040 = vmatpush1.bf16.msra.mxu0 0
        %2041 = vmatprep.subr.bf16.mxu0 0
        %2042 = vmatpush1.bf16.msra.mxu0 0
        %2043 = vmatprep.subr.bf16.mxu0 0
        %2044 = vmatpush1.bf16.msra.mxu0 0
        %2045 = vmatprep.subr.bf16.mxu0 0
        %2046 = vmatpush1.bf16.msra.mxu0 0
        %2047 = vmatprep.subr.bf16.mxu0 0
        %2048 = vmatpush1.bf16.msra.mxu0 0
        %2049 = vmatprep.subr.bf16.mxu0 0
        %2050 = vmatpush1.bf16.msra.mxu0 0
        %2051 = vmatprep.mubr.bf16.mxu0 0
        %2052 = vmatmul.mubr.bf16.gmra.mrb[0].mxu0 %v2014
        %v2053 = vpop.f32.mrb[0].mxu0
        %v2054 = vadd.f32 0.0, %v2053
        %v2055 = vpop.f32.mrb[0].mxu0
        %v2056 = vpop.f32.mrb[0].mxu0
        %v2057 = vpop.f32.mrb[0].mxu0
        %2058 = vdwg.mxu0
        %v2059 = vmul.f32 %v2054, %v629
        %v2060 = vmul.f32 %v2054, %v633
        %v2062 = vrot.slane %v2060, 1
        %v2064 = vadd.f32 %v2059, %v2062
        %v2065 = vmul.f32 %v2054, %v637
        %v2067 = vrot.slane %v2065, 2
        %v2069 = vadd.f32 %v2064, %v2067
        %v2070 = vmul.f32 %v2054, %v641
        %v2072 = vrot.slane %v2070, 3
        %v2074 = vadd.f32 %v2069, %v2072
        %v2076 = vrot.slane %v2074, 7
        %v2078 = vsel %vm1291, %v1937, %v2076
        %v2079 = vpack.c.bf16 %v2078, %v2078
        %v2080 = vld [vmem:[%s12] sm:$0xf]
        %v2081 = vld [vmem:[%s12 + $0x4] sm:$0xf]
        %v2082 = vld [vmem:[%s12 + $0x8] sm:$0xf]
        %v2083 = vld [vmem:[%s12 + $0xc] sm:$0xf]
        %v2084 = vld [vmem:[%s12 + $0x10] sm:$0xf]
        %v2085 = vld [vmem:[%s12 + $0x14] sm:$0xf]
        %v2086 = vld [vmem:[%s12 + $0x18] sm:$0xf]
        %v2087 = vld [vmem:[%s12 + $0x1c] sm:$0xf]
        %v2088 = vld [vmem:[%s12 + $0x20] sm:$0xf]
        %v2089 = vld [vmem:[%s12 + $0x24] sm:$0xf]
        %v2090 = vld [vmem:[%s12 + $0x28] sm:$0xf]
        %v2091 = vld [vmem:[%s12 + $0x2c] sm:$0xf]
        %v2092 = vld [vmem:[%s12 + $0x30] sm:$0xf]
        %v2093 = vld [vmem:[%s12 + $0x34] sm:$0xf]
        %v2094 = vld [vmem:[%s12 + $0x38] sm:$0xf]
        %v2095 = vld [vmem:[%s12 + $0x3c] sm:$0xf]
        %v2096 = vld [vmem:[%s13] sm:$0x1]
        %v2098 = vlaneseq
        %v2099 = vshrl.u32 %v2098, 7
        %v2100 = vsub.s32 0, %v2099
        %v2101 = vrot.slane %v2096, %v2100
        %v2119 = vunpack.c.l.b16 %v2080
        %v2120 = vunpack.c.l.b16 %v2081
        %v2121 = vunpack.c.l.b16 %v2082
        %v2122 = vunpack.c.l.b16 %v2083
        %v2123 = vunpack.c.l.b16 %v2084
        %v2124 = vunpack.c.l.b16 %v2085
        %v2125 = vunpack.c.l.b16 %v2086
        %v2126 = vunpack.c.l.b16 %v2087
        %v2127 = vunpack.c.l.b16 %v2088
        %v2128 = vunpack.c.l.b16 %v2089
        %v2129 = vunpack.c.l.b16 %v2090
        %v2130 = vunpack.c.l.b16 %v2091
        %v2131 = vunpack.c.l.b16 %v2092
        %v2132 = vunpack.c.l.b16 %v2093
        %v2133 = vunpack.c.l.b16 %v2094
        %v2134 = vunpack.c.l.b16 %v2095
        %v2135 = vpack.c.b16 %v2120, %v2119
        %v2136 = vpack.c.b16 %v2122, %v2121
        %v2137 = vpack.c.b16 %v2124, %v2123
        %v2138 = vpack.c.b16 %v2126, %v2125
        %v2139 = vpack.c.b16 %v2128, %v2127
        %v2140 = vpack.c.b16 %v2130, %v2129
        %v2141 = vpack.c.b16 %v2132, %v2131
        %v2142 = vpack.c.b16 %v2134, %v2133
        %2151 = vmatprep.subr.bf16.mxu0 0
        %2152 = vmatpush1.bf16.msra.mxu0 %v2135
        %2153 = vmatprep.subr.bf16.mxu0 0
        %2154 = vmatpush1.bf16.msra.mxu0 %v2136
        %2155 = vmatprep.subr.bf16.mxu0 0
        %2156 = vmatpush1.bf16.msra.mxu0 %v2137
        %2157 = vmatprep.subr.bf16.mxu0 0
        %2158 = vmatpush1.bf16.msra.mxu0 %v2138
        %2159 = vmatprep.subr.bf16.mxu0 0
        %2160 = vmatpush1.bf16.msra.mxu0 %v2139
        %2161 = vmatprep.subr.bf16.mxu0 0
        %2162 = vmatpush1.bf16.msra.mxu0 %v2140
        %2163 = vmatprep.subr.bf16.mxu0 0
        %2164 = vmatpush1.bf16.msra.mxu0 %v2141
        %2165 = vmatprep.subr.bf16.mxu0 0
        %2166 = vmatpush1.bf16.msra.mxu0 %v2142
        %2167 = vmatprep.subr.bf16.mxu0 0
        %2168 = vmatpush1.bf16.msra.mxu0 0
        %2169 = vmatprep.subr.bf16.mxu0 0
        %2170 = vmatpush1.bf16.msra.mxu0 0
        %2171 = vmatprep.subr.bf16.mxu0 0
        %2172 = vmatpush1.bf16.msra.mxu0 0
        %2173 = vmatprep.subr.bf16.mxu0 0
        %2174 = vmatpush1.bf16.msra.mxu0 0
        %2175 = vmatprep.subr.bf16.mxu0 0
        %2176 = vmatpush1.bf16.msra.mxu0 0
        %2177 = vmatprep.subr.bf16.mxu0 0
        %2178 = vmatpush1.bf16.msra.mxu0 0
        %2179 = vmatprep.subr.bf16.mxu0 0
        %2180 = vmatpush1.bf16.msra.mxu0 0
        %2181 = vmatprep.subr.bf16.mxu0 0
        %2182 = vmatpush1.bf16.msra.mxu0 0
        %2183 = vmatprep.mubr.bf16.mxu0 0
        %2184 = vmatmul.mubr.bf16.gmra.mrb[0].mxu0 %v2079
        %v2185 = vpop.f32.mrb[0].mxu0
        %v2186 = vadd.f32 %v2101, %v2185
        %v2187 = vpop.f32.mrb[0].mxu0
        %v2188 = vpop.f32.mrb[0].mxu0
        %v2189 = vpop.f32.mrb[0].mxu0
        %2190 = vdwg.mxu0
        %v2191 = vadd.f32 %v1681, %v2186
        %v2192 = vsel %vm1293, %v2191, 0.0
        %2193 = vadd.xlane.f32.xlu0 %v2192
        %v2194 = vpop.xlane.xlu0 %2193
        %v2195 = vmul.f32 %v2194, %v1661
        %v2196 = vsub.f32 %v2191, %v2195
        %v2197 = vmul.f32 %v2196, %v2196
        %v2198 = vsel %vm1293, %v2197, 0.0
        %2199 = vadd.xlane.f32.xlu0 %v2198
        %v2200 = vpop.xlane.xlu0 %2199
        %v2201 = vmul.f32 %v2200, %v1661
        %v2202 = vadd.f32 %v2201, 1e-05
        %v2203 = vrsqrt.pop %v2202
        %v2204 = vmul.f32 %v2196, %v2203
        %v2205 = vlaneseq
        %v2206 = vshrl.u32 %v2205, 7
        %v2207 = vsub.s32 2, %v2206
        %v2208 = vrot.slane %v920, %v2207
        %v2209 = vmul.f32 %v2204, %v2208
        %v2210 = vlaneseq
        %v2211 = vshrl.u32 %v2210, 7
        %v2212 = vsub.s32 3, %v2211
        %v2213 = vrot.slane %v920, %v2212
        %v2214 = vadd.f32 %v2209, %v2213
        %v2215 = vpack.c.bf16 %v2214, %v2214
        %v2216 = vld [vmem:[%s14] sm:$0xff]
        %v2217 = vld [vmem:[%s14 + $0x8] sm:$0xff]
        %v2218 = vld [vmem:[%s14 + $0x10] sm:$0xff]
        %v2219 = vld [vmem:[%s14 + $0x18] sm:$0xff]
        %v2220 = vld [vmem:[%s14 + $0x20] sm:$0xff]
        %v2221 = vld [vmem:[%s14 + $0x28] sm:$0xff]
        %v2222 = vld [vmem:[%s14 + $0x30] sm:$0xff]
        %v2223 = vld [vmem:[%s14 + $0x38] sm:$0xff]
        %v2224 = vld [vmem:[%s14 + $0x40] sm:$0xff]
        %v2225 = vld [vmem:[%s14 + $0x48] sm:$0xff]
        %v2226 = vld [vmem:[%s14 + $0x50] sm:$0xff]
        %v2227 = vld [vmem:[%s14 + $0x58] sm:$0xff]
        %v2228 = vld [vmem:[%s14 + $0x60] sm:$0xff]
        %v2229 = vld [vmem:[%s14 + $0x68] sm:$0xff]
        %v2230 = vld [vmem:[%s14 + $0x70] sm:$0xff]
        %v2231 = vld [vmem:[%s14 + $0x78] sm:$0xff]
        %v2232 = vld [vmem:[%s15] sm:$0x3]
        %v2234 = vlaneseq
        %v2235 = vshrl.u32 %v2234, 7
        %v2236 = vsub.s32 0, %v2235
        %v2237 = vrot.slane %v2232, %v2236
        %v2238 = vlaneseq
        %v2239 = vshrl.u32 %v2238, 7
        %v2240 = vsub.s32 1, %v2239
        %v2241 = vrot.slane %v2232, %v2240
        %v2260 = vunpack.c.l.b16 %v2216
        %v2261 = vunpack.c.h.b16 %v2216
        %v2262 = vunpack.c.l.b16 %v2217
        %v2263 = vunpack.c.h.b16 %v2217
        %v2264 = vunpack.c.l.b16 %v2218
        %v2265 = vunpack.c.h.b16 %v2218
        %v2266 = vunpack.c.l.b16 %v2219
        %v2267 = vunpack.c.h.b16 %v2219
        %v2268 = vunpack.c.l.b16 %v2220
        %v2269 = vunpack.c.h.b16 %v2220
        %v2270 = vunpack.c.l.b16 %v2221
        %v2271 = vunpack.c.h.b16 %v2221
        %v2272 = vunpack.c.l.b16 %v2222
        %v2273 = vunpack.c.h.b16 %v2222
        %v2274 = vunpack.c.l.b16 %v2223
        %v2275 = vunpack.c.h.b16 %v2223
        %v2276 = vunpack.c.l.b16 %v2224
        %v2277 = vunpack.c.h.b16 %v2224
        %v2278 = vunpack.c.l.b16 %v2225
        %v2279 = vunpack.c.h.b16 %v2225
        %v2280 = vunpack.c.l.b16 %v2226
        %v2281 = vunpack.c.h.b16 %v2226
        %v2282 = vunpack.c.l.b16 %v2227
        %v2283 = vunpack.c.h.b16 %v2227
        %v2284 = vunpack.c.l.b16 %v2228
        %v2285 = vunpack.c.h.b16 %v2228
        %v2286 = vunpack.c.l.b16 %v2229
        %v2287 = vunpack.c.h.b16 %v2229
        %v2288 = vunpack.c.l.b16 %v2230
        %v2289 = vunpack.c.h.b16 %v2230
        %v2290 = vunpack.c.l.b16 %v2231
        %v2291 = vunpack.c.h.b16 %v2231
        %v2292 = vpack.c.b16 %v2262, %v2260
        %v2293 = vpack.c.b16 %v2263, %v2261
        %v2294 = vpack.c.b16 %v2266, %v2264
        %v2295 = vpack.c.b16 %v2267, %v2265
        %v2296 = vpack.c.b16 %v2270, %v2268
        %v2297 = vpack.c.b16 %v2271, %v2269
        %v2298 = vpack.c.b16 %v2274, %v2272
        %v2299 = vpack.c.b16 %v2275, %v2273
        %v2300 = vpack.c.b16 %v2278, %v2276
        %v2301 = vpack.c.b16 %v2279, %v2277
        %v2302 = vpack.c.b16 %v2282, %v2280
        %v2303 = vpack.c.b16 %v2283, %v2281
        %v2304 = vpack.c.b16 %v2286, %v2284
        %v2305 = vpack.c.b16 %v2287, %v2285
        %v2306 = vpack.c.b16 %v2290, %v2288
        %v2307 = vpack.c.b16 %v2291, %v2289
        %2324 = vmatprep.subr.bf16.mxu0 %v2293
        %2325 = vmatpush1.bf16.msra.mxu0 %v2292
        %2326 = vmatprep.subr.bf16.mxu0 %v2295
        %2327 = vmatpush1.bf16.msra.mxu0 %v2294
        %2328 = vmatprep.subr.bf16.mxu0 %v2297
        %2329 = vmatpush1.bf16.msra.mxu0 %v2296
        %2330 = vmatprep.subr.bf16.mxu0 %v2299
        %2331 = vmatpush1.bf16.msra.mxu0 %v2298
        %2332 = vmatprep.subr.bf16.mxu0 %v2301
        %2333 = vmatpush1.bf16.msra.mxu0 %v2300
        %2334 = vmatprep.subr.bf16.mxu0 %v2303
        %2335 = vmatpush1.bf16.msra.mxu0 %v2302
        %2336 = vmatprep.subr.bf16.mxu0 %v2305
        %2337 = vmatpush1.bf16.msra.mxu0 %v2304
        %2338 = vmatprep.subr.bf16.mxu0 %v2307
        %2339 = vmatpush1.bf16.msra.mxu0 %v2306
        %2340 = vmatprep.subr.bf16.mxu0 0
        %2341 = vmatpush1.bf16.msra.mxu0 0
        %2342 = vmatprep.subr.bf16.mxu0 0
        %2343 = vmatpush1.bf16.msra.mxu0 0
        %2344 = vmatprep.subr.bf16.mxu0 0
        %2345 = vmatpush1.bf16.msra.mxu0 0
        %2346 = vmatprep.subr.bf16.mxu0 0
        %2347 = vmatpush1.bf16.msra.mxu0 0
        %2348 = vmatprep.subr.bf16.mxu0 0
        %2349 = vmatpush1.bf16.msra.mxu0 0
        %2350 = vmatprep.subr.bf16.mxu0 0
        %2351 = vmatpush1.bf16.msra.mxu0 0
        %2352 = vmatprep.subr.bf16.mxu0 0
        %2353 = vmatpush1.bf16.msra.mxu0 0
        %2354 = vmatprep.subr.bf16.mxu0 0
        %2355 = vmatpush1.bf16.msra.mxu0 0
        %2356 = vmatprep.mubr.bf16.mxu0 0
        %2357 = vmatmul.mubr.bf16.gmra.mrb[0].mxu0 %v2215
        %v2358 = vpop.f32.mrb[0].mxu0
        %v2359 = vadd.f32 %v2237, %v2358
        %v2360 = vpop.f32.mrb[0].mxu0
        %v2361 = vadd.f32 %v2241, %v2360
        %v2362 = vpop.f32.mrb[0].mxu0
        %v2363 = vpop.f32.mrb[0].mxu0
        %2364 = vdwg.mxu0
        %v2365 = vmax.f32 %v2359, 0.0
        %v2366 = vmax.f32 %v2361, 0.0
        %v2367 = vpack.c.bf16 %v2365, %v2365
        %v2368 = vpack.c.bf16 %v2366, %v2366
        %v2369 = vld [vmem:[%s16] sm:$0xf]
        %v2370 = vld [vmem:[%s16 + $0x4] sm:$0xf]
        %v2371 = vld [vmem:[%s16 + $0x8] sm:$0xf]
        %v2372 = vld [vmem:[%s16 + $0xc] sm:$0xf]
        %v2373 = vld [vmem:[%s16 + $0x10] sm:$0xf]
        %v2374 = vld [vmem:[%s16 + $0x14] sm:$0xf]
        %v2375 = vld [vmem:[%s16 + $0x18] sm:$0xf]
        %v2376 = vld [vmem:[%s16 + $0x1c] sm:$0xf]
        %v2377 = vld [vmem:[%s16 + $0x20] sm:$0xf]
        %v2378 = vld [vmem:[%s16 + $0x24] sm:$0xf]
        %v2379 = vld [vmem:[%s16 + $0x28] sm:$0xf]
        %v2380 = vld [vmem:[%s16 + $0x2c] sm:$0xf]
        %v2381 = vld [vmem:[%s16 + $0x30] sm:$0xf]
        %v2382 = vld [vmem:[%s16 + $0x34] sm:$0xf]
        %v2383 = vld [vmem:[%s16 + $0x38] sm:$0xf]
        %v2384 = vld [vmem:[%s16 + $0x3c] sm:$0xf]
        %v2385 = vld [vmem:[%s16 + $0x40] sm:$0xf]
        %v2386 = vld [vmem:[%s16 + $0x44] sm:$0xf]
        %v2387 = vld [vmem:[%s16 + $0x48] sm:$0xf]
        %v2388 = vld [vmem:[%s16 + $0x4c] sm:$0xf]
        %v2389 = vld [vmem:[%s16 + $0x50] sm:$0xf]
        %v2390 = vld [vmem:[%s16 + $0x54] sm:$0xf]
        %v2391 = vld [vmem:[%s16 + $0x58] sm:$0xf]
        %v2392 = vld [vmem:[%s16 + $0x5c] sm:$0xf]
        %v2393 = vld [vmem:[%s16 + $0x60] sm:$0xf]
        %v2394 = vld [vmem:[%s16 + $0x64] sm:$0xf]
        %v2395 = vld [vmem:[%s16 + $0x68] sm:$0xf]
        %v2396 = vld [vmem:[%s16 + $0x6c] sm:$0xf]
        %v2397 = vld [vmem:[%s16 + $0x70] sm:$0xf]
        %v2398 = vld [vmem:[%s16 + $0x74] sm:$0xf]
        %v2399 = vld [vmem:[%s16 + $0x78] sm:$0xf]
        %v2400 = vld [vmem:[%s16 + $0x7c] sm:$0xf]
        %v2433 = vunpack.c.l.b16 %v2369
        %v2434 = vunpack.c.l.b16 %v2370
        %v2435 = vunpack.c.l.b16 %v2371
        %v2436 = vunpack.c.l.b16 %v2372
        %v2437 = vunpack.c.l.b16 %v2373
        %v2438 = vunpack.c.l.b16 %v2374
        %v2439 = vunpack.c.l.b16 %v2375
        %v2440 = vunpack.c.l.b16 %v2376
        %v2441 = vunpack.c.l.b16 %v2377
        %v2442 = vunpack.c.l.b16 %v2378
        %v2443 = vunpack.c.l.b16 %v2379
        %v2444 = vunpack.c.l.b16 %v2380
        %v2445 = vunpack.c.l.b16 %v2381
        %v2446 = vunpack.c.l.b16 %v2382
        %v2447 = vunpack.c.l.b16 %v2383
        %v2448 = vunpack.c.l.b16 %v2384
        %v2449 = vunpack.c.l.b16 %v2385
        %v2450 = vunpack.c.l.b16 %v2386
        %v2451 = vunpack.c.l.b16 %v2387
        %v2452 = vunpack.c.l.b16 %v2388
        %v2453 = vunpack.c.l.b16 %v2389
        %v2454 = vunpack.c.l.b16 %v2390
        %v2455 = vunpack.c.l.b16 %v2391
        %v2456 = vunpack.c.l.b16 %v2392
        %v2457 = vunpack.c.l.b16 %v2393
        %v2458 = vunpack.c.l.b16 %v2394
        %v2459 = vunpack.c.l.b16 %v2395
        %v2460 = vunpack.c.l.b16 %v2396
        %v2461 = vunpack.c.l.b16 %v2397
        %v2462 = vunpack.c.l.b16 %v2398
        %v2463 = vunpack.c.l.b16 %v2399
        %v2464 = vunpack.c.l.b16 %v2400
        %v2465 = vpack.c.b16 %v2434, %v2433
        %v2466 = vpack.c.b16 %v2436, %v2435
        %v2467 = vpack.c.b16 %v2438, %v2437
        %v2468 = vpack.c.b16 %v2440, %v2439
        %v2469 = vpack.c.b16 %v2442, %v2441
        %v2470 = vpack.c.b16 %v2444, %v2443
        %v2471 = vpack.c.b16 %v2446, %v2445
        %v2472 = vpack.c.b16 %v2448, %v2447
        %v2473 = vpack.c.b16 %v2450, %v2449
        %v2474 = vpack.c.b16 %v2452, %v2451
        %v2475 = vpack.c.b16 %v2454, %v2453
        %v2476 = vpack.c.b16 %v2456, %v2455
        %v2477 = vpack.c.b16 %v2458, %v2457
        %v2478 = vpack.c.b16 %v2460, %v2459
        %v2479 = vpack.c.b16 %v2462, %v2461
        %v2480 = vpack.c.b16 %v2464, %v2463
        %2497 = vmatprep.subr.bf16.mxu0 0
        %2498 = vmatpush1.bf16.msra.mxu0 %v2465
        %2499 = vmatprep.subr.bf16.mxu0 0
        %2500 = vmatpush1.bf16.msra.mxu0 %v2466
        %2501 = vmatprep.subr.bf16.mxu0 0
        %2502 = vmatpush1.bf16.msra.mxu0 %v2467
        %2503 = vmatprep.subr.bf16.mxu0 0
        %2504 = vmatpush1.bf16.msra.mxu0 %v2468
        %2505 = vmatprep.subr.bf16.mxu0 0
        %2506 = vmatpush1.bf16.msra.mxu0 %v2469
        %2507 = vmatprep.subr.bf16.mxu0 0
        %2508 = vmatpush1.bf16.msra.mxu0 %v2470
        %2509 = vmatprep.subr.bf16.mxu0 0
        %2510 = vmatpush1.bf16.msra.mxu0 %v2471
        %2511 = vmatprep.subr.bf16.mxu0 0
        %2512 = vmatpush1.bf16.msra.mxu0 %v2472
        %2513 = vmatprep.subr.bf16.mxu0 0
        %2514 = vmatpush1.bf16.msra.mxu0 %v2473
        %2515 = vmatprep.subr.bf16.mxu0 0
        %2516 = vmatpush1.bf16.msra.mxu0 %v2474
        %2517 = vmatprep.subr.bf16.mxu0 0
        %2518 = vmatpush1.bf16.msra.mxu0 %v2475
        %2519 = vmatprep.subr.bf16.mxu0 0
        %2520 = vmatpush1.bf16.msra.mxu0 %v2476
        %2521 = vmatprep.subr.bf16.mxu0 0
        %2522 = vmatpush1.bf16.msra.mxu0 %v2477
        %2523 = vmatprep.subr.bf16.mxu0 0
        %2524 = vmatpush1.bf16.msra.mxu0 %v2478
        %2525 = vmatprep.subr.bf16.mxu0 0
        %2526 = vmatpush1.bf16.msra.mxu0 %v2479
        %2527 = vmatprep.subr.bf16.mxu0 0
        %2528 = vmatpush1.bf16.msra.mxu0 %v2480
        %2529 = vmatprep.mubr.bf16.mxu0 %v2368
        %2530 = vmatmul.mubr.bf16.gmra.mrb[0].mxu0 %v2367
        %v2531 = vpop.f32.mrb[0].mxu0
        %v2532 = vadd.f32 0.0, %v2531
        %v2533 = vpop.f32.mrb[0].mxu0
        %v2534 = vpop.f32.mrb[0].mxu0
        %v2535 = vpop.f32.mrb[0].mxu0
        %2536 = vdwg.mxu0
        %v2537 = vadd.f32 %v2214, %v2532
        %v2538 = vld [vmem:[%s17] sm:$0x1]
        %v2540 = vlaneseq
        %v2541 = vshrl.u32 %v2540, 7
        %v2542 = vsub.s32 0, %v2541
        %v2543 = vrot.slane %v2538, %v2542
        %v2545 = vadd.f32 %v2537, %v2543
        %v2546 = vsel %vm1293, %v2545, 0.0
        %2547 = vadd.xlane.f32.xlu0 %v2546
        %v2548 = vpop.xlane.xlu0 %2547
        %v2549 = vmul.f32 %v2548, %v1661
        %v2550 = vsub.f32 %v2545, %v2549
        %v2551 = vmul.f32 %v2550, %v2550
        %v2552 = vsel %vm1293, %v2551, 0.0
        %2553 = vadd.xlane.f32.xlu0 %v2552
        %v2554 = vpop.xlane.xlu0 %2553
        %v2555 = vmul.f32 %v2554, %v1661
        %v2556 = vadd.f32 %v2555, 1e-05
        %v2557 = vrsqrt.pop %v2556
        %v2558 = vmul.f32 %v2550, %v2557
        %v2559 = vlaneseq
        %v2560 = vshrl.u32 %v2559, 7
        %v2561 = vsub.s32 4, %v2560
        %v2562 = vrot.slane %v920, %v2561
        %v2563 = vmul.f32 %v2558, %v2562
        %v2564 = vlaneseq
        %v2565 = vshrl.u32 %v2564, 7
        %v2566 = vsub.s32 5, %v2565
        %v2567 = vrot.slane %v920, %v2566
        %v2568 = vadd.f32 %v2563, %v2567
        %v2569 = vpack.c.bf16 %v2568, %v2568
        %v2570 = vld [vmem:[%s19] sm:$0xf]
        %v2571 = vld [vmem:[%s19 + $0x4] sm:$0xf]
        %v2572 = vld [vmem:[%s19 + $0x8] sm:$0xf]
        %v2573 = vld [vmem:[%s19 + $0xc] sm:$0xf]
        %v2574 = vld [vmem:[%s19 + $0x10] sm:$0xf]
        %v2575 = vld [vmem:[%s19 + $0x14] sm:$0xf]
        %v2576 = vld [vmem:[%s19 + $0x18] sm:$0xf]
        %v2577 = vld [vmem:[%s19 + $0x1c] sm:$0xf]
        %v2578 = vld [vmem:[%s19 + $0x20] sm:$0xf]
        %v2579 = vld [vmem:[%s19 + $0x24] sm:$0xf]
        %v2580 = vld [vmem:[%s19 + $0x28] sm:$0xf]
        %v2581 = vld [vmem:[%s19 + $0x2c] sm:$0xf]
        %v2582 = vld [vmem:[%s19 + $0x30] sm:$0xf]
        %v2583 = vld [vmem:[%s19 + $0x34] sm:$0xf]
        %v2584 = vld [vmem:[%s19 + $0x38] sm:$0xf]
        %v2585 = vld [vmem:[%s19 + $0x3c] sm:$0xf]
        %v2586 = vld [vmem:[%s20] sm:$0x1]
        %v2588 = vlaneseq
        %v2589 = vshrl.u32 %v2588, 7
        %v2590 = vsub.s32 0, %v2589
        %v2591 = vrot.slane %v2586, %v2590
        %v2609 = vunpack.c.l.b16 %v2570
        %v2610 = vunpack.c.l.b16 %v2571
        %v2611 = vunpack.c.l.b16 %v2572
        %v2612 = vunpack.c.l.b16 %v2573
        %v2613 = vunpack.c.l.b16 %v2574
        %v2614 = vunpack.c.l.b16 %v2575
        %v2615 = vunpack.c.l.b16 %v2576
        %v2616 = vunpack.c.l.b16 %v2577
        %v2617 = vunpack.c.l.b16 %v2578
        %v2618 = vunpack.c.l.b16 %v2579
        %v2619 = vunpack.c.l.b16 %v2580
        %v2620 = vunpack.c.l.b16 %v2581
        %v2621 = vunpack.c.l.b16 %v2582
        %v2622 = vunpack.c.l.b16 %v2583
        %v2623 = vunpack.c.l.b16 %v2584
        %v2624 = vunpack.c.l.b16 %v2585
        %v2625 = vpack.c.b16 %v2610, %v2609
        %v2626 = vpack.c.b16 %v2612, %v2611
        %v2627 = vpack.c.b16 %v2614, %v2613
        %v2628 = vpack.c.b16 %v2616, %v2615
        %v2629 = vpack.c.b16 %v2618, %v2617
        %v2630 = vpack.c.b16 %v2620, %v2619
        %v2631 = vpack.c.b16 %v2622, %v2621
        %v2632 = vpack.c.b16 %v2624, %v2623
        %2641 = vmatprep.subr.bf16.mxu0 0
        %2642 = vmatpush1.bf16.msra.mxu0 %v2625
        %2643 = vmatprep.subr.bf16.mxu0 0
        %2644 = vmatpush1.bf16.msra.mxu0 %v2626
        %2645 = vmatprep.subr.bf16.mxu0 0
        %2646 = vmatpush1.bf16.msra.mxu0 %v2627
        %2647 = vmatprep.subr.bf16.mxu0 0
        %2648 = vmatpush1.bf16.msra.mxu0 %v2628
        %2649 = vmatprep.subr.bf16.mxu0 0
        %2650 = vmatpush1.bf16.msra.mxu0 %v2629
        %2651 = vmatprep.subr.bf16.mxu0 0
        %2652 = vmatpush1.bf16.msra.mxu0 %v2630
        %2653 = vmatprep.subr.bf16.mxu0 0
        %2654 = vmatpush1.bf16.msra.mxu0 %v2631
        %2655 = vmatprep.subr.bf16.mxu0 0
        %2656 = vmatpush1.bf16.msra.mxu0 %v2632
        %2657 = vmatprep.subr.bf16.mxu0 0
        %2658 = vmatpush1.bf16.msra.mxu0 0
        %2659 = vmatprep.subr.bf16.mxu0 0
        %2660 = vmatpush1.bf16.msra.mxu0 0
        %2661 = vmatprep.subr.bf16.mxu0 0
        %2662 = vmatpush1.bf16.msra.mxu0 0
        %2663 = vmatprep.subr.bf16.mxu0 0
        %2664 = vmatpush1.bf16.msra.mxu0 0
        %2665 = vmatprep.subr.bf16.mxu0 0
        %2666 = vmatpush1.bf16.msra.mxu0 0
        %2667 = vmatprep.subr.bf16.mxu0 0
        %2668 = vmatpush1.bf16.msra.mxu0 0
        %2669 = vmatprep.subr.bf16.mxu0 0
        %2670 = vmatpush1.bf16.msra.mxu0 0
        %2671 = vmatprep.subr.bf16.mxu0 0
        %2672 = vmatpush1.bf16.msra.mxu0 0
        %2673 = vmatprep.mubr.bf16.mxu0 0
        %2674 = vmatmul.mubr.bf16.gmra.mrb[0].mxu0 %v2569
        %v2675 = vpop.f32.mrb[0].mxu0
        %v2676 = vadd.f32 %v2591, %v2675
        %v2677 = vpop.f32.mrb[0].mxu0
        %v2678 = vpop.f32.mrb[0].mxu0
        %v2679 = vpop.f32.mrb[0].mxu0
        %2680 = vdwg.mxu0
        %vm2681 = vcmp.eq.s32.totalorder %v625, 1
        %vm2682 = vcmp.ge.s32.totalorder %v625, 104
        %vm2683 = vmor %vm2681, %vm2682
        %v2684 = vsel %vm2683, -1e+09, %v2676
        %v2685 = vadd.s32 %v1182, 1
        %v2686 = vadd.s32 %v1183, 1
        %vm2687 = vcmp.eq.s32.totalorder %v625, %v2685
        %vm2688 = vcmp.eq.s32.totalorder %v625, %v2686
        %v2689 = vsel %vm2687, 1.0, 0.0
        %v2690 = vsel %vm2688, 1.0, 0.0
        %v2691 = vpack.c.bf16 %v817, %v817
        %v2692 = vpack.c.bf16 %v2690, %v2689
        %v2694 = vsel %vm1355, %v2691, 0
        %2696 = vmatprep.subr.bf16.mxu0 0
        %2697 = vmatpush1.bf16.msra.mxu0 %v2692
        %2698 = vmatprep.subr.bf16.mxu0 0
        %2699 = vmatpush1.bf16.msra.mxu0 0
        %2700 = vmatprep.subr.bf16.mxu0 0
        %2701 = vmatpush1.bf16.msra.mxu0 0
        %2702 = vmatprep.subr.bf16.mxu0 0
        %2703 = vmatpush1.bf16.msra.mxu0 0
        %2704 = vmatprep.subr.bf16.mxu0 0
        %2705 = vmatpush1.bf16.msra.mxu0 0
        %2706 = vmatprep.subr.bf16.mxu0 0
        %2707 = vmatpush1.bf16.msra.mxu0 0
        %2708 = vmatprep.subr.bf16.mxu0 0
        %2709 = vmatpush1.bf16.msra.mxu0 0
        %2710 = vmatprep.subr.bf16.mxu0 0
        %2711 = vmatpush1.bf16.msra.mxu0 0
        %2712 = vmatprep.subr.bf16.mxu0 0
        %2713 = vmatpush1.bf16.msra.mxu0 0
        %2714 = vmatprep.subr.bf16.mxu0 0
        %2715 = vmatpush1.bf16.msra.mxu0 0
        %2716 = vmatprep.subr.bf16.mxu0 0
        %2717 = vmatpush1.bf16.msra.mxu0 0
        %2718 = vmatprep.subr.bf16.mxu0 0
        %2719 = vmatpush1.bf16.msra.mxu0 0
        %2720 = vmatprep.subr.bf16.mxu0 0
        %2721 = vmatpush1.bf16.msra.mxu0 0
        %2722 = vmatprep.subr.bf16.mxu0 0
        %2723 = vmatpush1.bf16.msra.mxu0 0
        %2724 = vmatprep.subr.bf16.mxu0 0
        %2725 = vmatpush1.bf16.msra.mxu0 0
        %2726 = vmatprep.subr.bf16.mxu0 0
        %2727 = vmatpush1.bf16.msra.mxu0 0
        %2728 = vmatprep.mubr.bf16.mxu0 0
        %2729 = vmatmul.mubr.bf16.gmra.mrb[0].mxu0 %v2694
        %v2730 = vpop.f32.mrb[0].mxu0
        %v2731 = vadd.f32 0.0, %v2730
        %v2732 = vpop.f32.mrb[0].mxu0
        %v2733 = vpop.f32.mrb[0].mxu0
        %v2734 = vpop.f32.mrb[0].mxu0
        %2735 = vdwg.mxu0
        %vm2736 = vcmp.eq.f32.partialorder %v2731, %v824
        %vm2737 = vcmp.ge.s32.totalorder %v625, 1
        %vm2738 = vmand %vm2736, %vm2737
        %vm2739 = vmand %vm2738, %vm1276
        %v2740 = vsel %vm2739, 1, 0
        %v2741 = vcvt.s32.f32 %v2740
        %v2742 = vlaneseq
        %v2743 = vshrl.u32 %v2742, 7
        %v2744 = vsub.s32 0, %v2743
        %v2745 = vrot.slane %v816, %v2744
        %2747 = vbcast.lane.b32.xlu0 %v2745, 256
        %v2748 = vpop.permute.xlu0 %2747
        %s2750 = sor.u32 256, 8
        %2751 = vbcast.lane.b32.xlu0 %v2745, %s2750
        %v2752 = vpop.permute.xlu0 %2751
        %v2753 = vlaneseq
        %v2754 = vshrl.u32 %v2753, 7
        %v2755 = vsub.s32 1, %v2754
        %v2756 = vrot.slane %v816, %v2755
        %2758 = vbcast.lane.b32.xlu0 %v2756, 256
        %v2759 = vpop.permute.xlu0 %2758
        %s2761 = sor.u32 256, 8
        %2762 = vbcast.lane.b32.xlu0 %v2756, %s2761
        %v2763 = vpop.permute.xlu0 %2762
        %vm2764 = vcmp.eq.s32.totalorder %v2748, %v625
        %vm2765 = vcmp.eq.s32.totalorder %v2752, %v625
        %vm2766 = vcmp.eq.s32.totalorder %v2759, %v625
        %vm2767 = vcmp.eq.s32.totalorder %v2763, %v625
        %v2768 = vlaneseq
        %v2769 = vshrl.u32 %v2768, 7
        %v2770 = vsub.s32 0, %v2769
        %v2771 = vrot.slane %v2741, %v2770
        %2773 = vbcast.lane.b32.xlu0 %v2771, 256
        %v2774 = vpop.permute.xlu0 %2773
        %s2776 = sor.u32 256, 8
        %2777 = vbcast.lane.b32.xlu0 %v2771, %s2776
        %v2778 = vpop.permute.xlu0 %2777
        %v2779 = vlaneseq
        %v2780 = vshrl.u32 %v2779, 7
        %v2781 = vsub.s32 1, %v2780
        %v2782 = vrot.slane %v2741, %v2781
        %2784 = vbcast.lane.b32.xlu0 %v2782, 256
        %v2785 = vpop.permute.xlu0 %2784
        %s2787 = sor.u32 256, 8
        %2788 = vbcast.lane.b32.xlu0 %v2782, %s2787
        %v2789 = vpop.permute.xlu0 %2788
        %v2790 = vsel %vm2764, %v2774, 0.0
        %v2791 = vsel %vm2765, %v2778, 0.0
        %v2792 = vsel %vm2766, %v2785, 0.0
        %v2793 = vsel %vm2767, %v2789, 0.0
        %v2794 = vadd.f32 %v2790, %v2791
        %v2795 = vrot.slane %v2794, 4
        %v2796 = vadd.f32 %v2794, %v2795
        %v2797 = vrot.slane %v2796, 2
        %v2798 = vadd.f32 %v2796, %v2797
        %v2799 = vrot.slane %v2798, 1
        %v2800 = vadd.f32 %v2798, %v2799
        %v2801 = vadd.f32 %v2792, %v2793
        %v2802 = vrot.slane %v2801, 4
        %v2803 = vadd.f32 %v2801, %v2802
        %v2804 = vrot.slane %v2803, 2
        %v2805 = vadd.f32 %v2803, %v2804
        %v2806 = vrot.slane %v2805, 1
        %v2807 = vadd.f32 %v2805, %v2806
        %vm2808 = vcmp.gt.f32.partialorder %v2800, 0.0
        %vm2809 = vcmp.gt.f32.partialorder %v2807, 0.0
        %v2811 = vrot.slane %v2684, 1
        %v2814 = vsel %vm2808, -1e+09, %v2684
        %v2815 = vsel %vm2809, -1e+09, %v2811
        %v2818 = vrot.slane %v2815, 7
        %vm2819 = vcmask 1041409
        %v2820 = vsel %vm2819, %v2818, %v2814
        %v2822 = vsel %vm1293, %v2820, -inf
        %2823 = vmax.xlane.f32.xlu0 %v2822
        %v2824 = vpop.xlane.xlu0 %2823
        %v2826 = vrot.slane %v2824, 1
        %vm2829 = vcmp.ge.f32.partialorder %v2814, %v2824
        %vm2830 = vcmp.ge.f32.partialorder %v2815, %v2826
        %v2831 = vsel %vm2829, %v825, 128.0
        %v2832 = vsel %vm2830, %v825, 128.0
        %v2835 = vrot.slane %v2832, 7
        %v2836 = vsel %vm2819, %v2835, %v2831
        %v2838 = vsel %vm1293, %v2836, inf
        %2839 = vmin.xlane.f32.xlu0 %v2838
        %v2840 = vpop.xlane.xlu0 %2839
        %vm2841 = vcmp.eq.s32.totalorder %v816, 2
        %vm2842 = vmand %vm2841, %vm2737
        %vm2843 = vmand %vm2842, %vm1276
        %v2844 = vsel %vm2843, 1.0, 0.0
        %v2845 = vsel %vm821, %v2844, 0.0
        %2846 = vadd.xlane.f32.xlu0 %v2845
        %v2847 = vpop.xlane.xlu0 %2846
        %vm2848 = vcmp.gt.f32.partialorder %v2847, 0.0
        %p2849 = scmp.eq.s32.totalorder %s33, 9
        %s2850 = scalar_select %p2849, 1, 0
        %v2851 = vstv %s2850
        %vm2852 = vcmp.eq.s32.totalorder %v2851, 1
        %v2853 = vsel %vm2852, 2.0, %v2840
        %v2854 = vsel %vm2848, 1.0, %v2853
        %s2855 = sadd.s32 %s33, 1
        %v2856 = vstv %s2855
        %vm2857 = vcmp.eq.s32.totalorder %v625, %v2856
        %v2858 = vcvt.f32.s32.to.zero.pseudo %v2854
        %v2859 = vsel %vm2857, %v2858, %v816
        %2860 = vst.msk [vmem:[#allocation6] sm:$0x3] %vm821, %v2859
        // Predicated region
        $region109: #{_generate_impl.3} parent=103 // pred_check
          %p2861 = pneg %p487
        $region110: #{_generate_impl.3} parent=103 // pred_check_branch
          %2863 = sbr.rel (%p2861) target = $region112
        $region111: #{_generate_impl.3} parent=103 // pred_region
          %s2865 = ssub.s32 32, 32
          %2866 = vsyncadd [#allocation7], %s2865
          %s2868 = sshll.u32 [#allocation6], 4
          %s2869 = int_to_ptr.vmem [resolvable:$true] %s2868
          %2871 = dma.vmem_to_hbm [thread:$0]  %s2869, 32, %s21, [#allocation7]
        $region112: #{_generate_impl.3} parent=103 // pred_fallthru
          _
        // Predicated region
        $region113: #{_generate_impl.3} parent=103 // pred_check
          %p2872 = pneg %p487
        $region114: #{_generate_impl.3} parent=103 // pred_check_branch
          %2874 = sbr.rel (%p2872) target = $region116
        $region115: #{_generate_impl.3} parent=103 // pred_region
          %2875 = dma.done [#allocation7], 32
        $region116: #{_generate_impl.3} parent=103 // pred_fallthru
          _
      $region104: #{_generate_impl.3} parent=5 // pred_fallthru
        _
      %p2876 = scmp.le.s32.totalorder 2, %s28
      // Predicated region
      $region117: #{_generate_impl.3} parent=5 // pred_check
        %p2877 = pneg %p2876
      $region118: #{_generate_impl.3} parent=5 // pred_check_branch
        %2879 = sbr.rel (%p2877) target = $region120
      $region119: #{_generate_impl.3} parent=5 // pred_region
        %s2880 = ssub.s32 %s28, 2
      $region120: #{_generate_impl.3} parent=5 // pred_fallthru
        _
    $region6: #{_generate_impl.3} parent=1 // loop_footer
      %s32 = sadd.s32 1, %s28
    $region7: #{_generate_impl.3} parent=1 // loop_footer_branch
      %27 = sbr.rel target = $region3
    $region8: #{_generate_impl.3} parent=1 // loop_exit
      _
    %2881 = vsyncpa [#allocation7], 1
    %s2882 = scalar_lea.sflag [#allocation7], 1
    %2883 = vsyncpa %s2882, 1

</llo_original>
